<compile_context>
chip_gen: v7x
topology: tpu7x:2x2x1
jax: 0.10.0
libtpu: 0.0.40
codegen_flags: <defaults>
</compile_context>

<pallas_src>
import functools

import jax
import jax.numpy as jnp
from jax import lax
from jax.experimental import pallas as pl
from jax.experimental.pallas import tpu as pltpu

LEAKY_SLOPE = 0.2
BN_EPS = 1e-5


def _round_up(x, m):
    return ((x + m - 1) // m) * m


def _choose_td(D, H, W, K, kpad, cout_pad, budget_bytes=16 * 1024 * 1024):
    """Largest divisor of D whose per-step working set fits a VMEM budget."""
    best = 1
    for td in range(1, D + 1):
        if D % td:
            continue
        rows = td * H * W
        # rough per-step VMEM: lane-padded patch pieces + im2col matrix + matmul out
        est = rows * 4 * (K * K * K * 128 + kpad + 2 * cout_pad)
        if est <= budget_bytes:
            best = td
    return best


def _basic_block_kernel(x_ref, w_ref, shift_ref, o_ref, *,
                        K, TD, H, W, C_in, K3C, activate, act):
    """Fused Conv3d (im2col matmul) + folded-BN shift + optional activation.

    x_ref:     (1, Dp, Hp, Wp, Cin)   padded input volume for batch element n
    w_ref:     (KPAD, COUT_PAD)       folded im2col weights (zero padded)
    shift_ref: (1, COUT_PAD)          folded bias/BN shift  (zero padded)
    o_ref:     (1, rows, COUT_PAD)    rows = TD*H*W output voxels of this tile
    """
    dt = pl.program_id(1)
    d0 = dt * TD                                   # first output D-plane of tile

    # One slab load per step (instead of 27 tiny dynamic loads).
    slab = x_ref[0, pl.ds(d0, TD + K - 1), :, :, :]          # (TD+K-1, Hp, Wp, Cin)

    rows = TD * H * W
    pieces = []
    for kd in range(K):
        for kh in range(K):
            for kw in range(K):
                p = slab[kd:kd + TD, kh:kh + H, kw:kw + W, :]  # (TD, H, W, Cin)
                pieces.append(p.reshape(rows, C_in))
    kpad = w_ref.shape[0]
    if kpad > K3C:  # pad contraction dim up to 128 for an aligned MXU matmul
        pieces.append(jnp.zeros((rows, kpad - K3C), jnp.float32))
    patches = jnp.concatenate(pieces, axis=-1)                 # (rows, KPAD)

    y = jnp.dot(patches, w_ref[...], preferred_element_type=jnp.float32)
    y = y + shift_ref[0, :]                                    # folded bias + BN
    if activate:
        if act == "ReLU":
            y = jnp.maximum(y, 0.0)
        else:  # LeakyReLU(0.2)
            y = jnp.where(y > 0, y, LEAKY_SLOPE * y)
    o_ref[0, :, :] = y.astype(o_ref.dtype)


def basic_block_forward(x_ncdhw, p, *, padding, activate=True, act="LeakyReLU"):
    """Forward of BasicBlock. x is PyTorch NCDHW; returns NCDHW."""
    N, C_in, D, H, W = x_ncdhw.shape
    K = p["kernel_size"]
    C_out = p["c_out"]
    K3C = p["k3c"]
    w_mat = p["w_mat"]                 # (KPAD, COUT_PAD)
    shift = p["shift_pad"]             # (1, COUT_PAD)
    KPAD, COUT_PAD = w_mat.shape
    assert 2 * padding == K - 1, "BasicBlock kernel assumes 'same' conv"

    # Channels-last + spatial halo (single host-side pad).
    x = jnp.transpose(x_ncdhw, (0, 2, 3, 4, 1))                       # NDHWC
    xp = jnp.pad(x, ((0, 0), (padding, padding), (padding, padding),
                     (padding, padding), (0, 0)))
    Dp, Hp, Wp = D + 2 * padding, H + 2 * padding, W + 2 * padding

    TD = _choose_td(D, H, W, K, KPAD, COUT_PAD)
    rows = TD * H * W
    grid = (N, D // TD)

    kernel = functools.partial(_basic_block_kernel, K=K, TD=TD, H=H, W=W,
                               C_in=C_in, K3C=K3C, activate=activate, act=act)

    out_pad = pl.pallas_call(
        kernel,
        out_shape=jax.ShapeDtypeStruct((N, D * H * W, COUT_PAD), jnp.float32),
        grid=grid,
        in_specs=[
            # Only one batch element resident at a time; constant in dt so the
            # block is DMA'd once per n and revisited across D-tiles.
            pl.BlockSpec((1, Dp, Hp, Wp, C_in), lambda n, dt: (n, 0, 0, 0, 0)),
            pl.BlockSpec((KPAD, COUT_PAD), lambda n, dt: (0, 0)),
            pl.BlockSpec((1, COUT_PAD), lambda n, dt: (0, 0)),
        ],
        out_specs=pl.BlockSpec((1, rows, COUT_PAD), lambda n, dt: (n, dt, 0)),
        compiler_params=pltpu.CompilerParams(
            dimension_semantics=("parallel", "parallel"),
            vmem_limit_bytes=32 * 1024 * 1024),
    )(xp, w_mat, shift)

    out = out_pad[:, :, :C_out].reshape(N, D, H, W, C_out)
    return jnp.transpose(out, (0, 4, 1, 2, 3))                        # NCDHW


def init_params(key, c_in, c_out, k):
    """Deterministic synthetic Conv3d + BatchNorm3d (running stats) parameters."""
    key, k1, k2, k3, k4, k5, k6 = jax.random.split(key, 7)
    w_torch = 0.1 * jax.random.normal(k1, (c_out, c_in, k, k, k), jnp.float32)
    bias = 0.1 * jax.random.normal(k2, (c_out,), jnp.float32)
    gamma = 1.0 + 0.1 * jax.random.normal(k3, (c_out,), jnp.float32)
    beta = 0.1 * jax.random.normal(k4, (c_out,), jnp.float32)
    rmean = 0.1 * jax.random.normal(k5, (c_out,), jnp.float32)
    rvar = 0.5 + 0.5 * jnp.abs(jax.random.normal(k6, (c_out,), jnp.float32))

    # Fold conv bias + eval-mode BN into the weights and a single shift:
    #   y = (conv(x) + b - mean) * gamma / sqrt(var+eps) + beta
    #     = conv_{w*scale}(x) + [beta + (b - mean) * scale]
    scale = gamma / jnp.sqrt(rvar + BN_EPS)                 # (Cout,)
    shift = beta + (bias - rmean) * scale                   # (Cout,)

    k3c = k * k * k * c_in
    kpad = _round_up(k3c, 128)
    cout_pad = _round_up(c_out, 128)

    w_k = jnp.transpose(w_torch, (2, 3, 4, 1, 0)) * scale   # (kD,kH,kW,Cin,Cout)
    w_mat = w_k.reshape(k3c, c_out)
    w_mat = jnp.pad(w_mat, ((0, kpad - k3c), (0, cout_pad - c_out)))
    shift_pad = jnp.pad(shift, (0, cout_pad - c_out)).reshape(1, cout_pad)

    return dict(
        w_torch=w_torch, bias=bias, gamma=gamma, beta=beta, rmean=rmean, rvar=rvar,
        w_mat=w_mat, shift_pad=shift_pad,
        kernel_size=k, c_in=c_in, c_out=c_out, k3c=k3c)


def reference_forward(x_ncdhw, p, *, padding, activate=True, act="LeakyReLU"):
    """Pure-JAX reference mirroring the PyTorch BasicBlock forward (eval-mode BN)."""
    def bcast(v):
        return v.reshape(1, -1, 1, 1, 1)

    y = lax.conv_general_dilated(
        x_ncdhw, p["w_torch"], window_strides=(1, 1, 1),
        padding=[(padding, padding)] * 3,
        dimension_numbers=("NCDHW", "OIDHW", "NCDHW"),
        precision=lax.Precision.HIGHEST)
    y = y + bcast(p["bias"])
    y = (y - bcast(p["rmean"])) / jnp.sqrt(bcast(p["rvar"]) + BN_EPS)
    y = y * bcast(p["gamma"]) + bcast(p["beta"])
    if activate:
        y = jnp.maximum(y, 0.0) if act == "ReLU" else jnp.where(y > 0, y, LEAKY_SLOPE * y)
    return y


if __name__ == "__main__":
    # Small shapes consistent with the module: batch=2, channels=4, 8^3 volume.
    N, C, D, H, W = 2, 4, 8, 8, 8
    kernel_size, padding = 3, 1

    key = jax.random.PRNGKey(0)
    key, xkey = jax.random.split(key)
    x = jax.random.normal(xkey, (N, C, D, H, W), jnp.float32)
    params = init_params(key, C, C, kernel_size)

    # Default BasicBlock path: conv -> BN -> LeakyReLU(0.2)
    out = basic_block_forward(x, params, padding=padding, activate=True, act="LeakyReLU")
    out = jax.block_until_ready(out)
    ref = reference_forward(x, params, padding=padding, activate=True, act="LeakyReLU")
    assert out.shape == x.shape and out.dtype == jnp.float32
    err = float(jnp.max(jnp.abs(out - ref)))
    assert jnp.allclose(out, ref, atol=2e-3, rtol=2e-3), f"max_err={err}"

    # en_activate=False path: conv -> BN only
    out2 = jax.block_until_ready(
        basic_block_forward(x, params, padding=padding, activate=False))
    ref2 = reference_forward(x, params, padding=padding, activate=False)
    err2 = float(jnp.max(jnp.abs(out2 - ref2)))
    assert jnp.allclose(out2, ref2, atol=2e-3, rtol=2e-3), f"max_err={err2}"

    print("KERNEL_OK")
</pallas_src>

<mosaic_0001>
module attributes {stable_mosaic.version = 11 : i64} {
  func.func @_basic_block_kernel(%arg0: i32, %arg1: i32, %arg2: memref<1x10x10x10x4xf32, #tpu.memory_space<vmem>>, %arg3: memref<128x128xf32, #tpu.memory_space<vmem>>, %arg4: memref<1x128xf32, #tpu.memory_space<vmem>>, %arg5: memref<1x512x128xf32, #tpu.memory_space<vmem>>) attributes {dimension_semantics = [#tpu.dimension_semantics<parallel>, #tpu.dimension_semantics<parallel>], iteration_bounds = array<i64: 2, 1>, scalar_prefetch = 0 : i64, scratch_operands = 0 : i64, tpu.core_type = #tpu.core_type<tc>, window_params = [{transform_indices = @transform_0, window_bounds = array<i64: 1, 10, 10, 10, 4>}, {pipeline_mode = #tpu.pipeline_mode<synchronous>, transform_indices = @transform_1, window_bounds = array<i64: 128, 128>}, {pipeline_mode = #tpu.pipeline_mode<synchronous>, transform_indices = @transform_2, window_bounds = array<i64: 1, 128>}, {transform_indices = @transform_3, window_bounds = array<i64: 1, 512, 128>}]} {
    %c8_i32 = arith.constant 8 : i32
    %0 = arith.muli %arg1, %c8_i32 : i32
    %c0 = arith.constant 0 : index
    %1 = arith.index_cast %0 : i32 to index
    %c0_0 = arith.constant 0 : index
    %c0_1 = arith.constant 0 : index
    %c0_2 = arith.constant 0 : index
    %2 = vector.load %arg2[%c0, %1, %c0_0, %c0_1, %c0_2] : memref<1x10x10x10x4xf32, #tpu.memory_space<vmem>>, vector<1x10x10x10x4xf32>
    %3 = vector.shape_cast %2 : vector<1x10x10x10x4xf32> to vector<10x10x10x4xf32>
    %4 = vector.extract_strided_slice %3 {offsets = [0, 0, 0, 0], sizes = [8, 8, 8, 4], strides = [1, 1, 1, 1]} : vector<10x10x10x4xf32> to vector<8x8x8x4xf32>
    %5 = vector.shape_cast %4 : vector<8x8x8x4xf32> to vector<512x4xf32>
    %6 = vector.extract_strided_slice %3 {offsets = [0, 0, 1, 0], sizes = [8, 8, 8, 4], strides = [1, 1, 1, 1]} : vector<10x10x10x4xf32> to vector<8x8x8x4xf32>
    %7 = vector.shape_cast %6 : vector<8x8x8x4xf32> to vector<512x4xf32>
    %8 = vector.extract_strided_slice %3 {offsets = [0, 0, 2, 0], sizes = [8, 8, 8, 4], strides = [1, 1, 1, 1]} : vector<10x10x10x4xf32> to vector<8x8x8x4xf32>
    %9 = vector.shape_cast %8 : vector<8x8x8x4xf32> to vector<512x4xf32>
    %10 = vector.extract_strided_slice %3 {offsets = [0, 1, 0, 0], sizes = [8, 8, 8, 4], strides = [1, 1, 1, 1]} : vector<10x10x10x4xf32> to vector<8x8x8x4xf32>
    %11 = vector.shape_cast %10 : vector<8x8x8x4xf32> to vector<512x4xf32>
    %12 = vector.extract_strided_slice %3 {offsets = [0, 1, 1, 0], sizes = [8, 8, 8, 4], strides = [1, 1, 1, 1]} : vector<10x10x10x4xf32> to vector<8x8x8x4xf32>
    %13 = vector.shape_cast %12 : vector<8x8x8x4xf32> to vector<512x4xf32>
    %14 = vector.extract_strided_slice %3 {offsets = [0, 1, 2, 0], sizes = [8, 8, 8, 4], strides = [1, 1, 1, 1]} : vector<10x10x10x4xf32> to vector<8x8x8x4xf32>
    %15 = vector.shape_cast %14 : vector<8x8x8x4xf32> to vector<512x4xf32>
    %16 = vector.extract_strided_slice %3 {offsets = [0, 2, 0, 0], sizes = [8, 8, 8, 4], strides = [1, 1, 1, 1]} : vector<10x10x10x4xf32> to vector<8x8x8x4xf32>
    %17 = vector.shape_cast %16 : vector<8x8x8x4xf32> to vector<512x4xf32>
    %18 = vector.extract_strided_slice %3 {offsets = [0, 2, 1, 0], sizes = [8, 8, 8, 4], strides = [1, 1, 1, 1]} : vector<10x10x10x4xf32> to vector<8x8x8x4xf32>
    %19 = vector.shape_cast %18 : vector<8x8x8x4xf32> to vector<512x4xf32>
    %20 = vector.extract_strided_slice %3 {offsets = [0, 2, 2, 0], sizes = [8, 8, 8, 4], strides = [1, 1, 1, 1]} : vector<10x10x10x4xf32> to vector<8x8x8x4xf32>
    %21 = vector.shape_cast %20 : vector<8x8x8x4xf32> to vector<512x4xf32>
    %22 = vector.extract_strided_slice %3 {offsets = [1, 0, 0, 0], sizes = [8, 8, 8, 4], strides = [1, 1, 1, 1]} : vector<10x10x10x4xf32> to vector<8x8x8x4xf32>
    %23 = vector.shape_cast %22 : vector<8x8x8x4xf32> to vector<512x4xf32>
    %24 = vector.extract_strided_slice %3 {offsets = [1, 0, 1, 0], sizes = [8, 8, 8, 4], strides = [1, 1, 1, 1]} : vector<10x10x10x4xf32> to vector<8x8x8x4xf32>
    %25 = vector.shape_cast %24 : vector<8x8x8x4xf32> to vector<512x4xf32>
    %26 = vector.extract_strided_slice %3 {offsets = [1, 0, 2, 0], sizes = [8, 8, 8, 4], strides = [1, 1, 1, 1]} : vector<10x10x10x4xf32> to vector<8x8x8x4xf32>
    %27 = vector.shape_cast %26 : vector<8x8x8x4xf32> to vector<512x4xf32>
    %28 = vector.extract_strided_slice %3 {offsets = [1, 1, 0, 0], sizes = [8, 8, 8, 4], strides = [1, 1, 1, 1]} : vector<10x10x10x4xf32> to vector<8x8x8x4xf32>
    %29 = vector.shape_cast %28 : vector<8x8x8x4xf32> to vector<512x4xf32>
    %30 = vector.extract_strided_slice %3 {offsets = [1, 1, 1, 0], sizes = [8, 8, 8, 4], strides = [1, 1, 1, 1]} : vector<10x10x10x4xf32> to vector<8x8x8x4xf32>
    %31 = vector.shape_cast %30 : vector<8x8x8x4xf32> to vector<512x4xf32>
    %32 = vector.extract_strided_slice %3 {offsets = [1, 1, 2, 0], sizes = [8, 8, 8, 4], strides = [1, 1, 1, 1]} : vector<10x10x10x4xf32> to vector<8x8x8x4xf32>
    %33 = vector.shape_cast %32 : vector<8x8x8x4xf32> to vector<512x4xf32>
    %34 = vector.extract_strided_slice %3 {offsets = [1, 2, 0, 0], sizes = [8, 8, 8, 4], strides = [1, 1, 1, 1]} : vector<10x10x10x4xf32> to vector<8x8x8x4xf32>
    %35 = vector.shape_cast %34 : vector<8x8x8x4xf32> to vector<512x4xf32>
    %36 = vector.extract_strided_slice %3 {offsets = [1, 2, 1, 0], sizes = [8, 8, 8, 4], strides = [1, 1, 1, 1]} : vector<10x10x10x4xf32> to vector<8x8x8x4xf32>
    %37 = vector.shape_cast %36 : vector<8x8x8x4xf32> to vector<512x4xf32>
    %38 = vector.extract_strided_slice %3 {offsets = [1, 2, 2, 0], sizes = [8, 8, 8, 4], strides = [1, 1, 1, 1]} : vector<10x10x10x4xf32> to vector<8x8x8x4xf32>
    %39 = vector.shape_cast %38 : vector<8x8x8x4xf32> to vector<512x4xf32>
    %40 = vector.extract_strided_slice %3 {offsets = [2, 0, 0, 0], sizes = [8, 8, 8, 4], strides = [1, 1, 1, 1]} : vector<10x10x10x4xf32> to vector<8x8x8x4xf32>
    %41 = vector.shape_cast %40 : vector<8x8x8x4xf32> to vector<512x4xf32>
    %42 = vector.extract_strided_slice %3 {offsets = [2, 0, 1, 0], sizes = [8, 8, 8, 4], strides = [1, 1, 1, 1]} : vector<10x10x10x4xf32> to vector<8x8x8x4xf32>
    %43 = vector.shape_cast %42 : vector<8x8x8x4xf32> to vector<512x4xf32>
    %44 = vector.extract_strided_slice %3 {offsets = [2, 0, 2, 0], sizes = [8, 8, 8, 4], strides = [1, 1, 1, 1]} : vector<10x10x10x4xf32> to vector<8x8x8x4xf32>
    %45 = vector.shape_cast %44 : vector<8x8x8x4xf32> to vector<512x4xf32>
    %46 = vector.extract_strided_slice %3 {offsets = [2, 1, 0, 0], sizes = [8, 8, 8, 4], strides = [1, 1, 1, 1]} : vector<10x10x10x4xf32> to vector<8x8x8x4xf32>
    %47 = vector.shape_cast %46 : vector<8x8x8x4xf32> to vector<512x4xf32>
    %48 = vector.extract_strided_slice %3 {offsets = [2, 1, 1, 0], sizes = [8, 8, 8, 4], strides = [1, 1, 1, 1]} : vector<10x10x10x4xf32> to vector<8x8x8x4xf32>
    %49 = vector.shape_cast %48 : vector<8x8x8x4xf32> to vector<512x4xf32>
    %50 = vector.extract_strided_slice %3 {offsets = [2, 1, 2, 0], sizes = [8, 8, 8, 4], strides = [1, 1, 1, 1]} : vector<10x10x10x4xf32> to vector<8x8x8x4xf32>
    %51 = vector.shape_cast %50 : vector<8x8x8x4xf32> to vector<512x4xf32>
    %52 = vector.extract_strided_slice %3 {offsets = [2, 2, 0, 0], sizes = [8, 8, 8, 4], strides = [1, 1, 1, 1]} : vector<10x10x10x4xf32> to vector<8x8x8x4xf32>
    %53 = vector.shape_cast %52 : vector<8x8x8x4xf32> to vector<512x4xf32>
    %54 = vector.extract_strided_slice %3 {offsets = [2, 2, 1, 0], sizes = [8, 8, 8, 4], strides = [1, 1, 1, 1]} : vector<10x10x10x4xf32> to vector<8x8x8x4xf32>
    %55 = vector.shape_cast %54 : vector<8x8x8x4xf32> to vector<512x4xf32>
    %56 = vector.extract_strided_slice %3 {offsets = [2, 2, 2, 0], sizes = [8, 8, 8, 4], strides = [1, 1, 1, 1]} : vector<10x10x10x4xf32> to vector<8x8x8x4xf32>
    %57 = vector.shape_cast %56 : vector<8x8x8x4xf32> to vector<512x4xf32>
    %cst = arith.constant 0.000000e+00 : f32
    %58 = vector.broadcast %cst : f32 to vector<512x20xf32>
    %59 = tpu.concatenate %5, %7, %9, %11, %13, %15, %17, %19, %21, %23, %25, %27, %29, %31, %33, %35 in 1 : vector<512x4xf32>, vector<512x4xf32>, vector<512x4xf32>, vector<512x4xf32>, vector<512x4xf32>, vector<512x4xf32>, vector<512x4xf32>, vector<512x4xf32>, vector<512x4xf32>, vector<512x4xf32>, vector<512x4xf32>, vector<512x4xf32>, vector<512x4xf32>, vector<512x4xf32>, vector<512x4xf32>, vector<512x4xf32> -> vector<512x64xf32>
    %60 = tpu.concatenate %37, %39, %41, %43, %45, %47, %49, %51, %53, %55, %57, %58 in 1 : vector<512x4xf32>, vector<512x4xf32>, vector<512x4xf32>, vector<512x4xf32>, vector<512x4xf32>, vector<512x4xf32>, vector<512x4xf32>, vector<512x4xf32>, vector<512x4xf32>, vector<512x4xf32>, vector<512x4xf32>, vector<512x20xf32> -> vector<512x64xf32>
    %61 = tpu.concatenate %59, %60 in 1 : vector<512x64xf32>, vector<512x64xf32> -> vector<512x128xf32>
    %c0_3 = arith.constant 0 : index
    %c0_4 = arith.constant 0 : index
    %62 = vector.load %arg3[%c0_3, %c0_4] : memref<128x128xf32, #tpu.memory_space<vmem>>, vector<128x128xf32>
    %cst_5 = arith.constant dense<0.000000e+00> : vector<512x128xf32>
    %63 = tpu.matmul %61, %62, %cst_5 {dimension_numbers = #tpu.dot_dimension_numbers<[1], [0], [0], [1], [0, 0, 1, 1], [], []>} : vector<512x128xf32>, vector<128x128xf32>, vector<512x128xf32> -> vector<512x128xf32>
    %c0_6 = arith.constant 0 : index
    %c0_7 = arith.constant 0 : index
    %64 = vector.load %arg4[%c0_6, %c0_7] : memref<1x128xf32, #tpu.memory_space<vmem>>, vector<1x128xf32>
    %65 = vector.shape_cast %64 : vector<1x128xf32> to vector<128xf32>
    %66 = vector.shape_cast %65 : vector<128xf32> to vector<1x128xf32>
    %67 = vector.broadcast %66 : vector<1x128xf32> to vector<512x128xf32>
    %68 = arith.addf %63, %67 : vector<512x128xf32>
    %cst_8 = arith.constant 0.000000e+00 : f32
    %69 = vector.broadcast %cst_8 : f32 to vector<512x128xf32>
    %70 = arith.cmpf ogt, %68, %69 : vector<512x128xf32>
    %cst_9 = arith.constant 2.000000e-01 : f32
    %71 = vector.broadcast %cst_9 : f32 to vector<512x128xf32>
    %72 = arith.mulf %71, %68 : vector<512x128xf32>
    %73 = arith.select %70, %68, %72 : vector<512x128xi1>, vector<512x128xf32>
    %c0_10 = arith.constant 0 : index
    %c0_11 = arith.constant 0 : index
    %c0_12 = arith.constant 0 : index
    %74 = vector.load %arg5[%c0_10, %c0_11, %c0_12] : memref<1x512x128xf32, #tpu.memory_space<vmem>>, vector<1x512x128xf32>
    %75 = vector.shape_cast %74 : vector<1x512x128xf32> to vector<512x128xf32>
    %76 = vector.shape_cast %73 : vector<512x128xf32> to vector<1x512x128xf32>
    tpu.vector_store %arg5[%c0_10, %c0_11, %c0_12], %76 {strides = array<i32>} : memref<1x512x128xf32, #tpu.memory_space<vmem>>, vector<1x512x128xf32>,
    return
  }
  func.func @transform_0(%arg0: i32, %arg1: i32) -> (i32, i32, i32, i32, i32) {
    %c0_i32 = arith.constant 0 : i32
    %c0_i32_0 = arith.constant 0 : i32
    %c0_i32_1 = arith.constant 0 : i32
    %c0_i32_2 = arith.constant 0 : i32
    %c0_i32_3 = arith.constant 0 : i32
    return %arg0, %c0_i32, %c0_i32_0, %c0_i32_1, %c0_i32_2 : i32, i32, i32, i32, i32
  }
  func.func @transform_1(%arg0: i32, %arg1: i32) -> (i32, i32) {
    %c0_i32 = arith.constant 0 : i32
    %c0_i32_0 = arith.constant 0 : i32
    %c0_i32_1 = arith.constant 0 : i32
    return %c0_i32, %c0_i32_0 : i32, i32
  }
  func.func @transform_2(%arg0: i32, %arg1: i32) -> (i32, i32) {
    %c0_i32 = arith.constant 0 : i32
    %c0_i32_0 = arith.constant 0 : i32
    %c0_i32_1 = arith.constant 0 : i32
    return %c0_i32, %c0_i32_0 : i32, i32
  }
  func.func @transform_3(%arg0: i32, %arg1: i32) -> (i32, i32, i32) {
    %c0_i32 = arith.constant 0 : i32
    %c0_i32_0 = arith.constant 0 : i32
    return %arg0, %arg1, %c0_i32 : i32, i32, i32
  }
}

</mosaic_0001>

<llo_original>
// kernel: tpu_custom_call.1
$region0: #{tpu_custom_call.1}
  #allocation0 [shape = 'u32[]', space=smem, size = 0x4, offset = 0x4, fixed_abs, tag = 'smem constant byte address 0x4 - core index']
  #allocation1 [shape = 'u32[144,128]{1,0:T(1,128)}', space=vmem, size = 0x12000, scoped, tag = 'internal scratch']
  %s0 = inlined_call_operand.vmem [shape: f32[2,10,10,10,4], index: 0, kind: input, shape index: {}]
  %s1 = inlined_call_operand.vmem [shape: f32[128,128], index: 1, kind: input, shape index: {}]
  %s2 = inlined_call_operand.vmem [shape: f32[1,128], index: 2, kind: input, shape index: {}]
  %s3 = inlined_call_operand.hbm [shape: f32[2,512,128], index: 3, kind: output, shape index: {}]
  %s4 = sld [smem:[#allocation0]]
  $region45: #{tpu_custom_call.1} parent=0
    _
  %s6 = ssub.s32 1, %s4
  %s7 = scalar_select 0, %s6, %s4
  $region1: #{tpu_custom_call.1} parent=0
    #allocation2 [shape = 'u8[524288]{0}', space=vmem, size = 0x80000, scoped, tag = 'output window, operand 0']
    #allocation3 [shape = 's32[2]{0}', space=sflag, size = 0x8, scoped, tag = 'scoped memory for tpu_custom_call.1']
    %8 = vsyncpa [#allocation3], 0
    %s9 = scalar_lea.sflag [#allocation3], 1
    %10 = vsyncpa %s9, 0
    loop: start=0, step=1, limit=4
    $region2: #{tpu_custom_call.1} parent=1 // loop_pre_header
      _
    $region3: #{tpu_custom_call.1} parent=1 // loop_header
      %s12 = sphi 0, %s16
      %p13 = scmp.ge.s32.totalorder %s12, 4
      %s19 = sphi 0, %s31
      %s20 = sphi 0, %s27
      %s21 = sphi 0, %s19
      %s22 = sphi 0, %s20
      %s23 = sphi 0, %s21
      %s24 = sphi 0, %s22
      %s34 = sphi 0, %s36
      %s37 = sphi 0, %s34
      %s38 = sphi 0, %s37
      %s54 = sphi 0, %s38
      %s58 = sphi 0, %s58
      %s60 = sphi 0, %s58
      %s61 = sphi 0, %s60
      %s75 = sphi 0, %s61
      %s79 = sphi 0, %s79
      %s81 = sphi 0, %s79
      %s82 = sphi 0, %s81
      %s96 = sphi 0, %s82
      %s104 = sphi 0, %s106
      %s107 = sphi 0, %s104
      %s108 = sphi 0, %s107
      %s124 = sphi 0, %s108
    $region4: #{tpu_custom_call.1} parent=1 // loop_header_branch
      %15 = sbr.rel (%p13) target = $region8
    $region5: #{tpu_custom_call.1} parent=1 // loop_body
      %s17 = ssub.s32 %s12, 1
      %s18 = ssub.s32 %s12, 2
      %s25 = sadd.s32 1, %s20
      %p26 = scmp.ge.s32.totalorder %s25, 1
      %s27 = scalar_select %p26, 0, %s25
      %s28 = sadd.s32 1, %s19
      %s29 = scalar_select %p26, %s28, %s19
      %p30 = scmp.ge.s32.totalorder %s29, 2
      %s31 = scalar_select %p30, 0, %s29
      %s32 = ssub.s32 %s19, %s31
      %p33 = scmp.eq.s32.totalorder %s32, 0
      %s35 = sadd.s32 %s34, 1
      %s36 = scalar_select %p33, %s34, %s35
      %p39 = pneg %p33
      %p40 = scmp.eq.s32.totalorder %s12, 1
      %p41 = por %p39, %p40
      %p42 = scmp.ne.s32.totalorder %s34, %s37
      %p43 = scmp.eq.s32.totalorder %s12, 0
      %p44 = por %p42, %p43
      %p45 = scmp.ne.s32.totalorder %s34, %s37
      %p46 = scmp.eq.s32.totalorder %s17, 1
      %p47 = por %p45, %p46
      %p48 = scmp.ne.s32.totalorder %s37, %s38
      %p49 = scmp.eq.s32.totalorder %s17, 0
      %p50 = por %p48, %p49
      %p51 = scmp.ne.s32.totalorder %s37, %s38
      %p52 = scmp.eq.s32.totalorder %s18, 1
      %p53 = por %p51, %p52
      %p55 = scmp.ne.s32.totalorder %s38, %s54
      %p56 = scmp.eq.s32.totalorder %s18, 0
      %p57 = por %p55, %p56
      %s59 = sadd.s32 %s58, 1
      %p62 = scmp.eq.s32.totalorder %s12, 1
      %p63 = scmp.ne.s32.totalorder %s58, %s60
      %p64 = scmp.eq.s32.totalorder %s12, 0
      %p65 = por %p63, %p64
      %p66 = scmp.ne.s32.totalorder %s58, %s60
      %p67 = scmp.eq.s32.totalorder %s17, 1
      %p68 = por %p66, %p67
      %p69 = scmp.ne.s32.totalorder %s60, %s61
      %p70 = scmp.eq.s32.totalorder %s17, 0
      %p71 = por %p69, %p70
      %p72 = scmp.ne.s32.totalorder %s60, %s61
      %p73 = scmp.eq.s32.totalorder %s18, 1
      %p74 = por %p72, %p73
      %p76 = scmp.ne.s32.totalorder %s61, %s75
      %p77 = scmp.eq.s32.totalorder %s18, 0
      %p78 = por %p76, %p77
      %s80 = sadd.s32 %s79, 1
      %p83 = scmp.eq.s32.totalorder %s12, 1
      %p84 = scmp.ne.s32.totalorder %s79, %s81
      %p85 = scmp.eq.s32.totalorder %s12, 0
      %p86 = por %p84, %p85
      %p87 = scmp.ne.s32.totalorder %s79, %s81
      %p88 = scmp.eq.s32.totalorder %s17, 1
      %p89 = por %p87, %p88
      %p90 = scmp.ne.s32.totalorder %s81, %s82
      %p91 = scmp.eq.s32.totalorder %s17, 0
      %p92 = por %p90, %p91
      %p93 = scmp.ne.s32.totalorder %s81, %s82
      %p94 = scmp.eq.s32.totalorder %s18, 1
      %p95 = por %p93, %p94
      %p97 = scmp.ne.s32.totalorder %s82, %s96
      %p98 = scmp.eq.s32.totalorder %s18, 0
      %p99 = por %p97, %p98
      %s100 = ssub.s32 %s19, %s31
      %s101 = ssub.s32 %s20, %s27
      %s102 = sor.u32 %s100, %s101
      %p103 = scmp.eq.s32.totalorder %s102, 0
      %s105 = sadd.s32 %s104, 1
      %s106 = scalar_select %p103, %s104, %s105
      %p109 = pneg %p103
      %p110 = scmp.eq.s32.totalorder %s12, 1
      %p111 = por %p109, %p110
      %p112 = scmp.ne.s32.totalorder %s104, %s107
      %p113 = scmp.eq.s32.totalorder %s12, 0
      %p114 = por %p112, %p113
      %p115 = scmp.ne.s32.totalorder %s104, %s107
      %p116 = scmp.eq.s32.totalorder %s17, 1
      %p117 = por %p115, %p116
      %p118 = scmp.ne.s32.totalorder %s107, %s108
      %p119 = scmp.eq.s32.totalorder %s17, 0
      %p120 = por %p118, %p119
      %p121 = scmp.ne.s32.totalorder %s107, %s108
      %p122 = scmp.eq.s32.totalorder %s18, 1
      %p123 = por %p121, %p122
      %p125 = scmp.ne.s32.totalorder %s108, %s124
      %p126 = scmp.eq.s32.totalorder %s18, 0
      %p127 = por %p125, %p126
      %p128 = scmp.le.s32.totalorder 1, %s12
      %p129 = scmp.lt.s32.totalorder %s12, 3
      %p130 = pnand %p128, %p129
      %p131 = pneg %p130
      // Predicated region
      $region9: #{tpu_custom_call.1} parent=5 // pred_check
        _
      $region10: #{tpu_custom_call.1} parent=5 // pred_check_branch
        %133 = sbr.rel (%p130) target = $region12
      $region11: #{tpu_custom_call.1} parent=5 // pred_region
        %s134 = ssub.s32 %s12, 1
        // Predicated region
        $region13: #{tpu_custom_call.1} parent=11 // pred_check
          %p135 = pneg %p71
        $region14: #{tpu_custom_call.1} parent=11 // pred_check_branch
          %137 = sbr.rel (%p135) target = $region16
        $region15: #{tpu_custom_call.1} parent=11 // pred_region
          _
        $region16: #{tpu_custom_call.1} parent=11 // pred_fallthru
          _
        // Predicated region
        $region17: #{tpu_custom_call.1} parent=11 // pred_check
          %p138 = pneg %p92
        $region18: #{tpu_custom_call.1} parent=11 // pred_check_branch
          %140 = sbr.rel (%p138) target = $region20
        $region19: #{tpu_custom_call.1} parent=11 // pred_region
          _
        $region20: #{tpu_custom_call.1} parent=11 // pred_fallthru
          _
      $region12: #{tpu_custom_call.1} parent=5 // pred_fallthru
        _
      %p141 = scmp.lt.s32.totalorder %s12, 2
      // Predicated region
      $region21: #{tpu_custom_call.1} parent=5 // pred_check
        %p142 = pneg %p141
      $region22: #{tpu_custom_call.1} parent=5 // pred_check_branch
        %144 = sbr.rel (%p142) target = $region24
      $region23: #{tpu_custom_call.1} parent=5 // pred_region
        // Predicated region
        $region25: #{tpu_custom_call.1} parent=23 // pred_check
          %p145 = pneg %p44
        $region26: #{tpu_custom_call.1} parent=23 // pred_check_branch
          %147 = sbr.rel (%p145) target = $region28
        $region27: #{tpu_custom_call.1} parent=23 // pred_region
          %p148 = scmp.lt.s32.totalorder %s19, 1
          %s149 = scalar_select %p148, %s19, 1
          %s150 = smul.addr %s149, 200
          %s151 = smul.addr %s150, 8
          %s152 = scalar_lea.vmem %s0, %s151
        $region28: #{tpu_custom_call.1} parent=23 // pred_fallthru
          _
      $region24: #{tpu_custom_call.1} parent=5 // pred_fallthru
        _
      %p153 = scmp.le.s32.totalorder 1, %s12
      %p154 = scmp.lt.s32.totalorder %s12, 3
      %p155 = pnand %p153, %p154
      %p156 = pneg %p155
      // Predicated region
      $region29: #{tpu_custom_call.1} parent=5 // pred_check
        _
      $region30: #{tpu_custom_call.1} parent=5 // pred_check_branch
        %158 = sbr.rel (%p155) target = $region32
      $region31: #{tpu_custom_call.1} parent=5 // pred_region
        %s159 = ssub.s32 %s12, 1
        %p160 = scmp.lt.s32.totalorder %s21, 1
        %s161 = scalar_select %p160, %s21, 1
        %s162 = smul.addr %s161, 200
        %s163 = smul.addr %s162, 8
        %s164 = scalar_lea.vmem %s0, %s163
        %p165 = pneg %p50
        %p166 = pneg %p47
        %p167 = pneg %p71
        %p168 = pneg %p68
        %p169 = pneg %p92
        %p170 = pneg %p89
        %p171 = pneg %p120
        %p172 = pneg %p117
        %s173 = sand.u32 %s107, 1
        %s174 = scalar_lea.sflag [#allocation3], %s173
        %s175 = sand.u32 %s107, 1
        %s176 = smul.addr %s175, 512
        %s177 = scalar_lea.vmem [#allocation2], %s176
        %p178 = scmp.lt.s32.totalorder %s21, 1
        %s179 = scalar_select %p178, %s21, 1
        %s180 = smul.addr %s179, 200
        %s181 = smul.addr %s180, 8
        %s182 = scalar_lea.vmem %s0, %s181
        %s183 = smul.u32 64, %s22
        %s184 = smul.u32 %s22, 8
        %s185 = smul.u32 %s184, 160
        %s186 = scalar_lea.vmem %s182, %s185
        %v187 = vld [vmem:[%s186] sm:$0xff]
        %v188 = vld [vmem:[%s186 + $0x8] sm:$0x3]
        %v189 = vld [vmem:[%s186 + $0x10] sm:$0xff]
        %v190 = vld [vmem:[%s186 + $0x18] sm:$0x3]
        %v191 = vld [vmem:[%s186 + $0x20] sm:$0xff]
        %v192 = vld [vmem:[%s186 + $0x28] sm:$0x3]
        %v193 = vld [vmem:[%s186 + $0x30] sm:$0xff]
        %v194 = vld [vmem:[%s186 + $0x38] sm:$0x3]
        %v195 = vld [vmem:[%s186 + $0x40] sm:$0xff]
        %v196 = vld [vmem:[%s186 + $0x48] sm:$0x3]
        %v197 = vld [vmem:[%s186 + $0x50] sm:$0xff]
        %v198 = vld [vmem:[%s186 + $0x58] sm:$0x3]
        %v199 = vld [vmem:[%s186 + $0x60] sm:$0xff]
        %v200 = vld [vmem:[%s186 + $0x68] sm:$0x3]
        %v201 = vld [vmem:[%s186 + $0x70] sm:$0xff]
        %v202 = vld [vmem:[%s186 + $0x78] sm:$0x3]
        %v203 = vld [vmem:[%s186 + $0x80] sm:$0xff]
        %v204 = vld [vmem:[%s186 + $0x88] sm:$0x3]
        %v205 = vld [vmem:[%s186 + $0x90] sm:$0xff]
        %v206 = vld [vmem:[%s186 + $0x98] sm:$0x3]
        %v207 = vld [vmem:[%s186 + $0xa0] sm:$0xff]
        %v208 = vld [vmem:[%s186 + $0xa8] sm:$0x3]
        %v209 = vld [vmem:[%s186 + $0xb0] sm:$0xff]
        %v210 = vld [vmem:[%s186 + $0xb8] sm:$0x3]
        %v211 = vld [vmem:[%s186 + $0xc0] sm:$0xff]
        %v212 = vld [vmem:[%s186 + $0xc8] sm:$0x3]
        %v213 = vld [vmem:[%s186 + $0xd0] sm:$0xff]
        %v214 = vld [vmem:[%s186 + $0xd8] sm:$0x3]
        %v215 = vld [vmem:[%s186 + $0xe0] sm:$0xff]
        %v216 = vld [vmem:[%s186 + $0xe8] sm:$0x3]
        %v217 = vld [vmem:[%s186 + $0xf0] sm:$0xff]
        %v218 = vld [vmem:[%s186 + $0xf8] sm:$0x3]
        %v219 = vld [vmem:[%s186 + $0x100] sm:$0xff]
        %v220 = vld [vmem:[%s186 + $0x108] sm:$0x3]
        %v221 = vld [vmem:[%s186 + $0x110] sm:$0xff]
        %v222 = vld [vmem:[%s186 + $0x118] sm:$0x3]
        %v223 = vld [vmem:[%s186 + $0x120] sm:$0xff]
        %v224 = vld [vmem:[%s186 + $0x128] sm:$0x3]
        %v225 = vld [vmem:[%s186 + $0x130] sm:$0xff]
        %v226 = vld [vmem:[%s186 + $0x138] sm:$0x3]
        %v227 = vld [vmem:[%s186 + $0x140] sm:$0xff]
        %v228 = vld [vmem:[%s186 + $0x148] sm:$0x3]
        %v229 = vld [vmem:[%s186 + $0x150] sm:$0xff]
        %v230 = vld [vmem:[%s186 + $0x158] sm:$0x3]
        %v231 = vld [vmem:[%s186 + $0x160] sm:$0xff]
        %v232 = vld [vmem:[%s186 + $0x168] sm:$0x3]
        %v233 = vld [vmem:[%s186 + $0x170] sm:$0xff]
        %v234 = vld [vmem:[%s186 + $0x178] sm:$0x3]
        %v235 = vld [vmem:[%s186 + $0x180] sm:$0xff]
        %v236 = vld [vmem:[%s186 + $0x188] sm:$0x3]
        %v237 = vld [vmem:[%s186 + $0x190] sm:$0xff]
        %v238 = vld [vmem:[%s186 + $0x198] sm:$0x3]
        %v239 = vld [vmem:[%s186 + $0x1a0] sm:$0xff]
        %v240 = vld [vmem:[%s186 + $0x1a8] sm:$0x3]
        %v241 = vld [vmem:[%s186 + $0x1b0] sm:$0xff]
        %v242 = vld [vmem:[%s186 + $0x1b8] sm:$0x3]
        %v243 = vld [vmem:[%s186 + $0x1c0] sm:$0xff]
        %v244 = vld [vmem:[%s186 + $0x1c8] sm:$0x3]
        %v245 = vld [vmem:[%s186 + $0x1d0] sm:$0xff]
        %v246 = vld [vmem:[%s186 + $0x1d8] sm:$0x3]
        %v247 = vld [vmem:[%s186 + $0x1e0] sm:$0xff]
        %v248 = vld [vmem:[%s186 + $0x1e8] sm:$0x3]
        %v249 = vld [vmem:[%s186 + $0x1f0] sm:$0xff]
        %v250 = vld [vmem:[%s186 + $0x1f8] sm:$0x3]
        %v251 = vld [vmem:[%s186 + $0x200] sm:$0xff]
        %v252 = vld [vmem:[%s186 + $0x208] sm:$0x3]
        %v253 = vld [vmem:[%s186 + $0x210] sm:$0xff]
        %v254 = vld [vmem:[%s186 + $0x218] sm:$0x3]
        %v255 = vld [vmem:[%s186 + $0x220] sm:$0xff]
        %v256 = vld [vmem:[%s186 + $0x228] sm:$0x3]
        %v257 = vld [vmem:[%s186 + $0x230] sm:$0xff]
        %v258 = vld [vmem:[%s186 + $0x238] sm:$0x3]
        %v259 = vld [vmem:[%s186 + $0x240] sm:$0xff]
        %v260 = vld [vmem:[%s186 + $0x248] sm:$0x3]
        %v261 = vld [vmem:[%s186 + $0x250] sm:$0xff]
        %v262 = vld [vmem:[%s186 + $0x258] sm:$0x3]
        %v263 = vld [vmem:[%s186 + $0x260] sm:$0xff]
        %v264 = vld [vmem:[%s186 + $0x268] sm:$0x3]
        %v265 = vld [vmem:[%s186 + $0x270] sm:$0xff]
        %v266 = vld [vmem:[%s186 + $0x278] sm:$0x3]
        %v267 = vld [vmem:[%s186 + $0x280] sm:$0xff]
        %v268 = vld [vmem:[%s186 + $0x288] sm:$0x3]
        %v269 = vld [vmem:[%s186 + $0x290] sm:$0xff]
        %v270 = vld [vmem:[%s186 + $0x298] sm:$0x3]
        %v271 = vld [vmem:[%s186 + $0x2a0] sm:$0xff]
        %v272 = vld [vmem:[%s186 + $0x2a8] sm:$0x3]
        %v273 = vld [vmem:[%s186 + $0x2b0] sm:$0xff]
        %v274 = vld [vmem:[%s186 + $0x2b8] sm:$0x3]
        %v275 = vld [vmem:[%s186 + $0x2c0] sm:$0xff]
        %v276 = vld [vmem:[%s186 + $0x2c8] sm:$0x3]
        %v277 = vld [vmem:[%s186 + $0x2d0] sm:$0xff]
        %v278 = vld [vmem:[%s186 + $0x2d8] sm:$0x3]
        %v279 = vld [vmem:[%s186 + $0x2e0] sm:$0xff]
        %v280 = vld [vmem:[%s186 + $0x2e8] sm:$0x3]
        %v281 = vld [vmem:[%s186 + $0x2f0] sm:$0xff]
        %v282 = vld [vmem:[%s186 + $0x2f8] sm:$0x3]
        %v283 = vld [vmem:[%s186 + $0x300] sm:$0xff]
        %v284 = vld [vmem:[%s186 + $0x308] sm:$0x3]
        %v285 = vld [vmem:[%s186 + $0x310] sm:$0xff]
        %v286 = vld [vmem:[%s186 + $0x318] sm:$0x3]
        %v287 = vld [vmem:[%s186 + $0x320] sm:$0xff]
        %v288 = vld [vmem:[%s186 + $0x328] sm:$0x3]
        %v289 = vld [vmem:[%s186 + $0x330] sm:$0xff]
        %v290 = vld [vmem:[%s186 + $0x338] sm:$0x3]
        %v291 = vld [vmem:[%s186 + $0x340] sm:$0xff]
        %v292 = vld [vmem:[%s186 + $0x348] sm:$0x3]
        %v293 = vld [vmem:[%s186 + $0x350] sm:$0xff]
        %v294 = vld [vmem:[%s186 + $0x358] sm:$0x3]
        %v295 = vld [vmem:[%s186 + $0x360] sm:$0xff]
        %v296 = vld [vmem:[%s186 + $0x368] sm:$0x3]
        %v297 = vld [vmem:[%s186 + $0x370] sm:$0xff]
        %v298 = vld [vmem:[%s186 + $0x378] sm:$0x3]
        %v299 = vld [vmem:[%s186 + $0x380] sm:$0xff]
        %v300 = vld [vmem:[%s186 + $0x388] sm:$0x3]
        %v301 = vld [vmem:[%s186 + $0x390] sm:$0xff]
        %v302 = vld [vmem:[%s186 + $0x398] sm:$0x3]
        %v303 = vld [vmem:[%s186 + $0x3a0] sm:$0xff]
        %v304 = vld [vmem:[%s186 + $0x3a8] sm:$0x3]
        %v305 = vld [vmem:[%s186 + $0x3b0] sm:$0xff]
        %v306 = vld [vmem:[%s186 + $0x3b8] sm:$0x3]
        %v307 = vld [vmem:[%s186 + $0x3c0] sm:$0xff]
        %v308 = vld [vmem:[%s186 + $0x3c8] sm:$0x3]
        %v309 = vld [vmem:[%s186 + $0x3d0] sm:$0xff]
        %v310 = vld [vmem:[%s186 + $0x3d8] sm:$0x3]
        %v311 = vld [vmem:[%s186 + $0x3e0] sm:$0xff]
        %v312 = vld [vmem:[%s186 + $0x3e8] sm:$0x3]
        %v313 = vld [vmem:[%s186 + $0x3f0] sm:$0xff]
        %v314 = vld [vmem:[%s186 + $0x3f8] sm:$0x3]
        %v315 = vld [vmem:[%s186 + $0x400] sm:$0xff]
        %v316 = vld [vmem:[%s186 + $0x408] sm:$0x3]
        %v317 = vld [vmem:[%s186 + $0x410] sm:$0xff]
        %v318 = vld [vmem:[%s186 + $0x418] sm:$0x3]
        %v319 = vld [vmem:[%s186 + $0x420] sm:$0xff]
        %v320 = vld [vmem:[%s186 + $0x428] sm:$0x3]
        %v321 = vld [vmem:[%s186 + $0x430] sm:$0xff]
        %v322 = vld [vmem:[%s186 + $0x438] sm:$0x3]
        %v323 = vld [vmem:[%s186 + $0x440] sm:$0xff]
        %v324 = vld [vmem:[%s186 + $0x448] sm:$0x3]
        %v325 = vld [vmem:[%s186 + $0x450] sm:$0xff]
        %v326 = vld [vmem:[%s186 + $0x458] sm:$0x3]
        %v327 = vld [vmem:[%s186 + $0x460] sm:$0xff]
        %v328 = vld [vmem:[%s186 + $0x468] sm:$0x3]
        %v329 = vld [vmem:[%s186 + $0x470] sm:$0xff]
        %v330 = vld [vmem:[%s186 + $0x478] sm:$0x3]
        %v331 = vld [vmem:[%s186 + $0x480] sm:$0xff]
        %v332 = vld [vmem:[%s186 + $0x488] sm:$0x3]
        %v333 = vld [vmem:[%s186 + $0x490] sm:$0xff]
        %v334 = vld [vmem:[%s186 + $0x498] sm:$0x3]
        %v335 = vld [vmem:[%s186 + $0x4a0] sm:$0xff]
        %v336 = vld [vmem:[%s186 + $0x4a8] sm:$0x3]
        %v337 = vld [vmem:[%s186 + $0x4b0] sm:$0xff]
        %v338 = vld [vmem:[%s186 + $0x4b8] sm:$0x3]
        %v339 = vld [vmem:[%s186 + $0x4c0] sm:$0xff]
        %v340 = vld [vmem:[%s186 + $0x4c8] sm:$0x3]
        %v341 = vld [vmem:[%s186 + $0x4d0] sm:$0xff]
        %v342 = vld [vmem:[%s186 + $0x4d8] sm:$0x3]
        %v343 = vld [vmem:[%s186 + $0x4e0] sm:$0xff]
        %v344 = vld [vmem:[%s186 + $0x4e8] sm:$0x3]
        %v345 = vld [vmem:[%s186 + $0x4f0] sm:$0xff]
        %v346 = vld [vmem:[%s186 + $0x4f8] sm:$0x3]
        %v347 = vld [vmem:[%s186 + $0x500] sm:$0xff]
        %v348 = vld [vmem:[%s186 + $0x508] sm:$0x3]
        %v349 = vld [vmem:[%s186 + $0x510] sm:$0xff]
        %v350 = vld [vmem:[%s186 + $0x518] sm:$0x3]
        %v351 = vld [vmem:[%s186 + $0x520] sm:$0xff]
        %v352 = vld [vmem:[%s186 + $0x528] sm:$0x3]
        %v353 = vld [vmem:[%s186 + $0x530] sm:$0xff]
        %v354 = vld [vmem:[%s186 + $0x538] sm:$0x3]
        %v355 = vld [vmem:[%s186 + $0x540] sm:$0xff]
        %v356 = vld [vmem:[%s186 + $0x548] sm:$0x3]
        %v357 = vld [vmem:[%s186 + $0x550] sm:$0xff]
        %v358 = vld [vmem:[%s186 + $0x558] sm:$0x3]
        %v359 = vld [vmem:[%s186 + $0x560] sm:$0xff]
        %v360 = vld [vmem:[%s186 + $0x568] sm:$0x3]
        %v361 = vld [vmem:[%s186 + $0x570] sm:$0xff]
        %v362 = vld [vmem:[%s186 + $0x578] sm:$0x3]
        %v363 = vld [vmem:[%s186 + $0x580] sm:$0xff]
        %v364 = vld [vmem:[%s186 + $0x588] sm:$0x3]
        %v365 = vld [vmem:[%s186 + $0x590] sm:$0xff]
        %v366 = vld [vmem:[%s186 + $0x598] sm:$0x3]
        %v367 = vld [vmem:[%s186 + $0x5a0] sm:$0xff]
        %v368 = vld [vmem:[%s186 + $0x5a8] sm:$0x3]
        %v369 = vld [vmem:[%s186 + $0x5b0] sm:$0xff]
        %v370 = vld [vmem:[%s186 + $0x5b8] sm:$0x3]
        %v371 = vld [vmem:[%s186 + $0x5c0] sm:$0xff]
        %v372 = vld [vmem:[%s186 + $0x5c8] sm:$0x3]
        %v373 = vld [vmem:[%s186 + $0x5d0] sm:$0xff]
        %v374 = vld [vmem:[%s186 + $0x5d8] sm:$0x3]
        %v375 = vld [vmem:[%s186 + $0x5e0] sm:$0xff]
        %v376 = vld [vmem:[%s186 + $0x5e8] sm:$0x3]
        %v377 = vld [vmem:[%s186 + $0x5f0] sm:$0xff]
        %v378 = vld [vmem:[%s186 + $0x5f8] sm:$0x3]
        %v379 = vld [vmem:[%s186 + $0x600] sm:$0xff]
        %v380 = vld [vmem:[%s186 + $0x608] sm:$0x3]
        %v381 = vld [vmem:[%s186 + $0x610] sm:$0xff]
        %v382 = vld [vmem:[%s186 + $0x618] sm:$0x3]
        %v383 = vld [vmem:[%s186 + $0x620] sm:$0xff]
        %v384 = vld [vmem:[%s186 + $0x628] sm:$0x3]
        %v385 = vld [vmem:[%s186 + $0x630] sm:$0xff]
        %v386 = vld [vmem:[%s186 + $0x638] sm:$0x3]
        %vm515 = vcmask 1046528
        %v516 = vrot.slane %v187, 1
        %v517 = vrot.slane %v188, 1
        %v518 = vsel %vm515, %v516, %v517
        %v519 = vrot.slane %v189, 1
        %v520 = vrot.slane %v190, 1
        %v521 = vsel %vm515, %v519, %v520
        %v522 = vrot.slane %v191, 1
        %v523 = vrot.slane %v192, 1
        %v524 = vsel %vm515, %v522, %v523
        %v525 = vrot.slane %v193, 1
        %v526 = vrot.slane %v194, 1
        %v527 = vsel %vm515, %v525, %v526
        %v528 = vrot.slane %v195, 1
        %v529 = vrot.slane %v196, 1
        %v530 = vsel %vm515, %v528, %v529
        %v531 = vrot.slane %v197, 1
        %v532 = vrot.slane %v198, 1
        %v533 = vsel %vm515, %v531, %v532
        %v534 = vrot.slane %v199, 1
        %v535 = vrot.slane %v200, 1
        %v536 = vsel %vm515, %v534, %v535
        %v537 = vrot.slane %v201, 1
        %v538 = vrot.slane %v202, 1
        %v539 = vsel %vm515, %v537, %v538
        %v540 = vrot.slane %v207, 1
        %v541 = vrot.slane %v208, 1
        %v542 = vsel %vm515, %v540, %v541
        %v543 = vrot.slane %v209, 1
        %v544 = vrot.slane %v210, 1
        %v545 = vsel %vm515, %v543, %v544
        %v546 = vrot.slane %v211, 1
        %v547 = vrot.slane %v212, 1
        %v548 = vsel %vm515, %v546, %v547
        %v549 = vrot.slane %v213, 1
        %v550 = vrot.slane %v214, 1
        %v551 = vsel %vm515, %v549, %v550
        %v552 = vrot.slane %v215, 1
        %v553 = vrot.slane %v216, 1
        %v554 = vsel %vm515, %v552, %v553
        %v555 = vrot.slane %v217, 1
        %v556 = vrot.slane %v218, 1
        %v557 = vsel %vm515, %v555, %v556
        %v558 = vrot.slane %v219, 1
        %v559 = vrot.slane %v220, 1
        %v560 = vsel %vm515, %v558, %v559
        %v561 = vrot.slane %v221, 1
        %v562 = vrot.slane %v222, 1
        %v563 = vsel %vm515, %v561, %v562
        %v564 = vrot.slane %v227, 1
        %v565 = vrot.slane %v228, 1
        %v566 = vsel %vm515, %v564, %v565
        %v567 = vrot.slane %v229, 1
        %v568 = vrot.slane %v230, 1
        %v569 = vsel %vm515, %v567, %v568
        %v570 = vrot.slane %v231, 1
        %v571 = vrot.slane %v232, 1
        %v572 = vsel %vm515, %v570, %v571
        %v573 = vrot.slane %v233, 1
        %v574 = vrot.slane %v234, 1
        %v575 = vsel %vm515, %v573, %v574
        %v576 = vrot.slane %v235, 1
        %v577 = vrot.slane %v236, 1
        %v578 = vsel %vm515, %v576, %v577
        %v579 = vrot.slane %v237, 1
        %v580 = vrot.slane %v238, 1
        %v581 = vsel %vm515, %v579, %v580
        %v582 = vrot.slane %v239, 1
        %v583 = vrot.slane %v240, 1
        %v584 = vsel %vm515, %v582, %v583
        %v585 = vrot.slane %v241, 1
        %v586 = vrot.slane %v242, 1
        %v587 = vsel %vm515, %v585, %v586
        %v588 = vrot.slane %v247, 1
        %v589 = vrot.slane %v248, 1
        %v590 = vsel %vm515, %v588, %v589
        %v591 = vrot.slane %v249, 1
        %v592 = vrot.slane %v250, 1
        %v593 = vsel %vm515, %v591, %v592
        %v594 = vrot.slane %v251, 1
        %v595 = vrot.slane %v252, 1
        %v596 = vsel %vm515, %v594, %v595
        %v597 = vrot.slane %v253, 1
        %v598 = vrot.slane %v254, 1
        %v599 = vsel %vm515, %v597, %v598
        %v600 = vrot.slane %v255, 1
        %v601 = vrot.slane %v256, 1
        %v602 = vsel %vm515, %v600, %v601
        %v603 = vrot.slane %v257, 1
        %v604 = vrot.slane %v258, 1
        %v605 = vsel %vm515, %v603, %v604
        %v606 = vrot.slane %v259, 1
        %v607 = vrot.slane %v260, 1
        %v608 = vsel %vm515, %v606, %v607
        %v609 = vrot.slane %v261, 1
        %v610 = vrot.slane %v262, 1
        %v611 = vsel %vm515, %v609, %v610
        %v612 = vrot.slane %v267, 1
        %v613 = vrot.slane %v268, 1
        %v614 = vsel %vm515, %v612, %v613
        %v615 = vrot.slane %v269, 1
        %v616 = vrot.slane %v270, 1
        %v617 = vsel %vm515, %v615, %v616
        %v618 = vrot.slane %v271, 1
        %v619 = vrot.slane %v272, 1
        %v620 = vsel %vm515, %v618, %v619
        %v621 = vrot.slane %v273, 1
        %v622 = vrot.slane %v274, 1
        %v623 = vsel %vm515, %v621, %v622
        %v624 = vrot.slane %v275, 1
        %v625 = vrot.slane %v276, 1
        %v626 = vsel %vm515, %v624, %v625
        %v627 = vrot.slane %v277, 1
        %v628 = vrot.slane %v278, 1
        %v629 = vsel %vm515, %v627, %v628
        %v630 = vrot.slane %v279, 1
        %v631 = vrot.slane %v280, 1
        %v632 = vsel %vm515, %v630, %v631
        %v633 = vrot.slane %v281, 1
        %v634 = vrot.slane %v282, 1
        %v635 = vsel %vm515, %v633, %v634
        %v636 = vrot.slane %v287, 1
        %v637 = vrot.slane %v288, 1
        %v638 = vsel %vm515, %v636, %v637
        %v639 = vrot.slane %v289, 1
        %v640 = vrot.slane %v290, 1
        %v641 = vsel %vm515, %v639, %v640
        %v642 = vrot.slane %v291, 1
        %v643 = vrot.slane %v292, 1
        %v644 = vsel %vm515, %v642, %v643
        %v645 = vrot.slane %v293, 1
        %v646 = vrot.slane %v294, 1
        %v647 = vsel %vm515, %v645, %v646
        %v648 = vrot.slane %v295, 1
        %v649 = vrot.slane %v296, 1
        %v650 = vsel %vm515, %v648, %v649
        %v651 = vrot.slane %v297, 1
        %v652 = vrot.slane %v298, 1
        %v653 = vsel %vm515, %v651, %v652
        %v654 = vrot.slane %v299, 1
        %v655 = vrot.slane %v300, 1
        %v656 = vsel %vm515, %v654, %v655
        %v657 = vrot.slane %v301, 1
        %v658 = vrot.slane %v302, 1
        %v659 = vsel %vm515, %v657, %v658
        %v660 = vrot.slane %v307, 1
        %v661 = vrot.slane %v308, 1
        %v662 = vsel %vm515, %v660, %v661
        %v663 = vrot.slane %v309, 1
        %v664 = vrot.slane %v310, 1
        %v665 = vsel %vm515, %v663, %v664
        %v666 = vrot.slane %v311, 1
        %v667 = vrot.slane %v312, 1
        %v668 = vsel %vm515, %v666, %v667
        %v669 = vrot.slane %v313, 1
        %v670 = vrot.slane %v314, 1
        %v671 = vsel %vm515, %v669, %v670
        %v672 = vrot.slane %v315, 1
        %v673 = vrot.slane %v316, 1
        %v674 = vsel %vm515, %v672, %v673
        %v675 = vrot.slane %v317, 1
        %v676 = vrot.slane %v318, 1
        %v677 = vsel %vm515, %v675, %v676
        %v678 = vrot.slane %v319, 1
        %v679 = vrot.slane %v320, 1
        %v680 = vsel %vm515, %v678, %v679
        %v681 = vrot.slane %v321, 1
        %v682 = vrot.slane %v322, 1
        %v683 = vsel %vm515, %v681, %v682
        %v684 = vrot.slane %v327, 1
        %v685 = vrot.slane %v328, 1
        %v686 = vsel %vm515, %v684, %v685
        %v687 = vrot.slane %v329, 1
        %v688 = vrot.slane %v330, 1
        %v689 = vsel %vm515, %v687, %v688
        %v690 = vrot.slane %v331, 1
        %v691 = vrot.slane %v332, 1
        %v692 = vsel %vm515, %v690, %v691
        %v693 = vrot.slane %v333, 1
        %v694 = vrot.slane %v334, 1
        %v695 = vsel %vm515, %v693, %v694
        %v696 = vrot.slane %v335, 1
        %v697 = vrot.slane %v336, 1
        %v698 = vsel %vm515, %v696, %v697
        %v699 = vrot.slane %v337, 1
        %v700 = vrot.slane %v338, 1
        %v701 = vsel %vm515, %v699, %v700
        %v702 = vrot.slane %v339, 1
        %v703 = vrot.slane %v340, 1
        %v704 = vsel %vm515, %v702, %v703
        %v705 = vrot.slane %v341, 1
        %v706 = vrot.slane %v342, 1
        %v707 = vsel %vm515, %v705, %v706
        %vm708 = vcmask 1045504
        %v709 = vrot.slane %v187, 2
        %v710 = vrot.slane %v188, 2
        %v711 = vsel %vm708, %v709, %v710
        %v712 = vrot.slane %v189, 2
        %v713 = vrot.slane %v190, 2
        %v714 = vsel %vm708, %v712, %v713
        %v715 = vrot.slane %v191, 2
        %v716 = vrot.slane %v192, 2
        %v717 = vsel %vm708, %v715, %v716
        %v718 = vrot.slane %v193, 2
        %v719 = vrot.slane %v194, 2
        %v720 = vsel %vm708, %v718, %v719
        %v721 = vrot.slane %v195, 2
        %v722 = vrot.slane %v196, 2
        %v723 = vsel %vm708, %v721, %v722
        %v724 = vrot.slane %v197, 2
        %v725 = vrot.slane %v198, 2
        %v726 = vsel %vm708, %v724, %v725
        %v727 = vrot.slane %v199, 2
        %v728 = vrot.slane %v200, 2
        %v729 = vsel %vm708, %v727, %v728
        %v730 = vrot.slane %v201, 2
        %v731 = vrot.slane %v202, 2
        %v732 = vsel %vm708, %v730, %v731
        %v733 = vrot.slane %v207, 2
        %v734 = vrot.slane %v208, 2
        %v735 = vsel %vm708, %v733, %v734
        %v736 = vrot.slane %v209, 2
        %v737 = vrot.slane %v210, 2
        %v738 = vsel %vm708, %v736, %v737
        %v739 = vrot.slane %v211, 2
        %v740 = vrot.slane %v212, 2
        %v741 = vsel %vm708, %v739, %v740
        %v742 = vrot.slane %v213, 2
        %v743 = vrot.slane %v214, 2
        %v744 = vsel %vm708, %v742, %v743
        %v745 = vrot.slane %v215, 2
        %v746 = vrot.slane %v216, 2
        %v747 = vsel %vm708, %v745, %v746
        %v748 = vrot.slane %v217, 2
        %v749 = vrot.slane %v218, 2
        %v750 = vsel %vm708, %v748, %v749
        %v751 = vrot.slane %v219, 2
        %v752 = vrot.slane %v220, 2
        %v753 = vsel %vm708, %v751, %v752
        %v754 = vrot.slane %v221, 2
        %v755 = vrot.slane %v222, 2
        %v756 = vsel %vm708, %v754, %v755
        %v757 = vrot.slane %v227, 2
        %v758 = vrot.slane %v228, 2
        %v759 = vsel %vm708, %v757, %v758
        %v760 = vrot.slane %v229, 2
        %v761 = vrot.slane %v230, 2
        %v762 = vsel %vm708, %v760, %v761
        %v763 = vrot.slane %v231, 2
        %v764 = vrot.slane %v232, 2
        %v765 = vsel %vm708, %v763, %v764
        %v766 = vrot.slane %v233, 2
        %v767 = vrot.slane %v234, 2
        %v768 = vsel %vm708, %v766, %v767
        %v769 = vrot.slane %v235, 2
        %v770 = vrot.slane %v236, 2
        %v771 = vsel %vm708, %v769, %v770
        %v772 = vrot.slane %v237, 2
        %v773 = vrot.slane %v238, 2
        %v774 = vsel %vm708, %v772, %v773
        %v775 = vrot.slane %v239, 2
        %v776 = vrot.slane %v240, 2
        %v777 = vsel %vm708, %v775, %v776
        %v778 = vrot.slane %v241, 2
        %v779 = vrot.slane %v242, 2
        %v780 = vsel %vm708, %v778, %v779
        %v781 = vrot.slane %v247, 2
        %v782 = vrot.slane %v248, 2
        %v783 = vsel %vm708, %v781, %v782
        %v784 = vrot.slane %v249, 2
        %v785 = vrot.slane %v250, 2
        %v786 = vsel %vm708, %v784, %v785
        %v787 = vrot.slane %v251, 2
        %v788 = vrot.slane %v252, 2
        %v789 = vsel %vm708, %v787, %v788
        %v790 = vrot.slane %v253, 2
        %v791 = vrot.slane %v254, 2
        %v792 = vsel %vm708, %v790, %v791
        %v793 = vrot.slane %v255, 2
        %v794 = vrot.slane %v256, 2
        %v795 = vsel %vm708, %v793, %v794
        %v796 = vrot.slane %v257, 2
        %v797 = vrot.slane %v258, 2
        %v798 = vsel %vm708, %v796, %v797
        %v799 = vrot.slane %v259, 2
        %v800 = vrot.slane %v260, 2
        %v801 = vsel %vm708, %v799, %v800
        %v802 = vrot.slane %v261, 2
        %v803 = vrot.slane %v262, 2
        %v804 = vsel %vm708, %v802, %v803
        %v805 = vrot.slane %v267, 2
        %v806 = vrot.slane %v268, 2
        %v807 = vsel %vm708, %v805, %v806
        %v808 = vrot.slane %v269, 2
        %v809 = vrot.slane %v270, 2
        %v810 = vsel %vm708, %v808, %v809
        %v811 = vrot.slane %v271, 2
        %v812 = vrot.slane %v272, 2
        %v813 = vsel %vm708, %v811, %v812
        %v814 = vrot.slane %v273, 2
        %v815 = vrot.slane %v274, 2
        %v816 = vsel %vm708, %v814, %v815
        %v817 = vrot.slane %v275, 2
        %v818 = vrot.slane %v276, 2
        %v819 = vsel %vm708, %v817, %v818
        %v820 = vrot.slane %v277, 2
        %v821 = vrot.slane %v278, 2
        %v822 = vsel %vm708, %v820, %v821
        %v823 = vrot.slane %v279, 2
        %v824 = vrot.slane %v280, 2
        %v825 = vsel %vm708, %v823, %v824
        %v826 = vrot.slane %v281, 2
        %v827 = vrot.slane %v282, 2
        %v828 = vsel %vm708, %v826, %v827
        %v829 = vrot.slane %v287, 2
        %v830 = vrot.slane %v288, 2
        %v831 = vsel %vm708, %v829, %v830
        %v832 = vrot.slane %v289, 2
        %v833 = vrot.slane %v290, 2
        %v834 = vsel %vm708, %v832, %v833
        %v835 = vrot.slane %v291, 2
        %v836 = vrot.slane %v292, 2
        %v837 = vsel %vm708, %v835, %v836
        %v838 = vrot.slane %v293, 2
        %v839 = vrot.slane %v294, 2
        %v840 = vsel %vm708, %v838, %v839
        %v841 = vrot.slane %v295, 2
        %v842 = vrot.slane %v296, 2
        %v843 = vsel %vm708, %v841, %v842
        %v844 = vrot.slane %v297, 2
        %v845 = vrot.slane %v298, 2
        %v846 = vsel %vm708, %v844, %v845
        %v847 = vrot.slane %v299, 2
        %v848 = vrot.slane %v300, 2
        %v849 = vsel %vm708, %v847, %v848
        %v850 = vrot.slane %v301, 2
        %v851 = vrot.slane %v302, 2
        %v852 = vsel %vm708, %v850, %v851
        %v853 = vrot.slane %v307, 2
        %v854 = vrot.slane %v308, 2
        %v855 = vsel %vm708, %v853, %v854
        %v856 = vrot.slane %v309, 2
        %v857 = vrot.slane %v310, 2
        %v858 = vsel %vm708, %v856, %v857
        %v859 = vrot.slane %v311, 2
        %v860 = vrot.slane %v312, 2
        %v861 = vsel %vm708, %v859, %v860
        %v862 = vrot.slane %v313, 2
        %v863 = vrot.slane %v314, 2
        %v864 = vsel %vm708, %v862, %v863
        %v865 = vrot.slane %v315, 2
        %v866 = vrot.slane %v316, 2
        %v867 = vsel %vm708, %v865, %v866
        %v868 = vrot.slane %v317, 2
        %v869 = vrot.slane %v318, 2
        %v870 = vsel %vm708, %v868, %v869
        %v871 = vrot.slane %v319, 2
        %v872 = vrot.slane %v320, 2
        %v873 = vsel %vm708, %v871, %v872
        %v874 = vrot.slane %v321, 2
        %v875 = vrot.slane %v322, 2
        %v876 = vsel %vm708, %v874, %v875
        %v877 = vrot.slane %v327, 2
        %v878 = vrot.slane %v328, 2
        %v879 = vsel %vm708, %v877, %v878
        %v880 = vrot.slane %v329, 2
        %v881 = vrot.slane %v330, 2
        %v882 = vsel %vm708, %v880, %v881
        %v883 = vrot.slane %v331, 2
        %v884 = vrot.slane %v332, 2
        %v885 = vsel %vm708, %v883, %v884
        %v886 = vrot.slane %v333, 2
        %v887 = vrot.slane %v334, 2
        %v888 = vsel %vm708, %v886, %v887
        %v889 = vrot.slane %v335, 2
        %v890 = vrot.slane %v336, 2
        %v891 = vsel %vm708, %v889, %v890
        %v892 = vrot.slane %v337, 2
        %v893 = vrot.slane %v338, 2
        %v894 = vsel %vm708, %v892, %v893
        %v895 = vrot.slane %v339, 2
        %v896 = vrot.slane %v340, 2
        %v897 = vsel %vm708, %v895, %v896
        %v898 = vrot.slane %v341, 2
        %v899 = vrot.slane %v342, 2
        %v900 = vsel %vm708, %v898, %v899
        %v917 = vrot.slane %v203, 1
        %v918 = vrot.slane %v204, 1
        %v919 = vsel %vm515, %v917, %v918
        %v920 = vrot.slane %v223, 1
        %v921 = vrot.slane %v224, 1
        %v922 = vsel %vm515, %v920, %v921
        %v923 = vrot.slane %v243, 1
        %v924 = vrot.slane %v244, 1
        %v925 = vsel %vm515, %v923, %v924
        %v926 = vrot.slane %v263, 1
        %v927 = vrot.slane %v264, 1
        %v928 = vsel %vm515, %v926, %v927
        %v929 = vrot.slane %v283, 1
        %v930 = vrot.slane %v284, 1
        %v931 = vsel %vm515, %v929, %v930
        %v932 = vrot.slane %v303, 1
        %v933 = vrot.slane %v304, 1
        %v934 = vsel %vm515, %v932, %v933
        %v935 = vrot.slane %v323, 1
        %v936 = vrot.slane %v324, 1
        %v937 = vsel %vm515, %v935, %v936
        %v938 = vrot.slane %v343, 1
        %v939 = vrot.slane %v344, 1
        %v940 = vsel %vm515, %v938, %v939
        %v941 = vrot.slane %v203, 2
        %v942 = vrot.slane %v204, 2
        %v943 = vsel %vm708, %v941, %v942
        %v944 = vrot.slane %v223, 2
        %v945 = vrot.slane %v224, 2
        %v946 = vsel %vm708, %v944, %v945
        %v947 = vrot.slane %v243, 2
        %v948 = vrot.slane %v244, 2
        %v949 = vsel %vm708, %v947, %v948
        %v950 = vrot.slane %v263, 2
        %v951 = vrot.slane %v264, 2
        %v952 = vsel %vm708, %v950, %v951
        %v953 = vrot.slane %v283, 2
        %v954 = vrot.slane %v284, 2
        %v955 = vsel %vm708, %v953, %v954
        %v956 = vrot.slane %v303, 2
        %v957 = vrot.slane %v304, 2
        %v958 = vsel %vm708, %v956, %v957
        %v959 = vrot.slane %v323, 2
        %v960 = vrot.slane %v324, 2
        %v961 = vsel %vm708, %v959, %v960
        %v962 = vrot.slane %v343, 2
        %v963 = vrot.slane %v344, 2
        %v964 = vsel %vm708, %v962, %v963
        %v981 = vrot.slane %v205, 1
        %v982 = vrot.slane %v206, 1
        %v983 = vsel %vm515, %v981, %v982
        %v984 = vrot.slane %v225, 1
        %v985 = vrot.slane %v226, 1
        %v986 = vsel %vm515, %v984, %v985
        %v987 = vrot.slane %v245, 1
        %v988 = vrot.slane %v246, 1
        %v989 = vsel %vm515, %v987, %v988
        %v990 = vrot.slane %v265, 1
        %v991 = vrot.slane %v266, 1
        %v992 = vsel %vm515, %v990, %v991
        %v993 = vrot.slane %v285, 1
        %v994 = vrot.slane %v286, 1
        %v995 = vsel %vm515, %v993, %v994
        %v996 = vrot.slane %v305, 1
        %v997 = vrot.slane %v306, 1
        %v998 = vsel %vm515, %v996, %v997
        %v999 = vrot.slane %v325, 1
        %v1000 = vrot.slane %v326, 1
        %v1001 = vsel %vm515, %v999, %v1000
        %v1002 = vrot.slane %v345, 1
        %v1003 = vrot.slane %v346, 1
        %v1004 = vsel %vm515, %v1002, %v1003
        %v1005 = vrot.slane %v205, 2
        %v1006 = vrot.slane %v206, 2
        %v1007 = vsel %vm708, %v1005, %v1006
        %v1008 = vrot.slane %v225, 2
        %v1009 = vrot.slane %v226, 2
        %v1010 = vsel %vm708, %v1008, %v1009
        %v1011 = vrot.slane %v245, 2
        %v1012 = vrot.slane %v246, 2
        %v1013 = vsel %vm708, %v1011, %v1012
        %v1014 = vrot.slane %v265, 2
        %v1015 = vrot.slane %v266, 2
        %v1016 = vsel %vm708, %v1014, %v1015
        %v1017 = vrot.slane %v285, 2
        %v1018 = vrot.slane %v286, 2
        %v1019 = vsel %vm708, %v1017, %v1018
        %v1020 = vrot.slane %v305, 2
        %v1021 = vrot.slane %v306, 2
        %v1022 = vsel %vm708, %v1020, %v1021
        %v1023 = vrot.slane %v325, 2
        %v1024 = vrot.slane %v326, 2
        %v1025 = vsel %vm708, %v1023, %v1024
        %v1026 = vrot.slane %v345, 2
        %v1027 = vrot.slane %v346, 2
        %v1028 = vsel %vm708, %v1026, %v1027
        %v1045 = vrot.slane %v347, 1
        %v1046 = vrot.slane %v348, 1
        %v1047 = vsel %vm515, %v1045, %v1046
        %v1048 = vrot.slane %v349, 1
        %v1049 = vrot.slane %v350, 1
        %v1050 = vsel %vm515, %v1048, %v1049
        %v1051 = vrot.slane %v351, 1
        %v1052 = vrot.slane %v352, 1
        %v1053 = vsel %vm515, %v1051, %v1052
        %v1054 = vrot.slane %v353, 1
        %v1055 = vrot.slane %v354, 1
        %v1056 = vsel %vm515, %v1054, %v1055
        %v1057 = vrot.slane %v355, 1
        %v1058 = vrot.slane %v356, 1
        %v1059 = vsel %vm515, %v1057, %v1058
        %v1060 = vrot.slane %v357, 1
        %v1061 = vrot.slane %v358, 1
        %v1062 = vsel %vm515, %v1060, %v1061
        %v1063 = vrot.slane %v359, 1
        %v1064 = vrot.slane %v360, 1
        %v1065 = vsel %vm515, %v1063, %v1064
        %v1066 = vrot.slane %v361, 1
        %v1067 = vrot.slane %v362, 1
        %v1068 = vsel %vm515, %v1066, %v1067
        %v1069 = vrot.slane %v347, 2
        %v1070 = vrot.slane %v348, 2
        %v1071 = vsel %vm708, %v1069, %v1070
        %v1072 = vrot.slane %v349, 2
        %v1073 = vrot.slane %v350, 2
        %v1074 = vsel %vm708, %v1072, %v1073
        %v1075 = vrot.slane %v351, 2
        %v1076 = vrot.slane %v352, 2
        %v1077 = vsel %vm708, %v1075, %v1076
        %v1078 = vrot.slane %v353, 2
        %v1079 = vrot.slane %v354, 2
        %v1080 = vsel %vm708, %v1078, %v1079
        %v1081 = vrot.slane %v355, 2
        %v1082 = vrot.slane %v356, 2
        %v1083 = vsel %vm708, %v1081, %v1082
        %v1084 = vrot.slane %v357, 2
        %v1085 = vrot.slane %v358, 2
        %v1086 = vsel %vm708, %v1084, %v1085
        %v1087 = vrot.slane %v359, 2
        %v1088 = vrot.slane %v360, 2
        %v1089 = vsel %vm708, %v1087, %v1088
        %v1090 = vrot.slane %v361, 2
        %v1091 = vrot.slane %v362, 2
        %v1092 = vsel %vm708, %v1090, %v1091
        %v1095 = vrot.slane %v363, 1
        %v1096 = vrot.slane %v364, 1
        %v1097 = vsel %vm515, %v1095, %v1096
        %v1098 = vrot.slane %v363, 2
        %v1099 = vrot.slane %v364, 2
        %v1100 = vsel %vm708, %v1098, %v1099
        %v1103 = vrot.slane %v365, 1
        %v1104 = vrot.slane %v366, 1
        %v1105 = vsel %vm515, %v1103, %v1104
        %v1170 = vrot.slane %v365, 2
        %v1171 = vrot.slane %v366, 2
        %v1172 = vsel %vm708, %v1170, %v1171
        %v1189 = vrot.slane %v367, 1
        %v1190 = vrot.slane %v368, 1
        %v1191 = vsel %vm515, %v1189, %v1190
        %v1192 = vrot.slane %v369, 1
        %v1193 = vrot.slane %v370, 1
        %v1194 = vsel %vm515, %v1192, %v1193
        %v1195 = vrot.slane %v371, 1
        %v1196 = vrot.slane %v372, 1
        %v1197 = vsel %vm515, %v1195, %v1196
        %v1198 = vrot.slane %v373, 1
        %v1199 = vrot.slane %v374, 1
        %v1200 = vsel %vm515, %v1198, %v1199
        %v1201 = vrot.slane %v375, 1
        %v1202 = vrot.slane %v376, 1
        %v1203 = vsel %vm515, %v1201, %v1202
        %v1204 = vrot.slane %v377, 1
        %v1205 = vrot.slane %v378, 1
        %v1206 = vsel %vm515, %v1204, %v1205
        %v1207 = vrot.slane %v379, 1
        %v1208 = vrot.slane %v380, 1
        %v1209 = vsel %vm515, %v1207, %v1208
        %v1210 = vrot.slane %v381, 1
        %v1211 = vrot.slane %v382, 1
        %v1212 = vsel %vm515, %v1210, %v1211
        %v1213 = vrot.slane %v367, 2
        %v1214 = vrot.slane %v368, 2
        %v1215 = vsel %vm708, %v1213, %v1214
        %v1216 = vrot.slane %v369, 2
        %v1217 = vrot.slane %v370, 2
        %v1218 = vsel %vm708, %v1216, %v1217
        %v1219 = vrot.slane %v371, 2
        %v1220 = vrot.slane %v372, 2
        %v1221 = vsel %vm708, %v1219, %v1220
        %v1222 = vrot.slane %v373, 2
        %v1223 = vrot.slane %v374, 2
        %v1224 = vsel %vm708, %v1222, %v1223
        %v1225 = vrot.slane %v375, 2
        %v1226 = vrot.slane %v376, 2
        %v1227 = vsel %vm708, %v1225, %v1226
        %v1228 = vrot.slane %v377, 2
        %v1229 = vrot.slane %v378, 2
        %v1230 = vsel %vm708, %v1228, %v1229
        %v1231 = vrot.slane %v379, 2
        %v1232 = vrot.slane %v380, 2
        %v1233 = vsel %vm708, %v1231, %v1232
        %v1234 = vrot.slane %v381, 2
        %v1235 = vrot.slane %v382, 2
        %v1236 = vsel %vm708, %v1234, %v1235
        %v1239 = vrot.slane %v383, 1
        %v1240 = vrot.slane %v384, 1
        %v1241 = vsel %vm515, %v1239, %v1240
        %v1242 = vrot.slane %v383, 2
        %v1243 = vrot.slane %v384, 2
        %v1244 = vsel %vm708, %v1242, %v1243
        %v1247 = vrot.slane %v385, 1
        %v1248 = vrot.slane %v386, 1
        %v1249 = vsel %vm515, %v1247, %v1248
        %v1250 = vrot.slane %v385, 2
        %v1251 = vrot.slane %v386, 2
        %v1252 = vsel %vm708, %v1250, %v1251
        %1253 = vrot.lane.b32.xlu0 %v518, 4
        %v1254 = vpop.permute.xlu0 %1253
        %1255 = vrot.lane.b32.xlu0 %v521, 4
        %v1256 = vpop.permute.xlu0 %1255
        %1257 = vrot.lane.b32.xlu0 %v524, 4
        %v1258 = vpop.permute.xlu0 %1257
        %1259 = vrot.lane.b32.xlu0 %v527, 4
        %v1260 = vpop.permute.xlu0 %1259
        %1261 = vrot.lane.b32.xlu0 %v530, 4
        %v1262 = vpop.permute.xlu0 %1261
        %1263 = vrot.lane.b32.xlu0 %v533, 4
        %v1264 = vpop.permute.xlu0 %1263
        %1265 = vrot.lane.b32.xlu0 %v536, 4
        %v1266 = vpop.permute.xlu0 %1265
        %1267 = vrot.lane.b32.xlu0 %v539, 4
        %v1268 = vpop.permute.xlu0 %1267
        %1269 = vrot.lane.b32.xlu0 %v542, 4
        %v1270 = vpop.permute.xlu0 %1269
        %1271 = vrot.lane.b32.xlu0 %v545, 4
        %v1272 = vpop.permute.xlu0 %1271
        %1273 = vrot.lane.b32.xlu0 %v548, 4
        %v1274 = vpop.permute.xlu0 %1273
        %1275 = vrot.lane.b32.xlu0 %v551, 4
        %v1276 = vpop.permute.xlu0 %1275
        %1277 = vrot.lane.b32.xlu0 %v554, 4
        %v1278 = vpop.permute.xlu0 %1277
        %1279 = vrot.lane.b32.xlu0 %v557, 4
        %v1280 = vpop.permute.xlu0 %1279
        %1281 = vrot.lane.b32.xlu0 %v560, 4
        %v1282 = vpop.permute.xlu0 %1281
        %1283 = vrot.lane.b32.xlu0 %v563, 4
        %v1284 = vpop.permute.xlu0 %1283
        %1285 = vrot.lane.b32.xlu0 %v566, 4
        %v1286 = vpop.permute.xlu0 %1285
        %1287 = vrot.lane.b32.xlu0 %v569, 4
        %v1288 = vpop.permute.xlu0 %1287
        %1289 = vrot.lane.b32.xlu0 %v572, 4
        %v1290 = vpop.permute.xlu0 %1289
        %1291 = vrot.lane.b32.xlu0 %v575, 4
        %v1292 = vpop.permute.xlu0 %1291
        %1293 = vrot.lane.b32.xlu0 %v578, 4
        %v1294 = vpop.permute.xlu0 %1293
        %1295 = vrot.lane.b32.xlu0 %v581, 4
        %v1296 = vpop.permute.xlu0 %1295
        %1297 = vrot.lane.b32.xlu0 %v584, 4
        %v1298 = vpop.permute.xlu0 %1297
        %1299 = vrot.lane.b32.xlu0 %v587, 4
        %v1300 = vpop.permute.xlu0 %1299
        %1301 = vrot.lane.b32.xlu0 %v590, 4
        %v1302 = vpop.permute.xlu0 %1301
        %1303 = vrot.lane.b32.xlu0 %v593, 4
        %v1304 = vpop.permute.xlu0 %1303
        %1305 = vrot.lane.b32.xlu0 %v596, 4
        %v1306 = vpop.permute.xlu0 %1305
        %1307 = vrot.lane.b32.xlu0 %v599, 4
        %v1308 = vpop.permute.xlu0 %1307
        %1309 = vrot.lane.b32.xlu0 %v602, 4
        %v1310 = vpop.permute.xlu0 %1309
        %1311 = vrot.lane.b32.xlu0 %v605, 4
        %v1312 = vpop.permute.xlu0 %1311
        %1313 = vrot.lane.b32.xlu0 %v608, 4
        %v1314 = vpop.permute.xlu0 %1313
        %1315 = vrot.lane.b32.xlu0 %v611, 4
        %v1316 = vpop.permute.xlu0 %1315
        %1317 = vrot.lane.b32.xlu0 %v614, 4
        %v1318 = vpop.permute.xlu0 %1317
        %1319 = vrot.lane.b32.xlu0 %v617, 4
        %v1320 = vpop.permute.xlu0 %1319
        %1321 = vrot.lane.b32.xlu0 %v620, 4
        %v1322 = vpop.permute.xlu0 %1321
        %1323 = vrot.lane.b32.xlu0 %v623, 4
        %v1324 = vpop.permute.xlu0 %1323
        %1325 = vrot.lane.b32.xlu0 %v626, 4
        %v1326 = vpop.permute.xlu0 %1325
        %1327 = vrot.lane.b32.xlu0 %v629, 4
        %v1328 = vpop.permute.xlu0 %1327
        %1329 = vrot.lane.b32.xlu0 %v632, 4
        %v1330 = vpop.permute.xlu0 %1329
        %1331 = vrot.lane.b32.xlu0 %v635, 4
        %v1332 = vpop.permute.xlu0 %1331
        %1333 = vrot.lane.b32.xlu0 %v638, 4
        %v1334 = vpop.permute.xlu0 %1333
        %1335 = vrot.lane.b32.xlu0 %v641, 4
        %v1336 = vpop.permute.xlu0 %1335
        %1337 = vrot.lane.b32.xlu0 %v644, 4
        %v1338 = vpop.permute.xlu0 %1337
        %1339 = vrot.lane.b32.xlu0 %v647, 4
        %v1340 = vpop.permute.xlu0 %1339
        %1341 = vrot.lane.b32.xlu0 %v650, 4
        %v1342 = vpop.permute.xlu0 %1341
        %1343 = vrot.lane.b32.xlu0 %v653, 4
        %v1344 = vpop.permute.xlu0 %1343
        %1345 = vrot.lane.b32.xlu0 %v656, 4
        %v1346 = vpop.permute.xlu0 %1345
        %1347 = vrot.lane.b32.xlu0 %v659, 4
        %v1348 = vpop.permute.xlu0 %1347
        %1349 = vrot.lane.b32.xlu0 %v662, 4
        %v1350 = vpop.permute.xlu0 %1349
        %1351 = vrot.lane.b32.xlu0 %v665, 4
        %v1352 = vpop.permute.xlu0 %1351
        %1353 = vrot.lane.b32.xlu0 %v668, 4
        %v1354 = vpop.permute.xlu0 %1353
        %1355 = vrot.lane.b32.xlu0 %v671, 4
        %v1356 = vpop.permute.xlu0 %1355
        %1357 = vrot.lane.b32.xlu0 %v674, 4
        %v1358 = vpop.permute.xlu0 %1357
        %1359 = vrot.lane.b32.xlu0 %v677, 4
        %v1360 = vpop.permute.xlu0 %1359
        %1361 = vrot.lane.b32.xlu0 %v680, 4
        %v1362 = vpop.permute.xlu0 %1361
        %1363 = vrot.lane.b32.xlu0 %v683, 4
        %v1364 = vpop.permute.xlu0 %1363
        %1365 = vrot.lane.b32.xlu0 %v686, 4
        %v1366 = vpop.permute.xlu0 %1365
        %1367 = vrot.lane.b32.xlu0 %v689, 4
        %v1368 = vpop.permute.xlu0 %1367
        %1369 = vrot.lane.b32.xlu0 %v692, 4
        %v1370 = vpop.permute.xlu0 %1369
        %1371 = vrot.lane.b32.xlu0 %v695, 4
        %v1372 = vpop.permute.xlu0 %1371
        %1373 = vrot.lane.b32.xlu0 %v698, 4
        %v1374 = vpop.permute.xlu0 %1373
        %1375 = vrot.lane.b32.xlu0 %v701, 4
        %v1376 = vpop.permute.xlu0 %1375
        %1377 = vrot.lane.b32.xlu0 %v704, 4
        %v1378 = vpop.permute.xlu0 %1377
        %1379 = vrot.lane.b32.xlu0 %v707, 4
        %v1380 = vpop.permute.xlu0 %1379
        %1445 = vrot.lane.b32.xlu0 %v711, 8
        %v1446 = vpop.permute.xlu0 %1445
        %1447 = vrot.lane.b32.xlu0 %v714, 8
        %v1448 = vpop.permute.xlu0 %1447
        %1449 = vrot.lane.b32.xlu0 %v717, 8
        %v1450 = vpop.permute.xlu0 %1449
        %1451 = vrot.lane.b32.xlu0 %v720, 8
        %v1452 = vpop.permute.xlu0 %1451
        %1453 = vrot.lane.b32.xlu0 %v723, 8
        %v1454 = vpop.permute.xlu0 %1453
        %1455 = vrot.lane.b32.xlu0 %v726, 8
        %v1456 = vpop.permute.xlu0 %1455
        %1457 = vrot.lane.b32.xlu0 %v729, 8
        %v1458 = vpop.permute.xlu0 %1457
        %1459 = vrot.lane.b32.xlu0 %v732, 8
        %v1460 = vpop.permute.xlu0 %1459
        %1461 = vrot.lane.b32.xlu0 %v735, 8
        %v1462 = vpop.permute.xlu0 %1461
        %1463 = vrot.lane.b32.xlu0 %v738, 8
        %v1464 = vpop.permute.xlu0 %1463
        %1465 = vrot.lane.b32.xlu0 %v741, 8
        %v1466 = vpop.permute.xlu0 %1465
        %1467 = vrot.lane.b32.xlu0 %v744, 8
        %v1468 = vpop.permute.xlu0 %1467
        %1469 = vrot.lane.b32.xlu0 %v747, 8
        %v1470 = vpop.permute.xlu0 %1469
        %1471 = vrot.lane.b32.xlu0 %v750, 8
        %v1472 = vpop.permute.xlu0 %1471
        %1473 = vrot.lane.b32.xlu0 %v753, 8
        %v1474 = vpop.permute.xlu0 %1473
        %1475 = vrot.lane.b32.xlu0 %v756, 8
        %v1476 = vpop.permute.xlu0 %1475
        %1477 = vrot.lane.b32.xlu0 %v759, 8
        %v1478 = vpop.permute.xlu0 %1477
        %1479 = vrot.lane.b32.xlu0 %v762, 8
        %v1480 = vpop.permute.xlu0 %1479
        %1481 = vrot.lane.b32.xlu0 %v765, 8
        %v1482 = vpop.permute.xlu0 %1481
        %1483 = vrot.lane.b32.xlu0 %v768, 8
        %v1484 = vpop.permute.xlu0 %1483
        %1485 = vrot.lane.b32.xlu0 %v771, 8
        %v1486 = vpop.permute.xlu0 %1485
        %1487 = vrot.lane.b32.xlu0 %v774, 8
        %v1488 = vpop.permute.xlu0 %1487
        %1489 = vrot.lane.b32.xlu0 %v777, 8
        %v1490 = vpop.permute.xlu0 %1489
        %1491 = vrot.lane.b32.xlu0 %v780, 8
        %v1492 = vpop.permute.xlu0 %1491
        %1493 = vrot.lane.b32.xlu0 %v783, 8
        %v1494 = vpop.permute.xlu0 %1493
        %1495 = vrot.lane.b32.xlu0 %v786, 8
        %v1496 = vpop.permute.xlu0 %1495
        %1497 = vrot.lane.b32.xlu0 %v789, 8
        %v1498 = vpop.permute.xlu0 %1497
        %1499 = vrot.lane.b32.xlu0 %v792, 8
        %v1500 = vpop.permute.xlu0 %1499
        %1501 = vrot.lane.b32.xlu0 %v795, 8
        %v1502 = vpop.permute.xlu0 %1501
        %1503 = vrot.lane.b32.xlu0 %v798, 8
        %v1504 = vpop.permute.xlu0 %1503
        %1505 = vrot.lane.b32.xlu0 %v801, 8
        %v1506 = vpop.permute.xlu0 %1505
        %1507 = vrot.lane.b32.xlu0 %v804, 8
        %v1508 = vpop.permute.xlu0 %1507
        %1509 = vrot.lane.b32.xlu0 %v807, 8
        %v1510 = vpop.permute.xlu0 %1509
        %1511 = vrot.lane.b32.xlu0 %v810, 8
        %v1512 = vpop.permute.xlu0 %1511
        %1513 = vrot.lane.b32.xlu0 %v813, 8
        %v1514 = vpop.permute.xlu0 %1513
        %1515 = vrot.lane.b32.xlu0 %v816, 8
        %v1516 = vpop.permute.xlu0 %1515
        %1517 = vrot.lane.b32.xlu0 %v819, 8
        %v1518 = vpop.permute.xlu0 %1517
        %1519 = vrot.lane.b32.xlu0 %v822, 8
        %v1520 = vpop.permute.xlu0 %1519
        %1521 = vrot.lane.b32.xlu0 %v825, 8
        %v1522 = vpop.permute.xlu0 %1521
        %1523 = vrot.lane.b32.xlu0 %v828, 8
        %v1524 = vpop.permute.xlu0 %1523
        %1525 = vrot.lane.b32.xlu0 %v831, 8
        %v1526 = vpop.permute.xlu0 %1525
        %1527 = vrot.lane.b32.xlu0 %v834, 8
        %v1528 = vpop.permute.xlu0 %1527
        %1529 = vrot.lane.b32.xlu0 %v837, 8
        %v1530 = vpop.permute.xlu0 %1529
        %1531 = vrot.lane.b32.xlu0 %v840, 8
        %v1532 = vpop.permute.xlu0 %1531
        %1533 = vrot.lane.b32.xlu0 %v843, 8
        %v1534 = vpop.permute.xlu0 %1533
        %1535 = vrot.lane.b32.xlu0 %v846, 8
        %v1536 = vpop.permute.xlu0 %1535
        %1537 = vrot.lane.b32.xlu0 %v849, 8
        %v1538 = vpop.permute.xlu0 %1537
        %1539 = vrot.lane.b32.xlu0 %v852, 8
        %v1540 = vpop.permute.xlu0 %1539
        %1541 = vrot.lane.b32.xlu0 %v855, 8
        %v1542 = vpop.permute.xlu0 %1541
        %1543 = vrot.lane.b32.xlu0 %v858, 8
        %v1544 = vpop.permute.xlu0 %1543
        %1545 = vrot.lane.b32.xlu0 %v861, 8
        %v1546 = vpop.permute.xlu0 %1545
        %1547 = vrot.lane.b32.xlu0 %v864, 8
        %v1548 = vpop.permute.xlu0 %1547
        %1549 = vrot.lane.b32.xlu0 %v867, 8
        %v1550 = vpop.permute.xlu0 %1549
        %1551 = vrot.lane.b32.xlu0 %v870, 8
        %v1552 = vpop.permute.xlu0 %1551
        %1553 = vrot.lane.b32.xlu0 %v873, 8
        %v1554 = vpop.permute.xlu0 %1553
        %1555 = vrot.lane.b32.xlu0 %v876, 8
        %v1556 = vpop.permute.xlu0 %1555
        %1557 = vrot.lane.b32.xlu0 %v879, 8
        %v1558 = vpop.permute.xlu0 %1557
        %1559 = vrot.lane.b32.xlu0 %v882, 8
        %v1560 = vpop.permute.xlu0 %1559
        %1561 = vrot.lane.b32.xlu0 %v885, 8
        %v1562 = vpop.permute.xlu0 %1561
        %1563 = vrot.lane.b32.xlu0 %v888, 8
        %v1564 = vpop.permute.xlu0 %1563
        %1565 = vrot.lane.b32.xlu0 %v891, 8
        %v1566 = vpop.permute.xlu0 %1565
        %1567 = vrot.lane.b32.xlu0 %v894, 8
        %v1568 = vpop.permute.xlu0 %1567
        %1569 = vrot.lane.b32.xlu0 %v897, 8
        %v1570 = vpop.permute.xlu0 %1569
        %1571 = vrot.lane.b32.xlu0 %v900, 8
        %v1572 = vpop.permute.xlu0 %1571
        %1637 = vrot.lane.b32.xlu0 %v189, 12
        %v1638 = vpop.permute.xlu0 %1637
        %1639 = vrot.lane.b32.xlu0 %v191, 12
        %v1640 = vpop.permute.xlu0 %1639
        %1641 = vrot.lane.b32.xlu0 %v193, 12
        %v1642 = vpop.permute.xlu0 %1641
        %1643 = vrot.lane.b32.xlu0 %v195, 12
        %v1644 = vpop.permute.xlu0 %1643
        %1645 = vrot.lane.b32.xlu0 %v197, 12
        %v1646 = vpop.permute.xlu0 %1645
        %1647 = vrot.lane.b32.xlu0 %v199, 12
        %v1648 = vpop.permute.xlu0 %1647
        %1649 = vrot.lane.b32.xlu0 %v201, 12
        %v1650 = vpop.permute.xlu0 %1649
        %1651 = vrot.lane.b32.xlu0 %v203, 12
        %v1652 = vpop.permute.xlu0 %1651
        %1653 = vrot.lane.b32.xlu0 %v209, 12
        %v1654 = vpop.permute.xlu0 %1653
        %1655 = vrot.lane.b32.xlu0 %v211, 12
        %v1656 = vpop.permute.xlu0 %1655
        %1657 = vrot.lane.b32.xlu0 %v213, 12
        %v1658 = vpop.permute.xlu0 %1657
        %1659 = vrot.lane.b32.xlu0 %v215, 12
        %v1660 = vpop.permute.xlu0 %1659
        %1661 = vrot.lane.b32.xlu0 %v217, 12
        %v1662 = vpop.permute.xlu0 %1661
        %1663 = vrot.lane.b32.xlu0 %v219, 12
        %v1664 = vpop.permute.xlu0 %1663
        %1665 = vrot.lane.b32.xlu0 %v221, 12
        %v1666 = vpop.permute.xlu0 %1665
        %1667 = vrot.lane.b32.xlu0 %v223, 12
        %v1668 = vpop.permute.xlu0 %1667
        %1669 = vrot.lane.b32.xlu0 %v229, 12
        %v1670 = vpop.permute.xlu0 %1669
        %1671 = vrot.lane.b32.xlu0 %v231, 12
        %v1672 = vpop.permute.xlu0 %1671
        %1673 = vrot.lane.b32.xlu0 %v233, 12
        %v1674 = vpop.permute.xlu0 %1673
        %1675 = vrot.lane.b32.xlu0 %v235, 12
        %v1676 = vpop.permute.xlu0 %1675
        %1677 = vrot.lane.b32.xlu0 %v237, 12
        %v1678 = vpop.permute.xlu0 %1677
        %1679 = vrot.lane.b32.xlu0 %v239, 12
        %v1680 = vpop.permute.xlu0 %1679
        %1681 = vrot.lane.b32.xlu0 %v241, 12
        %v1682 = vpop.permute.xlu0 %1681
        %1683 = vrot.lane.b32.xlu0 %v243, 12
        %v1684 = vpop.permute.xlu0 %1683
        %1685 = vrot.lane.b32.xlu0 %v249, 12
        %v1686 = vpop.permute.xlu0 %1685
        %1687 = vrot.lane.b32.xlu0 %v251, 12
        %v1688 = vpop.permute.xlu0 %1687
        %1689 = vrot.lane.b32.xlu0 %v253, 12
        %v1690 = vpop.permute.xlu0 %1689
        %1691 = vrot.lane.b32.xlu0 %v255, 12
        %v1692 = vpop.permute.xlu0 %1691
        %1693 = vrot.lane.b32.xlu0 %v257, 12
        %v1694 = vpop.permute.xlu0 %1693
        %1695 = vrot.lane.b32.xlu0 %v259, 12
        %v1696 = vpop.permute.xlu0 %1695
        %1697 = vrot.lane.b32.xlu0 %v261, 12
        %v1698 = vpop.permute.xlu0 %1697
        %1699 = vrot.lane.b32.xlu0 %v263, 12
        %v1700 = vpop.permute.xlu0 %1699
        %1701 = vrot.lane.b32.xlu0 %v269, 12
        %v1702 = vpop.permute.xlu0 %1701
        %1703 = vrot.lane.b32.xlu0 %v271, 12
        %v1704 = vpop.permute.xlu0 %1703
        %1705 = vrot.lane.b32.xlu0 %v273, 12
        %v1706 = vpop.permute.xlu0 %1705
        %1707 = vrot.lane.b32.xlu0 %v275, 12
        %v1708 = vpop.permute.xlu0 %1707
        %1709 = vrot.lane.b32.xlu0 %v277, 12
        %v1710 = vpop.permute.xlu0 %1709
        %1711 = vrot.lane.b32.xlu0 %v279, 12
        %v1712 = vpop.permute.xlu0 %1711
        %1713 = vrot.lane.b32.xlu0 %v281, 12
        %v1714 = vpop.permute.xlu0 %1713
        %1715 = vrot.lane.b32.xlu0 %v283, 12
        %v1716 = vpop.permute.xlu0 %1715
        %1717 = vrot.lane.b32.xlu0 %v289, 12
        %v1718 = vpop.permute.xlu0 %1717
        %1719 = vrot.lane.b32.xlu0 %v291, 12
        %v1720 = vpop.permute.xlu0 %1719
        %1721 = vrot.lane.b32.xlu0 %v293, 12
        %v1722 = vpop.permute.xlu0 %1721
        %1723 = vrot.lane.b32.xlu0 %v295, 12
        %v1724 = vpop.permute.xlu0 %1723
        %1725 = vrot.lane.b32.xlu0 %v297, 12
        %v1726 = vpop.permute.xlu0 %1725
        %1727 = vrot.lane.b32.xlu0 %v299, 12
        %v1728 = vpop.permute.xlu0 %1727
        %1729 = vrot.lane.b32.xlu0 %v301, 12
        %v1730 = vpop.permute.xlu0 %1729
        %1731 = vrot.lane.b32.xlu0 %v303, 12
        %v1732 = vpop.permute.xlu0 %1731
        %1733 = vrot.lane.b32.xlu0 %v309, 12
        %v1734 = vpop.permute.xlu0 %1733
        %1735 = vrot.lane.b32.xlu0 %v311, 12
        %v1736 = vpop.permute.xlu0 %1735
        %1737 = vrot.lane.b32.xlu0 %v313, 12
        %v1738 = vpop.permute.xlu0 %1737
        %1739 = vrot.lane.b32.xlu0 %v315, 12
        %v1740 = vpop.permute.xlu0 %1739
        %1741 = vrot.lane.b32.xlu0 %v317, 12
        %v1742 = vpop.permute.xlu0 %1741
        %1743 = vrot.lane.b32.xlu0 %v319, 12
        %v1744 = vpop.permute.xlu0 %1743
        %1745 = vrot.lane.b32.xlu0 %v321, 12
        %v1746 = vpop.permute.xlu0 %1745
        %1747 = vrot.lane.b32.xlu0 %v323, 12
        %v1748 = vpop.permute.xlu0 %1747
        %1749 = vrot.lane.b32.xlu0 %v329, 12
        %v1750 = vpop.permute.xlu0 %1749
        %1751 = vrot.lane.b32.xlu0 %v331, 12
        %v1752 = vpop.permute.xlu0 %1751
        %1753 = vrot.lane.b32.xlu0 %v333, 12
        %v1754 = vpop.permute.xlu0 %1753
        %1755 = vrot.lane.b32.xlu0 %v335, 12
        %v1756 = vpop.permute.xlu0 %1755
        %1757 = vrot.lane.b32.xlu0 %v337, 12
        %v1758 = vpop.permute.xlu0 %1757
        %1759 = vrot.lane.b32.xlu0 %v339, 12
        %v1760 = vpop.permute.xlu0 %1759
        %1761 = vrot.lane.b32.xlu0 %v341, 12
        %v1762 = vpop.permute.xlu0 %1761
        %1763 = vrot.lane.b32.xlu0 %v343, 12
        %v1764 = vpop.permute.xlu0 %1763
        %1829 = vrot.lane.b32.xlu0 %v521, 16
        %v1830 = vpop.permute.xlu0 %1829
        %1831 = vrot.lane.b32.xlu0 %v524, 16
        %v1832 = vpop.permute.xlu0 %1831
        %1833 = vrot.lane.b32.xlu0 %v527, 16
        %v1834 = vpop.permute.xlu0 %1833
        %1835 = vrot.lane.b32.xlu0 %v530, 16
        %v1836 = vpop.permute.xlu0 %1835
        %1837 = vrot.lane.b32.xlu0 %v533, 16
        %v1838 = vpop.permute.xlu0 %1837
        %1839 = vrot.lane.b32.xlu0 %v536, 16
        %v1840 = vpop.permute.xlu0 %1839
        %1841 = vrot.lane.b32.xlu0 %v539, 16
        %v1842 = vpop.permute.xlu0 %1841
        %1843 = vrot.lane.b32.xlu0 %v919, 16
        %v1844 = vpop.permute.xlu0 %1843
        %1845 = vrot.lane.b32.xlu0 %v545, 16
        %v1846 = vpop.permute.xlu0 %1845
        %1847 = vrot.lane.b32.xlu0 %v548, 16
        %v1848 = vpop.permute.xlu0 %1847
        %1849 = vrot.lane.b32.xlu0 %v551, 16
        %v1850 = vpop.permute.xlu0 %1849
        %1851 = vrot.lane.b32.xlu0 %v554, 16
        %v1852 = vpop.permute.xlu0 %1851
        %1853 = vrot.lane.b32.xlu0 %v557, 16
        %v1854 = vpop.permute.xlu0 %1853
        %1855 = vrot.lane.b32.xlu0 %v560, 16
        %v1856 = vpop.permute.xlu0 %1855
        %1857 = vrot.lane.b32.xlu0 %v563, 16
        %v1858 = vpop.permute.xlu0 %1857
        %1859 = vrot.lane.b32.xlu0 %v922, 16
        %v1860 = vpop.permute.xlu0 %1859
        %1861 = vrot.lane.b32.xlu0 %v569, 16
        %v1862 = vpop.permute.xlu0 %1861
        %1863 = vrot.lane.b32.xlu0 %v572, 16
        %v1864 = vpop.permute.xlu0 %1863
        %1865 = vrot.lane.b32.xlu0 %v575, 16
        %v1866 = vpop.permute.xlu0 %1865
        %1867 = vrot.lane.b32.xlu0 %v578, 16
        %v1868 = vpop.permute.xlu0 %1867
        %1869 = vrot.lane.b32.xlu0 %v581, 16
        %v1870 = vpop.permute.xlu0 %1869
        %1871 = vrot.lane.b32.xlu0 %v584, 16
        %v1872 = vpop.permute.xlu0 %1871
        %1873 = vrot.lane.b32.xlu0 %v587, 16
        %v1874 = vpop.permute.xlu0 %1873
        %1875 = vrot.lane.b32.xlu0 %v925, 16
        %v1876 = vpop.permute.xlu0 %1875
        %1877 = vrot.lane.b32.xlu0 %v593, 16
        %v1878 = vpop.permute.xlu0 %1877
        %1879 = vrot.lane.b32.xlu0 %v596, 16
        %v1880 = vpop.permute.xlu0 %1879
        %1881 = vrot.lane.b32.xlu0 %v599, 16
        %v1882 = vpop.permute.xlu0 %1881
        %1883 = vrot.lane.b32.xlu0 %v602, 16
        %v1884 = vpop.permute.xlu0 %1883
        %1885 = vrot.lane.b32.xlu0 %v605, 16
        %v1886 = vpop.permute.xlu0 %1885
        %1887 = vrot.lane.b32.xlu0 %v608, 16
        %v1888 = vpop.permute.xlu0 %1887
        %1889 = vrot.lane.b32.xlu0 %v611, 16
        %v1890 = vpop.permute.xlu0 %1889
        %1891 = vrot.lane.b32.xlu0 %v928, 16
        %v1892 = vpop.permute.xlu0 %1891
        %1893 = vrot.lane.b32.xlu0 %v617, 16
        %v1894 = vpop.permute.xlu0 %1893
        %1895 = vrot.lane.b32.xlu0 %v620, 16
        %v1896 = vpop.permute.xlu0 %1895
        %1897 = vrot.lane.b32.xlu0 %v623, 16
        %v1898 = vpop.permute.xlu0 %1897
        %1899 = vrot.lane.b32.xlu0 %v626, 16
        %v1900 = vpop.permute.xlu0 %1899
        %1901 = vrot.lane.b32.xlu0 %v629, 16
        %v1902 = vpop.permute.xlu0 %1901
        %1903 = vrot.lane.b32.xlu0 %v632, 16
        %v1904 = vpop.permute.xlu0 %1903
        %1905 = vrot.lane.b32.xlu0 %v635, 16
        %v1906 = vpop.permute.xlu0 %1905
        %1907 = vrot.lane.b32.xlu0 %v931, 16
        %v1908 = vpop.permute.xlu0 %1907
        %1909 = vrot.lane.b32.xlu0 %v641, 16
        %v1910 = vpop.permute.xlu0 %1909
        %1911 = vrot.lane.b32.xlu0 %v644, 16
        %v1912 = vpop.permute.xlu0 %1911
        %1913 = vrot.lane.b32.xlu0 %v647, 16
        %v1914 = vpop.permute.xlu0 %1913
        %1915 = vrot.lane.b32.xlu0 %v650, 16
        %v1916 = vpop.permute.xlu0 %1915
        %1917 = vrot.lane.b32.xlu0 %v653, 16
        %v1918 = vpop.permute.xlu0 %1917
        %1919 = vrot.lane.b32.xlu0 %v656, 16
        %v1920 = vpop.permute.xlu0 %1919
        %1921 = vrot.lane.b32.xlu0 %v659, 16
        %v1922 = vpop.permute.xlu0 %1921
        %1923 = vrot.lane.b32.xlu0 %v934, 16
        %v1924 = vpop.permute.xlu0 %1923
        %1925 = vrot.lane.b32.xlu0 %v665, 16
        %v1926 = vpop.permute.xlu0 %1925
        %1927 = vrot.lane.b32.xlu0 %v668, 16
        %v1928 = vpop.permute.xlu0 %1927
        %1929 = vrot.lane.b32.xlu0 %v671, 16
        %v1930 = vpop.permute.xlu0 %1929
        %1931 = vrot.lane.b32.xlu0 %v674, 16
        %v1932 = vpop.permute.xlu0 %1931
        %1933 = vrot.lane.b32.xlu0 %v677, 16
        %v1934 = vpop.permute.xlu0 %1933
        %1935 = vrot.lane.b32.xlu0 %v680, 16
        %v1936 = vpop.permute.xlu0 %1935
        %1937 = vrot.lane.b32.xlu0 %v683, 16
        %v1938 = vpop.permute.xlu0 %1937
        %1939 = vrot.lane.b32.xlu0 %v937, 16
        %v1940 = vpop.permute.xlu0 %1939
        %1941 = vrot.lane.b32.xlu0 %v689, 16
        %v1942 = vpop.permute.xlu0 %1941
        %1943 = vrot.lane.b32.xlu0 %v692, 16
        %v1944 = vpop.permute.xlu0 %1943
        %1945 = vrot.lane.b32.xlu0 %v695, 16
        %v1946 = vpop.permute.xlu0 %1945
        %1947 = vrot.lane.b32.xlu0 %v698, 16
        %v1948 = vpop.permute.xlu0 %1947
        %1949 = vrot.lane.b32.xlu0 %v701, 16
        %v1950 = vpop.permute.xlu0 %1949
        %1951 = vrot.lane.b32.xlu0 %v704, 16
        %v1952 = vpop.permute.xlu0 %1951
        %1953 = vrot.lane.b32.xlu0 %v707, 16
        %v1954 = vpop.permute.xlu0 %1953
        %1955 = vrot.lane.b32.xlu0 %v940, 16
        %v1956 = vpop.permute.xlu0 %1955
        %2021 = vrot.lane.b32.xlu0 %v714, 20
        %v2022 = vpop.permute.xlu0 %2021
        %2023 = vrot.lane.b32.xlu0 %v717, 20
        %v2024 = vpop.permute.xlu0 %2023
        %2025 = vrot.lane.b32.xlu0 %v720, 20
        %v2026 = vpop.permute.xlu0 %2025
        %2027 = vrot.lane.b32.xlu0 %v723, 20
        %v2028 = vpop.permute.xlu0 %2027
        %2029 = vrot.lane.b32.xlu0 %v726, 20
        %v2030 = vpop.permute.xlu0 %2029
        %2031 = vrot.lane.b32.xlu0 %v729, 20
        %v2032 = vpop.permute.xlu0 %2031
        %2033 = vrot.lane.b32.xlu0 %v732, 20
        %v2034 = vpop.permute.xlu0 %2033
        %2035 = vrot.lane.b32.xlu0 %v943, 20
        %v2036 = vpop.permute.xlu0 %2035
        %2037 = vrot.lane.b32.xlu0 %v738, 20
        %v2038 = vpop.permute.xlu0 %2037
        %2039 = vrot.lane.b32.xlu0 %v741, 20
        %v2040 = vpop.permute.xlu0 %2039
        %2041 = vrot.lane.b32.xlu0 %v744, 20
        %v2042 = vpop.permute.xlu0 %2041
        %2043 = vrot.lane.b32.xlu0 %v747, 20
        %v2044 = vpop.permute.xlu0 %2043
        %2045 = vrot.lane.b32.xlu0 %v750, 20
        %v2046 = vpop.permute.xlu0 %2045
        %2047 = vrot.lane.b32.xlu0 %v753, 20
        %v2048 = vpop.permute.xlu0 %2047
        %2049 = vrot.lane.b32.xlu0 %v756, 20
        %v2050 = vpop.permute.xlu0 %2049
        %2051 = vrot.lane.b32.xlu0 %v946, 20
        %v2052 = vpop.permute.xlu0 %2051
        %2053 = vrot.lane.b32.xlu0 %v762, 20
        %v2054 = vpop.permute.xlu0 %2053
        %2055 = vrot.lane.b32.xlu0 %v765, 20
        %v2056 = vpop.permute.xlu0 %2055
        %2057 = vrot.lane.b32.xlu0 %v768, 20
        %v2058 = vpop.permute.xlu0 %2057
        %2059 = vrot.lane.b32.xlu0 %v771, 20
        %v2060 = vpop.permute.xlu0 %2059
        %2061 = vrot.lane.b32.xlu0 %v774, 20
        %v2062 = vpop.permute.xlu0 %2061
        %2063 = vrot.lane.b32.xlu0 %v777, 20
        %v2064 = vpop.permute.xlu0 %2063
        %2065 = vrot.lane.b32.xlu0 %v780, 20
        %v2066 = vpop.permute.xlu0 %2065
        %2067 = vrot.lane.b32.xlu0 %v949, 20
        %v2068 = vpop.permute.xlu0 %2067
        %2069 = vrot.lane.b32.xlu0 %v786, 20
        %v2070 = vpop.permute.xlu0 %2069
        %2071 = vrot.lane.b32.xlu0 %v789, 20
        %v2072 = vpop.permute.xlu0 %2071
        %2073 = vrot.lane.b32.xlu0 %v792, 20
        %v2074 = vpop.permute.xlu0 %2073
        %2075 = vrot.lane.b32.xlu0 %v795, 20
        %v2076 = vpop.permute.xlu0 %2075
        %2077 = vrot.lane.b32.xlu0 %v798, 20
        %v2078 = vpop.permute.xlu0 %2077
        %2079 = vrot.lane.b32.xlu0 %v801, 20
        %v2080 = vpop.permute.xlu0 %2079
        %2081 = vrot.lane.b32.xlu0 %v804, 20
        %v2082 = vpop.permute.xlu0 %2081
        %2083 = vrot.lane.b32.xlu0 %v952, 20
        %v2084 = vpop.permute.xlu0 %2083
        %2085 = vrot.lane.b32.xlu0 %v810, 20
        %v2086 = vpop.permute.xlu0 %2085
        %2087 = vrot.lane.b32.xlu0 %v813, 20
        %v2088 = vpop.permute.xlu0 %2087
        %2089 = vrot.lane.b32.xlu0 %v816, 20
        %v2090 = vpop.permute.xlu0 %2089
        %2091 = vrot.lane.b32.xlu0 %v819, 20
        %v2092 = vpop.permute.xlu0 %2091
        %2093 = vrot.lane.b32.xlu0 %v822, 20
        %v2094 = vpop.permute.xlu0 %2093
        %2095 = vrot.lane.b32.xlu0 %v825, 20
        %v2096 = vpop.permute.xlu0 %2095
        %2097 = vrot.lane.b32.xlu0 %v828, 20
        %v2098 = vpop.permute.xlu0 %2097
        %2099 = vrot.lane.b32.xlu0 %v955, 20
        %v2100 = vpop.permute.xlu0 %2099
        %2101 = vrot.lane.b32.xlu0 %v834, 20
        %v2102 = vpop.permute.xlu0 %2101
        %2103 = vrot.lane.b32.xlu0 %v837, 20
        %v2104 = vpop.permute.xlu0 %2103
        %2105 = vrot.lane.b32.xlu0 %v840, 20
        %v2106 = vpop.permute.xlu0 %2105
        %2107 = vrot.lane.b32.xlu0 %v843, 20
        %v2108 = vpop.permute.xlu0 %2107
        %2109 = vrot.lane.b32.xlu0 %v846, 20
        %v2110 = vpop.permute.xlu0 %2109
        %2111 = vrot.lane.b32.xlu0 %v849, 20
        %v2112 = vpop.permute.xlu0 %2111
        %2113 = vrot.lane.b32.xlu0 %v852, 20
        %v2114 = vpop.permute.xlu0 %2113
        %2115 = vrot.lane.b32.xlu0 %v958, 20
        %v2116 = vpop.permute.xlu0 %2115
        %2117 = vrot.lane.b32.xlu0 %v858, 20
        %v2118 = vpop.permute.xlu0 %2117
        %2119 = vrot.lane.b32.xlu0 %v861, 20
        %v2120 = vpop.permute.xlu0 %2119
        %2121 = vrot.lane.b32.xlu0 %v864, 20
        %v2122 = vpop.permute.xlu0 %2121
        %2123 = vrot.lane.b32.xlu0 %v867, 20
        %v2124 = vpop.permute.xlu0 %2123
        %2125 = vrot.lane.b32.xlu0 %v870, 20
        %v2126 = vpop.permute.xlu0 %2125
        %2127 = vrot.lane.b32.xlu0 %v873, 20
        %v2128 = vpop.permute.xlu0 %2127
        %2129 = vrot.lane.b32.xlu0 %v876, 20
        %v2130 = vpop.permute.xlu0 %2129
        %2131 = vrot.lane.b32.xlu0 %v961, 20
        %v2132 = vpop.permute.xlu0 %2131
        %2133 = vrot.lane.b32.xlu0 %v882, 20
        %v2134 = vpop.permute.xlu0 %2133
        %2135 = vrot.lane.b32.xlu0 %v885, 20
        %v2136 = vpop.permute.xlu0 %2135
        %2137 = vrot.lane.b32.xlu0 %v888, 20
        %v2138 = vpop.permute.xlu0 %2137
        %2139 = vrot.lane.b32.xlu0 %v891, 20
        %v2140 = vpop.permute.xlu0 %2139
        %2141 = vrot.lane.b32.xlu0 %v894, 20
        %v2142 = vpop.permute.xlu0 %2141
        %2143 = vrot.lane.b32.xlu0 %v897, 20
        %v2144 = vpop.permute.xlu0 %2143
        %2145 = vrot.lane.b32.xlu0 %v900, 20
        %v2146 = vpop.permute.xlu0 %2145
        %2147 = vrot.lane.b32.xlu0 %v964, 20
        %v2148 = vpop.permute.xlu0 %2147
        %2213 = vrot.lane.b32.xlu0 %v191, 24
        %v2214 = vpop.permute.xlu0 %2213
        %2215 = vrot.lane.b32.xlu0 %v193, 24
        %v2216 = vpop.permute.xlu0 %2215
        %2217 = vrot.lane.b32.xlu0 %v195, 24
        %v2218 = vpop.permute.xlu0 %2217
        %2219 = vrot.lane.b32.xlu0 %v197, 24
        %v2220 = vpop.permute.xlu0 %2219
        %2221 = vrot.lane.b32.xlu0 %v199, 24
        %v2222 = vpop.permute.xlu0 %2221
        %2223 = vrot.lane.b32.xlu0 %v201, 24
        %v2224 = vpop.permute.xlu0 %2223
        %2225 = vrot.lane.b32.xlu0 %v203, 24
        %v2226 = vpop.permute.xlu0 %2225
        %2227 = vrot.lane.b32.xlu0 %v205, 24
        %v2228 = vpop.permute.xlu0 %2227
        %2229 = vrot.lane.b32.xlu0 %v211, 24
        %v2230 = vpop.permute.xlu0 %2229
        %2231 = vrot.lane.b32.xlu0 %v213, 24
        %v2232 = vpop.permute.xlu0 %2231
        %2233 = vrot.lane.b32.xlu0 %v215, 24
        %v2234 = vpop.permute.xlu0 %2233
        %2235 = vrot.lane.b32.xlu0 %v217, 24
        %v2236 = vpop.permute.xlu0 %2235
        %2237 = vrot.lane.b32.xlu0 %v219, 24
        %v2238 = vpop.permute.xlu0 %2237
        %2239 = vrot.lane.b32.xlu0 %v221, 24
        %v2240 = vpop.permute.xlu0 %2239
        %2241 = vrot.lane.b32.xlu0 %v223, 24
        %v2242 = vpop.permute.xlu0 %2241
        %2243 = vrot.lane.b32.xlu0 %v225, 24
        %v2244 = vpop.permute.xlu0 %2243
        %2245 = vrot.lane.b32.xlu0 %v231, 24
        %v2246 = vpop.permute.xlu0 %2245
        %2247 = vrot.lane.b32.xlu0 %v233, 24
        %v2248 = vpop.permute.xlu0 %2247
        %2249 = vrot.lane.b32.xlu0 %v235, 24
        %v2250 = vpop.permute.xlu0 %2249
        %2251 = vrot.lane.b32.xlu0 %v237, 24
        %v2252 = vpop.permute.xlu0 %2251
        %2253 = vrot.lane.b32.xlu0 %v239, 24
        %v2254 = vpop.permute.xlu0 %2253
        %2255 = vrot.lane.b32.xlu0 %v241, 24
        %v2256 = vpop.permute.xlu0 %2255
        %2257 = vrot.lane.b32.xlu0 %v243, 24
        %v2258 = vpop.permute.xlu0 %2257
        %2259 = vrot.lane.b32.xlu0 %v245, 24
        %v2260 = vpop.permute.xlu0 %2259
        %2261 = vrot.lane.b32.xlu0 %v251, 24
        %v2262 = vpop.permute.xlu0 %2261
        %2263 = vrot.lane.b32.xlu0 %v253, 24
        %v2264 = vpop.permute.xlu0 %2263
        %2265 = vrot.lane.b32.xlu0 %v255, 24
        %v2266 = vpop.permute.xlu0 %2265
        %2267 = vrot.lane.b32.xlu0 %v257, 24
        %v2268 = vpop.permute.xlu0 %2267
        %2269 = vrot.lane.b32.xlu0 %v259, 24
        %v2270 = vpop.permute.xlu0 %2269
        %2271 = vrot.lane.b32.xlu0 %v261, 24
        %v2272 = vpop.permute.xlu0 %2271
        %2273 = vrot.lane.b32.xlu0 %v263, 24
        %v2274 = vpop.permute.xlu0 %2273
        %2275 = vrot.lane.b32.xlu0 %v265, 24
        %v2276 = vpop.permute.xlu0 %2275
        %2277 = vrot.lane.b32.xlu0 %v271, 24
        %v2278 = vpop.permute.xlu0 %2277
        %2279 = vrot.lane.b32.xlu0 %v273, 24
        %v2280 = vpop.permute.xlu0 %2279
        %2281 = vrot.lane.b32.xlu0 %v275, 24
        %v2282 = vpop.permute.xlu0 %2281
        %2283 = vrot.lane.b32.xlu0 %v277, 24
        %v2284 = vpop.permute.xlu0 %2283
        %2285 = vrot.lane.b32.xlu0 %v279, 24
        %v2286 = vpop.permute.xlu0 %2285
        %2287 = vrot.lane.b32.xlu0 %v281, 24
        %v2288 = vpop.permute.xlu0 %2287
        %2289 = vrot.lane.b32.xlu0 %v283, 24
        %v2290 = vpop.permute.xlu0 %2289
        %2291 = vrot.lane.b32.xlu0 %v285, 24
        %v2292 = vpop.permute.xlu0 %2291
        %2293 = vrot.lane.b32.xlu0 %v291, 24
        %v2294 = vpop.permute.xlu0 %2293
        %2295 = vrot.lane.b32.xlu0 %v293, 24
        %v2296 = vpop.permute.xlu0 %2295
        %2297 = vrot.lane.b32.xlu0 %v295, 24
        %v2298 = vpop.permute.xlu0 %2297
        %2299 = vrot.lane.b32.xlu0 %v297, 24
        %v2300 = vpop.permute.xlu0 %2299
        %2301 = vrot.lane.b32.xlu0 %v299, 24
        %v2302 = vpop.permute.xlu0 %2301
        %2303 = vrot.lane.b32.xlu0 %v301, 24
        %v2304 = vpop.permute.xlu0 %2303
        %2305 = vrot.lane.b32.xlu0 %v303, 24
        %v2306 = vpop.permute.xlu0 %2305
        %2307 = vrot.lane.b32.xlu0 %v305, 24
        %v2308 = vpop.permute.xlu0 %2307
        %2309 = vrot.lane.b32.xlu0 %v311, 24
        %v2310 = vpop.permute.xlu0 %2309
        %2311 = vrot.lane.b32.xlu0 %v313, 24
        %v2312 = vpop.permute.xlu0 %2311
        %2313 = vrot.lane.b32.xlu0 %v315, 24
        %v2314 = vpop.permute.xlu0 %2313
        %2315 = vrot.lane.b32.xlu0 %v317, 24
        %v2316 = vpop.permute.xlu0 %2315
        %2317 = vrot.lane.b32.xlu0 %v319, 24
        %v2318 = vpop.permute.xlu0 %2317
        %2319 = vrot.lane.b32.xlu0 %v321, 24
        %v2320 = vpop.permute.xlu0 %2319
        %2321 = vrot.lane.b32.xlu0 %v323, 24
        %v2322 = vpop.permute.xlu0 %2321
        %2323 = vrot.lane.b32.xlu0 %v325, 24
        %v2324 = vpop.permute.xlu0 %2323
        %2325 = vrot.lane.b32.xlu0 %v331, 24
        %v2326 = vpop.permute.xlu0 %2325
        %2327 = vrot.lane.b32.xlu0 %v333, 24
        %v2328 = vpop.permute.xlu0 %2327
        %2329 = vrot.lane.b32.xlu0 %v335, 24
        %v2330 = vpop.permute.xlu0 %2329
        %2331 = vrot.lane.b32.xlu0 %v337, 24
        %v2332 = vpop.permute.xlu0 %2331
        %2333 = vrot.lane.b32.xlu0 %v339, 24
        %v2334 = vpop.permute.xlu0 %2333
        %2335 = vrot.lane.b32.xlu0 %v341, 24
        %v2336 = vpop.permute.xlu0 %2335
        %2337 = vrot.lane.b32.xlu0 %v343, 24
        %v2338 = vpop.permute.xlu0 %2337
        %2339 = vrot.lane.b32.xlu0 %v345, 24
        %v2340 = vpop.permute.xlu0 %2339
        %2405 = vrot.lane.b32.xlu0 %v524, 28
        %v2406 = vpop.permute.xlu0 %2405
        %2407 = vrot.lane.b32.xlu0 %v527, 28
        %v2408 = vpop.permute.xlu0 %2407
        %2409 = vrot.lane.b32.xlu0 %v530, 28
        %v2410 = vpop.permute.xlu0 %2409
        %2411 = vrot.lane.b32.xlu0 %v533, 28
        %v2412 = vpop.permute.xlu0 %2411
        %2413 = vrot.lane.b32.xlu0 %v536, 28
        %v2414 = vpop.permute.xlu0 %2413
        %2415 = vrot.lane.b32.xlu0 %v539, 28
        %v2416 = vpop.permute.xlu0 %2415
        %2417 = vrot.lane.b32.xlu0 %v919, 28
        %v2418 = vpop.permute.xlu0 %2417
        %2419 = vrot.lane.b32.xlu0 %v983, 28
        %v2420 = vpop.permute.xlu0 %2419
        %2421 = vrot.lane.b32.xlu0 %v548, 28
        %v2422 = vpop.permute.xlu0 %2421
        %2423 = vrot.lane.b32.xlu0 %v551, 28
        %v2424 = vpop.permute.xlu0 %2423
        %2425 = vrot.lane.b32.xlu0 %v554, 28
        %v2426 = vpop.permute.xlu0 %2425
        %2427 = vrot.lane.b32.xlu0 %v557, 28
        %v2428 = vpop.permute.xlu0 %2427
        %2429 = vrot.lane.b32.xlu0 %v560, 28
        %v2430 = vpop.permute.xlu0 %2429
        %2431 = vrot.lane.b32.xlu0 %v563, 28
        %v2432 = vpop.permute.xlu0 %2431
        %2433 = vrot.lane.b32.xlu0 %v922, 28
        %v2434 = vpop.permute.xlu0 %2433
        %2435 = vrot.lane.b32.xlu0 %v986, 28
        %v2436 = vpop.permute.xlu0 %2435
        %2437 = vrot.lane.b32.xlu0 %v572, 28
        %v2438 = vpop.permute.xlu0 %2437
        %2439 = vrot.lane.b32.xlu0 %v575, 28
        %v2440 = vpop.permute.xlu0 %2439
        %2441 = vrot.lane.b32.xlu0 %v578, 28
        %v2442 = vpop.permute.xlu0 %2441
        %2443 = vrot.lane.b32.xlu0 %v581, 28
        %v2444 = vpop.permute.xlu0 %2443
        %2445 = vrot.lane.b32.xlu0 %v584, 28
        %v2446 = vpop.permute.xlu0 %2445
        %2447 = vrot.lane.b32.xlu0 %v587, 28
        %v2448 = vpop.permute.xlu0 %2447
        %2449 = vrot.lane.b32.xlu0 %v925, 28
        %v2450 = vpop.permute.xlu0 %2449
        %2451 = vrot.lane.b32.xlu0 %v989, 28
        %v2452 = vpop.permute.xlu0 %2451
        %2453 = vrot.lane.b32.xlu0 %v596, 28
        %v2454 = vpop.permute.xlu0 %2453
        %2455 = vrot.lane.b32.xlu0 %v599, 28
        %v2456 = vpop.permute.xlu0 %2455
        %2457 = vrot.lane.b32.xlu0 %v602, 28
        %v2458 = vpop.permute.xlu0 %2457
        %2459 = vrot.lane.b32.xlu0 %v605, 28
        %v2460 = vpop.permute.xlu0 %2459
        %2461 = vrot.lane.b32.xlu0 %v608, 28
        %v2462 = vpop.permute.xlu0 %2461
        %2463 = vrot.lane.b32.xlu0 %v611, 28
        %v2464 = vpop.permute.xlu0 %2463
        %2465 = vrot.lane.b32.xlu0 %v928, 28
        %v2466 = vpop.permute.xlu0 %2465
        %2467 = vrot.lane.b32.xlu0 %v992, 28
        %v2468 = vpop.permute.xlu0 %2467
        %2469 = vrot.lane.b32.xlu0 %v620, 28
        %v2470 = vpop.permute.xlu0 %2469
        %2471 = vrot.lane.b32.xlu0 %v623, 28
        %v2472 = vpop.permute.xlu0 %2471
        %2473 = vrot.lane.b32.xlu0 %v626, 28
        %v2474 = vpop.permute.xlu0 %2473
        %2475 = vrot.lane.b32.xlu0 %v629, 28
        %v2476 = vpop.permute.xlu0 %2475
        %2477 = vrot.lane.b32.xlu0 %v632, 28
        %v2478 = vpop.permute.xlu0 %2477
        %2479 = vrot.lane.b32.xlu0 %v635, 28
        %v2480 = vpop.permute.xlu0 %2479
        %2481 = vrot.lane.b32.xlu0 %v931, 28
        %v2482 = vpop.permute.xlu0 %2481
        %2483 = vrot.lane.b32.xlu0 %v995, 28
        %v2484 = vpop.permute.xlu0 %2483
        %2485 = vrot.lane.b32.xlu0 %v644, 28
        %v2486 = vpop.permute.xlu0 %2485
        %2487 = vrot.lane.b32.xlu0 %v647, 28
        %v2488 = vpop.permute.xlu0 %2487
        %2489 = vrot.lane.b32.xlu0 %v650, 28
        %v2490 = vpop.permute.xlu0 %2489
        %2491 = vrot.lane.b32.xlu0 %v653, 28
        %v2492 = vpop.permute.xlu0 %2491
        %2493 = vrot.lane.b32.xlu0 %v656, 28
        %v2494 = vpop.permute.xlu0 %2493
        %2495 = vrot.lane.b32.xlu0 %v659, 28
        %v2496 = vpop.permute.xlu0 %2495
        %2497 = vrot.lane.b32.xlu0 %v934, 28
        %v2498 = vpop.permute.xlu0 %2497
        %2499 = vrot.lane.b32.xlu0 %v998, 28
        %v2500 = vpop.permute.xlu0 %2499
        %2501 = vrot.lane.b32.xlu0 %v668, 28
        %v2502 = vpop.permute.xlu0 %2501
        %2503 = vrot.lane.b32.xlu0 %v671, 28
        %v2504 = vpop.permute.xlu0 %2503
        %2505 = vrot.lane.b32.xlu0 %v674, 28
        %v2506 = vpop.permute.xlu0 %2505
        %2507 = vrot.lane.b32.xlu0 %v677, 28
        %v2508 = vpop.permute.xlu0 %2507
        %2509 = vrot.lane.b32.xlu0 %v680, 28
        %v2510 = vpop.permute.xlu0 %2509
        %2511 = vrot.lane.b32.xlu0 %v683, 28
        %v2512 = vpop.permute.xlu0 %2511
        %2513 = vrot.lane.b32.xlu0 %v937, 28
        %v2514 = vpop.permute.xlu0 %2513
        %2515 = vrot.lane.b32.xlu0 %v1001, 28
        %v2516 = vpop.permute.xlu0 %2515
        %2517 = vrot.lane.b32.xlu0 %v692, 28
        %v2518 = vpop.permute.xlu0 %2517
        %2519 = vrot.lane.b32.xlu0 %v695, 28
        %v2520 = vpop.permute.xlu0 %2519
        %2521 = vrot.lane.b32.xlu0 %v698, 28
        %v2522 = vpop.permute.xlu0 %2521
        %2523 = vrot.lane.b32.xlu0 %v701, 28
        %v2524 = vpop.permute.xlu0 %2523
        %2525 = vrot.lane.b32.xlu0 %v704, 28
        %v2526 = vpop.permute.xlu0 %2525
        %2527 = vrot.lane.b32.xlu0 %v707, 28
        %v2528 = vpop.permute.xlu0 %2527
        %2529 = vrot.lane.b32.xlu0 %v940, 28
        %v2530 = vpop.permute.xlu0 %2529
        %2531 = vrot.lane.b32.xlu0 %v1004, 28
        %v2532 = vpop.permute.xlu0 %2531
        %2597 = vrot.lane.b32.xlu0 %v717, 32
        %v2598 = vpop.permute.xlu0 %2597
        %2599 = vrot.lane.b32.xlu0 %v720, 32
        %v2600 = vpop.permute.xlu0 %2599
        %2601 = vrot.lane.b32.xlu0 %v723, 32
        %v2602 = vpop.permute.xlu0 %2601
        %2603 = vrot.lane.b32.xlu0 %v726, 32
        %v2604 = vpop.permute.xlu0 %2603
        %2605 = vrot.lane.b32.xlu0 %v729, 32
        %v2606 = vpop.permute.xlu0 %2605
        %2607 = vrot.lane.b32.xlu0 %v732, 32
        %v2608 = vpop.permute.xlu0 %2607
        %2609 = vrot.lane.b32.xlu0 %v943, 32
        %v2610 = vpop.permute.xlu0 %2609
        %2611 = vrot.lane.b32.xlu0 %v1007, 32
        %v2612 = vpop.permute.xlu0 %2611
        %2613 = vrot.lane.b32.xlu0 %v741, 32
        %v2614 = vpop.permute.xlu0 %2613
        %2615 = vrot.lane.b32.xlu0 %v744, 32
        %v2616 = vpop.permute.xlu0 %2615
        %2617 = vrot.lane.b32.xlu0 %v747, 32
        %v2618 = vpop.permute.xlu0 %2617
        %2619 = vrot.lane.b32.xlu0 %v750, 32
        %v2620 = vpop.permute.xlu0 %2619
        %2621 = vrot.lane.b32.xlu0 %v753, 32
        %v2622 = vpop.permute.xlu0 %2621
        %2623 = vrot.lane.b32.xlu0 %v756, 32
        %v2624 = vpop.permute.xlu0 %2623
        %2625 = vrot.lane.b32.xlu0 %v946, 32
        %v2626 = vpop.permute.xlu0 %2625
        %2627 = vrot.lane.b32.xlu0 %v1010, 32
        %v2628 = vpop.permute.xlu0 %2627
        %2629 = vrot.lane.b32.xlu0 %v765, 32
        %v2630 = vpop.permute.xlu0 %2629
        %2631 = vrot.lane.b32.xlu0 %v768, 32
        %v2632 = vpop.permute.xlu0 %2631
        %2633 = vrot.lane.b32.xlu0 %v771, 32
        %v2634 = vpop.permute.xlu0 %2633
        %2635 = vrot.lane.b32.xlu0 %v774, 32
        %v2636 = vpop.permute.xlu0 %2635
        %2637 = vrot.lane.b32.xlu0 %v777, 32
        %v2638 = vpop.permute.xlu0 %2637
        %2639 = vrot.lane.b32.xlu0 %v780, 32
        %v2640 = vpop.permute.xlu0 %2639
        %2641 = vrot.lane.b32.xlu0 %v949, 32
        %v2642 = vpop.permute.xlu0 %2641
        %2643 = vrot.lane.b32.xlu0 %v1013, 32
        %v2644 = vpop.permute.xlu0 %2643
        %2645 = vrot.lane.b32.xlu0 %v789, 32
        %v2646 = vpop.permute.xlu0 %2645
        %2647 = vrot.lane.b32.xlu0 %v792, 32
        %v2648 = vpop.permute.xlu0 %2647
        %2649 = vrot.lane.b32.xlu0 %v795, 32
        %v2650 = vpop.permute.xlu0 %2649
        %2651 = vrot.lane.b32.xlu0 %v798, 32
        %v2652 = vpop.permute.xlu0 %2651
        %2653 = vrot.lane.b32.xlu0 %v801, 32
        %v2654 = vpop.permute.xlu0 %2653
        %2655 = vrot.lane.b32.xlu0 %v804, 32
        %v2656 = vpop.permute.xlu0 %2655
        %2657 = vrot.lane.b32.xlu0 %v952, 32
        %v2658 = vpop.permute.xlu0 %2657
        %2659 = vrot.lane.b32.xlu0 %v1016, 32
        %v2660 = vpop.permute.xlu0 %2659
        %2661 = vrot.lane.b32.xlu0 %v813, 32
        %v2662 = vpop.permute.xlu0 %2661
        %2663 = vrot.lane.b32.xlu0 %v816, 32
        %v2664 = vpop.permute.xlu0 %2663
        %2665 = vrot.lane.b32.xlu0 %v819, 32
        %v2666 = vpop.permute.xlu0 %2665
        %2667 = vrot.lane.b32.xlu0 %v822, 32
        %v2668 = vpop.permute.xlu0 %2667
        %2669 = vrot.lane.b32.xlu0 %v825, 32
        %v2670 = vpop.permute.xlu0 %2669
        %2671 = vrot.lane.b32.xlu0 %v828, 32
        %v2672 = vpop.permute.xlu0 %2671
        %2673 = vrot.lane.b32.xlu0 %v955, 32
        %v2674 = vpop.permute.xlu0 %2673
        %2675 = vrot.lane.b32.xlu0 %v1019, 32
        %v2676 = vpop.permute.xlu0 %2675
        %2677 = vrot.lane.b32.xlu0 %v837, 32
        %v2678 = vpop.permute.xlu0 %2677
        %2679 = vrot.lane.b32.xlu0 %v840, 32
        %v2680 = vpop.permute.xlu0 %2679
        %2681 = vrot.lane.b32.xlu0 %v843, 32
        %v2682 = vpop.permute.xlu0 %2681
        %2683 = vrot.lane.b32.xlu0 %v846, 32
        %v2684 = vpop.permute.xlu0 %2683
        %2685 = vrot.lane.b32.xlu0 %v849, 32
        %v2686 = vpop.permute.xlu0 %2685
        %2687 = vrot.lane.b32.xlu0 %v852, 32
        %v2688 = vpop.permute.xlu0 %2687
        %2689 = vrot.lane.b32.xlu0 %v958, 32
        %v2690 = vpop.permute.xlu0 %2689
        %2691 = vrot.lane.b32.xlu0 %v1022, 32
        %v2692 = vpop.permute.xlu0 %2691
        %2693 = vrot.lane.b32.xlu0 %v861, 32
        %v2694 = vpop.permute.xlu0 %2693
        %2695 = vrot.lane.b32.xlu0 %v864, 32
        %v2696 = vpop.permute.xlu0 %2695
        %2697 = vrot.lane.b32.xlu0 %v867, 32
        %v2698 = vpop.permute.xlu0 %2697
        %2699 = vrot.lane.b32.xlu0 %v870, 32
        %v2700 = vpop.permute.xlu0 %2699
        %2701 = vrot.lane.b32.xlu0 %v873, 32
        %v2702 = vpop.permute.xlu0 %2701
        %2703 = vrot.lane.b32.xlu0 %v876, 32
        %v2704 = vpop.permute.xlu0 %2703
        %2705 = vrot.lane.b32.xlu0 %v961, 32
        %v2706 = vpop.permute.xlu0 %2705
        %2707 = vrot.lane.b32.xlu0 %v1025, 32
        %v2708 = vpop.permute.xlu0 %2707
        %2709 = vrot.lane.b32.xlu0 %v885, 32
        %v2710 = vpop.permute.xlu0 %2709
        %2711 = vrot.lane.b32.xlu0 %v888, 32
        %v2712 = vpop.permute.xlu0 %2711
        %2713 = vrot.lane.b32.xlu0 %v891, 32
        %v2714 = vpop.permute.xlu0 %2713
        %2715 = vrot.lane.b32.xlu0 %v894, 32
        %v2716 = vpop.permute.xlu0 %2715
        %2717 = vrot.lane.b32.xlu0 %v897, 32
        %v2718 = vpop.permute.xlu0 %2717
        %2719 = vrot.lane.b32.xlu0 %v900, 32
        %v2720 = vpop.permute.xlu0 %2719
        %2721 = vrot.lane.b32.xlu0 %v964, 32
        %v2722 = vpop.permute.xlu0 %2721
        %2723 = vrot.lane.b32.xlu0 %v1028, 32
        %v2724 = vpop.permute.xlu0 %2723
        %2789 = vrot.lane.b32.xlu0 %v207, 36
        %v2790 = vpop.permute.xlu0 %2789
        %2791 = vrot.lane.b32.xlu0 %v209, 36
        %v2792 = vpop.permute.xlu0 %2791
        %2793 = vrot.lane.b32.xlu0 %v211, 36
        %v2794 = vpop.permute.xlu0 %2793
        %2795 = vrot.lane.b32.xlu0 %v213, 36
        %v2796 = vpop.permute.xlu0 %2795
        %2797 = vrot.lane.b32.xlu0 %v215, 36
        %v2798 = vpop.permute.xlu0 %2797
        %2799 = vrot.lane.b32.xlu0 %v217, 36
        %v2800 = vpop.permute.xlu0 %2799
        %2801 = vrot.lane.b32.xlu0 %v219, 36
        %v2802 = vpop.permute.xlu0 %2801
        %2803 = vrot.lane.b32.xlu0 %v221, 36
        %v2804 = vpop.permute.xlu0 %2803
        %2805 = vrot.lane.b32.xlu0 %v227, 36
        %v2806 = vpop.permute.xlu0 %2805
        %2807 = vrot.lane.b32.xlu0 %v229, 36
        %v2808 = vpop.permute.xlu0 %2807
        %2809 = vrot.lane.b32.xlu0 %v231, 36
        %v2810 = vpop.permute.xlu0 %2809
        %2811 = vrot.lane.b32.xlu0 %v233, 36
        %v2812 = vpop.permute.xlu0 %2811
        %2813 = vrot.lane.b32.xlu0 %v235, 36
        %v2814 = vpop.permute.xlu0 %2813
        %2815 = vrot.lane.b32.xlu0 %v237, 36
        %v2816 = vpop.permute.xlu0 %2815
        %2817 = vrot.lane.b32.xlu0 %v239, 36
        %v2818 = vpop.permute.xlu0 %2817
        %2819 = vrot.lane.b32.xlu0 %v241, 36
        %v2820 = vpop.permute.xlu0 %2819
        %2821 = vrot.lane.b32.xlu0 %v247, 36
        %v2822 = vpop.permute.xlu0 %2821
        %2823 = vrot.lane.b32.xlu0 %v249, 36
        %v2824 = vpop.permute.xlu0 %2823
        %2825 = vrot.lane.b32.xlu0 %v251, 36
        %v2826 = vpop.permute.xlu0 %2825
        %2827 = vrot.lane.b32.xlu0 %v253, 36
        %v2828 = vpop.permute.xlu0 %2827
        %2829 = vrot.lane.b32.xlu0 %v255, 36
        %v2830 = vpop.permute.xlu0 %2829
        %2831 = vrot.lane.b32.xlu0 %v257, 36
        %v2832 = vpop.permute.xlu0 %2831
        %2833 = vrot.lane.b32.xlu0 %v259, 36
        %v2834 = vpop.permute.xlu0 %2833
        %2835 = vrot.lane.b32.xlu0 %v261, 36
        %v2836 = vpop.permute.xlu0 %2835
        %2837 = vrot.lane.b32.xlu0 %v267, 36
        %v2838 = vpop.permute.xlu0 %2837
        %2839 = vrot.lane.b32.xlu0 %v269, 36
        %v2840 = vpop.permute.xlu0 %2839
        %2841 = vrot.lane.b32.xlu0 %v271, 36
        %v2842 = vpop.permute.xlu0 %2841
        %2843 = vrot.lane.b32.xlu0 %v273, 36
        %v2844 = vpop.permute.xlu0 %2843
        %2845 = vrot.lane.b32.xlu0 %v275, 36
        %v2846 = vpop.permute.xlu0 %2845
        %2847 = vrot.lane.b32.xlu0 %v277, 36
        %v2848 = vpop.permute.xlu0 %2847
        %2849 = vrot.lane.b32.xlu0 %v279, 36
        %v2850 = vpop.permute.xlu0 %2849
        %2851 = vrot.lane.b32.xlu0 %v281, 36
        %v2852 = vpop.permute.xlu0 %2851
        %2853 = vrot.lane.b32.xlu0 %v287, 36
        %v2854 = vpop.permute.xlu0 %2853
        %2855 = vrot.lane.b32.xlu0 %v289, 36
        %v2856 = vpop.permute.xlu0 %2855
        %2857 = vrot.lane.b32.xlu0 %v291, 36
        %v2858 = vpop.permute.xlu0 %2857
        %2859 = vrot.lane.b32.xlu0 %v293, 36
        %v2860 = vpop.permute.xlu0 %2859
        %2861 = vrot.lane.b32.xlu0 %v295, 36
        %v2862 = vpop.permute.xlu0 %2861
        %2863 = vrot.lane.b32.xlu0 %v297, 36
        %v2864 = vpop.permute.xlu0 %2863
        %2865 = vrot.lane.b32.xlu0 %v299, 36
        %v2866 = vpop.permute.xlu0 %2865
        %2867 = vrot.lane.b32.xlu0 %v301, 36
        %v2868 = vpop.permute.xlu0 %2867
        %2869 = vrot.lane.b32.xlu0 %v307, 36
        %v2870 = vpop.permute.xlu0 %2869
        %2871 = vrot.lane.b32.xlu0 %v309, 36
        %v2872 = vpop.permute.xlu0 %2871
        %2873 = vrot.lane.b32.xlu0 %v311, 36
        %v2874 = vpop.permute.xlu0 %2873
        %2875 = vrot.lane.b32.xlu0 %v313, 36
        %v2876 = vpop.permute.xlu0 %2875
        %2877 = vrot.lane.b32.xlu0 %v315, 36
        %v2878 = vpop.permute.xlu0 %2877
        %2879 = vrot.lane.b32.xlu0 %v317, 36
        %v2880 = vpop.permute.xlu0 %2879
        %2881 = vrot.lane.b32.xlu0 %v319, 36
        %v2882 = vpop.permute.xlu0 %2881
        %2883 = vrot.lane.b32.xlu0 %v321, 36
        %v2884 = vpop.permute.xlu0 %2883
        %2885 = vrot.lane.b32.xlu0 %v327, 36
        %v2886 = vpop.permute.xlu0 %2885
        %2887 = vrot.lane.b32.xlu0 %v329, 36
        %v2888 = vpop.permute.xlu0 %2887
        %2889 = vrot.lane.b32.xlu0 %v331, 36
        %v2890 = vpop.permute.xlu0 %2889
        %2891 = vrot.lane.b32.xlu0 %v333, 36
        %v2892 = vpop.permute.xlu0 %2891
        %2893 = vrot.lane.b32.xlu0 %v335, 36
        %v2894 = vpop.permute.xlu0 %2893
        %2895 = vrot.lane.b32.xlu0 %v337, 36
        %v2896 = vpop.permute.xlu0 %2895
        %2897 = vrot.lane.b32.xlu0 %v339, 36
        %v2898 = vpop.permute.xlu0 %2897
        %2899 = vrot.lane.b32.xlu0 %v341, 36
        %v2900 = vpop.permute.xlu0 %2899
        %2901 = vrot.lane.b32.xlu0 %v347, 36
        %v2902 = vpop.permute.xlu0 %2901
        %2903 = vrot.lane.b32.xlu0 %v349, 36
        %v2904 = vpop.permute.xlu0 %2903
        %2905 = vrot.lane.b32.xlu0 %v351, 36
        %v2906 = vpop.permute.xlu0 %2905
        %2907 = vrot.lane.b32.xlu0 %v353, 36
        %v2908 = vpop.permute.xlu0 %2907
        %2909 = vrot.lane.b32.xlu0 %v355, 36
        %v2910 = vpop.permute.xlu0 %2909
        %2911 = vrot.lane.b32.xlu0 %v357, 36
        %v2912 = vpop.permute.xlu0 %2911
        %2913 = vrot.lane.b32.xlu0 %v359, 36
        %v2914 = vpop.permute.xlu0 %2913
        %2915 = vrot.lane.b32.xlu0 %v361, 36
        %v2916 = vpop.permute.xlu0 %2915
        %2981 = vrot.lane.b32.xlu0 %v542, 40
        %v2982 = vpop.permute.xlu0 %2981
        %2983 = vrot.lane.b32.xlu0 %v545, 40
        %v2984 = vpop.permute.xlu0 %2983
        %2985 = vrot.lane.b32.xlu0 %v548, 40
        %v2986 = vpop.permute.xlu0 %2985
        %2987 = vrot.lane.b32.xlu0 %v551, 40
        %v2988 = vpop.permute.xlu0 %2987
        %2989 = vrot.lane.b32.xlu0 %v554, 40
        %v2990 = vpop.permute.xlu0 %2989
        %2991 = vrot.lane.b32.xlu0 %v557, 40
        %v2992 = vpop.permute.xlu0 %2991
        %2993 = vrot.lane.b32.xlu0 %v560, 40
        %v2994 = vpop.permute.xlu0 %2993
        %2995 = vrot.lane.b32.xlu0 %v563, 40
        %v2996 = vpop.permute.xlu0 %2995
        %2997 = vrot.lane.b32.xlu0 %v566, 40
        %v2998 = vpop.permute.xlu0 %2997
        %2999 = vrot.lane.b32.xlu0 %v569, 40
        %v3000 = vpop.permute.xlu0 %2999
        %3001 = vrot.lane.b32.xlu0 %v572, 40
        %v3002 = vpop.permute.xlu0 %3001
        %3003 = vrot.lane.b32.xlu0 %v575, 40
        %v3004 = vpop.permute.xlu0 %3003
        %3005 = vrot.lane.b32.xlu0 %v578, 40
        %v3006 = vpop.permute.xlu0 %3005
        %3007 = vrot.lane.b32.xlu0 %v581, 40
        %v3008 = vpop.permute.xlu0 %3007
        %3009 = vrot.lane.b32.xlu0 %v584, 40
        %v3010 = vpop.permute.xlu0 %3009
        %3011 = vrot.lane.b32.xlu0 %v587, 40
        %v3012 = vpop.permute.xlu0 %3011
        %3013 = vrot.lane.b32.xlu0 %v590, 40
        %v3014 = vpop.permute.xlu0 %3013
        %3015 = vrot.lane.b32.xlu0 %v593, 40
        %v3016 = vpop.permute.xlu0 %3015
        %3017 = vrot.lane.b32.xlu0 %v596, 40
        %v3018 = vpop.permute.xlu0 %3017
        %3019 = vrot.lane.b32.xlu0 %v599, 40
        %v3020 = vpop.permute.xlu0 %3019
        %3021 = vrot.lane.b32.xlu0 %v602, 40
        %v3022 = vpop.permute.xlu0 %3021
        %3023 = vrot.lane.b32.xlu0 %v605, 40
        %v3024 = vpop.permute.xlu0 %3023
        %3025 = vrot.lane.b32.xlu0 %v608, 40
        %v3026 = vpop.permute.xlu0 %3025
        %3027 = vrot.lane.b32.xlu0 %v611, 40
        %v3028 = vpop.permute.xlu0 %3027
        %3029 = vrot.lane.b32.xlu0 %v614, 40
        %v3030 = vpop.permute.xlu0 %3029
        %3031 = vrot.lane.b32.xlu0 %v617, 40
        %v3032 = vpop.permute.xlu0 %3031
        %3033 = vrot.lane.b32.xlu0 %v620, 40
        %v3034 = vpop.permute.xlu0 %3033
        %3035 = vrot.lane.b32.xlu0 %v623, 40
        %v3036 = vpop.permute.xlu0 %3035
        %3037 = vrot.lane.b32.xlu0 %v626, 40
        %v3038 = vpop.permute.xlu0 %3037
        %3039 = vrot.lane.b32.xlu0 %v629, 40
        %v3040 = vpop.permute.xlu0 %3039
        %3041 = vrot.lane.b32.xlu0 %v632, 40
        %v3042 = vpop.permute.xlu0 %3041
        %3043 = vrot.lane.b32.xlu0 %v635, 40
        %v3044 = vpop.permute.xlu0 %3043
        %3045 = vrot.lane.b32.xlu0 %v638, 40
        %v3046 = vpop.permute.xlu0 %3045
        %3047 = vrot.lane.b32.xlu0 %v641, 40
        %v3048 = vpop.permute.xlu0 %3047
        %3049 = vrot.lane.b32.xlu0 %v644, 40
        %v3050 = vpop.permute.xlu0 %3049
        %3051 = vrot.lane.b32.xlu0 %v647, 40
        %v3052 = vpop.permute.xlu0 %3051
        %3053 = vrot.lane.b32.xlu0 %v650, 40
        %v3054 = vpop.permute.xlu0 %3053
        %3055 = vrot.lane.b32.xlu0 %v653, 40
        %v3056 = vpop.permute.xlu0 %3055
        %3057 = vrot.lane.b32.xlu0 %v656, 40
        %v3058 = vpop.permute.xlu0 %3057
        %3059 = vrot.lane.b32.xlu0 %v659, 40
        %v3060 = vpop.permute.xlu0 %3059
        %3061 = vrot.lane.b32.xlu0 %v662, 40
        %v3062 = vpop.permute.xlu0 %3061
        %3063 = vrot.lane.b32.xlu0 %v665, 40
        %v3064 = vpop.permute.xlu0 %3063
        %3065 = vrot.lane.b32.xlu0 %v668, 40
        %v3066 = vpop.permute.xlu0 %3065
        %3067 = vrot.lane.b32.xlu0 %v671, 40
        %v3068 = vpop.permute.xlu0 %3067
        %3069 = vrot.lane.b32.xlu0 %v674, 40
        %v3070 = vpop.permute.xlu0 %3069
        %3071 = vrot.lane.b32.xlu0 %v677, 40
        %v3072 = vpop.permute.xlu0 %3071
        %3073 = vrot.lane.b32.xlu0 %v680, 40
        %v3074 = vpop.permute.xlu0 %3073
        %3075 = vrot.lane.b32.xlu0 %v683, 40
        %v3076 = vpop.permute.xlu0 %3075
        %3077 = vrot.lane.b32.xlu0 %v686, 40
        %v3078 = vpop.permute.xlu0 %3077
        %3079 = vrot.lane.b32.xlu0 %v689, 40
        %v3080 = vpop.permute.xlu0 %3079
        %3081 = vrot.lane.b32.xlu0 %v692, 40
        %v3082 = vpop.permute.xlu0 %3081
        %3083 = vrot.lane.b32.xlu0 %v695, 40
        %v3084 = vpop.permute.xlu0 %3083
        %3085 = vrot.lane.b32.xlu0 %v698, 40
        %v3086 = vpop.permute.xlu0 %3085
        %3087 = vrot.lane.b32.xlu0 %v701, 40
        %v3088 = vpop.permute.xlu0 %3087
        %3089 = vrot.lane.b32.xlu0 %v704, 40
        %v3090 = vpop.permute.xlu0 %3089
        %3091 = vrot.lane.b32.xlu0 %v707, 40
        %v3092 = vpop.permute.xlu0 %3091
        %3093 = vrot.lane.b32.xlu0 %v1047, 40
        %v3094 = vpop.permute.xlu0 %3093
        %3095 = vrot.lane.b32.xlu0 %v1050, 40
        %v3096 = vpop.permute.xlu0 %3095
        %3097 = vrot.lane.b32.xlu0 %v1053, 40
        %v3098 = vpop.permute.xlu0 %3097
        %3099 = vrot.lane.b32.xlu0 %v1056, 40
        %v3100 = vpop.permute.xlu0 %3099
        %3101 = vrot.lane.b32.xlu0 %v1059, 40
        %v3102 = vpop.permute.xlu0 %3101
        %3103 = vrot.lane.b32.xlu0 %v1062, 40
        %v3104 = vpop.permute.xlu0 %3103
        %3105 = vrot.lane.b32.xlu0 %v1065, 40
        %v3106 = vpop.permute.xlu0 %3105
        %3107 = vrot.lane.b32.xlu0 %v1068, 40
        %v3108 = vpop.permute.xlu0 %3107
        %3173 = vrot.lane.b32.xlu0 %v735, 44
        %v3174 = vpop.permute.xlu0 %3173
        %3175 = vrot.lane.b32.xlu0 %v738, 44
        %v3176 = vpop.permute.xlu0 %3175
        %3177 = vrot.lane.b32.xlu0 %v741, 44
        %v3178 = vpop.permute.xlu0 %3177
        %3179 = vrot.lane.b32.xlu0 %v744, 44
        %v3180 = vpop.permute.xlu0 %3179
        %3181 = vrot.lane.b32.xlu0 %v747, 44
        %v3182 = vpop.permute.xlu0 %3181
        %3183 = vrot.lane.b32.xlu0 %v750, 44
        %v3184 = vpop.permute.xlu0 %3183
        %3185 = vrot.lane.b32.xlu0 %v753, 44
        %v3186 = vpop.permute.xlu0 %3185
        %3187 = vrot.lane.b32.xlu0 %v756, 44
        %v3188 = vpop.permute.xlu0 %3187
        %3189 = vrot.lane.b32.xlu0 %v759, 44
        %v3190 = vpop.permute.xlu0 %3189
        %3191 = vrot.lane.b32.xlu0 %v762, 44
        %v3192 = vpop.permute.xlu0 %3191
        %3193 = vrot.lane.b32.xlu0 %v765, 44
        %v3194 = vpop.permute.xlu0 %3193
        %3195 = vrot.lane.b32.xlu0 %v768, 44
        %v3196 = vpop.permute.xlu0 %3195
        %3197 = vrot.lane.b32.xlu0 %v771, 44
        %v3198 = vpop.permute.xlu0 %3197
        %3199 = vrot.lane.b32.xlu0 %v774, 44
        %v3200 = vpop.permute.xlu0 %3199
        %3201 = vrot.lane.b32.xlu0 %v777, 44
        %v3202 = vpop.permute.xlu0 %3201
        %3203 = vrot.lane.b32.xlu0 %v780, 44
        %v3204 = vpop.permute.xlu0 %3203
        %3205 = vrot.lane.b32.xlu0 %v783, 44
        %v3206 = vpop.permute.xlu0 %3205
        %3207 = vrot.lane.b32.xlu0 %v786, 44
        %v3208 = vpop.permute.xlu0 %3207
        %3209 = vrot.lane.b32.xlu0 %v789, 44
        %v3210 = vpop.permute.xlu0 %3209
        %3211 = vrot.lane.b32.xlu0 %v792, 44
        %v3212 = vpop.permute.xlu0 %3211
        %3213 = vrot.lane.b32.xlu0 %v795, 44
        %v3214 = vpop.permute.xlu0 %3213
        %3215 = vrot.lane.b32.xlu0 %v798, 44
        %v3216 = vpop.permute.xlu0 %3215
        %3217 = vrot.lane.b32.xlu0 %v801, 44
        %v3218 = vpop.permute.xlu0 %3217
        %3219 = vrot.lane.b32.xlu0 %v804, 44
        %v3220 = vpop.permute.xlu0 %3219
        %3221 = vrot.lane.b32.xlu0 %v807, 44
        %v3222 = vpop.permute.xlu0 %3221
        %3223 = vrot.lane.b32.xlu0 %v810, 44
        %v3224 = vpop.permute.xlu0 %3223
        %3225 = vrot.lane.b32.xlu0 %v813, 44
        %v3226 = vpop.permute.xlu0 %3225
        %3227 = vrot.lane.b32.xlu0 %v816, 44
        %v3228 = vpop.permute.xlu0 %3227
        %3229 = vrot.lane.b32.xlu0 %v819, 44
        %v3230 = vpop.permute.xlu0 %3229
        %3231 = vrot.lane.b32.xlu0 %v822, 44
        %v3232 = vpop.permute.xlu0 %3231
        %3233 = vrot.lane.b32.xlu0 %v825, 44
        %v3234 = vpop.permute.xlu0 %3233
        %3235 = vrot.lane.b32.xlu0 %v828, 44
        %v3236 = vpop.permute.xlu0 %3235
        %3237 = vrot.lane.b32.xlu0 %v831, 44
        %v3238 = vpop.permute.xlu0 %3237
        %3239 = vrot.lane.b32.xlu0 %v834, 44
        %v3240 = vpop.permute.xlu0 %3239
        %3241 = vrot.lane.b32.xlu0 %v837, 44
        %v3242 = vpop.permute.xlu0 %3241
        %3243 = vrot.lane.b32.xlu0 %v840, 44
        %v3244 = vpop.permute.xlu0 %3243
        %3245 = vrot.lane.b32.xlu0 %v843, 44
        %v3246 = vpop.permute.xlu0 %3245
        %3247 = vrot.lane.b32.xlu0 %v846, 44
        %v3248 = vpop.permute.xlu0 %3247
        %3249 = vrot.lane.b32.xlu0 %v849, 44
        %v3250 = vpop.permute.xlu0 %3249
        %3251 = vrot.lane.b32.xlu0 %v852, 44
        %v3252 = vpop.permute.xlu0 %3251
        %3253 = vrot.lane.b32.xlu0 %v855, 44
        %v3254 = vpop.permute.xlu0 %3253
        %3255 = vrot.lane.b32.xlu0 %v858, 44
        %v3256 = vpop.permute.xlu0 %3255
        %3257 = vrot.lane.b32.xlu0 %v861, 44
        %v3258 = vpop.permute.xlu0 %3257
        %3259 = vrot.lane.b32.xlu0 %v864, 44
        %v3260 = vpop.permute.xlu0 %3259
        %3261 = vrot.lane.b32.xlu0 %v867, 44
        %v3262 = vpop.permute.xlu0 %3261
        %3263 = vrot.lane.b32.xlu0 %v870, 44
        %v3264 = vpop.permute.xlu0 %3263
        %3265 = vrot.lane.b32.xlu0 %v873, 44
        %v3266 = vpop.permute.xlu0 %3265
        %3267 = vrot.lane.b32.xlu0 %v876, 44
        %v3268 = vpop.permute.xlu0 %3267
        %3269 = vrot.lane.b32.xlu0 %v879, 44
        %v3270 = vpop.permute.xlu0 %3269
        %3271 = vrot.lane.b32.xlu0 %v882, 44
        %v3272 = vpop.permute.xlu0 %3271
        %3273 = vrot.lane.b32.xlu0 %v885, 44
        %v3274 = vpop.permute.xlu0 %3273
        %3275 = vrot.lane.b32.xlu0 %v888, 44
        %v3276 = vpop.permute.xlu0 %3275
        %3277 = vrot.lane.b32.xlu0 %v891, 44
        %v3278 = vpop.permute.xlu0 %3277
        %3279 = vrot.lane.b32.xlu0 %v894, 44
        %v3280 = vpop.permute.xlu0 %3279
        %3281 = vrot.lane.b32.xlu0 %v897, 44
        %v3282 = vpop.permute.xlu0 %3281
        %3283 = vrot.lane.b32.xlu0 %v900, 44
        %v3284 = vpop.permute.xlu0 %3283
        %3285 = vrot.lane.b32.xlu0 %v1071, 44
        %v3286 = vpop.permute.xlu0 %3285
        %3287 = vrot.lane.b32.xlu0 %v1074, 44
        %v3288 = vpop.permute.xlu0 %3287
        %3289 = vrot.lane.b32.xlu0 %v1077, 44
        %v3290 = vpop.permute.xlu0 %3289
        %3291 = vrot.lane.b32.xlu0 %v1080, 44
        %v3292 = vpop.permute.xlu0 %3291
        %3293 = vrot.lane.b32.xlu0 %v1083, 44
        %v3294 = vpop.permute.xlu0 %3293
        %3295 = vrot.lane.b32.xlu0 %v1086, 44
        %v3296 = vpop.permute.xlu0 %3295
        %3297 = vrot.lane.b32.xlu0 %v1089, 44
        %v3298 = vpop.permute.xlu0 %3297
        %3299 = vrot.lane.b32.xlu0 %v1092, 44
        %v3300 = vpop.permute.xlu0 %3299
        %3365 = vrot.lane.b32.xlu0 %v209, 48
        %v3366 = vpop.permute.xlu0 %3365
        %3367 = vrot.lane.b32.xlu0 %v211, 48
        %v3368 = vpop.permute.xlu0 %3367
        %3369 = vrot.lane.b32.xlu0 %v213, 48
        %v3370 = vpop.permute.xlu0 %3369
        %3371 = vrot.lane.b32.xlu0 %v215, 48
        %v3372 = vpop.permute.xlu0 %3371
        %3373 = vrot.lane.b32.xlu0 %v217, 48
        %v3374 = vpop.permute.xlu0 %3373
        %3375 = vrot.lane.b32.xlu0 %v219, 48
        %v3376 = vpop.permute.xlu0 %3375
        %3377 = vrot.lane.b32.xlu0 %v221, 48
        %v3378 = vpop.permute.xlu0 %3377
        %3379 = vrot.lane.b32.xlu0 %v223, 48
        %v3380 = vpop.permute.xlu0 %3379
        %3381 = vrot.lane.b32.xlu0 %v229, 48
        %v3382 = vpop.permute.xlu0 %3381
        %3383 = vrot.lane.b32.xlu0 %v231, 48
        %v3384 = vpop.permute.xlu0 %3383
        %3385 = vrot.lane.b32.xlu0 %v233, 48
        %v3386 = vpop.permute.xlu0 %3385
        %3387 = vrot.lane.b32.xlu0 %v235, 48
        %v3388 = vpop.permute.xlu0 %3387
        %3389 = vrot.lane.b32.xlu0 %v237, 48
        %v3390 = vpop.permute.xlu0 %3389
        %3391 = vrot.lane.b32.xlu0 %v239, 48
        %v3392 = vpop.permute.xlu0 %3391
        %3393 = vrot.lane.b32.xlu0 %v241, 48
        %v3394 = vpop.permute.xlu0 %3393
        %3395 = vrot.lane.b32.xlu0 %v243, 48
        %v3396 = vpop.permute.xlu0 %3395
        %3397 = vrot.lane.b32.xlu0 %v249, 48
        %v3398 = vpop.permute.xlu0 %3397
        %3399 = vrot.lane.b32.xlu0 %v251, 48
        %v3400 = vpop.permute.xlu0 %3399
        %3401 = vrot.lane.b32.xlu0 %v253, 48
        %v3402 = vpop.permute.xlu0 %3401
        %3403 = vrot.lane.b32.xlu0 %v255, 48
        %v3404 = vpop.permute.xlu0 %3403
        %3405 = vrot.lane.b32.xlu0 %v257, 48
        %v3406 = vpop.permute.xlu0 %3405
        %3407 = vrot.lane.b32.xlu0 %v259, 48
        %v3408 = vpop.permute.xlu0 %3407
        %3409 = vrot.lane.b32.xlu0 %v261, 48
        %v3410 = vpop.permute.xlu0 %3409
        %3411 = vrot.lane.b32.xlu0 %v263, 48
        %v3412 = vpop.permute.xlu0 %3411
        %3413 = vrot.lane.b32.xlu0 %v269, 48
        %v3414 = vpop.permute.xlu0 %3413
        %3415 = vrot.lane.b32.xlu0 %v271, 48
        %v3416 = vpop.permute.xlu0 %3415
        %3417 = vrot.lane.b32.xlu0 %v273, 48
        %v3418 = vpop.permute.xlu0 %3417
        %3419 = vrot.lane.b32.xlu0 %v275, 48
        %v3420 = vpop.permute.xlu0 %3419
        %3421 = vrot.lane.b32.xlu0 %v277, 48
        %v3422 = vpop.permute.xlu0 %3421
        %3423 = vrot.lane.b32.xlu0 %v279, 48
        %v3424 = vpop.permute.xlu0 %3423
        %3425 = vrot.lane.b32.xlu0 %v281, 48
        %v3426 = vpop.permute.xlu0 %3425
        %3427 = vrot.lane.b32.xlu0 %v283, 48
        %v3428 = vpop.permute.xlu0 %3427
        %3429 = vrot.lane.b32.xlu0 %v289, 48
        %v3430 = vpop.permute.xlu0 %3429
        %3431 = vrot.lane.b32.xlu0 %v291, 48
        %v3432 = vpop.permute.xlu0 %3431
        %3433 = vrot.lane.b32.xlu0 %v293, 48
        %v3434 = vpop.permute.xlu0 %3433
        %3435 = vrot.lane.b32.xlu0 %v295, 48
        %v3436 = vpop.permute.xlu0 %3435
        %3437 = vrot.lane.b32.xlu0 %v297, 48
        %v3438 = vpop.permute.xlu0 %3437
        %3439 = vrot.lane.b32.xlu0 %v299, 48
        %v3440 = vpop.permute.xlu0 %3439
        %3441 = vrot.lane.b32.xlu0 %v301, 48
        %v3442 = vpop.permute.xlu0 %3441
        %3443 = vrot.lane.b32.xlu0 %v303, 48
        %v3444 = vpop.permute.xlu0 %3443
        %3445 = vrot.lane.b32.xlu0 %v309, 48
        %v3446 = vpop.permute.xlu0 %3445
        %3447 = vrot.lane.b32.xlu0 %v311, 48
        %v3448 = vpop.permute.xlu0 %3447
        %3449 = vrot.lane.b32.xlu0 %v313, 48
        %v3450 = vpop.permute.xlu0 %3449
        %3451 = vrot.lane.b32.xlu0 %v315, 48
        %v3452 = vpop.permute.xlu0 %3451
        %3453 = vrot.lane.b32.xlu0 %v317, 48
        %v3454 = vpop.permute.xlu0 %3453
        %3455 = vrot.lane.b32.xlu0 %v319, 48
        %v3456 = vpop.permute.xlu0 %3455
        %3457 = vrot.lane.b32.xlu0 %v321, 48
        %v3458 = vpop.permute.xlu0 %3457
        %3459 = vrot.lane.b32.xlu0 %v323, 48
        %v3460 = vpop.permute.xlu0 %3459
        %3461 = vrot.lane.b32.xlu0 %v329, 48
        %v3462 = vpop.permute.xlu0 %3461
        %3463 = vrot.lane.b32.xlu0 %v331, 48
        %v3464 = vpop.permute.xlu0 %3463
        %3465 = vrot.lane.b32.xlu0 %v333, 48
        %v3466 = vpop.permute.xlu0 %3465
        %3467 = vrot.lane.b32.xlu0 %v335, 48
        %v3468 = vpop.permute.xlu0 %3467
        %3469 = vrot.lane.b32.xlu0 %v337, 48
        %v3470 = vpop.permute.xlu0 %3469
        %3471 = vrot.lane.b32.xlu0 %v339, 48
        %v3472 = vpop.permute.xlu0 %3471
        %3473 = vrot.lane.b32.xlu0 %v341, 48
        %v3474 = vpop.permute.xlu0 %3473
        %3475 = vrot.lane.b32.xlu0 %v343, 48
        %v3476 = vpop.permute.xlu0 %3475
        %3477 = vrot.lane.b32.xlu0 %v349, 48
        %v3478 = vpop.permute.xlu0 %3477
        %3479 = vrot.lane.b32.xlu0 %v351, 48
        %v3480 = vpop.permute.xlu0 %3479
        %3481 = vrot.lane.b32.xlu0 %v353, 48
        %v3482 = vpop.permute.xlu0 %3481
        %3483 = vrot.lane.b32.xlu0 %v355, 48
        %v3484 = vpop.permute.xlu0 %3483
        %3485 = vrot.lane.b32.xlu0 %v357, 48
        %v3486 = vpop.permute.xlu0 %3485
        %3487 = vrot.lane.b32.xlu0 %v359, 48
        %v3488 = vpop.permute.xlu0 %3487
        %3489 = vrot.lane.b32.xlu0 %v361, 48
        %v3490 = vpop.permute.xlu0 %3489
        %3491 = vrot.lane.b32.xlu0 %v363, 48
        %v3492 = vpop.permute.xlu0 %3491
        %3557 = vrot.lane.b32.xlu0 %v545, 52
        %v3558 = vpop.permute.xlu0 %3557
        %3559 = vrot.lane.b32.xlu0 %v548, 52
        %v3560 = vpop.permute.xlu0 %3559
        %3561 = vrot.lane.b32.xlu0 %v551, 52
        %v3562 = vpop.permute.xlu0 %3561
        %3563 = vrot.lane.b32.xlu0 %v554, 52
        %v3564 = vpop.permute.xlu0 %3563
        %3565 = vrot.lane.b32.xlu0 %v557, 52
        %v3566 = vpop.permute.xlu0 %3565
        %3567 = vrot.lane.b32.xlu0 %v560, 52
        %v3568 = vpop.permute.xlu0 %3567
        %3569 = vrot.lane.b32.xlu0 %v563, 52
        %v3570 = vpop.permute.xlu0 %3569
        %3571 = vrot.lane.b32.xlu0 %v922, 52
        %v3572 = vpop.permute.xlu0 %3571
        %3573 = vrot.lane.b32.xlu0 %v569, 52
        %v3574 = vpop.permute.xlu0 %3573
        %3575 = vrot.lane.b32.xlu0 %v572, 52
        %v3576 = vpop.permute.xlu0 %3575
        %3577 = vrot.lane.b32.xlu0 %v575, 52
        %v3578 = vpop.permute.xlu0 %3577
        %3579 = vrot.lane.b32.xlu0 %v578, 52
        %v3580 = vpop.permute.xlu0 %3579
        %3581 = vrot.lane.b32.xlu0 %v581, 52
        %v3582 = vpop.permute.xlu0 %3581
        %3583 = vrot.lane.b32.xlu0 %v584, 52
        %v3584 = vpop.permute.xlu0 %3583
        %3585 = vrot.lane.b32.xlu0 %v587, 52
        %v3586 = vpop.permute.xlu0 %3585
        %3587 = vrot.lane.b32.xlu0 %v925, 52
        %v3588 = vpop.permute.xlu0 %3587
        %3589 = vrot.lane.b32.xlu0 %v593, 52
        %v3590 = vpop.permute.xlu0 %3589
        %3591 = vrot.lane.b32.xlu0 %v596, 52
        %v3592 = vpop.permute.xlu0 %3591
        %3593 = vrot.lane.b32.xlu0 %v599, 52
        %v3594 = vpop.permute.xlu0 %3593
        %3595 = vrot.lane.b32.xlu0 %v602, 52
        %v3596 = vpop.permute.xlu0 %3595
        %3597 = vrot.lane.b32.xlu0 %v605, 52
        %v3598 = vpop.permute.xlu0 %3597
        %3599 = vrot.lane.b32.xlu0 %v608, 52
        %v3600 = vpop.permute.xlu0 %3599
        %3601 = vrot.lane.b32.xlu0 %v611, 52
        %v3602 = vpop.permute.xlu0 %3601
        %3603 = vrot.lane.b32.xlu0 %v928, 52
        %v3604 = vpop.permute.xlu0 %3603
        %3605 = vrot.lane.b32.xlu0 %v617, 52
        %v3606 = vpop.permute.xlu0 %3605
        %3607 = vrot.lane.b32.xlu0 %v620, 52
        %v3608 = vpop.permute.xlu0 %3607
        %3609 = vrot.lane.b32.xlu0 %v623, 52
        %v3610 = vpop.permute.xlu0 %3609
        %3611 = vrot.lane.b32.xlu0 %v626, 52
        %v3612 = vpop.permute.xlu0 %3611
        %3613 = vrot.lane.b32.xlu0 %v629, 52
        %v3614 = vpop.permute.xlu0 %3613
        %3615 = vrot.lane.b32.xlu0 %v632, 52
        %v3616 = vpop.permute.xlu0 %3615
        %3617 = vrot.lane.b32.xlu0 %v635, 52
        %v3618 = vpop.permute.xlu0 %3617
        %3619 = vrot.lane.b32.xlu0 %v931, 52
        %v3620 = vpop.permute.xlu0 %3619
        %3621 = vrot.lane.b32.xlu0 %v641, 52
        %v3622 = vpop.permute.xlu0 %3621
        %3623 = vrot.lane.b32.xlu0 %v644, 52
        %v3624 = vpop.permute.xlu0 %3623
        %3625 = vrot.lane.b32.xlu0 %v647, 52
        %v3626 = vpop.permute.xlu0 %3625
        %3627 = vrot.lane.b32.xlu0 %v650, 52
        %v3628 = vpop.permute.xlu0 %3627
        %3629 = vrot.lane.b32.xlu0 %v653, 52
        %v3630 = vpop.permute.xlu0 %3629
        %3631 = vrot.lane.b32.xlu0 %v656, 52
        %v3632 = vpop.permute.xlu0 %3631
        %3633 = vrot.lane.b32.xlu0 %v659, 52
        %v3634 = vpop.permute.xlu0 %3633
        %3635 = vrot.lane.b32.xlu0 %v934, 52
        %v3636 = vpop.permute.xlu0 %3635
        %3637 = vrot.lane.b32.xlu0 %v665, 52
        %v3638 = vpop.permute.xlu0 %3637
        %3639 = vrot.lane.b32.xlu0 %v668, 52
        %v3640 = vpop.permute.xlu0 %3639
        %3641 = vrot.lane.b32.xlu0 %v671, 52
        %v3642 = vpop.permute.xlu0 %3641
        %3643 = vrot.lane.b32.xlu0 %v674, 52
        %v3644 = vpop.permute.xlu0 %3643
        %3645 = vrot.lane.b32.xlu0 %v677, 52
        %v3646 = vpop.permute.xlu0 %3645
        %3647 = vrot.lane.b32.xlu0 %v680, 52
        %v3648 = vpop.permute.xlu0 %3647
        %3649 = vrot.lane.b32.xlu0 %v683, 52
        %v3650 = vpop.permute.xlu0 %3649
        %3651 = vrot.lane.b32.xlu0 %v937, 52
        %v3652 = vpop.permute.xlu0 %3651
        %3653 = vrot.lane.b32.xlu0 %v689, 52
        %v3654 = vpop.permute.xlu0 %3653
        %3655 = vrot.lane.b32.xlu0 %v692, 52
        %v3656 = vpop.permute.xlu0 %3655
        %3657 = vrot.lane.b32.xlu0 %v695, 52
        %v3658 = vpop.permute.xlu0 %3657
        %3659 = vrot.lane.b32.xlu0 %v698, 52
        %v3660 = vpop.permute.xlu0 %3659
        %3661 = vrot.lane.b32.xlu0 %v701, 52
        %v3662 = vpop.permute.xlu0 %3661
        %3663 = vrot.lane.b32.xlu0 %v704, 52
        %v3664 = vpop.permute.xlu0 %3663
        %3665 = vrot.lane.b32.xlu0 %v707, 52
        %v3666 = vpop.permute.xlu0 %3665
        %3667 = vrot.lane.b32.xlu0 %v940, 52
        %v3668 = vpop.permute.xlu0 %3667
        %3669 = vrot.lane.b32.xlu0 %v1050, 52
        %v3670 = vpop.permute.xlu0 %3669
        %3671 = vrot.lane.b32.xlu0 %v1053, 52
        %v3672 = vpop.permute.xlu0 %3671
        %3673 = vrot.lane.b32.xlu0 %v1056, 52
        %v3674 = vpop.permute.xlu0 %3673
        %3675 = vrot.lane.b32.xlu0 %v1059, 52
        %v3676 = vpop.permute.xlu0 %3675
        %3677 = vrot.lane.b32.xlu0 %v1062, 52
        %v3678 = vpop.permute.xlu0 %3677
        %3679 = vrot.lane.b32.xlu0 %v1065, 52
        %v3680 = vpop.permute.xlu0 %3679
        %3681 = vrot.lane.b32.xlu0 %v1068, 52
        %v3682 = vpop.permute.xlu0 %3681
        %3683 = vrot.lane.b32.xlu0 %v1097, 52
        %v3684 = vpop.permute.xlu0 %3683
        %3749 = vrot.lane.b32.xlu0 %v738, 56
        %v3750 = vpop.permute.xlu0 %3749
        %3751 = vrot.lane.b32.xlu0 %v741, 56
        %v3752 = vpop.permute.xlu0 %3751
        %3753 = vrot.lane.b32.xlu0 %v744, 56
        %v3754 = vpop.permute.xlu0 %3753
        %3755 = vrot.lane.b32.xlu0 %v747, 56
        %v3756 = vpop.permute.xlu0 %3755
        %3757 = vrot.lane.b32.xlu0 %v750, 56
        %v3758 = vpop.permute.xlu0 %3757
        %3759 = vrot.lane.b32.xlu0 %v753, 56
        %v3760 = vpop.permute.xlu0 %3759
        %3761 = vrot.lane.b32.xlu0 %v756, 56
        %v3762 = vpop.permute.xlu0 %3761
        %3763 = vrot.lane.b32.xlu0 %v946, 56
        %v3764 = vpop.permute.xlu0 %3763
        %3765 = vrot.lane.b32.xlu0 %v762, 56
        %v3766 = vpop.permute.xlu0 %3765
        %3767 = vrot.lane.b32.xlu0 %v765, 56
        %v3768 = vpop.permute.xlu0 %3767
        %3769 = vrot.lane.b32.xlu0 %v768, 56
        %v3770 = vpop.permute.xlu0 %3769
        %3771 = vrot.lane.b32.xlu0 %v771, 56
        %v3772 = vpop.permute.xlu0 %3771
        %3773 = vrot.lane.b32.xlu0 %v774, 56
        %v3774 = vpop.permute.xlu0 %3773
        %3775 = vrot.lane.b32.xlu0 %v777, 56
        %v3776 = vpop.permute.xlu0 %3775
        %3777 = vrot.lane.b32.xlu0 %v780, 56
        %v3778 = vpop.permute.xlu0 %3777
        %3779 = vrot.lane.b32.xlu0 %v949, 56
        %v3780 = vpop.permute.xlu0 %3779
        %3781 = vrot.lane.b32.xlu0 %v786, 56
        %v3782 = vpop.permute.xlu0 %3781
        %3783 = vrot.lane.b32.xlu0 %v789, 56
        %v3784 = vpop.permute.xlu0 %3783
        %3785 = vrot.lane.b32.xlu0 %v792, 56
        %v3786 = vpop.permute.xlu0 %3785
        %3787 = vrot.lane.b32.xlu0 %v795, 56
        %v3788 = vpop.permute.xlu0 %3787
        %3789 = vrot.lane.b32.xlu0 %v798, 56
        %v3790 = vpop.permute.xlu0 %3789
        %3791 = vrot.lane.b32.xlu0 %v801, 56
        %v3792 = vpop.permute.xlu0 %3791
        %3793 = vrot.lane.b32.xlu0 %v804, 56
        %v3794 = vpop.permute.xlu0 %3793
        %3795 = vrot.lane.b32.xlu0 %v952, 56
        %v3796 = vpop.permute.xlu0 %3795
        %3797 = vrot.lane.b32.xlu0 %v810, 56
        %v3798 = vpop.permute.xlu0 %3797
        %3799 = vrot.lane.b32.xlu0 %v813, 56
        %v3800 = vpop.permute.xlu0 %3799
        %3801 = vrot.lane.b32.xlu0 %v816, 56
        %v3802 = vpop.permute.xlu0 %3801
        %3803 = vrot.lane.b32.xlu0 %v819, 56
        %v3804 = vpop.permute.xlu0 %3803
        %3805 = vrot.lane.b32.xlu0 %v822, 56
        %v3806 = vpop.permute.xlu0 %3805
        %3807 = vrot.lane.b32.xlu0 %v825, 56
        %v3808 = vpop.permute.xlu0 %3807
        %3809 = vrot.lane.b32.xlu0 %v828, 56
        %v3810 = vpop.permute.xlu0 %3809
        %3811 = vrot.lane.b32.xlu0 %v955, 56
        %v3812 = vpop.permute.xlu0 %3811
        %3813 = vrot.lane.b32.xlu0 %v834, 56
        %v3814 = vpop.permute.xlu0 %3813
        %3815 = vrot.lane.b32.xlu0 %v837, 56
        %v3816 = vpop.permute.xlu0 %3815
        %3817 = vrot.lane.b32.xlu0 %v840, 56
        %v3818 = vpop.permute.xlu0 %3817
        %3819 = vrot.lane.b32.xlu0 %v843, 56
        %v3820 = vpop.permute.xlu0 %3819
        %3821 = vrot.lane.b32.xlu0 %v846, 56
        %v3822 = vpop.permute.xlu0 %3821
        %3823 = vrot.lane.b32.xlu0 %v849, 56
        %v3824 = vpop.permute.xlu0 %3823
        %3825 = vrot.lane.b32.xlu0 %v852, 56
        %v3826 = vpop.permute.xlu0 %3825
        %3827 = vrot.lane.b32.xlu0 %v958, 56
        %v3828 = vpop.permute.xlu0 %3827
        %3829 = vrot.lane.b32.xlu0 %v858, 56
        %v3830 = vpop.permute.xlu0 %3829
        %3831 = vrot.lane.b32.xlu0 %v861, 56
        %v3832 = vpop.permute.xlu0 %3831
        %3833 = vrot.lane.b32.xlu0 %v864, 56
        %v3834 = vpop.permute.xlu0 %3833
        %3835 = vrot.lane.b32.xlu0 %v867, 56
        %v3836 = vpop.permute.xlu0 %3835
        %3837 = vrot.lane.b32.xlu0 %v870, 56
        %v3838 = vpop.permute.xlu0 %3837
        %3839 = vrot.lane.b32.xlu0 %v873, 56
        %v3840 = vpop.permute.xlu0 %3839
        %3841 = vrot.lane.b32.xlu0 %v876, 56
        %v3842 = vpop.permute.xlu0 %3841
        %3843 = vrot.lane.b32.xlu0 %v961, 56
        %v3844 = vpop.permute.xlu0 %3843
        %3845 = vrot.lane.b32.xlu0 %v882, 56
        %v3846 = vpop.permute.xlu0 %3845
        %3847 = vrot.lane.b32.xlu0 %v885, 56
        %v3848 = vpop.permute.xlu0 %3847
        %3849 = vrot.lane.b32.xlu0 %v888, 56
        %v3850 = vpop.permute.xlu0 %3849
        %3851 = vrot.lane.b32.xlu0 %v891, 56
        %v3852 = vpop.permute.xlu0 %3851
        %3853 = vrot.lane.b32.xlu0 %v894, 56
        %v3854 = vpop.permute.xlu0 %3853
        %3855 = vrot.lane.b32.xlu0 %v897, 56
        %v3856 = vpop.permute.xlu0 %3855
        %3857 = vrot.lane.b32.xlu0 %v900, 56
        %v3858 = vpop.permute.xlu0 %3857
        %3859 = vrot.lane.b32.xlu0 %v964, 56
        %v3860 = vpop.permute.xlu0 %3859
        %3861 = vrot.lane.b32.xlu0 %v1074, 56
        %v3862 = vpop.permute.xlu0 %3861
        %3863 = vrot.lane.b32.xlu0 %v1077, 56
        %v3864 = vpop.permute.xlu0 %3863
        %3865 = vrot.lane.b32.xlu0 %v1080, 56
        %v3866 = vpop.permute.xlu0 %3865
        %3867 = vrot.lane.b32.xlu0 %v1083, 56
        %v3868 = vpop.permute.xlu0 %3867
        %3869 = vrot.lane.b32.xlu0 %v1086, 56
        %v3870 = vpop.permute.xlu0 %3869
        %3871 = vrot.lane.b32.xlu0 %v1089, 56
        %v3872 = vpop.permute.xlu0 %3871
        %3873 = vrot.lane.b32.xlu0 %v1092, 56
        %v3874 = vpop.permute.xlu0 %3873
        %3875 = vrot.lane.b32.xlu0 %v1100, 56
        %v3876 = vpop.permute.xlu0 %3875
        %3941 = vrot.lane.b32.xlu0 %v211, 60
        %v3942 = vpop.permute.xlu0 %3941
        %3943 = vrot.lane.b32.xlu0 %v213, 60
        %v3944 = vpop.permute.xlu0 %3943
        %3945 = vrot.lane.b32.xlu0 %v215, 60
        %v3946 = vpop.permute.xlu0 %3945
        %3947 = vrot.lane.b32.xlu0 %v217, 60
        %v3948 = vpop.permute.xlu0 %3947
        %3949 = vrot.lane.b32.xlu0 %v219, 60
        %v3950 = vpop.permute.xlu0 %3949
        %3951 = vrot.lane.b32.xlu0 %v221, 60
        %v3952 = vpop.permute.xlu0 %3951
        %3953 = vrot.lane.b32.xlu0 %v223, 60
        %v3954 = vpop.permute.xlu0 %3953
        %3955 = vrot.lane.b32.xlu0 %v225, 60
        %v3956 = vpop.permute.xlu0 %3955
        %3957 = vrot.lane.b32.xlu0 %v231, 60
        %v3958 = vpop.permute.xlu0 %3957
        %3959 = vrot.lane.b32.xlu0 %v233, 60
        %v3960 = vpop.permute.xlu0 %3959
        %3961 = vrot.lane.b32.xlu0 %v235, 60
        %v3962 = vpop.permute.xlu0 %3961
        %3963 = vrot.lane.b32.xlu0 %v237, 60
        %v3964 = vpop.permute.xlu0 %3963
        %3965 = vrot.lane.b32.xlu0 %v239, 60
        %v3966 = vpop.permute.xlu0 %3965
        %3967 = vrot.lane.b32.xlu0 %v241, 60
        %v3968 = vpop.permute.xlu0 %3967
        %3969 = vrot.lane.b32.xlu0 %v243, 60
        %v3970 = vpop.permute.xlu0 %3969
        %3971 = vrot.lane.b32.xlu0 %v245, 60
        %v3972 = vpop.permute.xlu0 %3971
        %3973 = vrot.lane.b32.xlu0 %v251, 60
        %v3974 = vpop.permute.xlu0 %3973
        %3975 = vrot.lane.b32.xlu0 %v253, 60
        %v3976 = vpop.permute.xlu0 %3975
        %3977 = vrot.lane.b32.xlu0 %v255, 60
        %v3978 = vpop.permute.xlu0 %3977
        %3979 = vrot.lane.b32.xlu0 %v257, 60
        %v3980 = vpop.permute.xlu0 %3979
        %3981 = vrot.lane.b32.xlu0 %v259, 60
        %v3982 = vpop.permute.xlu0 %3981
        %3983 = vrot.lane.b32.xlu0 %v261, 60
        %v3984 = vpop.permute.xlu0 %3983
        %3985 = vrot.lane.b32.xlu0 %v263, 60
        %v3986 = vpop.permute.xlu0 %3985
        %3987 = vrot.lane.b32.xlu0 %v265, 60
        %v3988 = vpop.permute.xlu0 %3987
        %3989 = vrot.lane.b32.xlu0 %v271, 60
        %v3990 = vpop.permute.xlu0 %3989
        %3991 = vrot.lane.b32.xlu0 %v273, 60
        %v3992 = vpop.permute.xlu0 %3991
        %3993 = vrot.lane.b32.xlu0 %v275, 60
        %v3994 = vpop.permute.xlu0 %3993
        %3995 = vrot.lane.b32.xlu0 %v277, 60
        %v3996 = vpop.permute.xlu0 %3995
        %3997 = vrot.lane.b32.xlu0 %v279, 60
        %v3998 = vpop.permute.xlu0 %3997
        %3999 = vrot.lane.b32.xlu0 %v281, 60
        %v4000 = vpop.permute.xlu0 %3999
        %4001 = vrot.lane.b32.xlu0 %v283, 60
        %v4002 = vpop.permute.xlu0 %4001
        %4003 = vrot.lane.b32.xlu0 %v285, 60
        %v4004 = vpop.permute.xlu0 %4003
        %4005 = vrot.lane.b32.xlu0 %v291, 60
        %v4006 = vpop.permute.xlu0 %4005
        %4007 = vrot.lane.b32.xlu0 %v293, 60
        %v4008 = vpop.permute.xlu0 %4007
        %4009 = vrot.lane.b32.xlu0 %v295, 60
        %v4010 = vpop.permute.xlu0 %4009
        %4011 = vrot.lane.b32.xlu0 %v297, 60
        %v4012 = vpop.permute.xlu0 %4011
        %4013 = vrot.lane.b32.xlu0 %v299, 60
        %v4014 = vpop.permute.xlu0 %4013
        %4015 = vrot.lane.b32.xlu0 %v301, 60
        %v4016 = vpop.permute.xlu0 %4015
        %4017 = vrot.lane.b32.xlu0 %v303, 60
        %v4018 = vpop.permute.xlu0 %4017
        %4019 = vrot.lane.b32.xlu0 %v305, 60
        %v4020 = vpop.permute.xlu0 %4019
        %4021 = vrot.lane.b32.xlu0 %v311, 60
        %v4022 = vpop.permute.xlu0 %4021
        %4023 = vrot.lane.b32.xlu0 %v313, 60
        %v4024 = vpop.permute.xlu0 %4023
        %4025 = vrot.lane.b32.xlu0 %v315, 60
        %v4026 = vpop.permute.xlu0 %4025
        %4027 = vrot.lane.b32.xlu0 %v317, 60
        %v4028 = vpop.permute.xlu0 %4027
        %4029 = vrot.lane.b32.xlu0 %v319, 60
        %v4030 = vpop.permute.xlu0 %4029
        %4031 = vrot.lane.b32.xlu0 %v321, 60
        %v4032 = vpop.permute.xlu0 %4031
        %4033 = vrot.lane.b32.xlu0 %v323, 60
        %v4034 = vpop.permute.xlu0 %4033
        %4035 = vrot.lane.b32.xlu0 %v325, 60
        %v4036 = vpop.permute.xlu0 %4035
        %4037 = vrot.lane.b32.xlu0 %v331, 60
        %v4038 = vpop.permute.xlu0 %4037
        %4039 = vrot.lane.b32.xlu0 %v333, 60
        %v4040 = vpop.permute.xlu0 %4039
        %4041 = vrot.lane.b32.xlu0 %v335, 60
        %v4042 = vpop.permute.xlu0 %4041
        %4043 = vrot.lane.b32.xlu0 %v337, 60
        %v4044 = vpop.permute.xlu0 %4043
        %4045 = vrot.lane.b32.xlu0 %v339, 60
        %v4046 = vpop.permute.xlu0 %4045
        %4047 = vrot.lane.b32.xlu0 %v341, 60
        %v4048 = vpop.permute.xlu0 %4047
        %4049 = vrot.lane.b32.xlu0 %v343, 60
        %v4050 = vpop.permute.xlu0 %4049
        %4051 = vrot.lane.b32.xlu0 %v345, 60
        %v4052 = vpop.permute.xlu0 %4051
        %4053 = vrot.lane.b32.xlu0 %v351, 60
        %v4054 = vpop.permute.xlu0 %4053
        %4055 = vrot.lane.b32.xlu0 %v353, 60
        %v4056 = vpop.permute.xlu0 %4055
        %4057 = vrot.lane.b32.xlu0 %v355, 60
        %v4058 = vpop.permute.xlu0 %4057
        %4059 = vrot.lane.b32.xlu0 %v357, 60
        %v4060 = vpop.permute.xlu0 %4059
        %4061 = vrot.lane.b32.xlu0 %v359, 60
        %v4062 = vpop.permute.xlu0 %4061
        %4063 = vrot.lane.b32.xlu0 %v361, 60
        %v4064 = vpop.permute.xlu0 %4063
        %4065 = vrot.lane.b32.xlu0 %v363, 60
        %v4066 = vpop.permute.xlu0 %4065
        %4067 = vrot.lane.b32.xlu0 %v365, 60
        %v4068 = vpop.permute.xlu0 %4067
        %vm4133 = vcmask 31744
        %v4134 = vsel %vm4133, %v187, %v1254
        %v4135 = vsel %vm4133, %v189, %v1256
        %v4136 = vsel %vm4133, %v191, %v1258
        %v4137 = vsel %vm4133, %v193, %v1260
        %v4138 = vsel %vm4133, %v195, %v1262
        %v4139 = vsel %vm4133, %v197, %v1264
        %v4140 = vsel %vm4133, %v199, %v1266
        %v4141 = vsel %vm4133, %v201, %v1268
        %v4142 = vsel %vm4133, %v207, %v1270
        %v4143 = vsel %vm4133, %v209, %v1272
        %v4144 = vsel %vm4133, %v211, %v1274
        %v4145 = vsel %vm4133, %v213, %v1276
        %v4146 = vsel %vm4133, %v215, %v1278
        %v4147 = vsel %vm4133, %v217, %v1280
        %v4148 = vsel %vm4133, %v219, %v1282
        %v4149 = vsel %vm4133, %v221, %v1284
        %v4150 = vsel %vm4133, %v227, %v1286
        %v4151 = vsel %vm4133, %v229, %v1288
        %v4152 = vsel %vm4133, %v231, %v1290
        %v4153 = vsel %vm4133, %v233, %v1292
        %v4154 = vsel %vm4133, %v235, %v1294
        %v4155 = vsel %vm4133, %v237, %v1296
        %v4156 = vsel %vm4133, %v239, %v1298
        %v4157 = vsel %vm4133, %v241, %v1300
        %v4158 = vsel %vm4133, %v247, %v1302
        %v4159 = vsel %vm4133, %v249, %v1304
        %v4160 = vsel %vm4133, %v251, %v1306
        %v4161 = vsel %vm4133, %v253, %v1308
        %v4162 = vsel %vm4133, %v255, %v1310
        %v4163 = vsel %vm4133, %v257, %v1312
        %v4164 = vsel %vm4133, %v259, %v1314
        %v4165 = vsel %vm4133, %v261, %v1316
        %v4166 = vsel %vm4133, %v267, %v1318
        %v4167 = vsel %vm4133, %v269, %v1320
        %v4168 = vsel %vm4133, %v271, %v1322
        %v4169 = vsel %vm4133, %v273, %v1324
        %v4170 = vsel %vm4133, %v275, %v1326
        %v4171 = vsel %vm4133, %v277, %v1328
        %v4172 = vsel %vm4133, %v279, %v1330
        %v4173 = vsel %vm4133, %v281, %v1332
        %v4174 = vsel %vm4133, %v287, %v1334
        %v4175 = vsel %vm4133, %v289, %v1336
        %v4176 = vsel %vm4133, %v291, %v1338
        %v4177 = vsel %vm4133, %v293, %v1340
        %v4178 = vsel %vm4133, %v295, %v1342
        %v4179 = vsel %vm4133, %v297, %v1344
        %v4180 = vsel %vm4133, %v299, %v1346
        %v4181 = vsel %vm4133, %v301, %v1348
        %v4182 = vsel %vm4133, %v307, %v1350
        %v4183 = vsel %vm4133, %v309, %v1352
        %v4184 = vsel %vm4133, %v311, %v1354
        %v4185 = vsel %vm4133, %v313, %v1356
        %v4186 = vsel %vm4133, %v315, %v1358
        %v4187 = vsel %vm4133, %v317, %v1360
        %v4188 = vsel %vm4133, %v319, %v1362
        %v4189 = vsel %vm4133, %v321, %v1364
        %v4190 = vsel %vm4133, %v327, %v1366
        %v4191 = vsel %vm4133, %v329, %v1368
        %v4192 = vsel %vm4133, %v331, %v1370
        %v4193 = vsel %vm4133, %v333, %v1372
        %v4194 = vsel %vm4133, %v335, %v1374
        %v4195 = vsel %vm4133, %v337, %v1376
        %v4196 = vsel %vm4133, %v339, %v1378
        %v4197 = vsel %vm4133, %v341, %v1380
        %vm4198 = vcmask 64512
        %v4199 = vsel %vm4198, %v4134, %v1446
        %v4200 = vsel %vm4198, %v4135, %v1448
        %v4201 = vsel %vm4198, %v4136, %v1450
        %v4202 = vsel %vm4198, %v4137, %v1452
        %v4203 = vsel %vm4198, %v4138, %v1454
        %v4204 = vsel %vm4198, %v4139, %v1456
        %v4205 = vsel %vm4198, %v4140, %v1458
        %v4206 = vsel %vm4198, %v4141, %v1460
        %v4207 = vsel %vm4198, %v4142, %v1462
        %v4208 = vsel %vm4198, %v4143, %v1464
        %v4209 = vsel %vm4198, %v4144, %v1466
        %v4210 = vsel %vm4198, %v4145, %v1468
        %v4211 = vsel %vm4198, %v4146, %v1470
        %v4212 = vsel %vm4198, %v4147, %v1472
        %v4213 = vsel %vm4198, %v4148, %v1474
        %v4214 = vsel %vm4198, %v4149, %v1476
        %v4215 = vsel %vm4198, %v4150, %v1478
        %v4216 = vsel %vm4198, %v4151, %v1480
        %v4217 = vsel %vm4198, %v4152, %v1482
        %v4218 = vsel %vm4198, %v4153, %v1484
        %v4219 = vsel %vm4198, %v4154, %v1486
        %v4220 = vsel %vm4198, %v4155, %v1488
        %v4221 = vsel %vm4198, %v4156, %v1490
        %v4222 = vsel %vm4198, %v4157, %v1492
        %v4223 = vsel %vm4198, %v4158, %v1494
        %v4224 = vsel %vm4198, %v4159, %v1496
        %v4225 = vsel %vm4198, %v4160, %v1498
        %v4226 = vsel %vm4198, %v4161, %v1500
        %v4227 = vsel %vm4198, %v4162, %v1502
        %v4228 = vsel %vm4198, %v4163, %v1504
        %v4229 = vsel %vm4198, %v4164, %v1506
        %v4230 = vsel %vm4198, %v4165, %v1508
        %v4231 = vsel %vm4198, %v4166, %v1510
        %v4232 = vsel %vm4198, %v4167, %v1512
        %v4233 = vsel %vm4198, %v4168, %v1514
        %v4234 = vsel %vm4198, %v4169, %v1516
        %v4235 = vsel %vm4198, %v4170, %v1518
        %v4236 = vsel %vm4198, %v4171, %v1520
        %v4237 = vsel %vm4198, %v4172, %v1522
        %v4238 = vsel %vm4198, %v4173, %v1524
        %v4239 = vsel %vm4198, %v4174, %v1526
        %v4240 = vsel %vm4198, %v4175, %v1528
        %v4241 = vsel %vm4198, %v4176, %v1530
        %v4242 = vsel %vm4198, %v4177, %v1532
        %v4243 = vsel %vm4198, %v4178, %v1534
        %v4244 = vsel %vm4198, %v4179, %v1536
        %v4245 = vsel %vm4198, %v4180, %v1538
        %v4246 = vsel %vm4198, %v4181, %v1540
        %v4247 = vsel %vm4198, %v4182, %v1542
        %v4248 = vsel %vm4198, %v4183, %v1544
        %v4249 = vsel %vm4198, %v4184, %v1546
        %v4250 = vsel %vm4198, %v4185, %v1548
        %v4251 = vsel %vm4198, %v4186, %v1550
        %v4252 = vsel %vm4198, %v4187, %v1552
        %v4253 = vsel %vm4198, %v4188, %v1554
        %v4254 = vsel %vm4198, %v4189, %v1556
        %v4255 = vsel %vm4198, %v4190, %v1558
        %v4256 = vsel %vm4198, %v4191, %v1560
        %v4257 = vsel %vm4198, %v4192, %v1562
        %v4258 = vsel %vm4198, %v4193, %v1564
        %v4259 = vsel %vm4198, %v4194, %v1566
        %v4260 = vsel %vm4198, %v4195, %v1568
        %v4261 = vsel %vm4198, %v4196, %v1570
        %v4262 = vsel %vm4198, %v4197, %v1572
        %vm4263 = vcmask 97280
        %v4264 = vsel %vm4263, %v4199, %v1638
        %v4265 = vsel %vm4263, %v4200, %v1640
        %v4266 = vsel %vm4263, %v4201, %v1642
        %v4267 = vsel %vm4263, %v4202, %v1644
        %v4268 = vsel %vm4263, %v4203, %v1646
        %v4269 = vsel %vm4263, %v4204, %v1648
        %v4270 = vsel %vm4263, %v4205, %v1650
        %v4271 = vsel %vm4263, %v4206, %v1652
        %v4272 = vsel %vm4263, %v4207, %v1654
        %v4273 = vsel %vm4263, %v4208, %v1656
        %v4274 = vsel %vm4263, %v4209, %v1658
        %v4275 = vsel %vm4263, %v4210, %v1660
        %v4276 = vsel %vm4263, %v4211, %v1662
        %v4277 = vsel %vm4263, %v4212, %v1664
        %v4278 = vsel %vm4263, %v4213, %v1666
        %v4279 = vsel %vm4263, %v4214, %v1668
        %v4280 = vsel %vm4263, %v4215, %v1670
        %v4281 = vsel %vm4263, %v4216, %v1672
        %v4282 = vsel %vm4263, %v4217, %v1674
        %v4283 = vsel %vm4263, %v4218, %v1676
        %v4284 = vsel %vm4263, %v4219, %v1678
        %v4285 = vsel %vm4263, %v4220, %v1680
        %v4286 = vsel %vm4263, %v4221, %v1682
        %v4287 = vsel %vm4263, %v4222, %v1684
        %v4288 = vsel %vm4263, %v4223, %v1686
        %v4289 = vsel %vm4263, %v4224, %v1688
        %v4290 = vsel %vm4263, %v4225, %v1690
        %v4291 = vsel %vm4263, %v4226, %v1692
        %v4292 = vsel %vm4263, %v4227, %v1694
        %v4293 = vsel %vm4263, %v4228, %v1696
        %v4294 = vsel %vm4263, %v4229, %v1698
        %v4295 = vsel %vm4263, %v4230, %v1700
        %v4296 = vsel %vm4263, %v4231, %v1702
        %v4297 = vsel %vm4263, %v4232, %v1704
        %v4298 = vsel %vm4263, %v4233, %v1706
        %v4299 = vsel %vm4263, %v4234, %v1708
        %v4300 = vsel %vm4263, %v4235, %v1710
        %v4301 = vsel %vm4263, %v4236, %v1712
        %v4302 = vsel %vm4263, %v4237, %v1714
        %v4303 = vsel %vm4263, %v4238, %v1716
        %v4304 = vsel %vm4263, %v4239, %v1718
        %v4305 = vsel %vm4263, %v4240, %v1720
        %v4306 = vsel %vm4263, %v4241, %v1722
        %v4307 = vsel %vm4263, %v4242, %v1724
        %v4308 = vsel %vm4263, %v4243, %v1726
        %v4309 = vsel %vm4263, %v4244, %v1728
        %v4310 = vsel %vm4263, %v4245, %v1730
        %v4311 = vsel %vm4263, %v4246, %v1732
        %v4312 = vsel %vm4263, %v4247, %v1734
        %v4313 = vsel %vm4263, %v4248, %v1736
        %v4314 = vsel %vm4263, %v4249, %v1738
        %v4315 = vsel %vm4263, %v4250, %v1740
        %v4316 = vsel %vm4263, %v4251, %v1742
        %v4317 = vsel %vm4263, %v4252, %v1744
        %v4318 = vsel %vm4263, %v4253, %v1746
        %v4319 = vsel %vm4263, %v4254, %v1748
        %v4320 = vsel %vm4263, %v4255, %v1750
        %v4321 = vsel %vm4263, %v4256, %v1752
        %v4322 = vsel %vm4263, %v4257, %v1754
        %v4323 = vsel %vm4263, %v4258, %v1756
        %v4324 = vsel %vm4263, %v4259, %v1758
        %v4325 = vsel %vm4263, %v4260, %v1760
        %v4326 = vsel %vm4263, %v4261, %v1762
        %v4327 = vsel %vm4263, %v4262, %v1764
        %vm4328 = vcmask 130048
        %v4329 = vsel %vm4328, %v4264, %v1830
        %v4330 = vsel %vm4328, %v4265, %v1832
        %v4331 = vsel %vm4328, %v4266, %v1834
        %v4332 = vsel %vm4328, %v4267, %v1836
        %v4333 = vsel %vm4328, %v4268, %v1838
        %v4334 = vsel %vm4328, %v4269, %v1840
        %v4335 = vsel %vm4328, %v4270, %v1842
        %v4336 = vsel %vm4328, %v4271, %v1844
        %v4337 = vsel %vm4328, %v4272, %v1846
        %v4338 = vsel %vm4328, %v4273, %v1848
        %v4339 = vsel %vm4328, %v4274, %v1850
        %v4340 = vsel %vm4328, %v4275, %v1852
        %v4341 = vsel %vm4328, %v4276, %v1854
        %v4342 = vsel %vm4328, %v4277, %v1856
        %v4343 = vsel %vm4328, %v4278, %v1858
        %v4344 = vsel %vm4328, %v4279, %v1860
        %v4345 = vsel %vm4328, %v4280, %v1862
        %v4346 = vsel %vm4328, %v4281, %v1864
        %v4347 = vsel %vm4328, %v4282, %v1866
        %v4348 = vsel %vm4328, %v4283, %v1868
        %v4349 = vsel %vm4328, %v4284, %v1870
        %v4350 = vsel %vm4328, %v4285, %v1872
        %v4351 = vsel %vm4328, %v4286, %v1874
        %v4352 = vsel %vm4328, %v4287, %v1876
        %v4353 = vsel %vm4328, %v4288, %v1878
        %v4354 = vsel %vm4328, %v4289, %v1880
        %v4355 = vsel %vm4328, %v4290, %v1882
        %v4356 = vsel %vm4328, %v4291, %v1884
        %v4357 = vsel %vm4328, %v4292, %v1886
        %v4358 = vsel %vm4328, %v4293, %v1888
        %v4359 = vsel %vm4328, %v4294, %v1890
        %v4360 = vsel %vm4328, %v4295, %v1892
        %v4361 = vsel %vm4328, %v4296, %v1894
        %v4362 = vsel %vm4328, %v4297, %v1896
        %v4363 = vsel %vm4328, %v4298, %v1898
        %v4364 = vsel %vm4328, %v4299, %v1900
        %v4365 = vsel %vm4328, %v4300, %v1902
        %v4366 = vsel %vm4328, %v4301, %v1904
        %v4367 = vsel %vm4328, %v4302, %v1906
        %v4368 = vsel %vm4328, %v4303, %v1908
        %v4369 = vsel %vm4328, %v4304, %v1910
        %v4370 = vsel %vm4328, %v4305, %v1912
        %v4371 = vsel %vm4328, %v4306, %v1914
        %v4372 = vsel %vm4328, %v4307, %v1916
        %v4373 = vsel %vm4328, %v4308, %v1918
        %v4374 = vsel %vm4328, %v4309, %v1920
        %v4375 = vsel %vm4328, %v4310, %v1922
        %v4376 = vsel %vm4328, %v4311, %v1924
        %v4377 = vsel %vm4328, %v4312, %v1926
        %v4378 = vsel %vm4328, %v4313, %v1928
        %v4379 = vsel %vm4328, %v4314, %v1930
        %v4380 = vsel %vm4328, %v4315, %v1932
        %v4381 = vsel %vm4328, %v4316, %v1934
        %v4382 = vsel %vm4328, %v4317, %v1936
        %v4383 = vsel %vm4328, %v4318, %v1938
        %v4384 = vsel %vm4328, %v4319, %v1940
        %v4385 = vsel %vm4328, %v4320, %v1942
        %v4386 = vsel %vm4328, %v4321, %v1944
        %v4387 = vsel %vm4328, %v4322, %v1946
        %v4388 = vsel %vm4328, %v4323, %v1948
        %v4389 = vsel %vm4328, %v4324, %v1950
        %v4390 = vsel %vm4328, %v4325, %v1952
        %v4391 = vsel %vm4328, %v4326, %v1954
        %v4392 = vsel %vm4328, %v4327, %v1956
        %vm4393 = vcmask 162816
        %v4394 = vsel %vm4393, %v4329, %v2022
        %v4395 = vsel %vm4393, %v4330, %v2024
        %v4396 = vsel %vm4393, %v4331, %v2026
        %v4397 = vsel %vm4393, %v4332, %v2028
        %v4398 = vsel %vm4393, %v4333, %v2030
        %v4399 = vsel %vm4393, %v4334, %v2032
        %v4400 = vsel %vm4393, %v4335, %v2034
        %v4401 = vsel %vm4393, %v4336, %v2036
        %v4402 = vsel %vm4393, %v4337, %v2038
        %v4403 = vsel %vm4393, %v4338, %v2040
        %v4404 = vsel %vm4393, %v4339, %v2042
        %v4405 = vsel %vm4393, %v4340, %v2044
        %v4406 = vsel %vm4393, %v4341, %v2046
        %v4407 = vsel %vm4393, %v4342, %v2048
        %v4408 = vsel %vm4393, %v4343, %v2050
        %v4409 = vsel %vm4393, %v4344, %v2052
        %v4410 = vsel %vm4393, %v4345, %v2054
        %v4411 = vsel %vm4393, %v4346, %v2056
        %v4412 = vsel %vm4393, %v4347, %v2058
        %v4413 = vsel %vm4393, %v4348, %v2060
        %v4414 = vsel %vm4393, %v4349, %v2062
        %v4415 = vsel %vm4393, %v4350, %v2064
        %v4416 = vsel %vm4393, %v4351, %v2066
        %v4417 = vsel %vm4393, %v4352, %v2068
        %v4418 = vsel %vm4393, %v4353, %v2070
        %v4419 = vsel %vm4393, %v4354, %v2072
        %v4420 = vsel %vm4393, %v4355, %v2074
        %v4421 = vsel %vm4393, %v4356, %v2076
        %v4422 = vsel %vm4393, %v4357, %v2078
        %v4423 = vsel %vm4393, %v4358, %v2080
        %v4424 = vsel %vm4393, %v4359, %v2082
        %v4425 = vsel %vm4393, %v4360, %v2084
        %v4426 = vsel %vm4393, %v4361, %v2086
        %v4427 = vsel %vm4393, %v4362, %v2088
        %v4428 = vsel %vm4393, %v4363, %v2090
        %v4429 = vsel %vm4393, %v4364, %v2092
        %v4430 = vsel %vm4393, %v4365, %v2094
        %v4431 = vsel %vm4393, %v4366, %v2096
        %v4432 = vsel %vm4393, %v4367, %v2098
        %v4433 = vsel %vm4393, %v4368, %v2100
        %v4434 = vsel %vm4393, %v4369, %v2102
        %v4435 = vsel %vm4393, %v4370, %v2104
        %v4436 = vsel %vm4393, %v4371, %v2106
        %v4437 = vsel %vm4393, %v4372, %v2108
        %v4438 = vsel %vm4393, %v4373, %v2110
        %v4439 = vsel %vm4393, %v4374, %v2112
        %v4440 = vsel %vm4393, %v4375, %v2114
        %v4441 = vsel %vm4393, %v4376, %v2116
        %v4442 = vsel %vm4393, %v4377, %v2118
        %v4443 = vsel %vm4393, %v4378, %v2120
        %v4444 = vsel %vm4393, %v4379, %v2122
        %v4445 = vsel %vm4393, %v4380, %v2124
        %v4446 = vsel %vm4393, %v4381, %v2126
        %v4447 = vsel %vm4393, %v4382, %v2128
        %v4448 = vsel %vm4393, %v4383, %v2130
        %v4449 = vsel %vm4393, %v4384, %v2132
        %v4450 = vsel %vm4393, %v4385, %v2134
        %v4451 = vsel %vm4393, %v4386, %v2136
        %v4452 = vsel %vm4393, %v4387, %v2138
        %v4453 = vsel %vm4393, %v4388, %v2140
        %v4454 = vsel %vm4393, %v4389, %v2142
        %v4455 = vsel %vm4393, %v4390, %v2144
        %v4456 = vsel %vm4393, %v4391, %v2146
        %v4457 = vsel %vm4393, %v4392, %v2148
        %vm4458 = vcmask 195584
        %v4459 = vsel %vm4458, %v4394, %v2214
        %v4460 = vsel %vm4458, %v4395, %v2216
        %v4461 = vsel %vm4458, %v4396, %v2218
        %v4462 = vsel %vm4458, %v4397, %v2220
        %v4463 = vsel %vm4458, %v4398, %v2222
        %v4464 = vsel %vm4458, %v4399, %v2224
        %v4465 = vsel %vm4458, %v4400, %v2226
        %v4466 = vsel %vm4458, %v4401, %v2228
        %v4467 = vsel %vm4458, %v4402, %v2230
        %v4468 = vsel %vm4458, %v4403, %v2232
        %v4469 = vsel %vm4458, %v4404, %v2234
        %v4470 = vsel %vm4458, %v4405, %v2236
        %v4471 = vsel %vm4458, %v4406, %v2238
        %v4472 = vsel %vm4458, %v4407, %v2240
        %v4473 = vsel %vm4458, %v4408, %v2242
        %v4474 = vsel %vm4458, %v4409, %v2244
        %v4475 = vsel %vm4458, %v4410, %v2246
        %v4476 = vsel %vm4458, %v4411, %v2248
        %v4477 = vsel %vm4458, %v4412, %v2250
        %v4478 = vsel %vm4458, %v4413, %v2252
        %v4479 = vsel %vm4458, %v4414, %v2254
        %v4480 = vsel %vm4458, %v4415, %v2256
        %v4481 = vsel %vm4458, %v4416, %v2258
        %v4482 = vsel %vm4458, %v4417, %v2260
        %v4483 = vsel %vm4458, %v4418, %v2262
        %v4484 = vsel %vm4458, %v4419, %v2264
        %v4485 = vsel %vm4458, %v4420, %v2266
        %v4486 = vsel %vm4458, %v4421, %v2268
        %v4487 = vsel %vm4458, %v4422, %v2270
        %v4488 = vsel %vm4458, %v4423, %v2272
        %v4489 = vsel %vm4458, %v4424, %v2274
        %v4490 = vsel %vm4458, %v4425, %v2276
        %v4491 = vsel %vm4458, %v4426, %v2278
        %v4492 = vsel %vm4458, %v4427, %v2280
        %v4493 = vsel %vm4458, %v4428, %v2282
        %v4494 = vsel %vm4458, %v4429, %v2284
        %v4495 = vsel %vm4458, %v4430, %v2286
        %v4496 = vsel %vm4458, %v4431, %v2288
        %v4497 = vsel %vm4458, %v4432, %v2290
        %v4498 = vsel %vm4458, %v4433, %v2292
        %v4499 = vsel %vm4458, %v4434, %v2294
        %v4500 = vsel %vm4458, %v4435, %v2296
        %v4501 = vsel %vm4458, %v4436, %v2298
        %v4502 = vsel %vm4458, %v4437, %v2300
        %v4503 = vsel %vm4458, %v4438, %v2302
        %v4504 = vsel %vm4458, %v4439, %v2304
        %v4505 = vsel %vm4458, %v4440, %v2306
        %v4506 = vsel %vm4458, %v4441, %v2308
        %v4507 = vsel %vm4458, %v4442, %v2310
        %v4508 = vsel %vm4458, %v4443, %v2312
        %v4509 = vsel %vm4458, %v4444, %v2314
        %v4510 = vsel %vm4458, %v4445, %v2316
        %v4511 = vsel %vm4458, %v4446, %v2318
        %v4512 = vsel %vm4458, %v4447, %v2320
        %v4513 = vsel %vm4458, %v4448, %v2322
        %v4514 = vsel %vm4458, %v4449, %v2324
        %v4515 = vsel %vm4458, %v4450, %v2326
        %v4516 = vsel %vm4458, %v4451, %v2328
        %v4517 = vsel %vm4458, %v4452, %v2330
        %v4518 = vsel %vm4458, %v4453, %v2332
        %v4519 = vsel %vm4458, %v4454, %v2334
        %v4520 = vsel %vm4458, %v4455, %v2336
        %v4521 = vsel %vm4458, %v4456, %v2338
        %v4522 = vsel %vm4458, %v4457, %v2340
        %vm4523 = vcmask 228352
        %v4524 = vsel %vm4523, %v4459, %v2406
        %v4525 = vsel %vm4523, %v4460, %v2408
        %v4526 = vsel %vm4523, %v4461, %v2410
        %v4527 = vsel %vm4523, %v4462, %v2412
        %v4528 = vsel %vm4523, %v4463, %v2414
        %v4529 = vsel %vm4523, %v4464, %v2416
        %v4530 = vsel %vm4523, %v4465, %v2418
        %v4531 = vsel %vm4523, %v4466, %v2420
        %v4532 = vsel %vm4523, %v4467, %v2422
        %v4533 = vsel %vm4523, %v4468, %v2424
        %v4534 = vsel %vm4523, %v4469, %v2426
        %v4535 = vsel %vm4523, %v4470, %v2428
        %v4536 = vsel %vm4523, %v4471, %v2430
        %v4537 = vsel %vm4523, %v4472, %v2432
        %v4538 = vsel %vm4523, %v4473, %v2434
        %v4539 = vsel %vm4523, %v4474, %v2436
        %v4540 = vsel %vm4523, %v4475, %v2438
        %v4541 = vsel %vm4523, %v4476, %v2440
        %v4542 = vsel %vm4523, %v4477, %v2442
        %v4543 = vsel %vm4523, %v4478, %v2444
        %v4544 = vsel %vm4523, %v4479, %v2446
        %v4545 = vsel %vm4523, %v4480, %v2448
        %v4546 = vsel %vm4523, %v4481, %v2450
        %v4547 = vsel %vm4523, %v4482, %v2452
        %v4548 = vsel %vm4523, %v4483, %v2454
        %v4549 = vsel %vm4523, %v4484, %v2456
        %v4550 = vsel %vm4523, %v4485, %v2458
        %v4551 = vsel %vm4523, %v4486, %v2460
        %v4552 = vsel %vm4523, %v4487, %v2462
        %v4553 = vsel %vm4523, %v4488, %v2464
        %v4554 = vsel %vm4523, %v4489, %v2466
        %v4555 = vsel %vm4523, %v4490, %v2468
        %v4556 = vsel %vm4523, %v4491, %v2470
        %v4557 = vsel %vm4523, %v4492, %v2472
        %v4558 = vsel %vm4523, %v4493, %v2474
        %v4559 = vsel %vm4523, %v4494, %v2476
        %v4560 = vsel %vm4523, %v4495, %v2478
        %v4561 = vsel %vm4523, %v4496, %v2480
        %v4562 = vsel %vm4523, %v4497, %v2482
        %v4563 = vsel %vm4523, %v4498, %v2484
        %v4564 = vsel %vm4523, %v4499, %v2486
        %v4565 = vsel %vm4523, %v4500, %v2488
        %v4566 = vsel %vm4523, %v4501, %v2490
        %v4567 = vsel %vm4523, %v4502, %v2492
        %v4568 = vsel %vm4523, %v4503, %v2494
        %v4569 = vsel %vm4523, %v4504, %v2496
        %v4570 = vsel %vm4523, %v4505, %v2498
        %v4571 = vsel %vm4523, %v4506, %v2500
        %v4572 = vsel %vm4523, %v4507, %v2502
        %v4573 = vsel %vm4523, %v4508, %v2504
        %v4574 = vsel %vm4523, %v4509, %v2506
        %v4575 = vsel %vm4523, %v4510, %v2508
        %v4576 = vsel %vm4523, %v4511, %v2510
        %v4577 = vsel %vm4523, %v4512, %v2512
        %v4578 = vsel %vm4523, %v4513, %v2514
        %v4579 = vsel %vm4523, %v4514, %v2516
        %v4580 = vsel %vm4523, %v4515, %v2518
        %v4581 = vsel %vm4523, %v4516, %v2520
        %v4582 = vsel %vm4523, %v4517, %v2522
        %v4583 = vsel %vm4523, %v4518, %v2524
        %v4584 = vsel %vm4523, %v4519, %v2526
        %v4585 = vsel %vm4523, %v4520, %v2528
        %v4586 = vsel %vm4523, %v4521, %v2530
        %v4587 = vsel %vm4523, %v4522, %v2532
        %vm4588 = vcmask 261120
        %v4589 = vsel %vm4588, %v4524, %v2598
        %v4590 = vsel %vm4588, %v4525, %v2600
        %v4591 = vsel %vm4588, %v4526, %v2602
        %v4592 = vsel %vm4588, %v4527, %v2604
        %v4593 = vsel %vm4588, %v4528, %v2606
        %v4594 = vsel %vm4588, %v4529, %v2608
        %v4595 = vsel %vm4588, %v4530, %v2610
        %v4596 = vsel %vm4588, %v4531, %v2612
        %v4597 = vsel %vm4588, %v4532, %v2614
        %v4598 = vsel %vm4588, %v4533, %v2616
        %v4599 = vsel %vm4588, %v4534, %v2618
        %v4600 = vsel %vm4588, %v4535, %v2620
        %v4601 = vsel %vm4588, %v4536, %v2622
        %v4602 = vsel %vm4588, %v4537, %v2624
        %v4603 = vsel %vm4588, %v4538, %v2626
        %v4604 = vsel %vm4588, %v4539, %v2628
        %v4605 = vsel %vm4588, %v4540, %v2630
        %v4606 = vsel %vm4588, %v4541, %v2632
        %v4607 = vsel %vm4588, %v4542, %v2634
        %v4608 = vsel %vm4588, %v4543, %v2636
        %v4609 = vsel %vm4588, %v4544, %v2638
        %v4610 = vsel %vm4588, %v4545, %v2640
        %v4611 = vsel %vm4588, %v4546, %v2642
        %v4612 = vsel %vm4588, %v4547, %v2644
        %v4613 = vsel %vm4588, %v4548, %v2646
        %v4614 = vsel %vm4588, %v4549, %v2648
        %v4615 = vsel %vm4588, %v4550, %v2650
        %v4616 = vsel %vm4588, %v4551, %v2652
        %v4617 = vsel %vm4588, %v4552, %v2654
        %v4618 = vsel %vm4588, %v4553, %v2656
        %v4619 = vsel %vm4588, %v4554, %v2658
        %v4620 = vsel %vm4588, %v4555, %v2660
        %v4621 = vsel %vm4588, %v4556, %v2662
        %v4622 = vsel %vm4588, %v4557, %v2664
        %v4623 = vsel %vm4588, %v4558, %v2666
        %v4624 = vsel %vm4588, %v4559, %v2668
        %v4625 = vsel %vm4588, %v4560, %v2670
        %v4626 = vsel %vm4588, %v4561, %v2672
        %v4627 = vsel %vm4588, %v4562, %v2674
        %v4628 = vsel %vm4588, %v4563, %v2676
        %v4629 = vsel %vm4588, %v4564, %v2678
        %v4630 = vsel %vm4588, %v4565, %v2680
        %v4631 = vsel %vm4588, %v4566, %v2682
        %v4632 = vsel %vm4588, %v4567, %v2684
        %v4633 = vsel %vm4588, %v4568, %v2686
        %v4634 = vsel %vm4588, %v4569, %v2688
        %v4635 = vsel %vm4588, %v4570, %v2690
        %v4636 = vsel %vm4588, %v4571, %v2692
        %v4637 = vsel %vm4588, %v4572, %v2694
        %v4638 = vsel %vm4588, %v4573, %v2696
        %v4639 = vsel %vm4588, %v4574, %v2698
        %v4640 = vsel %vm4588, %v4575, %v2700
        %v4641 = vsel %vm4588, %v4576, %v2702
        %v4642 = vsel %vm4588, %v4577, %v2704
        %v4643 = vsel %vm4588, %v4578, %v2706
        %v4644 = vsel %vm4588, %v4579, %v2708
        %v4645 = vsel %vm4588, %v4580, %v2710
        %v4646 = vsel %vm4588, %v4581, %v2712
        %v4647 = vsel %vm4588, %v4582, %v2714
        %v4648 = vsel %vm4588, %v4583, %v2716
        %v4649 = vsel %vm4588, %v4584, %v2718
        %v4650 = vsel %vm4588, %v4585, %v2720
        %v4651 = vsel %vm4588, %v4586, %v2722
        %v4652 = vsel %vm4588, %v4587, %v2724
        %vm4653 = vcmask 293888
        %v4654 = vsel %vm4653, %v4589, %v2790
        %v4655 = vsel %vm4653, %v4590, %v2792
        %v4656 = vsel %vm4653, %v4591, %v2794
        %v4657 = vsel %vm4653, %v4592, %v2796
        %v4658 = vsel %vm4653, %v4593, %v2798
        %v4659 = vsel %vm4653, %v4594, %v2800
        %v4660 = vsel %vm4653, %v4595, %v2802
        %v4661 = vsel %vm4653, %v4596, %v2804
        %v4662 = vsel %vm4653, %v4597, %v2806
        %v4663 = vsel %vm4653, %v4598, %v2808
        %v4664 = vsel %vm4653, %v4599, %v2810
        %v4665 = vsel %vm4653, %v4600, %v2812
        %v4666 = vsel %vm4653, %v4601, %v2814
        %v4667 = vsel %vm4653, %v4602, %v2816
        %v4668 = vsel %vm4653, %v4603, %v2818
        %v4669 = vsel %vm4653, %v4604, %v2820
        %v4670 = vsel %vm4653, %v4605, %v2822
        %v4671 = vsel %vm4653, %v4606, %v2824
        %v4672 = vsel %vm4653, %v4607, %v2826
        %v4673 = vsel %vm4653, %v4608, %v2828
        %v4674 = vsel %vm4653, %v4609, %v2830
        %v4675 = vsel %vm4653, %v4610, %v2832
        %v4676 = vsel %vm4653, %v4611, %v2834
        %v4677 = vsel %vm4653, %v4612, %v2836
        %v4678 = vsel %vm4653, %v4613, %v2838
        %v4679 = vsel %vm4653, %v4614, %v2840
        %v4680 = vsel %vm4653, %v4615, %v2842
        %v4681 = vsel %vm4653, %v4616, %v2844
        %v4682 = vsel %vm4653, %v4617, %v2846
        %v4683 = vsel %vm4653, %v4618, %v2848
        %v4684 = vsel %vm4653, %v4619, %v2850
        %v4685 = vsel %vm4653, %v4620, %v2852
        %v4686 = vsel %vm4653, %v4621, %v2854
        %v4687 = vsel %vm4653, %v4622, %v2856
        %v4688 = vsel %vm4653, %v4623, %v2858
        %v4689 = vsel %vm4653, %v4624, %v2860
        %v4690 = vsel %vm4653, %v4625, %v2862
        %v4691 = vsel %vm4653, %v4626, %v2864
        %v4692 = vsel %vm4653, %v4627, %v2866
        %v4693 = vsel %vm4653, %v4628, %v2868
        %v4694 = vsel %vm4653, %v4629, %v2870
        %v4695 = vsel %vm4653, %v4630, %v2872
        %v4696 = vsel %vm4653, %v4631, %v2874
        %v4697 = vsel %vm4653, %v4632, %v2876
        %v4698 = vsel %vm4653, %v4633, %v2878
        %v4699 = vsel %vm4653, %v4634, %v2880
        %v4700 = vsel %vm4653, %v4635, %v2882
        %v4701 = vsel %vm4653, %v4636, %v2884
        %v4702 = vsel %vm4653, %v4637, %v2886
        %v4703 = vsel %vm4653, %v4638, %v2888
        %v4704 = vsel %vm4653, %v4639, %v2890
        %v4705 = vsel %vm4653, %v4640, %v2892
        %v4706 = vsel %vm4653, %v4641, %v2894
        %v4707 = vsel %vm4653, %v4642, %v2896
        %v4708 = vsel %vm4653, %v4643, %v2898
        %v4709 = vsel %vm4653, %v4644, %v2900
        %v4710 = vsel %vm4653, %v4645, %v2902
        %v4711 = vsel %vm4653, %v4646, %v2904
        %v4712 = vsel %vm4653, %v4647, %v2906
        %v4713 = vsel %vm4653, %v4648, %v2908
        %v4714 = vsel %vm4653, %v4649, %v2910
        %v4715 = vsel %vm4653, %v4650, %v2912
        %v4716 = vsel %vm4653, %v4651, %v2914
        %v4717 = vsel %vm4653, %v4652, %v2916
        %vm4718 = vcmask 326656
        %v4719 = vsel %vm4718, %v4654, %v2982
        %v4720 = vsel %vm4718, %v4655, %v2984
        %v4721 = vsel %vm4718, %v4656, %v2986
        %v4722 = vsel %vm4718, %v4657, %v2988
        %v4723 = vsel %vm4718, %v4658, %v2990
        %v4724 = vsel %vm4718, %v4659, %v2992
        %v4725 = vsel %vm4718, %v4660, %v2994
        %v4726 = vsel %vm4718, %v4661, %v2996
        %v4727 = vsel %vm4718, %v4662, %v2998
        %v4728 = vsel %vm4718, %v4663, %v3000
        %v4729 = vsel %vm4718, %v4664, %v3002
        %v4730 = vsel %vm4718, %v4665, %v3004
        %v4731 = vsel %vm4718, %v4666, %v3006
        %v4732 = vsel %vm4718, %v4667, %v3008
        %v4733 = vsel %vm4718, %v4668, %v3010
        %v4734 = vsel %vm4718, %v4669, %v3012
        %v4735 = vsel %vm4718, %v4670, %v3014
        %v4736 = vsel %vm4718, %v4671, %v3016
        %v4737 = vsel %vm4718, %v4672, %v3018
        %v4738 = vsel %vm4718, %v4673, %v3020
        %v4739 = vsel %vm4718, %v4674, %v3022
        %v4740 = vsel %vm4718, %v4675, %v3024
        %v4741 = vsel %vm4718, %v4676, %v3026
        %v4742 = vsel %vm4718, %v4677, %v3028
        %v4743 = vsel %vm4718, %v4678, %v3030
        %v4744 = vsel %vm4718, %v4679, %v3032
        %v4745 = vsel %vm4718, %v4680, %v3034
        %v4746 = vsel %vm4718, %v4681, %v3036
        %v4747 = vsel %vm4718, %v4682, %v3038
        %v4748 = vsel %vm4718, %v4683, %v3040
        %v4749 = vsel %vm4718, %v4684, %v3042
        %v4750 = vsel %vm4718, %v4685, %v3044
        %v4751 = vsel %vm4718, %v4686, %v3046
        %v4752 = vsel %vm4718, %v4687, %v3048
        %v4753 = vsel %vm4718, %v4688, %v3050
        %v4754 = vsel %vm4718, %v4689, %v3052
        %v4755 = vsel %vm4718, %v4690, %v3054
        %v4756 = vsel %vm4718, %v4691, %v3056
        %v4757 = vsel %vm4718, %v4692, %v3058
        %v4758 = vsel %vm4718, %v4693, %v3060
        %v4759 = vsel %vm4718, %v4694, %v3062
        %v4760 = vsel %vm4718, %v4695, %v3064
        %v4761 = vsel %vm4718, %v4696, %v3066
        %v4762 = vsel %vm4718, %v4697, %v3068
        %v4763 = vsel %vm4718, %v4698, %v3070
        %v4764 = vsel %vm4718, %v4699, %v3072
        %v4765 = vsel %vm4718, %v4700, %v3074
        %v4766 = vsel %vm4718, %v4701, %v3076
        %v4767 = vsel %vm4718, %v4702, %v3078
        %v4768 = vsel %vm4718, %v4703, %v3080
        %v4769 = vsel %vm4718, %v4704, %v3082
        %v4770 = vsel %vm4718, %v4705, %v3084
        %v4771 = vsel %vm4718, %v4706, %v3086
        %v4772 = vsel %vm4718, %v4707, %v3088
        %v4773 = vsel %vm4718, %v4708, %v3090
        %v4774 = vsel %vm4718, %v4709, %v3092
        %v4775 = vsel %vm4718, %v4710, %v3094
        %v4776 = vsel %vm4718, %v4711, %v3096
        %v4777 = vsel %vm4718, %v4712, %v3098
        %v4778 = vsel %vm4718, %v4713, %v3100
        %v4779 = vsel %vm4718, %v4714, %v3102
        %v4780 = vsel %vm4718, %v4715, %v3104
        %v4781 = vsel %vm4718, %v4716, %v3106
        %v4782 = vsel %vm4718, %v4717, %v3108
        %vm4783 = vcmask 359424
        %v4784 = vsel %vm4783, %v4719, %v3174
        %v4785 = vsel %vm4783, %v4720, %v3176
        %v4786 = vsel %vm4783, %v4721, %v3178
        %v4787 = vsel %vm4783, %v4722, %v3180
        %v4788 = vsel %vm4783, %v4723, %v3182
        %v4789 = vsel %vm4783, %v4724, %v3184
        %v4790 = vsel %vm4783, %v4725, %v3186
        %v4791 = vsel %vm4783, %v4726, %v3188
        %v4792 = vsel %vm4783, %v4727, %v3190
        %v4793 = vsel %vm4783, %v4728, %v3192
        %v4794 = vsel %vm4783, %v4729, %v3194
        %v4795 = vsel %vm4783, %v4730, %v3196
        %v4796 = vsel %vm4783, %v4731, %v3198
        %v4797 = vsel %vm4783, %v4732, %v3200
        %v4798 = vsel %vm4783, %v4733, %v3202
        %v4799 = vsel %vm4783, %v4734, %v3204
        %v4800 = vsel %vm4783, %v4735, %v3206
        %v4801 = vsel %vm4783, %v4736, %v3208
        %v4802 = vsel %vm4783, %v4737, %v3210
        %v4803 = vsel %vm4783, %v4738, %v3212
        %v4804 = vsel %vm4783, %v4739, %v3214
        %v4805 = vsel %vm4783, %v4740, %v3216
        %v4806 = vsel %vm4783, %v4741, %v3218
        %v4807 = vsel %vm4783, %v4742, %v3220
        %v4808 = vsel %vm4783, %v4743, %v3222
        %v4809 = vsel %vm4783, %v4744, %v3224
        %v4810 = vsel %vm4783, %v4745, %v3226
        %v4811 = vsel %vm4783, %v4746, %v3228
        %v4812 = vsel %vm4783, %v4747, %v3230
        %v4813 = vsel %vm4783, %v4748, %v3232
        %v4814 = vsel %vm4783, %v4749, %v3234
        %v4815 = vsel %vm4783, %v4750, %v3236
        %v4816 = vsel %vm4783, %v4751, %v3238
        %v4817 = vsel %vm4783, %v4752, %v3240
        %v4818 = vsel %vm4783, %v4753, %v3242
        %v4819 = vsel %vm4783, %v4754, %v3244
        %v4820 = vsel %vm4783, %v4755, %v3246
        %v4821 = vsel %vm4783, %v4756, %v3248
        %v4822 = vsel %vm4783, %v4757, %v3250
        %v4823 = vsel %vm4783, %v4758, %v3252
        %v4824 = vsel %vm4783, %v4759, %v3254
        %v4825 = vsel %vm4783, %v4760, %v3256
        %v4826 = vsel %vm4783, %v4761, %v3258
        %v4827 = vsel %vm4783, %v4762, %v3260
        %v4828 = vsel %vm4783, %v4763, %v3262
        %v4829 = vsel %vm4783, %v4764, %v3264
        %v4830 = vsel %vm4783, %v4765, %v3266
        %v4831 = vsel %vm4783, %v4766, %v3268
        %v4832 = vsel %vm4783, %v4767, %v3270
        %v4833 = vsel %vm4783, %v4768, %v3272
        %v4834 = vsel %vm4783, %v4769, %v3274
        %v4835 = vsel %vm4783, %v4770, %v3276
        %v4836 = vsel %vm4783, %v4771, %v3278
        %v4837 = vsel %vm4783, %v4772, %v3280
        %v4838 = vsel %vm4783, %v4773, %v3282
        %v4839 = vsel %vm4783, %v4774, %v3284
        %v4840 = vsel %vm4783, %v4775, %v3286
        %v4841 = vsel %vm4783, %v4776, %v3288
        %v4842 = vsel %vm4783, %v4777, %v3290
        %v4843 = vsel %vm4783, %v4778, %v3292
        %v4844 = vsel %vm4783, %v4779, %v3294
        %v4845 = vsel %vm4783, %v4780, %v3296
        %v4846 = vsel %vm4783, %v4781, %v3298
        %v4847 = vsel %vm4783, %v4782, %v3300
        %vm4848 = vcmask 392192
        %v4849 = vsel %vm4848, %v4784, %v3366
        %v4850 = vsel %vm4848, %v4785, %v3368
        %v4851 = vsel %vm4848, %v4786, %v3370
        %v4852 = vsel %vm4848, %v4787, %v3372
        %v4853 = vsel %vm4848, %v4788, %v3374
        %v4854 = vsel %vm4848, %v4789, %v3376
        %v4855 = vsel %vm4848, %v4790, %v3378
        %v4856 = vsel %vm4848, %v4791, %v3380
        %v4857 = vsel %vm4848, %v4792, %v3382
        %v4858 = vsel %vm4848, %v4793, %v3384
        %v4859 = vsel %vm4848, %v4794, %v3386
        %v4860 = vsel %vm4848, %v4795, %v3388
        %v4861 = vsel %vm4848, %v4796, %v3390
        %v4862 = vsel %vm4848, %v4797, %v3392
        %v4863 = vsel %vm4848, %v4798, %v3394
        %v4864 = vsel %vm4848, %v4799, %v3396
        %v4865 = vsel %vm4848, %v4800, %v3398
        %v4866 = vsel %vm4848, %v4801, %v3400
        %v4867 = vsel %vm4848, %v4802, %v3402
        %v4868 = vsel %vm4848, %v4803, %v3404
        %v4869 = vsel %vm4848, %v4804, %v3406
        %v4870 = vsel %vm4848, %v4805, %v3408
        %v4871 = vsel %vm4848, %v4806, %v3410
        %v4872 = vsel %vm4848, %v4807, %v3412
        %v4873 = vsel %vm4848, %v4808, %v3414
        %v4874 = vsel %vm4848, %v4809, %v3416
        %v4875 = vsel %vm4848, %v4810, %v3418
        %v4876 = vsel %vm4848, %v4811, %v3420
        %v4877 = vsel %vm4848, %v4812, %v3422
        %v4878 = vsel %vm4848, %v4813, %v3424
        %v4879 = vsel %vm4848, %v4814, %v3426
        %v4880 = vsel %vm4848, %v4815, %v3428
        %v4881 = vsel %vm4848, %v4816, %v3430
        %v4882 = vsel %vm4848, %v4817, %v3432
        %v4883 = vsel %vm4848, %v4818, %v3434
        %v4884 = vsel %vm4848, %v4819, %v3436
        %v4885 = vsel %vm4848, %v4820, %v3438
        %v4886 = vsel %vm4848, %v4821, %v3440
        %v4887 = vsel %vm4848, %v4822, %v3442
        %v4888 = vsel %vm4848, %v4823, %v3444
        %v4889 = vsel %vm4848, %v4824, %v3446
        %v4890 = vsel %vm4848, %v4825, %v3448
        %v4891 = vsel %vm4848, %v4826, %v3450
        %v4892 = vsel %vm4848, %v4827, %v3452
        %v4893 = vsel %vm4848, %v4828, %v3454
        %v4894 = vsel %vm4848, %v4829, %v3456
        %v4895 = vsel %vm4848, %v4830, %v3458
        %v4896 = vsel %vm4848, %v4831, %v3460
        %v4897 = vsel %vm4848, %v4832, %v3462
        %v4898 = vsel %vm4848, %v4833, %v3464
        %v4899 = vsel %vm4848, %v4834, %v3466
        %v4900 = vsel %vm4848, %v4835, %v3468
        %v4901 = vsel %vm4848, %v4836, %v3470
        %v4902 = vsel %vm4848, %v4837, %v3472
        %v4903 = vsel %vm4848, %v4838, %v3474
        %v4904 = vsel %vm4848, %v4839, %v3476
        %v4905 = vsel %vm4848, %v4840, %v3478
        %v4906 = vsel %vm4848, %v4841, %v3480
        %v4907 = vsel %vm4848, %v4842, %v3482
        %v4908 = vsel %vm4848, %v4843, %v3484
        %v4909 = vsel %vm4848, %v4844, %v3486
        %v4910 = vsel %vm4848, %v4845, %v3488
        %v4911 = vsel %vm4848, %v4846, %v3490
        %v4912 = vsel %vm4848, %v4847, %v3492
        %vm4913 = vcmask 424960
        %v4914 = vsel %vm4913, %v4849, %v3558
        %v4915 = vsel %vm4913, %v4850, %v3560
        %v4916 = vsel %vm4913, %v4851, %v3562
        %v4917 = vsel %vm4913, %v4852, %v3564
        %v4918 = vsel %vm4913, %v4853, %v3566
        %v4919 = vsel %vm4913, %v4854, %v3568
        %v4920 = vsel %vm4913, %v4855, %v3570
        %v4921 = vsel %vm4913, %v4856, %v3572
        %v4922 = vsel %vm4913, %v4857, %v3574
        %v4923 = vsel %vm4913, %v4858, %v3576
        %v4924 = vsel %vm4913, %v4859, %v3578
        %v4925 = vsel %vm4913, %v4860, %v3580
        %v4926 = vsel %vm4913, %v4861, %v3582
        %v4927 = vsel %vm4913, %v4862, %v3584
        %v4928 = vsel %vm4913, %v4863, %v3586
        %v4929 = vsel %vm4913, %v4864, %v3588
        %v4930 = vsel %vm4913, %v4865, %v3590
        %v4931 = vsel %vm4913, %v4866, %v3592
        %v4932 = vsel %vm4913, %v4867, %v3594
        %v4933 = vsel %vm4913, %v4868, %v3596
        %v4934 = vsel %vm4913, %v4869, %v3598
        %v4935 = vsel %vm4913, %v4870, %v3600
        %v4936 = vsel %vm4913, %v4871, %v3602
        %v4937 = vsel %vm4913, %v4872, %v3604
        %v4938 = vsel %vm4913, %v4873, %v3606
        %v4939 = vsel %vm4913, %v4874, %v3608
        %v4940 = vsel %vm4913, %v4875, %v3610
        %v4941 = vsel %vm4913, %v4876, %v3612
        %v4942 = vsel %vm4913, %v4877, %v3614
        %v4943 = vsel %vm4913, %v4878, %v3616
        %v4944 = vsel %vm4913, %v4879, %v3618
        %v4945 = vsel %vm4913, %v4880, %v3620
        %v4946 = vsel %vm4913, %v4881, %v3622
        %v4947 = vsel %vm4913, %v4882, %v3624
        %v4948 = vsel %vm4913, %v4883, %v3626
        %v4949 = vsel %vm4913, %v4884, %v3628
        %v4950 = vsel %vm4913, %v4885, %v3630
        %v4951 = vsel %vm4913, %v4886, %v3632
        %v4952 = vsel %vm4913, %v4887, %v3634
        %v4953 = vsel %vm4913, %v4888, %v3636
        %v4954 = vsel %vm4913, %v4889, %v3638
        %v4955 = vsel %vm4913, %v4890, %v3640
        %v4956 = vsel %vm4913, %v4891, %v3642
        %v4957 = vsel %vm4913, %v4892, %v3644
        %v4958 = vsel %vm4913, %v4893, %v3646
        %v4959 = vsel %vm4913, %v4894, %v3648
        %v4960 = vsel %vm4913, %v4895, %v3650
        %v4961 = vsel %vm4913, %v4896, %v3652
        %v4962 = vsel %vm4913, %v4897, %v3654
        %v4963 = vsel %vm4913, %v4898, %v3656
        %v4964 = vsel %vm4913, %v4899, %v3658
        %v4965 = vsel %vm4913, %v4900, %v3660
        %v4966 = vsel %vm4913, %v4901, %v3662
        %v4967 = vsel %vm4913, %v4902, %v3664
        %v4968 = vsel %vm4913, %v4903, %v3666
        %v4969 = vsel %vm4913, %v4904, %v3668
        %v4970 = vsel %vm4913, %v4905, %v3670
        %v4971 = vsel %vm4913, %v4906, %v3672
        %v4972 = vsel %vm4913, %v4907, %v3674
        %v4973 = vsel %vm4913, %v4908, %v3676
        %v4974 = vsel %vm4913, %v4909, %v3678
        %v4975 = vsel %vm4913, %v4910, %v3680
        %v4976 = vsel %vm4913, %v4911, %v3682
        %v4977 = vsel %vm4913, %v4912, %v3684
        %vm4978 = vcmask 457728
        %v4979 = vsel %vm4978, %v4914, %v3750
        %v4980 = vsel %vm4978, %v4915, %v3752
        %v4981 = vsel %vm4978, %v4916, %v3754
        %v4982 = vsel %vm4978, %v4917, %v3756
        %v4983 = vsel %vm4978, %v4918, %v3758
        %v4984 = vsel %vm4978, %v4919, %v3760
        %v4985 = vsel %vm4978, %v4920, %v3762
        %v4986 = vsel %vm4978, %v4921, %v3764
        %v4987 = vsel %vm4978, %v4922, %v3766
        %v4988 = vsel %vm4978, %v4923, %v3768
        %v4989 = vsel %vm4978, %v4924, %v3770
        %v4990 = vsel %vm4978, %v4925, %v3772
        %v4991 = vsel %vm4978, %v4926, %v3774
        %v4992 = vsel %vm4978, %v4927, %v3776
        %v4993 = vsel %vm4978, %v4928, %v3778
        %v4994 = vsel %vm4978, %v4929, %v3780
        %v4995 = vsel %vm4978, %v4930, %v3782
        %v4996 = vsel %vm4978, %v4931, %v3784
        %v4997 = vsel %vm4978, %v4932, %v3786
        %v4998 = vsel %vm4978, %v4933, %v3788
        %v4999 = vsel %vm4978, %v4934, %v3790
        %v5000 = vsel %vm4978, %v4935, %v3792
        %v5001 = vsel %vm4978, %v4936, %v3794
        %v5002 = vsel %vm4978, %v4937, %v3796
        %v5003 = vsel %vm4978, %v4938, %v3798
        %v5004 = vsel %vm4978, %v4939, %v3800
        %v5005 = vsel %vm4978, %v4940, %v3802
        %v5006 = vsel %vm4978, %v4941, %v3804
        %v5007 = vsel %vm4978, %v4942, %v3806
        %v5008 = vsel %vm4978, %v4943, %v3808
        %v5009 = vsel %vm4978, %v4944, %v3810
        %v5010 = vsel %vm4978, %v4945, %v3812
        %v5011 = vsel %vm4978, %v4946, %v3814
        %v5012 = vsel %vm4978, %v4947, %v3816
        %v5013 = vsel %vm4978, %v4948, %v3818
        %v5014 = vsel %vm4978, %v4949, %v3820
        %v5015 = vsel %vm4978, %v4950, %v3822
        %v5016 = vsel %vm4978, %v4951, %v3824
        %v5017 = vsel %vm4978, %v4952, %v3826
        %v5018 = vsel %vm4978, %v4953, %v3828
        %v5019 = vsel %vm4978, %v4954, %v3830
        %v5020 = vsel %vm4978, %v4955, %v3832
        %v5021 = vsel %vm4978, %v4956, %v3834
        %v5022 = vsel %vm4978, %v4957, %v3836
        %v5023 = vsel %vm4978, %v4958, %v3838
        %v5024 = vsel %vm4978, %v4959, %v3840
        %v5025 = vsel %vm4978, %v4960, %v3842
        %v5026 = vsel %vm4978, %v4961, %v3844
        %v5027 = vsel %vm4978, %v4962, %v3846
        %v5028 = vsel %vm4978, %v4963, %v3848
        %v5029 = vsel %vm4978, %v4964, %v3850
        %v5030 = vsel %vm4978, %v4965, %v3852
        %v5031 = vsel %vm4978, %v4966, %v3854
        %v5032 = vsel %vm4978, %v4967, %v3856
        %v5033 = vsel %vm4978, %v4968, %v3858
        %v5034 = vsel %vm4978, %v4969, %v3860
        %v5035 = vsel %vm4978, %v4970, %v3862
        %v5036 = vsel %vm4978, %v4971, %v3864
        %v5037 = vsel %vm4978, %v4972, %v3866
        %v5038 = vsel %vm4978, %v4973, %v3868
        %v5039 = vsel %vm4978, %v4974, %v3870
        %v5040 = vsel %vm4978, %v4975, %v3872
        %v5041 = vsel %vm4978, %v4976, %v3874
        %v5042 = vsel %vm4978, %v4977, %v3876
        %vm5043 = vcmask 490496
        %v5044 = vsel %vm5043, %v4979, %v3942
        %v5045 = vsel %vm5043, %v4980, %v3944
        %v5046 = vsel %vm5043, %v4981, %v3946
        %v5047 = vsel %vm5043, %v4982, %v3948
        %v5048 = vsel %vm5043, %v4983, %v3950
        %v5049 = vsel %vm5043, %v4984, %v3952
        %v5050 = vsel %vm5043, %v4985, %v3954
        %v5051 = vsel %vm5043, %v4986, %v3956
        %v5052 = vsel %vm5043, %v4987, %v3958
        %v5053 = vsel %vm5043, %v4988, %v3960
        %v5054 = vsel %vm5043, %v4989, %v3962
        %v5055 = vsel %vm5043, %v4990, %v3964
        %v5056 = vsel %vm5043, %v4991, %v3966
        %v5057 = vsel %vm5043, %v4992, %v3968
        %v5058 = vsel %vm5043, %v4993, %v3970
        %v5059 = vsel %vm5043, %v4994, %v3972
        %v5060 = vsel %vm5043, %v4995, %v3974
        %v5061 = vsel %vm5043, %v4996, %v3976
        %v5062 = vsel %vm5043, %v4997, %v3978
        %v5063 = vsel %vm5043, %v4998, %v3980
        %v5064 = vsel %vm5043, %v4999, %v3982
        %v5065 = vsel %vm5043, %v5000, %v3984
        %v5066 = vsel %vm5043, %v5001, %v3986
        %v5067 = vsel %vm5043, %v5002, %v3988
        %v5068 = vsel %vm5043, %v5003, %v3990
        %v5069 = vsel %vm5043, %v5004, %v3992
        %v5070 = vsel %vm5043, %v5005, %v3994
        %v5071 = vsel %vm5043, %v5006, %v3996
        %v5072 = vsel %vm5043, %v5007, %v3998
        %v5073 = vsel %vm5043, %v5008, %v4000
        %v5074 = vsel %vm5043, %v5009, %v4002
        %v5075 = vsel %vm5043, %v5010, %v4004
        %v5076 = vsel %vm5043, %v5011, %v4006
        %v5077 = vsel %vm5043, %v5012, %v4008
        %v5078 = vsel %vm5043, %v5013, %v4010
        %v5079 = vsel %vm5043, %v5014, %v4012
        %v5080 = vsel %vm5043, %v5015, %v4014
        %v5081 = vsel %vm5043, %v5016, %v4016
        %v5082 = vsel %vm5043, %v5017, %v4018
        %v5083 = vsel %vm5043, %v5018, %v4020
        %v5084 = vsel %vm5043, %v5019, %v4022
        %v5085 = vsel %vm5043, %v5020, %v4024
        %v5086 = vsel %vm5043, %v5021, %v4026
        %v5087 = vsel %vm5043, %v5022, %v4028
        %v5088 = vsel %vm5043, %v5023, %v4030
        %v5089 = vsel %vm5043, %v5024, %v4032
        %v5090 = vsel %vm5043, %v5025, %v4034
        %v5091 = vsel %vm5043, %v5026, %v4036
        %v5092 = vsel %vm5043, %v5027, %v4038
        %v5093 = vsel %vm5043, %v5028, %v4040
        %v5094 = vsel %vm5043, %v5029, %v4042
        %v5095 = vsel %vm5043, %v5030, %v4044
        %v5096 = vsel %vm5043, %v5031, %v4046
        %v5097 = vsel %vm5043, %v5032, %v4048
        %v5098 = vsel %vm5043, %v5033, %v4050
        %v5099 = vsel %vm5043, %v5034, %v4052
        %v5100 = vsel %vm5043, %v5035, %v4054
        %v5101 = vsel %vm5043, %v5036, %v4056
        %v5102 = vsel %vm5043, %v5037, %v4058
        %v5103 = vsel %vm5043, %v5038, %v4060
        %v5104 = vsel %vm5043, %v5039, %v4062
        %v5105 = vsel %vm5043, %v5040, %v4064
        %v5106 = vsel %vm5043, %v5041, %v4066
        %v5107 = vsel %vm5043, %v5042, %v4068
        %5108 = vrot.lane.b32.xlu0 %v741, 4
        %v5109 = vpop.permute.xlu0 %5108
        %5110 = vrot.lane.b32.xlu0 %v744, 4
        %v5111 = vpop.permute.xlu0 %5110
        %5112 = vrot.lane.b32.xlu0 %v747, 4
        %v5113 = vpop.permute.xlu0 %5112
        %5114 = vrot.lane.b32.xlu0 %v750, 4
        %v5115 = vpop.permute.xlu0 %5114
        %5116 = vrot.lane.b32.xlu0 %v753, 4
        %v5117 = vpop.permute.xlu0 %5116
        %5118 = vrot.lane.b32.xlu0 %v756, 4
        %v5119 = vpop.permute.xlu0 %5118
        %5120 = vrot.lane.b32.xlu0 %v946, 4
        %v5121 = vpop.permute.xlu0 %5120
        %5122 = vrot.lane.b32.xlu0 %v1010, 4
        %v5123 = vpop.permute.xlu0 %5122
        %5124 = vrot.lane.b32.xlu0 %v765, 4
        %v5125 = vpop.permute.xlu0 %5124
        %5126 = vrot.lane.b32.xlu0 %v768, 4
        %v5127 = vpop.permute.xlu0 %5126
        %5128 = vrot.lane.b32.xlu0 %v771, 4
        %v5129 = vpop.permute.xlu0 %5128
        %5130 = vrot.lane.b32.xlu0 %v774, 4
        %v5131 = vpop.permute.xlu0 %5130
        %5132 = vrot.lane.b32.xlu0 %v777, 4
        %v5133 = vpop.permute.xlu0 %5132
        %5134 = vrot.lane.b32.xlu0 %v780, 4
        %v5135 = vpop.permute.xlu0 %5134
        %5136 = vrot.lane.b32.xlu0 %v949, 4
        %v5137 = vpop.permute.xlu0 %5136
        %5138 = vrot.lane.b32.xlu0 %v1013, 4
        %v5139 = vpop.permute.xlu0 %5138
        %5140 = vrot.lane.b32.xlu0 %v789, 4
        %v5141 = vpop.permute.xlu0 %5140
        %5142 = vrot.lane.b32.xlu0 %v792, 4
        %v5143 = vpop.permute.xlu0 %5142
        %5144 = vrot.lane.b32.xlu0 %v795, 4
        %v5145 = vpop.permute.xlu0 %5144
        %5146 = vrot.lane.b32.xlu0 %v798, 4
        %v5147 = vpop.permute.xlu0 %5146
        %5148 = vrot.lane.b32.xlu0 %v801, 4
        %v5149 = vpop.permute.xlu0 %5148
        %5150 = vrot.lane.b32.xlu0 %v804, 4
        %v5151 = vpop.permute.xlu0 %5150
        %5152 = vrot.lane.b32.xlu0 %v952, 4
        %v5153 = vpop.permute.xlu0 %5152
        %5154 = vrot.lane.b32.xlu0 %v1016, 4
        %v5155 = vpop.permute.xlu0 %5154
        %5156 = vrot.lane.b32.xlu0 %v813, 4
        %v5157 = vpop.permute.xlu0 %5156
        %5158 = vrot.lane.b32.xlu0 %v816, 4
        %v5159 = vpop.permute.xlu0 %5158
        %5160 = vrot.lane.b32.xlu0 %v819, 4
        %v5161 = vpop.permute.xlu0 %5160
        %5162 = vrot.lane.b32.xlu0 %v822, 4
        %v5163 = vpop.permute.xlu0 %5162
        %5164 = vrot.lane.b32.xlu0 %v825, 4
        %v5165 = vpop.permute.xlu0 %5164
        %5166 = vrot.lane.b32.xlu0 %v828, 4
        %v5167 = vpop.permute.xlu0 %5166
        %5168 = vrot.lane.b32.xlu0 %v955, 4
        %v5169 = vpop.permute.xlu0 %5168
        %5170 = vrot.lane.b32.xlu0 %v1019, 4
        %v5171 = vpop.permute.xlu0 %5170
        %5172 = vrot.lane.b32.xlu0 %v837, 4
        %v5173 = vpop.permute.xlu0 %5172
        %5174 = vrot.lane.b32.xlu0 %v840, 4
        %v5175 = vpop.permute.xlu0 %5174
        %5176 = vrot.lane.b32.xlu0 %v843, 4
        %v5177 = vpop.permute.xlu0 %5176
        %5178 = vrot.lane.b32.xlu0 %v846, 4
        %v5179 = vpop.permute.xlu0 %5178
        %5180 = vrot.lane.b32.xlu0 %v849, 4
        %v5181 = vpop.permute.xlu0 %5180
        %5182 = vrot.lane.b32.xlu0 %v852, 4
        %v5183 = vpop.permute.xlu0 %5182
        %5184 = vrot.lane.b32.xlu0 %v958, 4
        %v5185 = vpop.permute.xlu0 %5184
        %5186 = vrot.lane.b32.xlu0 %v1022, 4
        %v5187 = vpop.permute.xlu0 %5186
        %5188 = vrot.lane.b32.xlu0 %v861, 4
        %v5189 = vpop.permute.xlu0 %5188
        %5190 = vrot.lane.b32.xlu0 %v864, 4
        %v5191 = vpop.permute.xlu0 %5190
        %5192 = vrot.lane.b32.xlu0 %v867, 4
        %v5193 = vpop.permute.xlu0 %5192
        %5194 = vrot.lane.b32.xlu0 %v870, 4
        %v5195 = vpop.permute.xlu0 %5194
        %5196 = vrot.lane.b32.xlu0 %v873, 4
        %v5197 = vpop.permute.xlu0 %5196
        %5198 = vrot.lane.b32.xlu0 %v876, 4
        %v5199 = vpop.permute.xlu0 %5198
        %5200 = vrot.lane.b32.xlu0 %v961, 4
        %v5201 = vpop.permute.xlu0 %5200
        %5202 = vrot.lane.b32.xlu0 %v1025, 4
        %v5203 = vpop.permute.xlu0 %5202
        %5204 = vrot.lane.b32.xlu0 %v885, 4
        %v5205 = vpop.permute.xlu0 %5204
        %5206 = vrot.lane.b32.xlu0 %v888, 4
        %v5207 = vpop.permute.xlu0 %5206
        %5208 = vrot.lane.b32.xlu0 %v891, 4
        %v5209 = vpop.permute.xlu0 %5208
        %5210 = vrot.lane.b32.xlu0 %v894, 4
        %v5211 = vpop.permute.xlu0 %5210
        %5212 = vrot.lane.b32.xlu0 %v897, 4
        %v5213 = vpop.permute.xlu0 %5212
        %5214 = vrot.lane.b32.xlu0 %v900, 4
        %v5215 = vpop.permute.xlu0 %5214
        %5216 = vrot.lane.b32.xlu0 %v964, 4
        %v5217 = vpop.permute.xlu0 %5216
        %5218 = vrot.lane.b32.xlu0 %v1028, 4
        %v5219 = vpop.permute.xlu0 %5218
        %5220 = vrot.lane.b32.xlu0 %v1077, 4
        %v5221 = vpop.permute.xlu0 %5220
        %5222 = vrot.lane.b32.xlu0 %v1080, 4
        %v5223 = vpop.permute.xlu0 %5222
        %5224 = vrot.lane.b32.xlu0 %v1083, 4
        %v5225 = vpop.permute.xlu0 %5224
        %5226 = vrot.lane.b32.xlu0 %v1086, 4
        %v5227 = vpop.permute.xlu0 %5226
        %5228 = vrot.lane.b32.xlu0 %v1089, 4
        %v5229 = vpop.permute.xlu0 %5228
        %5230 = vrot.lane.b32.xlu0 %v1092, 4
        %v5231 = vpop.permute.xlu0 %5230
        %5232 = vrot.lane.b32.xlu0 %v1100, 4
        %v5233 = vpop.permute.xlu0 %5232
        %5234 = vrot.lane.b32.xlu0 %v1172, 4
        %v5235 = vpop.permute.xlu0 %5234
        %5300 = vrot.lane.b32.xlu0 %v227, 8
        %v5301 = vpop.permute.xlu0 %5300
        %5302 = vrot.lane.b32.xlu0 %v229, 8
        %v5303 = vpop.permute.xlu0 %5302
        %5304 = vrot.lane.b32.xlu0 %v231, 8
        %v5305 = vpop.permute.xlu0 %5304
        %5306 = vrot.lane.b32.xlu0 %v233, 8
        %v5307 = vpop.permute.xlu0 %5306
        %5308 = vrot.lane.b32.xlu0 %v235, 8
        %v5309 = vpop.permute.xlu0 %5308
        %5310 = vrot.lane.b32.xlu0 %v237, 8
        %v5311 = vpop.permute.xlu0 %5310
        %5312 = vrot.lane.b32.xlu0 %v239, 8
        %v5313 = vpop.permute.xlu0 %5312
        %5314 = vrot.lane.b32.xlu0 %v241, 8
        %v5315 = vpop.permute.xlu0 %5314
        %5316 = vrot.lane.b32.xlu0 %v247, 8
        %v5317 = vpop.permute.xlu0 %5316
        %5318 = vrot.lane.b32.xlu0 %v249, 8
        %v5319 = vpop.permute.xlu0 %5318
        %5320 = vrot.lane.b32.xlu0 %v251, 8
        %v5321 = vpop.permute.xlu0 %5320
        %5322 = vrot.lane.b32.xlu0 %v253, 8
        %v5323 = vpop.permute.xlu0 %5322
        %5324 = vrot.lane.b32.xlu0 %v255, 8
        %v5325 = vpop.permute.xlu0 %5324
        %5326 = vrot.lane.b32.xlu0 %v257, 8
        %v5327 = vpop.permute.xlu0 %5326
        %5328 = vrot.lane.b32.xlu0 %v259, 8
        %v5329 = vpop.permute.xlu0 %5328
        %5330 = vrot.lane.b32.xlu0 %v261, 8
        %v5331 = vpop.permute.xlu0 %5330
        %5332 = vrot.lane.b32.xlu0 %v267, 8
        %v5333 = vpop.permute.xlu0 %5332
        %5334 = vrot.lane.b32.xlu0 %v269, 8
        %v5335 = vpop.permute.xlu0 %5334
        %5336 = vrot.lane.b32.xlu0 %v271, 8
        %v5337 = vpop.permute.xlu0 %5336
        %5338 = vrot.lane.b32.xlu0 %v273, 8
        %v5339 = vpop.permute.xlu0 %5338
        %5340 = vrot.lane.b32.xlu0 %v275, 8
        %v5341 = vpop.permute.xlu0 %5340
        %5342 = vrot.lane.b32.xlu0 %v277, 8
        %v5343 = vpop.permute.xlu0 %5342
        %5344 = vrot.lane.b32.xlu0 %v279, 8
        %v5345 = vpop.permute.xlu0 %5344
        %5346 = vrot.lane.b32.xlu0 %v281, 8
        %v5347 = vpop.permute.xlu0 %5346
        %5348 = vrot.lane.b32.xlu0 %v287, 8
        %v5349 = vpop.permute.xlu0 %5348
        %5350 = vrot.lane.b32.xlu0 %v289, 8
        %v5351 = vpop.permute.xlu0 %5350
        %5352 = vrot.lane.b32.xlu0 %v291, 8
        %v5353 = vpop.permute.xlu0 %5352
        %5354 = vrot.lane.b32.xlu0 %v293, 8
        %v5355 = vpop.permute.xlu0 %5354
        %5356 = vrot.lane.b32.xlu0 %v295, 8
        %v5357 = vpop.permute.xlu0 %5356
        %5358 = vrot.lane.b32.xlu0 %v297, 8
        %v5359 = vpop.permute.xlu0 %5358
        %5360 = vrot.lane.b32.xlu0 %v299, 8
        %v5361 = vpop.permute.xlu0 %5360
        %5362 = vrot.lane.b32.xlu0 %v301, 8
        %v5363 = vpop.permute.xlu0 %5362
        %5364 = vrot.lane.b32.xlu0 %v307, 8
        %v5365 = vpop.permute.xlu0 %5364
        %5366 = vrot.lane.b32.xlu0 %v309, 8
        %v5367 = vpop.permute.xlu0 %5366
        %5368 = vrot.lane.b32.xlu0 %v311, 8
        %v5369 = vpop.permute.xlu0 %5368
        %5370 = vrot.lane.b32.xlu0 %v313, 8
        %v5371 = vpop.permute.xlu0 %5370
        %5372 = vrot.lane.b32.xlu0 %v315, 8
        %v5373 = vpop.permute.xlu0 %5372
        %5374 = vrot.lane.b32.xlu0 %v317, 8
        %v5375 = vpop.permute.xlu0 %5374
        %5376 = vrot.lane.b32.xlu0 %v319, 8
        %v5377 = vpop.permute.xlu0 %5376
        %5378 = vrot.lane.b32.xlu0 %v321, 8
        %v5379 = vpop.permute.xlu0 %5378
        %5380 = vrot.lane.b32.xlu0 %v327, 8
        %v5381 = vpop.permute.xlu0 %5380
        %5382 = vrot.lane.b32.xlu0 %v329, 8
        %v5383 = vpop.permute.xlu0 %5382
        %5384 = vrot.lane.b32.xlu0 %v331, 8
        %v5385 = vpop.permute.xlu0 %5384
        %5386 = vrot.lane.b32.xlu0 %v333, 8
        %v5387 = vpop.permute.xlu0 %5386
        %5388 = vrot.lane.b32.xlu0 %v335, 8
        %v5389 = vpop.permute.xlu0 %5388
        %5390 = vrot.lane.b32.xlu0 %v337, 8
        %v5391 = vpop.permute.xlu0 %5390
        %5392 = vrot.lane.b32.xlu0 %v339, 8
        %v5393 = vpop.permute.xlu0 %5392
        %5394 = vrot.lane.b32.xlu0 %v341, 8
        %v5395 = vpop.permute.xlu0 %5394
        %5396 = vrot.lane.b32.xlu0 %v347, 8
        %v5397 = vpop.permute.xlu0 %5396
        %5398 = vrot.lane.b32.xlu0 %v349, 8
        %v5399 = vpop.permute.xlu0 %5398
        %5400 = vrot.lane.b32.xlu0 %v351, 8
        %v5401 = vpop.permute.xlu0 %5400
        %5402 = vrot.lane.b32.xlu0 %v353, 8
        %v5403 = vpop.permute.xlu0 %5402
        %5404 = vrot.lane.b32.xlu0 %v355, 8
        %v5405 = vpop.permute.xlu0 %5404
        %5406 = vrot.lane.b32.xlu0 %v357, 8
        %v5407 = vpop.permute.xlu0 %5406
        %5408 = vrot.lane.b32.xlu0 %v359, 8
        %v5409 = vpop.permute.xlu0 %5408
        %5410 = vrot.lane.b32.xlu0 %v361, 8
        %v5411 = vpop.permute.xlu0 %5410
        %5412 = vrot.lane.b32.xlu0 %v367, 8
        %v5413 = vpop.permute.xlu0 %5412
        %5414 = vrot.lane.b32.xlu0 %v369, 8
        %v5415 = vpop.permute.xlu0 %5414
        %5416 = vrot.lane.b32.xlu0 %v371, 8
        %v5417 = vpop.permute.xlu0 %5416
        %5418 = vrot.lane.b32.xlu0 %v373, 8
        %v5419 = vpop.permute.xlu0 %5418
        %5420 = vrot.lane.b32.xlu0 %v375, 8
        %v5421 = vpop.permute.xlu0 %5420
        %5422 = vrot.lane.b32.xlu0 %v377, 8
        %v5423 = vpop.permute.xlu0 %5422
        %5424 = vrot.lane.b32.xlu0 %v379, 8
        %v5425 = vpop.permute.xlu0 %5424
        %5426 = vrot.lane.b32.xlu0 %v381, 8
        %v5427 = vpop.permute.xlu0 %5426
        %5492 = vrot.lane.b32.xlu0 %v566, 12
        %v5493 = vpop.permute.xlu0 %5492
        %5494 = vrot.lane.b32.xlu0 %v569, 12
        %v5495 = vpop.permute.xlu0 %5494
        %5496 = vrot.lane.b32.xlu0 %v572, 12
        %v5497 = vpop.permute.xlu0 %5496
        %5498 = vrot.lane.b32.xlu0 %v575, 12
        %v5499 = vpop.permute.xlu0 %5498
        %5500 = vrot.lane.b32.xlu0 %v578, 12
        %v5501 = vpop.permute.xlu0 %5500
        %5502 = vrot.lane.b32.xlu0 %v581, 12
        %v5503 = vpop.permute.xlu0 %5502
        %5504 = vrot.lane.b32.xlu0 %v584, 12
        %v5505 = vpop.permute.xlu0 %5504
        %5506 = vrot.lane.b32.xlu0 %v587, 12
        %v5507 = vpop.permute.xlu0 %5506
        %5508 = vrot.lane.b32.xlu0 %v590, 12
        %v5509 = vpop.permute.xlu0 %5508
        %5510 = vrot.lane.b32.xlu0 %v593, 12
        %v5511 = vpop.permute.xlu0 %5510
        %5512 = vrot.lane.b32.xlu0 %v596, 12
        %v5513 = vpop.permute.xlu0 %5512
        %5514 = vrot.lane.b32.xlu0 %v599, 12
        %v5515 = vpop.permute.xlu0 %5514
        %5516 = vrot.lane.b32.xlu0 %v602, 12
        %v5517 = vpop.permute.xlu0 %5516
        %5518 = vrot.lane.b32.xlu0 %v605, 12
        %v5519 = vpop.permute.xlu0 %5518
        %5520 = vrot.lane.b32.xlu0 %v608, 12
        %v5521 = vpop.permute.xlu0 %5520
        %5522 = vrot.lane.b32.xlu0 %v611, 12
        %v5523 = vpop.permute.xlu0 %5522
        %5524 = vrot.lane.b32.xlu0 %v614, 12
        %v5525 = vpop.permute.xlu0 %5524
        %5526 = vrot.lane.b32.xlu0 %v617, 12
        %v5527 = vpop.permute.xlu0 %5526
        %5528 = vrot.lane.b32.xlu0 %v620, 12
        %v5529 = vpop.permute.xlu0 %5528
        %5530 = vrot.lane.b32.xlu0 %v623, 12
        %v5531 = vpop.permute.xlu0 %5530
        %5532 = vrot.lane.b32.xlu0 %v626, 12
        %v5533 = vpop.permute.xlu0 %5532
        %5534 = vrot.lane.b32.xlu0 %v629, 12
        %v5535 = vpop.permute.xlu0 %5534
        %5536 = vrot.lane.b32.xlu0 %v632, 12
        %v5537 = vpop.permute.xlu0 %5536
        %5538 = vrot.lane.b32.xlu0 %v635, 12
        %v5539 = vpop.permute.xlu0 %5538
        %5540 = vrot.lane.b32.xlu0 %v638, 12
        %v5541 = vpop.permute.xlu0 %5540
        %5542 = vrot.lane.b32.xlu0 %v641, 12
        %v5543 = vpop.permute.xlu0 %5542
        %5544 = vrot.lane.b32.xlu0 %v644, 12
        %v5545 = vpop.permute.xlu0 %5544
        %5546 = vrot.lane.b32.xlu0 %v647, 12
        %v5547 = vpop.permute.xlu0 %5546
        %5548 = vrot.lane.b32.xlu0 %v650, 12
        %v5549 = vpop.permute.xlu0 %5548
        %5550 = vrot.lane.b32.xlu0 %v653, 12
        %v5551 = vpop.permute.xlu0 %5550
        %5552 = vrot.lane.b32.xlu0 %v656, 12
        %v5553 = vpop.permute.xlu0 %5552
        %5554 = vrot.lane.b32.xlu0 %v659, 12
        %v5555 = vpop.permute.xlu0 %5554
        %5556 = vrot.lane.b32.xlu0 %v662, 12
        %v5557 = vpop.permute.xlu0 %5556
        %5558 = vrot.lane.b32.xlu0 %v665, 12
        %v5559 = vpop.permute.xlu0 %5558
        %5560 = vrot.lane.b32.xlu0 %v668, 12
        %v5561 = vpop.permute.xlu0 %5560
        %5562 = vrot.lane.b32.xlu0 %v671, 12
        %v5563 = vpop.permute.xlu0 %5562
        %5564 = vrot.lane.b32.xlu0 %v674, 12
        %v5565 = vpop.permute.xlu0 %5564
        %5566 = vrot.lane.b32.xlu0 %v677, 12
        %v5567 = vpop.permute.xlu0 %5566
        %5568 = vrot.lane.b32.xlu0 %v680, 12
        %v5569 = vpop.permute.xlu0 %5568
        %5570 = vrot.lane.b32.xlu0 %v683, 12
        %v5571 = vpop.permute.xlu0 %5570
        %5572 = vrot.lane.b32.xlu0 %v686, 12
        %v5573 = vpop.permute.xlu0 %5572
        %5574 = vrot.lane.b32.xlu0 %v689, 12
        %v5575 = vpop.permute.xlu0 %5574
        %5576 = vrot.lane.b32.xlu0 %v692, 12
        %v5577 = vpop.permute.xlu0 %5576
        %5578 = vrot.lane.b32.xlu0 %v695, 12
        %v5579 = vpop.permute.xlu0 %5578
        %5580 = vrot.lane.b32.xlu0 %v698, 12
        %v5581 = vpop.permute.xlu0 %5580
        %5582 = vrot.lane.b32.xlu0 %v701, 12
        %v5583 = vpop.permute.xlu0 %5582
        %5584 = vrot.lane.b32.xlu0 %v704, 12
        %v5585 = vpop.permute.xlu0 %5584
        %5586 = vrot.lane.b32.xlu0 %v707, 12
        %v5587 = vpop.permute.xlu0 %5586
        %5588 = vrot.lane.b32.xlu0 %v1047, 12
        %v5589 = vpop.permute.xlu0 %5588
        %5590 = vrot.lane.b32.xlu0 %v1050, 12
        %v5591 = vpop.permute.xlu0 %5590
        %5592 = vrot.lane.b32.xlu0 %v1053, 12
        %v5593 = vpop.permute.xlu0 %5592
        %5594 = vrot.lane.b32.xlu0 %v1056, 12
        %v5595 = vpop.permute.xlu0 %5594
        %5596 = vrot.lane.b32.xlu0 %v1059, 12
        %v5597 = vpop.permute.xlu0 %5596
        %5598 = vrot.lane.b32.xlu0 %v1062, 12
        %v5599 = vpop.permute.xlu0 %5598
        %5600 = vrot.lane.b32.xlu0 %v1065, 12
        %v5601 = vpop.permute.xlu0 %5600
        %5602 = vrot.lane.b32.xlu0 %v1068, 12
        %v5603 = vpop.permute.xlu0 %5602
        %5604 = vrot.lane.b32.xlu0 %v1191, 12
        %v5605 = vpop.permute.xlu0 %5604
        %5606 = vrot.lane.b32.xlu0 %v1194, 12
        %v5607 = vpop.permute.xlu0 %5606
        %5608 = vrot.lane.b32.xlu0 %v1197, 12
        %v5609 = vpop.permute.xlu0 %5608
        %5610 = vrot.lane.b32.xlu0 %v1200, 12
        %v5611 = vpop.permute.xlu0 %5610
        %5612 = vrot.lane.b32.xlu0 %v1203, 12
        %v5613 = vpop.permute.xlu0 %5612
        %5614 = vrot.lane.b32.xlu0 %v1206, 12
        %v5615 = vpop.permute.xlu0 %5614
        %5616 = vrot.lane.b32.xlu0 %v1209, 12
        %v5617 = vpop.permute.xlu0 %5616
        %5618 = vrot.lane.b32.xlu0 %v1212, 12
        %v5619 = vpop.permute.xlu0 %5618
        %5684 = vrot.lane.b32.xlu0 %v759, 16
        %v5685 = vpop.permute.xlu0 %5684
        %5686 = vrot.lane.b32.xlu0 %v762, 16
        %v5687 = vpop.permute.xlu0 %5686
        %5688 = vrot.lane.b32.xlu0 %v765, 16
        %v5689 = vpop.permute.xlu0 %5688
        %5690 = vrot.lane.b32.xlu0 %v768, 16
        %v5691 = vpop.permute.xlu0 %5690
        %5692 = vrot.lane.b32.xlu0 %v771, 16
        %v5693 = vpop.permute.xlu0 %5692
        %5694 = vrot.lane.b32.xlu0 %v774, 16
        %v5695 = vpop.permute.xlu0 %5694
        %5696 = vrot.lane.b32.xlu0 %v777, 16
        %v5697 = vpop.permute.xlu0 %5696
        %5698 = vrot.lane.b32.xlu0 %v780, 16
        %v5699 = vpop.permute.xlu0 %5698
        %5700 = vrot.lane.b32.xlu0 %v783, 16
        %v5701 = vpop.permute.xlu0 %5700
        %5702 = vrot.lane.b32.xlu0 %v786, 16
        %v5703 = vpop.permute.xlu0 %5702
        %5704 = vrot.lane.b32.xlu0 %v789, 16
        %v5705 = vpop.permute.xlu0 %5704
        %5706 = vrot.lane.b32.xlu0 %v792, 16
        %v5707 = vpop.permute.xlu0 %5706
        %5708 = vrot.lane.b32.xlu0 %v795, 16
        %v5709 = vpop.permute.xlu0 %5708
        %5710 = vrot.lane.b32.xlu0 %v798, 16
        %v5711 = vpop.permute.xlu0 %5710
        %5712 = vrot.lane.b32.xlu0 %v801, 16
        %v5713 = vpop.permute.xlu0 %5712
        %5714 = vrot.lane.b32.xlu0 %v804, 16
        %v5715 = vpop.permute.xlu0 %5714
        %5716 = vrot.lane.b32.xlu0 %v807, 16
        %v5717 = vpop.permute.xlu0 %5716
        %5718 = vrot.lane.b32.xlu0 %v810, 16
        %v5719 = vpop.permute.xlu0 %5718
        %5720 = vrot.lane.b32.xlu0 %v813, 16
        %v5721 = vpop.permute.xlu0 %5720
        %5722 = vrot.lane.b32.xlu0 %v816, 16
        %v5723 = vpop.permute.xlu0 %5722
        %5724 = vrot.lane.b32.xlu0 %v819, 16
        %v5725 = vpop.permute.xlu0 %5724
        %5726 = vrot.lane.b32.xlu0 %v822, 16
        %v5727 = vpop.permute.xlu0 %5726
        %5728 = vrot.lane.b32.xlu0 %v825, 16
        %v5729 = vpop.permute.xlu0 %5728
        %5730 = vrot.lane.b32.xlu0 %v828, 16
        %v5731 = vpop.permute.xlu0 %5730
        %5732 = vrot.lane.b32.xlu0 %v831, 16
        %v5733 = vpop.permute.xlu0 %5732
        %5734 = vrot.lane.b32.xlu0 %v834, 16
        %v5735 = vpop.permute.xlu0 %5734
        %5736 = vrot.lane.b32.xlu0 %v837, 16
        %v5737 = vpop.permute.xlu0 %5736
        %5738 = vrot.lane.b32.xlu0 %v840, 16
        %v5739 = vpop.permute.xlu0 %5738
        %5740 = vrot.lane.b32.xlu0 %v843, 16
        %v5741 = vpop.permute.xlu0 %5740
        %5742 = vrot.lane.b32.xlu0 %v846, 16
        %v5743 = vpop.permute.xlu0 %5742
        %5744 = vrot.lane.b32.xlu0 %v849, 16
        %v5745 = vpop.permute.xlu0 %5744
        %5746 = vrot.lane.b32.xlu0 %v852, 16
        %v5747 = vpop.permute.xlu0 %5746
        %5748 = vrot.lane.b32.xlu0 %v855, 16
        %v5749 = vpop.permute.xlu0 %5748
        %5750 = vrot.lane.b32.xlu0 %v858, 16
        %v5751 = vpop.permute.xlu0 %5750
        %5752 = vrot.lane.b32.xlu0 %v861, 16
        %v5753 = vpop.permute.xlu0 %5752
        %5754 = vrot.lane.b32.xlu0 %v864, 16
        %v5755 = vpop.permute.xlu0 %5754
        %5756 = vrot.lane.b32.xlu0 %v867, 16
        %v5757 = vpop.permute.xlu0 %5756
        %5758 = vrot.lane.b32.xlu0 %v870, 16
        %v5759 = vpop.permute.xlu0 %5758
        %5760 = vrot.lane.b32.xlu0 %v873, 16
        %v5761 = vpop.permute.xlu0 %5760
        %5762 = vrot.lane.b32.xlu0 %v876, 16
        %v5763 = vpop.permute.xlu0 %5762
        %5764 = vrot.lane.b32.xlu0 %v879, 16
        %v5765 = vpop.permute.xlu0 %5764
        %5766 = vrot.lane.b32.xlu0 %v882, 16
        %v5767 = vpop.permute.xlu0 %5766
        %5768 = vrot.lane.b32.xlu0 %v885, 16
        %v5769 = vpop.permute.xlu0 %5768
        %5770 = vrot.lane.b32.xlu0 %v888, 16
        %v5771 = vpop.permute.xlu0 %5770
        %5772 = vrot.lane.b32.xlu0 %v891, 16
        %v5773 = vpop.permute.xlu0 %5772
        %5774 = vrot.lane.b32.xlu0 %v894, 16
        %v5775 = vpop.permute.xlu0 %5774
        %5776 = vrot.lane.b32.xlu0 %v897, 16
        %v5777 = vpop.permute.xlu0 %5776
        %5778 = vrot.lane.b32.xlu0 %v900, 16
        %v5779 = vpop.permute.xlu0 %5778
        %5780 = vrot.lane.b32.xlu0 %v1071, 16
        %v5781 = vpop.permute.xlu0 %5780
        %5782 = vrot.lane.b32.xlu0 %v1074, 16
        %v5783 = vpop.permute.xlu0 %5782
        %5784 = vrot.lane.b32.xlu0 %v1077, 16
        %v5785 = vpop.permute.xlu0 %5784
        %5786 = vrot.lane.b32.xlu0 %v1080, 16
        %v5787 = vpop.permute.xlu0 %5786
        %5788 = vrot.lane.b32.xlu0 %v1083, 16
        %v5789 = vpop.permute.xlu0 %5788
        %5790 = vrot.lane.b32.xlu0 %v1086, 16
        %v5791 = vpop.permute.xlu0 %5790
        %5792 = vrot.lane.b32.xlu0 %v1089, 16
        %v5793 = vpop.permute.xlu0 %5792
        %5794 = vrot.lane.b32.xlu0 %v1092, 16
        %v5795 = vpop.permute.xlu0 %5794
        %5796 = vrot.lane.b32.xlu0 %v1215, 16
        %v5797 = vpop.permute.xlu0 %5796
        %5798 = vrot.lane.b32.xlu0 %v1218, 16
        %v5799 = vpop.permute.xlu0 %5798
        %5800 = vrot.lane.b32.xlu0 %v1221, 16
        %v5801 = vpop.permute.xlu0 %5800
        %5802 = vrot.lane.b32.xlu0 %v1224, 16
        %v5803 = vpop.permute.xlu0 %5802
        %5804 = vrot.lane.b32.xlu0 %v1227, 16
        %v5805 = vpop.permute.xlu0 %5804
        %5806 = vrot.lane.b32.xlu0 %v1230, 16
        %v5807 = vpop.permute.xlu0 %5806
        %5808 = vrot.lane.b32.xlu0 %v1233, 16
        %v5809 = vpop.permute.xlu0 %5808
        %5810 = vrot.lane.b32.xlu0 %v1236, 16
        %v5811 = vpop.permute.xlu0 %5810
        %5876 = vrot.lane.b32.xlu0 %v229, 20
        %v5877 = vpop.permute.xlu0 %5876
        %5878 = vrot.lane.b32.xlu0 %v231, 20
        %v5879 = vpop.permute.xlu0 %5878
        %5880 = vrot.lane.b32.xlu0 %v233, 20
        %v5881 = vpop.permute.xlu0 %5880
        %5882 = vrot.lane.b32.xlu0 %v235, 20
        %v5883 = vpop.permute.xlu0 %5882
        %5884 = vrot.lane.b32.xlu0 %v237, 20
        %v5885 = vpop.permute.xlu0 %5884
        %5886 = vrot.lane.b32.xlu0 %v239, 20
        %v5887 = vpop.permute.xlu0 %5886
        %5888 = vrot.lane.b32.xlu0 %v241, 20
        %v5889 = vpop.permute.xlu0 %5888
        %5890 = vrot.lane.b32.xlu0 %v243, 20
        %v5891 = vpop.permute.xlu0 %5890
        %5892 = vrot.lane.b32.xlu0 %v249, 20
        %v5893 = vpop.permute.xlu0 %5892
        %5894 = vrot.lane.b32.xlu0 %v251, 20
        %v5895 = vpop.permute.xlu0 %5894
        %5896 = vrot.lane.b32.xlu0 %v253, 20
        %v5897 = vpop.permute.xlu0 %5896
        %5898 = vrot.lane.b32.xlu0 %v255, 20
        %v5899 = vpop.permute.xlu0 %5898
        %5900 = vrot.lane.b32.xlu0 %v257, 20
        %v5901 = vpop.permute.xlu0 %5900
        %5902 = vrot.lane.b32.xlu0 %v259, 20
        %v5903 = vpop.permute.xlu0 %5902
        %5904 = vrot.lane.b32.xlu0 %v261, 20
        %v5905 = vpop.permute.xlu0 %5904
        %5906 = vrot.lane.b32.xlu0 %v263, 20
        %v5907 = vpop.permute.xlu0 %5906
        %5908 = vrot.lane.b32.xlu0 %v269, 20
        %v5909 = vpop.permute.xlu0 %5908
        %5910 = vrot.lane.b32.xlu0 %v271, 20
        %v5911 = vpop.permute.xlu0 %5910
        %5912 = vrot.lane.b32.xlu0 %v273, 20
        %v5913 = vpop.permute.xlu0 %5912
        %5914 = vrot.lane.b32.xlu0 %v275, 20
        %v5915 = vpop.permute.xlu0 %5914
        %5916 = vrot.lane.b32.xlu0 %v277, 20
        %v5917 = vpop.permute.xlu0 %5916
        %5918 = vrot.lane.b32.xlu0 %v279, 20
        %v5919 = vpop.permute.xlu0 %5918
        %5920 = vrot.lane.b32.xlu0 %v281, 20
        %v5921 = vpop.permute.xlu0 %5920
        %5922 = vrot.lane.b32.xlu0 %v283, 20
        %v5923 = vpop.permute.xlu0 %5922
        %5924 = vrot.lane.b32.xlu0 %v289, 20
        %v5925 = vpop.permute.xlu0 %5924
        %5926 = vrot.lane.b32.xlu0 %v291, 20
        %v5927 = vpop.permute.xlu0 %5926
        %5928 = vrot.lane.b32.xlu0 %v293, 20
        %v5929 = vpop.permute.xlu0 %5928
        %5930 = vrot.lane.b32.xlu0 %v295, 20
        %v5931 = vpop.permute.xlu0 %5930
        %5932 = vrot.lane.b32.xlu0 %v297, 20
        %v5933 = vpop.permute.xlu0 %5932
        %5934 = vrot.lane.b32.xlu0 %v299, 20
        %v5935 = vpop.permute.xlu0 %5934
        %5936 = vrot.lane.b32.xlu0 %v301, 20
        %v5937 = vpop.permute.xlu0 %5936
        %5938 = vrot.lane.b32.xlu0 %v303, 20
        %v5939 = vpop.permute.xlu0 %5938
        %5940 = vrot.lane.b32.xlu0 %v309, 20
        %v5941 = vpop.permute.xlu0 %5940
        %5942 = vrot.lane.b32.xlu0 %v311, 20
        %v5943 = vpop.permute.xlu0 %5942
        %5944 = vrot.lane.b32.xlu0 %v313, 20
        %v5945 = vpop.permute.xlu0 %5944
        %5946 = vrot.lane.b32.xlu0 %v315, 20
        %v5947 = vpop.permute.xlu0 %5946
        %5948 = vrot.lane.b32.xlu0 %v317, 20
        %v5949 = vpop.permute.xlu0 %5948
        %5950 = vrot.lane.b32.xlu0 %v319, 20
        %v5951 = vpop.permute.xlu0 %5950
        %5952 = vrot.lane.b32.xlu0 %v321, 20
        %v5953 = vpop.permute.xlu0 %5952
        %5954 = vrot.lane.b32.xlu0 %v323, 20
        %v5955 = vpop.permute.xlu0 %5954
        %5956 = vrot.lane.b32.xlu0 %v329, 20
        %v5957 = vpop.permute.xlu0 %5956
        %5958 = vrot.lane.b32.xlu0 %v331, 20
        %v5959 = vpop.permute.xlu0 %5958
        %5960 = vrot.lane.b32.xlu0 %v333, 20
        %v5961 = vpop.permute.xlu0 %5960
        %5962 = vrot.lane.b32.xlu0 %v335, 20
        %v5963 = vpop.permute.xlu0 %5962
        %5964 = vrot.lane.b32.xlu0 %v337, 20
        %v5965 = vpop.permute.xlu0 %5964
        %5966 = vrot.lane.b32.xlu0 %v339, 20
        %v5967 = vpop.permute.xlu0 %5966
        %5968 = vrot.lane.b32.xlu0 %v341, 20
        %v5969 = vpop.permute.xlu0 %5968
        %5970 = vrot.lane.b32.xlu0 %v343, 20
        %v5971 = vpop.permute.xlu0 %5970
        %5972 = vrot.lane.b32.xlu0 %v349, 20
        %v5973 = vpop.permute.xlu0 %5972
        %5974 = vrot.lane.b32.xlu0 %v351, 20
        %v5975 = vpop.permute.xlu0 %5974
        %5976 = vrot.lane.b32.xlu0 %v353, 20
        %v5977 = vpop.permute.xlu0 %5976
        %5978 = vrot.lane.b32.xlu0 %v355, 20
        %v5979 = vpop.permute.xlu0 %5978
        %5980 = vrot.lane.b32.xlu0 %v357, 20
        %v5981 = vpop.permute.xlu0 %5980
        %5982 = vrot.lane.b32.xlu0 %v359, 20
        %v5983 = vpop.permute.xlu0 %5982
        %5984 = vrot.lane.b32.xlu0 %v361, 20
        %v5985 = vpop.permute.xlu0 %5984
        %5986 = vrot.lane.b32.xlu0 %v363, 20
        %v5987 = vpop.permute.xlu0 %5986
        %5988 = vrot.lane.b32.xlu0 %v369, 20
        %v5989 = vpop.permute.xlu0 %5988
        %5990 = vrot.lane.b32.xlu0 %v371, 20
        %v5991 = vpop.permute.xlu0 %5990
        %5992 = vrot.lane.b32.xlu0 %v373, 20
        %v5993 = vpop.permute.xlu0 %5992
        %5994 = vrot.lane.b32.xlu0 %v375, 20
        %v5995 = vpop.permute.xlu0 %5994
        %5996 = vrot.lane.b32.xlu0 %v377, 20
        %v5997 = vpop.permute.xlu0 %5996
        %5998 = vrot.lane.b32.xlu0 %v379, 20
        %v5999 = vpop.permute.xlu0 %5998
        %6000 = vrot.lane.b32.xlu0 %v381, 20
        %v6001 = vpop.permute.xlu0 %6000
        %6002 = vrot.lane.b32.xlu0 %v383, 20
        %v6003 = vpop.permute.xlu0 %6002
        %6068 = vrot.lane.b32.xlu0 %v569, 24
        %v6069 = vpop.permute.xlu0 %6068
        %6070 = vrot.lane.b32.xlu0 %v572, 24
        %v6071 = vpop.permute.xlu0 %6070
        %6072 = vrot.lane.b32.xlu0 %v575, 24
        %v6073 = vpop.permute.xlu0 %6072
        %6074 = vrot.lane.b32.xlu0 %v578, 24
        %v6075 = vpop.permute.xlu0 %6074
        %6076 = vrot.lane.b32.xlu0 %v581, 24
        %v6077 = vpop.permute.xlu0 %6076
        %6078 = vrot.lane.b32.xlu0 %v584, 24
        %v6079 = vpop.permute.xlu0 %6078
        %6080 = vrot.lane.b32.xlu0 %v587, 24
        %v6081 = vpop.permute.xlu0 %6080
        %6082 = vrot.lane.b32.xlu0 %v925, 24
        %v6083 = vpop.permute.xlu0 %6082
        %6084 = vrot.lane.b32.xlu0 %v593, 24
        %v6085 = vpop.permute.xlu0 %6084
        %6086 = vrot.lane.b32.xlu0 %v596, 24
        %v6087 = vpop.permute.xlu0 %6086
        %6088 = vrot.lane.b32.xlu0 %v599, 24
        %v6089 = vpop.permute.xlu0 %6088
        %6090 = vrot.lane.b32.xlu0 %v602, 24
        %v6091 = vpop.permute.xlu0 %6090
        %6092 = vrot.lane.b32.xlu0 %v605, 24
        %v6093 = vpop.permute.xlu0 %6092
        %6094 = vrot.lane.b32.xlu0 %v608, 24
        %v6095 = vpop.permute.xlu0 %6094
        %6096 = vrot.lane.b32.xlu0 %v611, 24
        %v6097 = vpop.permute.xlu0 %6096
        %6098 = vrot.lane.b32.xlu0 %v928, 24
        %v6099 = vpop.permute.xlu0 %6098
        %6100 = vrot.lane.b32.xlu0 %v617, 24
        %v6101 = vpop.permute.xlu0 %6100
        %6102 = vrot.lane.b32.xlu0 %v620, 24
        %v6103 = vpop.permute.xlu0 %6102
        %6104 = vrot.lane.b32.xlu0 %v623, 24
        %v6105 = vpop.permute.xlu0 %6104
        %6106 = vrot.lane.b32.xlu0 %v626, 24
        %v6107 = vpop.permute.xlu0 %6106
        %6108 = vrot.lane.b32.xlu0 %v629, 24
        %v6109 = vpop.permute.xlu0 %6108
        %6110 = vrot.lane.b32.xlu0 %v632, 24
        %v6111 = vpop.permute.xlu0 %6110
        %6112 = vrot.lane.b32.xlu0 %v635, 24
        %v6113 = vpop.permute.xlu0 %6112
        %6114 = vrot.lane.b32.xlu0 %v931, 24
        %v6115 = vpop.permute.xlu0 %6114
        %6116 = vrot.lane.b32.xlu0 %v641, 24
        %v6117 = vpop.permute.xlu0 %6116
        %6118 = vrot.lane.b32.xlu0 %v644, 24
        %v6119 = vpop.permute.xlu0 %6118
        %6120 = vrot.lane.b32.xlu0 %v647, 24
        %v6121 = vpop.permute.xlu0 %6120
        %6122 = vrot.lane.b32.xlu0 %v650, 24
        %v6123 = vpop.permute.xlu0 %6122
        %6124 = vrot.lane.b32.xlu0 %v653, 24
        %v6125 = vpop.permute.xlu0 %6124
        %6126 = vrot.lane.b32.xlu0 %v656, 24
        %v6127 = vpop.permute.xlu0 %6126
        %6128 = vrot.lane.b32.xlu0 %v659, 24
        %v6129 = vpop.permute.xlu0 %6128
        %6130 = vrot.lane.b32.xlu0 %v934, 24
        %v6131 = vpop.permute.xlu0 %6130
        %6132 = vrot.lane.b32.xlu0 %v665, 24
        %v6133 = vpop.permute.xlu0 %6132
        %6134 = vrot.lane.b32.xlu0 %v668, 24
        %v6135 = vpop.permute.xlu0 %6134
        %6136 = vrot.lane.b32.xlu0 %v671, 24
        %v6137 = vpop.permute.xlu0 %6136
        %6138 = vrot.lane.b32.xlu0 %v674, 24
        %v6139 = vpop.permute.xlu0 %6138
        %6140 = vrot.lane.b32.xlu0 %v677, 24
        %v6141 = vpop.permute.xlu0 %6140
        %6142 = vrot.lane.b32.xlu0 %v680, 24
        %v6143 = vpop.permute.xlu0 %6142
        %6144 = vrot.lane.b32.xlu0 %v683, 24
        %v6145 = vpop.permute.xlu0 %6144
        %6146 = vrot.lane.b32.xlu0 %v937, 24
        %v6147 = vpop.permute.xlu0 %6146
        %6148 = vrot.lane.b32.xlu0 %v689, 24
        %v6149 = vpop.permute.xlu0 %6148
        %6150 = vrot.lane.b32.xlu0 %v692, 24
        %v6151 = vpop.permute.xlu0 %6150
        %6152 = vrot.lane.b32.xlu0 %v695, 24
        %v6153 = vpop.permute.xlu0 %6152
        %6154 = vrot.lane.b32.xlu0 %v698, 24
        %v6155 = vpop.permute.xlu0 %6154
        %6156 = vrot.lane.b32.xlu0 %v701, 24
        %v6157 = vpop.permute.xlu0 %6156
        %6158 = vrot.lane.b32.xlu0 %v704, 24
        %v6159 = vpop.permute.xlu0 %6158
        %6160 = vrot.lane.b32.xlu0 %v707, 24
        %v6161 = vpop.permute.xlu0 %6160
        %6162 = vrot.lane.b32.xlu0 %v940, 24
        %v6163 = vpop.permute.xlu0 %6162
        %6164 = vrot.lane.b32.xlu0 %v1050, 24
        %v6165 = vpop.permute.xlu0 %6164
        %6166 = vrot.lane.b32.xlu0 %v1053, 24
        %v6167 = vpop.permute.xlu0 %6166
        %6168 = vrot.lane.b32.xlu0 %v1056, 24
        %v6169 = vpop.permute.xlu0 %6168
        %6170 = vrot.lane.b32.xlu0 %v1059, 24
        %v6171 = vpop.permute.xlu0 %6170
        %6172 = vrot.lane.b32.xlu0 %v1062, 24
        %v6173 = vpop.permute.xlu0 %6172
        %6174 = vrot.lane.b32.xlu0 %v1065, 24
        %v6175 = vpop.permute.xlu0 %6174
        %6176 = vrot.lane.b32.xlu0 %v1068, 24
        %v6177 = vpop.permute.xlu0 %6176
        %6178 = vrot.lane.b32.xlu0 %v1097, 24
        %v6179 = vpop.permute.xlu0 %6178
        %6180 = vrot.lane.b32.xlu0 %v1194, 24
        %v6181 = vpop.permute.xlu0 %6180
        %6182 = vrot.lane.b32.xlu0 %v1197, 24
        %v6183 = vpop.permute.xlu0 %6182
        %6184 = vrot.lane.b32.xlu0 %v1200, 24
        %v6185 = vpop.permute.xlu0 %6184
        %6186 = vrot.lane.b32.xlu0 %v1203, 24
        %v6187 = vpop.permute.xlu0 %6186
        %6188 = vrot.lane.b32.xlu0 %v1206, 24
        %v6189 = vpop.permute.xlu0 %6188
        %6190 = vrot.lane.b32.xlu0 %v1209, 24
        %v6191 = vpop.permute.xlu0 %6190
        %6192 = vrot.lane.b32.xlu0 %v1212, 24
        %v6193 = vpop.permute.xlu0 %6192
        %6194 = vrot.lane.b32.xlu0 %v1241, 24
        %v6195 = vpop.permute.xlu0 %6194
        %6260 = vrot.lane.b32.xlu0 %v762, 28
        %v6261 = vpop.permute.xlu0 %6260
        %6262 = vrot.lane.b32.xlu0 %v765, 28
        %v6263 = vpop.permute.xlu0 %6262
        %6264 = vrot.lane.b32.xlu0 %v768, 28
        %v6265 = vpop.permute.xlu0 %6264
        %6266 = vrot.lane.b32.xlu0 %v771, 28
        %v6267 = vpop.permute.xlu0 %6266
        %6268 = vrot.lane.b32.xlu0 %v774, 28
        %v6269 = vpop.permute.xlu0 %6268
        %6270 = vrot.lane.b32.xlu0 %v777, 28
        %v6271 = vpop.permute.xlu0 %6270
        %6272 = vrot.lane.b32.xlu0 %v780, 28
        %v6273 = vpop.permute.xlu0 %6272
        %6274 = vrot.lane.b32.xlu0 %v949, 28
        %v6275 = vpop.permute.xlu0 %6274
        %6276 = vrot.lane.b32.xlu0 %v786, 28
        %v6277 = vpop.permute.xlu0 %6276
        %6278 = vrot.lane.b32.xlu0 %v789, 28
        %v6279 = vpop.permute.xlu0 %6278
        %6280 = vrot.lane.b32.xlu0 %v792, 28
        %v6281 = vpop.permute.xlu0 %6280
        %6282 = vrot.lane.b32.xlu0 %v795, 28
        %v6283 = vpop.permute.xlu0 %6282
        %6284 = vrot.lane.b32.xlu0 %v798, 28
        %v6285 = vpop.permute.xlu0 %6284
        %6286 = vrot.lane.b32.xlu0 %v801, 28
        %v6287 = vpop.permute.xlu0 %6286
        %6288 = vrot.lane.b32.xlu0 %v804, 28
        %v6289 = vpop.permute.xlu0 %6288
        %6290 = vrot.lane.b32.xlu0 %v952, 28
        %v6291 = vpop.permute.xlu0 %6290
        %6292 = vrot.lane.b32.xlu0 %v810, 28
        %v6293 = vpop.permute.xlu0 %6292
        %6294 = vrot.lane.b32.xlu0 %v813, 28
        %v6295 = vpop.permute.xlu0 %6294
        %6296 = vrot.lane.b32.xlu0 %v816, 28
        %v6297 = vpop.permute.xlu0 %6296
        %6298 = vrot.lane.b32.xlu0 %v819, 28
        %v6299 = vpop.permute.xlu0 %6298
        %6300 = vrot.lane.b32.xlu0 %v822, 28
        %v6301 = vpop.permute.xlu0 %6300
        %6302 = vrot.lane.b32.xlu0 %v825, 28
        %v6303 = vpop.permute.xlu0 %6302
        %6304 = vrot.lane.b32.xlu0 %v828, 28
        %v6305 = vpop.permute.xlu0 %6304
        %6306 = vrot.lane.b32.xlu0 %v955, 28
        %v6307 = vpop.permute.xlu0 %6306
        %6308 = vrot.lane.b32.xlu0 %v834, 28
        %v6309 = vpop.permute.xlu0 %6308
        %6310 = vrot.lane.b32.xlu0 %v837, 28
        %v6311 = vpop.permute.xlu0 %6310
        %6312 = vrot.lane.b32.xlu0 %v840, 28
        %v6313 = vpop.permute.xlu0 %6312
        %6314 = vrot.lane.b32.xlu0 %v843, 28
        %v6315 = vpop.permute.xlu0 %6314
        %6316 = vrot.lane.b32.xlu0 %v846, 28
        %v6317 = vpop.permute.xlu0 %6316
        %6318 = vrot.lane.b32.xlu0 %v849, 28
        %v6319 = vpop.permute.xlu0 %6318
        %6320 = vrot.lane.b32.xlu0 %v852, 28
        %v6321 = vpop.permute.xlu0 %6320
        %6322 = vrot.lane.b32.xlu0 %v958, 28
        %v6323 = vpop.permute.xlu0 %6322
        %6324 = vrot.lane.b32.xlu0 %v858, 28
        %v6325 = vpop.permute.xlu0 %6324
        %6326 = vrot.lane.b32.xlu0 %v861, 28
        %v6327 = vpop.permute.xlu0 %6326
        %6328 = vrot.lane.b32.xlu0 %v864, 28
        %v6329 = vpop.permute.xlu0 %6328
        %6330 = vrot.lane.b32.xlu0 %v867, 28
        %v6331 = vpop.permute.xlu0 %6330
        %6332 = vrot.lane.b32.xlu0 %v870, 28
        %v6333 = vpop.permute.xlu0 %6332
        %6334 = vrot.lane.b32.xlu0 %v873, 28
        %v6335 = vpop.permute.xlu0 %6334
        %6336 = vrot.lane.b32.xlu0 %v876, 28
        %v6337 = vpop.permute.xlu0 %6336
        %6338 = vrot.lane.b32.xlu0 %v961, 28
        %v6339 = vpop.permute.xlu0 %6338
        %6340 = vrot.lane.b32.xlu0 %v882, 28
        %v6341 = vpop.permute.xlu0 %6340
        %6342 = vrot.lane.b32.xlu0 %v885, 28
        %v6343 = vpop.permute.xlu0 %6342
        %6344 = vrot.lane.b32.xlu0 %v888, 28
        %v6345 = vpop.permute.xlu0 %6344
        %6346 = vrot.lane.b32.xlu0 %v891, 28
        %v6347 = vpop.permute.xlu0 %6346
        %6348 = vrot.lane.b32.xlu0 %v894, 28
        %v6349 = vpop.permute.xlu0 %6348
        %6350 = vrot.lane.b32.xlu0 %v897, 28
        %v6351 = vpop.permute.xlu0 %6350
        %6352 = vrot.lane.b32.xlu0 %v900, 28
        %v6353 = vpop.permute.xlu0 %6352
        %6354 = vrot.lane.b32.xlu0 %v964, 28
        %v6355 = vpop.permute.xlu0 %6354
        %6356 = vrot.lane.b32.xlu0 %v1074, 28
        %v6357 = vpop.permute.xlu0 %6356
        %6358 = vrot.lane.b32.xlu0 %v1077, 28
        %v6359 = vpop.permute.xlu0 %6358
        %6360 = vrot.lane.b32.xlu0 %v1080, 28
        %v6361 = vpop.permute.xlu0 %6360
        %6362 = vrot.lane.b32.xlu0 %v1083, 28
        %v6363 = vpop.permute.xlu0 %6362
        %6364 = vrot.lane.b32.xlu0 %v1086, 28
        %v6365 = vpop.permute.xlu0 %6364
        %6366 = vrot.lane.b32.xlu0 %v1089, 28
        %v6367 = vpop.permute.xlu0 %6366
        %6368 = vrot.lane.b32.xlu0 %v1092, 28
        %v6369 = vpop.permute.xlu0 %6368
        %6370 = vrot.lane.b32.xlu0 %v1100, 28
        %v6371 = vpop.permute.xlu0 %6370
        %6372 = vrot.lane.b32.xlu0 %v1218, 28
        %v6373 = vpop.permute.xlu0 %6372
        %6374 = vrot.lane.b32.xlu0 %v1221, 28
        %v6375 = vpop.permute.xlu0 %6374
        %6376 = vrot.lane.b32.xlu0 %v1224, 28
        %v6377 = vpop.permute.xlu0 %6376
        %6378 = vrot.lane.b32.xlu0 %v1227, 28
        %v6379 = vpop.permute.xlu0 %6378
        %6380 = vrot.lane.b32.xlu0 %v1230, 28
        %v6381 = vpop.permute.xlu0 %6380
        %6382 = vrot.lane.b32.xlu0 %v1233, 28
        %v6383 = vpop.permute.xlu0 %6382
        %6384 = vrot.lane.b32.xlu0 %v1236, 28
        %v6385 = vpop.permute.xlu0 %6384
        %6386 = vrot.lane.b32.xlu0 %v1244, 28
        %v6387 = vpop.permute.xlu0 %6386
        %6452 = vrot.lane.b32.xlu0 %v231, 32
        %v6453 = vpop.permute.xlu0 %6452
        %6454 = vrot.lane.b32.xlu0 %v233, 32
        %v6455 = vpop.permute.xlu0 %6454
        %6456 = vrot.lane.b32.xlu0 %v235, 32
        %v6457 = vpop.permute.xlu0 %6456
        %6458 = vrot.lane.b32.xlu0 %v237, 32
        %v6459 = vpop.permute.xlu0 %6458
        %6460 = vrot.lane.b32.xlu0 %v239, 32
        %v6461 = vpop.permute.xlu0 %6460
        %6462 = vrot.lane.b32.xlu0 %v241, 32
        %v6463 = vpop.permute.xlu0 %6462
        %6464 = vrot.lane.b32.xlu0 %v243, 32
        %v6465 = vpop.permute.xlu0 %6464
        %6466 = vrot.lane.b32.xlu0 %v245, 32
        %v6467 = vpop.permute.xlu0 %6466
        %6468 = vrot.lane.b32.xlu0 %v251, 32
        %v6469 = vpop.permute.xlu0 %6468
        %6470 = vrot.lane.b32.xlu0 %v253, 32
        %v6471 = vpop.permute.xlu0 %6470
        %6472 = vrot.lane.b32.xlu0 %v255, 32
        %v6473 = vpop.permute.xlu0 %6472
        %6474 = vrot.lane.b32.xlu0 %v257, 32
        %v6475 = vpop.permute.xlu0 %6474
        %6476 = vrot.lane.b32.xlu0 %v259, 32
        %v6477 = vpop.permute.xlu0 %6476
        %6478 = vrot.lane.b32.xlu0 %v261, 32
        %v6479 = vpop.permute.xlu0 %6478
        %6480 = vrot.lane.b32.xlu0 %v263, 32
        %v6481 = vpop.permute.xlu0 %6480
        %6482 = vrot.lane.b32.xlu0 %v265, 32
        %v6483 = vpop.permute.xlu0 %6482
        %6484 = vrot.lane.b32.xlu0 %v271, 32
        %v6485 = vpop.permute.xlu0 %6484
        %6486 = vrot.lane.b32.xlu0 %v273, 32
        %v6487 = vpop.permute.xlu0 %6486
        %6488 = vrot.lane.b32.xlu0 %v275, 32
        %v6489 = vpop.permute.xlu0 %6488
        %6490 = vrot.lane.b32.xlu0 %v277, 32
        %v6491 = vpop.permute.xlu0 %6490
        %6492 = vrot.lane.b32.xlu0 %v279, 32
        %v6493 = vpop.permute.xlu0 %6492
        %6494 = vrot.lane.b32.xlu0 %v281, 32
        %v6495 = vpop.permute.xlu0 %6494
        %6496 = vrot.lane.b32.xlu0 %v283, 32
        %v6497 = vpop.permute.xlu0 %6496
        %6498 = vrot.lane.b32.xlu0 %v285, 32
        %v6499 = vpop.permute.xlu0 %6498
        %6500 = vrot.lane.b32.xlu0 %v291, 32
        %v6501 = vpop.permute.xlu0 %6500
        %6502 = vrot.lane.b32.xlu0 %v293, 32
        %v6503 = vpop.permute.xlu0 %6502
        %6504 = vrot.lane.b32.xlu0 %v295, 32
        %v6505 = vpop.permute.xlu0 %6504
        %6506 = vrot.lane.b32.xlu0 %v297, 32
        %v6507 = vpop.permute.xlu0 %6506
        %6508 = vrot.lane.b32.xlu0 %v299, 32
        %v6509 = vpop.permute.xlu0 %6508
        %6510 = vrot.lane.b32.xlu0 %v301, 32
        %v6511 = vpop.permute.xlu0 %6510
        %6512 = vrot.lane.b32.xlu0 %v303, 32
        %v6513 = vpop.permute.xlu0 %6512
        %6514 = vrot.lane.b32.xlu0 %v305, 32
        %v6515 = vpop.permute.xlu0 %6514
        %6516 = vrot.lane.b32.xlu0 %v311, 32
        %v6517 = vpop.permute.xlu0 %6516
        %6518 = vrot.lane.b32.xlu0 %v313, 32
        %v6519 = vpop.permute.xlu0 %6518
        %6520 = vrot.lane.b32.xlu0 %v315, 32
        %v6521 = vpop.permute.xlu0 %6520
        %6522 = vrot.lane.b32.xlu0 %v317, 32
        %v6523 = vpop.permute.xlu0 %6522
        %6524 = vrot.lane.b32.xlu0 %v319, 32
        %v6525 = vpop.permute.xlu0 %6524
        %6526 = vrot.lane.b32.xlu0 %v321, 32
        %v6527 = vpop.permute.xlu0 %6526
        %6528 = vrot.lane.b32.xlu0 %v323, 32
        %v6529 = vpop.permute.xlu0 %6528
        %6530 = vrot.lane.b32.xlu0 %v325, 32
        %v6531 = vpop.permute.xlu0 %6530
        %6532 = vrot.lane.b32.xlu0 %v331, 32
        %v6533 = vpop.permute.xlu0 %6532
        %6534 = vrot.lane.b32.xlu0 %v333, 32
        %v6535 = vpop.permute.xlu0 %6534
        %6536 = vrot.lane.b32.xlu0 %v335, 32
        %v6537 = vpop.permute.xlu0 %6536
        %6538 = vrot.lane.b32.xlu0 %v337, 32
        %v6539 = vpop.permute.xlu0 %6538
        %6540 = vrot.lane.b32.xlu0 %v339, 32
        %v6541 = vpop.permute.xlu0 %6540
        %6542 = vrot.lane.b32.xlu0 %v341, 32
        %v6543 = vpop.permute.xlu0 %6542
        %6544 = vrot.lane.b32.xlu0 %v343, 32
        %v6545 = vpop.permute.xlu0 %6544
        %6546 = vrot.lane.b32.xlu0 %v345, 32
        %v6547 = vpop.permute.xlu0 %6546
        %6548 = vrot.lane.b32.xlu0 %v351, 32
        %v6549 = vpop.permute.xlu0 %6548
        %6550 = vrot.lane.b32.xlu0 %v353, 32
        %v6551 = vpop.permute.xlu0 %6550
        %6552 = vrot.lane.b32.xlu0 %v355, 32
        %v6553 = vpop.permute.xlu0 %6552
        %6554 = vrot.lane.b32.xlu0 %v357, 32
        %v6555 = vpop.permute.xlu0 %6554
        %6556 = vrot.lane.b32.xlu0 %v359, 32
        %v6557 = vpop.permute.xlu0 %6556
        %6558 = vrot.lane.b32.xlu0 %v361, 32
        %v6559 = vpop.permute.xlu0 %6558
        %6560 = vrot.lane.b32.xlu0 %v363, 32
        %v6561 = vpop.permute.xlu0 %6560
        %6562 = vrot.lane.b32.xlu0 %v365, 32
        %v6563 = vpop.permute.xlu0 %6562
        %6564 = vrot.lane.b32.xlu0 %v371, 32
        %v6565 = vpop.permute.xlu0 %6564
        %6566 = vrot.lane.b32.xlu0 %v373, 32
        %v6567 = vpop.permute.xlu0 %6566
        %6568 = vrot.lane.b32.xlu0 %v375, 32
        %v6569 = vpop.permute.xlu0 %6568
        %6570 = vrot.lane.b32.xlu0 %v377, 32
        %v6571 = vpop.permute.xlu0 %6570
        %6572 = vrot.lane.b32.xlu0 %v379, 32
        %v6573 = vpop.permute.xlu0 %6572
        %6574 = vrot.lane.b32.xlu0 %v381, 32
        %v6575 = vpop.permute.xlu0 %6574
        %6576 = vrot.lane.b32.xlu0 %v383, 32
        %v6577 = vpop.permute.xlu0 %6576
        %6578 = vrot.lane.b32.xlu0 %v385, 32
        %v6579 = vpop.permute.xlu0 %6578
        %6644 = vrot.lane.b32.xlu0 %v572, 36
        %v6645 = vpop.permute.xlu0 %6644
        %6646 = vrot.lane.b32.xlu0 %v575, 36
        %v6647 = vpop.permute.xlu0 %6646
        %6648 = vrot.lane.b32.xlu0 %v578, 36
        %v6649 = vpop.permute.xlu0 %6648
        %6650 = vrot.lane.b32.xlu0 %v581, 36
        %v6651 = vpop.permute.xlu0 %6650
        %6652 = vrot.lane.b32.xlu0 %v584, 36
        %v6653 = vpop.permute.xlu0 %6652
        %6654 = vrot.lane.b32.xlu0 %v587, 36
        %v6655 = vpop.permute.xlu0 %6654
        %6656 = vrot.lane.b32.xlu0 %v925, 36
        %v6657 = vpop.permute.xlu0 %6656
        %6658 = vrot.lane.b32.xlu0 %v989, 36
        %v6659 = vpop.permute.xlu0 %6658
        %6660 = vrot.lane.b32.xlu0 %v596, 36
        %v6661 = vpop.permute.xlu0 %6660
        %6662 = vrot.lane.b32.xlu0 %v599, 36
        %v6663 = vpop.permute.xlu0 %6662
        %6664 = vrot.lane.b32.xlu0 %v602, 36
        %v6665 = vpop.permute.xlu0 %6664
        %6666 = vrot.lane.b32.xlu0 %v605, 36
        %v6667 = vpop.permute.xlu0 %6666
        %6668 = vrot.lane.b32.xlu0 %v608, 36
        %v6669 = vpop.permute.xlu0 %6668
        %6670 = vrot.lane.b32.xlu0 %v611, 36
        %v6671 = vpop.permute.xlu0 %6670
        %6672 = vrot.lane.b32.xlu0 %v928, 36
        %v6673 = vpop.permute.xlu0 %6672
        %6674 = vrot.lane.b32.xlu0 %v992, 36
        %v6675 = vpop.permute.xlu0 %6674
        %6676 = vrot.lane.b32.xlu0 %v620, 36
        %v6677 = vpop.permute.xlu0 %6676
        %6678 = vrot.lane.b32.xlu0 %v623, 36
        %v6679 = vpop.permute.xlu0 %6678
        %6680 = vrot.lane.b32.xlu0 %v626, 36
        %v6681 = vpop.permute.xlu0 %6680
        %6682 = vrot.lane.b32.xlu0 %v629, 36
        %v6683 = vpop.permute.xlu0 %6682
        %6684 = vrot.lane.b32.xlu0 %v632, 36
        %v6685 = vpop.permute.xlu0 %6684
        %6686 = vrot.lane.b32.xlu0 %v635, 36
        %v6687 = vpop.permute.xlu0 %6686
        %6688 = vrot.lane.b32.xlu0 %v931, 36
        %v6689 = vpop.permute.xlu0 %6688
        %6690 = vrot.lane.b32.xlu0 %v995, 36
        %v6691 = vpop.permute.xlu0 %6690
        %6692 = vrot.lane.b32.xlu0 %v644, 36
        %v6693 = vpop.permute.xlu0 %6692
        %6694 = vrot.lane.b32.xlu0 %v647, 36
        %v6695 = vpop.permute.xlu0 %6694
        %6696 = vrot.lane.b32.xlu0 %v650, 36
        %v6697 = vpop.permute.xlu0 %6696
        %6698 = vrot.lane.b32.xlu0 %v653, 36
        %v6699 = vpop.permute.xlu0 %6698
        %6700 = vrot.lane.b32.xlu0 %v656, 36
        %v6701 = vpop.permute.xlu0 %6700
        %6702 = vrot.lane.b32.xlu0 %v659, 36
        %v6703 = vpop.permute.xlu0 %6702
        %6704 = vrot.lane.b32.xlu0 %v934, 36
        %v6705 = vpop.permute.xlu0 %6704
        %6706 = vrot.lane.b32.xlu0 %v998, 36
        %v6707 = vpop.permute.xlu0 %6706
        %6708 = vrot.lane.b32.xlu0 %v668, 36
        %v6709 = vpop.permute.xlu0 %6708
        %6710 = vrot.lane.b32.xlu0 %v671, 36
        %v6711 = vpop.permute.xlu0 %6710
        %6712 = vrot.lane.b32.xlu0 %v674, 36
        %v6713 = vpop.permute.xlu0 %6712
        %6714 = vrot.lane.b32.xlu0 %v677, 36
        %v6715 = vpop.permute.xlu0 %6714
        %6716 = vrot.lane.b32.xlu0 %v680, 36
        %v6717 = vpop.permute.xlu0 %6716
        %6718 = vrot.lane.b32.xlu0 %v683, 36
        %v6719 = vpop.permute.xlu0 %6718
        %6720 = vrot.lane.b32.xlu0 %v937, 36
        %v6721 = vpop.permute.xlu0 %6720
        %6722 = vrot.lane.b32.xlu0 %v1001, 36
        %v6723 = vpop.permute.xlu0 %6722
        %6724 = vrot.lane.b32.xlu0 %v692, 36
        %v6725 = vpop.permute.xlu0 %6724
        %6726 = vrot.lane.b32.xlu0 %v695, 36
        %v6727 = vpop.permute.xlu0 %6726
        %6728 = vrot.lane.b32.xlu0 %v698, 36
        %v6729 = vpop.permute.xlu0 %6728
        %6730 = vrot.lane.b32.xlu0 %v701, 36
        %v6731 = vpop.permute.xlu0 %6730
        %6732 = vrot.lane.b32.xlu0 %v704, 36
        %v6733 = vpop.permute.xlu0 %6732
        %6734 = vrot.lane.b32.xlu0 %v707, 36
        %v6735 = vpop.permute.xlu0 %6734
        %6736 = vrot.lane.b32.xlu0 %v940, 36
        %v6737 = vpop.permute.xlu0 %6736
        %6738 = vrot.lane.b32.xlu0 %v1004, 36
        %v6739 = vpop.permute.xlu0 %6738
        %6740 = vrot.lane.b32.xlu0 %v1053, 36
        %v6741 = vpop.permute.xlu0 %6740
        %6742 = vrot.lane.b32.xlu0 %v1056, 36
        %v6743 = vpop.permute.xlu0 %6742
        %6744 = vrot.lane.b32.xlu0 %v1059, 36
        %v6745 = vpop.permute.xlu0 %6744
        %6746 = vrot.lane.b32.xlu0 %v1062, 36
        %v6747 = vpop.permute.xlu0 %6746
        %6748 = vrot.lane.b32.xlu0 %v1065, 36
        %v6749 = vpop.permute.xlu0 %6748
        %6750 = vrot.lane.b32.xlu0 %v1068, 36
        %v6751 = vpop.permute.xlu0 %6750
        %6752 = vrot.lane.b32.xlu0 %v1097, 36
        %v6753 = vpop.permute.xlu0 %6752
        %6754 = vrot.lane.b32.xlu0 %v1105, 36
        %v6755 = vpop.permute.xlu0 %6754
        %6756 = vrot.lane.b32.xlu0 %v1197, 36
        %v6757 = vpop.permute.xlu0 %6756
        %6758 = vrot.lane.b32.xlu0 %v1200, 36
        %v6759 = vpop.permute.xlu0 %6758
        %6760 = vrot.lane.b32.xlu0 %v1203, 36
        %v6761 = vpop.permute.xlu0 %6760
        %6762 = vrot.lane.b32.xlu0 %v1206, 36
        %v6763 = vpop.permute.xlu0 %6762
        %6764 = vrot.lane.b32.xlu0 %v1209, 36
        %v6765 = vpop.permute.xlu0 %6764
        %6766 = vrot.lane.b32.xlu0 %v1212, 36
        %v6767 = vpop.permute.xlu0 %6766
        %6768 = vrot.lane.b32.xlu0 %v1241, 36
        %v6769 = vpop.permute.xlu0 %6768
        %6770 = vrot.lane.b32.xlu0 %v1249, 36
        %v6771 = vpop.permute.xlu0 %6770
        %6836 = vrot.lane.b32.xlu0 %v765, 40
        %v6837 = vpop.permute.xlu0 %6836
        %6838 = vrot.lane.b32.xlu0 %v768, 40
        %v6839 = vpop.permute.xlu0 %6838
        %6840 = vrot.lane.b32.xlu0 %v771, 40
        %v6841 = vpop.permute.xlu0 %6840
        %6842 = vrot.lane.b32.xlu0 %v774, 40
        %v6843 = vpop.permute.xlu0 %6842
        %6844 = vrot.lane.b32.xlu0 %v777, 40
        %v6845 = vpop.permute.xlu0 %6844
        %6846 = vrot.lane.b32.xlu0 %v780, 40
        %v6847 = vpop.permute.xlu0 %6846
        %6848 = vrot.lane.b32.xlu0 %v949, 40
        %v6849 = vpop.permute.xlu0 %6848
        %6850 = vrot.lane.b32.xlu0 %v1013, 40
        %v6851 = vpop.permute.xlu0 %6850
        %6852 = vrot.lane.b32.xlu0 %v789, 40
        %v6853 = vpop.permute.xlu0 %6852
        %6854 = vrot.lane.b32.xlu0 %v792, 40
        %v6855 = vpop.permute.xlu0 %6854
        %6856 = vrot.lane.b32.xlu0 %v795, 40
        %v6857 = vpop.permute.xlu0 %6856
        %6858 = vrot.lane.b32.xlu0 %v798, 40
        %v6859 = vpop.permute.xlu0 %6858
        %6860 = vrot.lane.b32.xlu0 %v801, 40
        %v6861 = vpop.permute.xlu0 %6860
        %6862 = vrot.lane.b32.xlu0 %v804, 40
        %v6863 = vpop.permute.xlu0 %6862
        %6864 = vrot.lane.b32.xlu0 %v952, 40
        %v6865 = vpop.permute.xlu0 %6864
        %6866 = vrot.lane.b32.xlu0 %v1016, 40
        %v6867 = vpop.permute.xlu0 %6866
        %6868 = vrot.lane.b32.xlu0 %v813, 40
        %v6869 = vpop.permute.xlu0 %6868
        %6870 = vrot.lane.b32.xlu0 %v816, 40
        %v6871 = vpop.permute.xlu0 %6870
        %6872 = vrot.lane.b32.xlu0 %v819, 40
        %v6873 = vpop.permute.xlu0 %6872
        %6874 = vrot.lane.b32.xlu0 %v822, 40
        %v6875 = vpop.permute.xlu0 %6874
        %6876 = vrot.lane.b32.xlu0 %v825, 40
        %v6877 = vpop.permute.xlu0 %6876
        %6878 = vrot.lane.b32.xlu0 %v828, 40
        %v6879 = vpop.permute.xlu0 %6878
        %6880 = vrot.lane.b32.xlu0 %v955, 40
        %v6881 = vpop.permute.xlu0 %6880
        %6882 = vrot.lane.b32.xlu0 %v1019, 40
        %v6883 = vpop.permute.xlu0 %6882
        %6884 = vrot.lane.b32.xlu0 %v837, 40
        %v6885 = vpop.permute.xlu0 %6884
        %6886 = vrot.lane.b32.xlu0 %v840, 40
        %v6887 = vpop.permute.xlu0 %6886
        %6888 = vrot.lane.b32.xlu0 %v843, 40
        %v6889 = vpop.permute.xlu0 %6888
        %6890 = vrot.lane.b32.xlu0 %v846, 40
        %v6891 = vpop.permute.xlu0 %6890
        %6892 = vrot.lane.b32.xlu0 %v849, 40
        %v6893 = vpop.permute.xlu0 %6892
        %6894 = vrot.lane.b32.xlu0 %v852, 40
        %v6895 = vpop.permute.xlu0 %6894
        %6896 = vrot.lane.b32.xlu0 %v958, 40
        %v6897 = vpop.permute.xlu0 %6896
        %6898 = vrot.lane.b32.xlu0 %v1022, 40
        %v6899 = vpop.permute.xlu0 %6898
        %6900 = vrot.lane.b32.xlu0 %v861, 40
        %v6901 = vpop.permute.xlu0 %6900
        %6902 = vrot.lane.b32.xlu0 %v864, 40
        %v6903 = vpop.permute.xlu0 %6902
        %6904 = vrot.lane.b32.xlu0 %v867, 40
        %v6905 = vpop.permute.xlu0 %6904
        %6906 = vrot.lane.b32.xlu0 %v870, 40
        %v6907 = vpop.permute.xlu0 %6906
        %6908 = vrot.lane.b32.xlu0 %v873, 40
        %v6909 = vpop.permute.xlu0 %6908
        %6910 = vrot.lane.b32.xlu0 %v876, 40
        %v6911 = vpop.permute.xlu0 %6910
        %6912 = vrot.lane.b32.xlu0 %v961, 40
        %v6913 = vpop.permute.xlu0 %6912
        %6914 = vrot.lane.b32.xlu0 %v1025, 40
        %v6915 = vpop.permute.xlu0 %6914
        %6916 = vrot.lane.b32.xlu0 %v885, 40
        %v6917 = vpop.permute.xlu0 %6916
        %6918 = vrot.lane.b32.xlu0 %v888, 40
        %v6919 = vpop.permute.xlu0 %6918
        %6920 = vrot.lane.b32.xlu0 %v891, 40
        %v6921 = vpop.permute.xlu0 %6920
        %6922 = vrot.lane.b32.xlu0 %v894, 40
        %v6923 = vpop.permute.xlu0 %6922
        %6924 = vrot.lane.b32.xlu0 %v897, 40
        %v6925 = vpop.permute.xlu0 %6924
        %6926 = vrot.lane.b32.xlu0 %v900, 40
        %v6927 = vpop.permute.xlu0 %6926
        %6928 = vrot.lane.b32.xlu0 %v964, 40
        %v6929 = vpop.permute.xlu0 %6928
        %6930 = vrot.lane.b32.xlu0 %v1028, 40
        %v6931 = vpop.permute.xlu0 %6930
        %6932 = vrot.lane.b32.xlu0 %v1077, 40
        %v6933 = vpop.permute.xlu0 %6932
        %6934 = vrot.lane.b32.xlu0 %v1080, 40
        %v6935 = vpop.permute.xlu0 %6934
        %6936 = vrot.lane.b32.xlu0 %v1083, 40
        %v6937 = vpop.permute.xlu0 %6936
        %6938 = vrot.lane.b32.xlu0 %v1086, 40
        %v6939 = vpop.permute.xlu0 %6938
        %6940 = vrot.lane.b32.xlu0 %v1089, 40
        %v6941 = vpop.permute.xlu0 %6940
        %6942 = vrot.lane.b32.xlu0 %v1092, 40
        %v6943 = vpop.permute.xlu0 %6942
        %6944 = vrot.lane.b32.xlu0 %v1100, 40
        %v6945 = vpop.permute.xlu0 %6944
        %6946 = vrot.lane.b32.xlu0 %v1172, 40
        %v6947 = vpop.permute.xlu0 %6946
        %6948 = vrot.lane.b32.xlu0 %v1221, 40
        %v6949 = vpop.permute.xlu0 %6948
        %6950 = vrot.lane.b32.xlu0 %v1224, 40
        %v6951 = vpop.permute.xlu0 %6950
        %6952 = vrot.lane.b32.xlu0 %v1227, 40
        %v6953 = vpop.permute.xlu0 %6952
        %6954 = vrot.lane.b32.xlu0 %v1230, 40
        %v6955 = vpop.permute.xlu0 %6954
        %6956 = vrot.lane.b32.xlu0 %v1233, 40
        %v6957 = vpop.permute.xlu0 %6956
        %6958 = vrot.lane.b32.xlu0 %v1236, 40
        %v6959 = vpop.permute.xlu0 %6958
        %6960 = vrot.lane.b32.xlu0 %v1244, 40
        %v6961 = vpop.permute.xlu0 %6960
        %6962 = vrot.lane.b32.xlu0 %v1252, 40
        %v6963 = vpop.permute.xlu0 %6962
        %v7028 = vsel %vm4133, %v548, %v5109
        %v7029 = vsel %vm4133, %v551, %v5111
        %v7030 = vsel %vm4133, %v554, %v5113
        %v7031 = vsel %vm4133, %v557, %v5115
        %v7032 = vsel %vm4133, %v560, %v5117
        %v7033 = vsel %vm4133, %v563, %v5119
        %v7034 = vsel %vm4133, %v922, %v5121
        %v7035 = vsel %vm4133, %v986, %v5123
        %v7036 = vsel %vm4133, %v572, %v5125
        %v7037 = vsel %vm4133, %v575, %v5127
        %v7038 = vsel %vm4133, %v578, %v5129
        %v7039 = vsel %vm4133, %v581, %v5131
        %v7040 = vsel %vm4133, %v584, %v5133
        %v7041 = vsel %vm4133, %v587, %v5135
        %v7042 = vsel %vm4133, %v925, %v5137
        %v7043 = vsel %vm4133, %v989, %v5139
        %v7044 = vsel %vm4133, %v596, %v5141
        %v7045 = vsel %vm4133, %v599, %v5143
        %v7046 = vsel %vm4133, %v602, %v5145
        %v7047 = vsel %vm4133, %v605, %v5147
        %v7048 = vsel %vm4133, %v608, %v5149
        %v7049 = vsel %vm4133, %v611, %v5151
        %v7050 = vsel %vm4133, %v928, %v5153
        %v7051 = vsel %vm4133, %v992, %v5155
        %v7052 = vsel %vm4133, %v620, %v5157
        %v7053 = vsel %vm4133, %v623, %v5159
        %v7054 = vsel %vm4133, %v626, %v5161
        %v7055 = vsel %vm4133, %v629, %v5163
        %v7056 = vsel %vm4133, %v632, %v5165
        %v7057 = vsel %vm4133, %v635, %v5167
        %v7058 = vsel %vm4133, %v931, %v5169
        %v7059 = vsel %vm4133, %v995, %v5171
        %v7060 = vsel %vm4133, %v644, %v5173
        %v7061 = vsel %vm4133, %v647, %v5175
        %v7062 = vsel %vm4133, %v650, %v5177
        %v7063 = vsel %vm4133, %v653, %v5179
        %v7064 = vsel %vm4133, %v656, %v5181
        %v7065 = vsel %vm4133, %v659, %v5183
        %v7066 = vsel %vm4133, %v934, %v5185
        %v7067 = vsel %vm4133, %v998, %v5187
        %v7068 = vsel %vm4133, %v668, %v5189
        %v7069 = vsel %vm4133, %v671, %v5191
        %v7070 = vsel %vm4133, %v674, %v5193
        %v7071 = vsel %vm4133, %v677, %v5195
        %v7072 = vsel %vm4133, %v680, %v5197
        %v7073 = vsel %vm4133, %v683, %v5199
        %v7074 = vsel %vm4133, %v937, %v5201
        %v7075 = vsel %vm4133, %v1001, %v5203
        %v7076 = vsel %vm4133, %v692, %v5205
        %v7077 = vsel %vm4133, %v695, %v5207
        %v7078 = vsel %vm4133, %v698, %v5209
        %v7079 = vsel %vm4133, %v701, %v5211
        %v7080 = vsel %vm4133, %v704, %v5213
        %v7081 = vsel %vm4133, %v707, %v5215
        %v7082 = vsel %vm4133, %v940, %v5217
        %v7083 = vsel %vm4133, %v1004, %v5219
        %v7084 = vsel %vm4133, %v1053, %v5221
        %v7085 = vsel %vm4133, %v1056, %v5223
        %v7086 = vsel %vm4133, %v1059, %v5225
        %v7087 = vsel %vm4133, %v1062, %v5227
        %v7088 = vsel %vm4133, %v1065, %v5229
        %v7089 = vsel %vm4133, %v1068, %v5231
        %v7090 = vsel %vm4133, %v1097, %v5233
        %v7091 = vsel %vm4133, %v1105, %v5235
        %v7092 = vsel %vm4198, %v7028, %v5301
        %v7093 = vsel %vm4198, %v7029, %v5303
        %v7094 = vsel %vm4198, %v7030, %v5305
        %v7095 = vsel %vm4198, %v7031, %v5307
        %v7096 = vsel %vm4198, %v7032, %v5309
        %v7097 = vsel %vm4198, %v7033, %v5311
        %v7098 = vsel %vm4198, %v7034, %v5313
        %v7099 = vsel %vm4198, %v7035, %v5315
        %v7100 = vsel %vm4198, %v7036, %v5317
        %v7101 = vsel %vm4198, %v7037, %v5319
        %v7102 = vsel %vm4198, %v7038, %v5321
        %v7103 = vsel %vm4198, %v7039, %v5323
        %v7104 = vsel %vm4198, %v7040, %v5325
        %v7105 = vsel %vm4198, %v7041, %v5327
        %v7106 = vsel %vm4198, %v7042, %v5329
        %v7107 = vsel %vm4198, %v7043, %v5331
        %v7108 = vsel %vm4198, %v7044, %v5333
        %v7109 = vsel %vm4198, %v7045, %v5335
        %v7110 = vsel %vm4198, %v7046, %v5337
        %v7111 = vsel %vm4198, %v7047, %v5339
        %v7112 = vsel %vm4198, %v7048, %v5341
        %v7113 = vsel %vm4198, %v7049, %v5343
        %v7114 = vsel %vm4198, %v7050, %v5345
        %v7115 = vsel %vm4198, %v7051, %v5347
        %v7116 = vsel %vm4198, %v7052, %v5349
        %v7117 = vsel %vm4198, %v7053, %v5351
        %v7118 = vsel %vm4198, %v7054, %v5353
        %v7119 = vsel %vm4198, %v7055, %v5355
        %v7120 = vsel %vm4198, %v7056, %v5357
        %v7121 = vsel %vm4198, %v7057, %v5359
        %v7122 = vsel %vm4198, %v7058, %v5361
        %v7123 = vsel %vm4198, %v7059, %v5363
        %v7124 = vsel %vm4198, %v7060, %v5365
        %v7125 = vsel %vm4198, %v7061, %v5367
        %v7126 = vsel %vm4198, %v7062, %v5369
        %v7127 = vsel %vm4198, %v7063, %v5371
        %v7128 = vsel %vm4198, %v7064, %v5373
        %v7129 = vsel %vm4198, %v7065, %v5375
        %v7130 = vsel %vm4198, %v7066, %v5377
        %v7131 = vsel %vm4198, %v7067, %v5379
        %v7132 = vsel %vm4198, %v7068, %v5381
        %v7133 = vsel %vm4198, %v7069, %v5383
        %v7134 = vsel %vm4198, %v7070, %v5385
        %v7135 = vsel %vm4198, %v7071, %v5387
        %v7136 = vsel %vm4198, %v7072, %v5389
        %v7137 = vsel %vm4198, %v7073, %v5391
        %v7138 = vsel %vm4198, %v7074, %v5393
        %v7139 = vsel %vm4198, %v7075, %v5395
        %v7140 = vsel %vm4198, %v7076, %v5397
        %v7141 = vsel %vm4198, %v7077, %v5399
        %v7142 = vsel %vm4198, %v7078, %v5401
        %v7143 = vsel %vm4198, %v7079, %v5403
        %v7144 = vsel %vm4198, %v7080, %v5405
        %v7145 = vsel %vm4198, %v7081, %v5407
        %v7146 = vsel %vm4198, %v7082, %v5409
        %v7147 = vsel %vm4198, %v7083, %v5411
        %v7148 = vsel %vm4198, %v7084, %v5413
        %v7149 = vsel %vm4198, %v7085, %v5415
        %v7150 = vsel %vm4198, %v7086, %v5417
        %v7151 = vsel %vm4198, %v7087, %v5419
        %v7152 = vsel %vm4198, %v7088, %v5421
        %v7153 = vsel %vm4198, %v7089, %v5423
        %v7154 = vsel %vm4198, %v7090, %v5425
        %v7155 = vsel %vm4198, %v7091, %v5427
        %v7156 = vsel %vm4263, %v7092, %v5493
        %v7157 = vsel %vm4263, %v7093, %v5495
        %v7158 = vsel %vm4263, %v7094, %v5497
        %v7159 = vsel %vm4263, %v7095, %v5499
        %v7160 = vsel %vm4263, %v7096, %v5501
        %v7161 = vsel %vm4263, %v7097, %v5503
        %v7162 = vsel %vm4263, %v7098, %v5505
        %v7163 = vsel %vm4263, %v7099, %v5507
        %v7164 = vsel %vm4263, %v7100, %v5509
        %v7165 = vsel %vm4263, %v7101, %v5511
        %v7166 = vsel %vm4263, %v7102, %v5513
        %v7167 = vsel %vm4263, %v7103, %v5515
        %v7168 = vsel %vm4263, %v7104, %v5517
        %v7169 = vsel %vm4263, %v7105, %v5519
        %v7170 = vsel %vm4263, %v7106, %v5521
        %v7171 = vsel %vm4263, %v7107, %v5523
        %v7172 = vsel %vm4263, %v7108, %v5525
        %v7173 = vsel %vm4263, %v7109, %v5527
        %v7174 = vsel %vm4263, %v7110, %v5529
        %v7175 = vsel %vm4263, %v7111, %v5531
        %v7176 = vsel %vm4263, %v7112, %v5533
        %v7177 = vsel %vm4263, %v7113, %v5535
        %v7178 = vsel %vm4263, %v7114, %v5537
        %v7179 = vsel %vm4263, %v7115, %v5539
        %v7180 = vsel %vm4263, %v7116, %v5541
        %v7181 = vsel %vm4263, %v7117, %v5543
        %v7182 = vsel %vm4263, %v7118, %v5545
        %v7183 = vsel %vm4263, %v7119, %v5547
        %v7184 = vsel %vm4263, %v7120, %v5549
        %v7185 = vsel %vm4263, %v7121, %v5551
        %v7186 = vsel %vm4263, %v7122, %v5553
        %v7187 = vsel %vm4263, %v7123, %v5555
        %v7188 = vsel %vm4263, %v7124, %v5557
        %v7189 = vsel %vm4263, %v7125, %v5559
        %v7190 = vsel %vm4263, %v7126, %v5561
        %v7191 = vsel %vm4263, %v7127, %v5563
        %v7192 = vsel %vm4263, %v7128, %v5565
        %v7193 = vsel %vm4263, %v7129, %v5567
        %v7194 = vsel %vm4263, %v7130, %v5569
        %v7195 = vsel %vm4263, %v7131, %v5571
        %v7196 = vsel %vm4263, %v7132, %v5573
        %v7197 = vsel %vm4263, %v7133, %v5575
        %v7198 = vsel %vm4263, %v7134, %v5577
        %v7199 = vsel %vm4263, %v7135, %v5579
        %v7200 = vsel %vm4263, %v7136, %v5581
        %v7201 = vsel %vm4263, %v7137, %v5583
        %v7202 = vsel %vm4263, %v7138, %v5585
        %v7203 = vsel %vm4263, %v7139, %v5587
        %v7204 = vsel %vm4263, %v7140, %v5589
        %v7205 = vsel %vm4263, %v7141, %v5591
        %v7206 = vsel %vm4263, %v7142, %v5593
        %v7207 = vsel %vm4263, %v7143, %v5595
        %v7208 = vsel %vm4263, %v7144, %v5597
        %v7209 = vsel %vm4263, %v7145, %v5599
        %v7210 = vsel %vm4263, %v7146, %v5601
        %v7211 = vsel %vm4263, %v7147, %v5603
        %v7212 = vsel %vm4263, %v7148, %v5605
        %v7213 = vsel %vm4263, %v7149, %v5607
        %v7214 = vsel %vm4263, %v7150, %v5609
        %v7215 = vsel %vm4263, %v7151, %v5611
        %v7216 = vsel %vm4263, %v7152, %v5613
        %v7217 = vsel %vm4263, %v7153, %v5615
        %v7218 = vsel %vm4263, %v7154, %v5617
        %v7219 = vsel %vm4263, %v7155, %v5619
        %v7220 = vsel %vm4328, %v7156, %v5685
        %v7221 = vsel %vm4328, %v7157, %v5687
        %v7222 = vsel %vm4328, %v7158, %v5689
        %v7223 = vsel %vm4328, %v7159, %v5691
        %v7224 = vsel %vm4328, %v7160, %v5693
        %v7225 = vsel %vm4328, %v7161, %v5695
        %v7226 = vsel %vm4328, %v7162, %v5697
        %v7227 = vsel %vm4328, %v7163, %v5699
        %v7228 = vsel %vm4328, %v7164, %v5701
        %v7229 = vsel %vm4328, %v7165, %v5703
        %v7230 = vsel %vm4328, %v7166, %v5705
        %v7231 = vsel %vm4328, %v7167, %v5707
        %v7232 = vsel %vm4328, %v7168, %v5709
        %v7233 = vsel %vm4328, %v7169, %v5711
        %v7234 = vsel %vm4328, %v7170, %v5713
        %v7235 = vsel %vm4328, %v7171, %v5715
        %v7236 = vsel %vm4328, %v7172, %v5717
        %v7237 = vsel %vm4328, %v7173, %v5719
        %v7238 = vsel %vm4328, %v7174, %v5721
        %v7239 = vsel %vm4328, %v7175, %v5723
        %v7240 = vsel %vm4328, %v7176, %v5725
        %v7241 = vsel %vm4328, %v7177, %v5727
        %v7242 = vsel %vm4328, %v7178, %v5729
        %v7243 = vsel %vm4328, %v7179, %v5731
        %v7244 = vsel %vm4328, %v7180, %v5733
        %v7245 = vsel %vm4328, %v7181, %v5735
        %v7246 = vsel %vm4328, %v7182, %v5737
        %v7247 = vsel %vm4328, %v7183, %v5739
        %v7248 = vsel %vm4328, %v7184, %v5741
        %v7249 = vsel %vm4328, %v7185, %v5743
        %v7250 = vsel %vm4328, %v7186, %v5745
        %v7251 = vsel %vm4328, %v7187, %v5747
        %v7252 = vsel %vm4328, %v7188, %v5749
        %v7253 = vsel %vm4328, %v7189, %v5751
        %v7254 = vsel %vm4328, %v7190, %v5753
        %v7255 = vsel %vm4328, %v7191, %v5755
        %v7256 = vsel %vm4328, %v7192, %v5757
        %v7257 = vsel %vm4328, %v7193, %v5759
        %v7258 = vsel %vm4328, %v7194, %v5761
        %v7259 = vsel %vm4328, %v7195, %v5763
        %v7260 = vsel %vm4328, %v7196, %v5765
        %v7261 = vsel %vm4328, %v7197, %v5767
        %v7262 = vsel %vm4328, %v7198, %v5769
        %v7263 = vsel %vm4328, %v7199, %v5771
        %v7264 = vsel %vm4328, %v7200, %v5773
        %v7265 = vsel %vm4328, %v7201, %v5775
        %v7266 = vsel %vm4328, %v7202, %v5777
        %v7267 = vsel %vm4328, %v7203, %v5779
        %v7268 = vsel %vm4328, %v7204, %v5781
        %v7269 = vsel %vm4328, %v7205, %v5783
        %v7270 = vsel %vm4328, %v7206, %v5785
        %v7271 = vsel %vm4328, %v7207, %v5787
        %v7272 = vsel %vm4328, %v7208, %v5789
        %v7273 = vsel %vm4328, %v7209, %v5791
        %v7274 = vsel %vm4328, %v7210, %v5793
        %v7275 = vsel %vm4328, %v7211, %v5795
        %v7276 = vsel %vm4328, %v7212, %v5797
        %v7277 = vsel %vm4328, %v7213, %v5799
        %v7278 = vsel %vm4328, %v7214, %v5801
        %v7279 = vsel %vm4328, %v7215, %v5803
        %v7280 = vsel %vm4328, %v7216, %v5805
        %v7281 = vsel %vm4328, %v7217, %v5807
        %v7282 = vsel %vm4328, %v7218, %v5809
        %v7283 = vsel %vm4328, %v7219, %v5811
        %v7284 = vsel %vm4393, %v7220, %v5877
        %v7285 = vsel %vm4393, %v7221, %v5879
        %v7286 = vsel %vm4393, %v7222, %v5881
        %v7287 = vsel %vm4393, %v7223, %v5883
        %v7288 = vsel %vm4393, %v7224, %v5885
        %v7289 = vsel %vm4393, %v7225, %v5887
        %v7290 = vsel %vm4393, %v7226, %v5889
        %v7291 = vsel %vm4393, %v7227, %v5891
        %v7292 = vsel %vm4393, %v7228, %v5893
        %v7293 = vsel %vm4393, %v7229, %v5895
        %v7294 = vsel %vm4393, %v7230, %v5897
        %v7295 = vsel %vm4393, %v7231, %v5899
        %v7296 = vsel %vm4393, %v7232, %v5901
        %v7297 = vsel %vm4393, %v7233, %v5903
        %v7298 = vsel %vm4393, %v7234, %v5905
        %v7299 = vsel %vm4393, %v7235, %v5907
        %v7300 = vsel %vm4393, %v7236, %v5909
        %v7301 = vsel %vm4393, %v7237, %v5911
        %v7302 = vsel %vm4393, %v7238, %v5913
        %v7303 = vsel %vm4393, %v7239, %v5915
        %v7304 = vsel %vm4393, %v7240, %v5917
        %v7305 = vsel %vm4393, %v7241, %v5919
        %v7306 = vsel %vm4393, %v7242, %v5921
        %v7307 = vsel %vm4393, %v7243, %v5923
        %v7308 = vsel %vm4393, %v7244, %v5925
        %v7309 = vsel %vm4393, %v7245, %v5927
        %v7310 = vsel %vm4393, %v7246, %v5929
        %v7311 = vsel %vm4393, %v7247, %v5931
        %v7312 = vsel %vm4393, %v7248, %v5933
        %v7313 = vsel %vm4393, %v7249, %v5935
        %v7314 = vsel %vm4393, %v7250, %v5937
        %v7315 = vsel %vm4393, %v7251, %v5939
        %v7316 = vsel %vm4393, %v7252, %v5941
        %v7317 = vsel %vm4393, %v7253, %v5943
        %v7318 = vsel %vm4393, %v7254, %v5945
        %v7319 = vsel %vm4393, %v7255, %v5947
        %v7320 = vsel %vm4393, %v7256, %v5949
        %v7321 = vsel %vm4393, %v7257, %v5951
        %v7322 = vsel %vm4393, %v7258, %v5953
        %v7323 = vsel %vm4393, %v7259, %v5955
        %v7324 = vsel %vm4393, %v7260, %v5957
        %v7325 = vsel %vm4393, %v7261, %v5959
        %v7326 = vsel %vm4393, %v7262, %v5961
        %v7327 = vsel %vm4393, %v7263, %v5963
        %v7328 = vsel %vm4393, %v7264, %v5965
        %v7329 = vsel %vm4393, %v7265, %v5967
        %v7330 = vsel %vm4393, %v7266, %v5969
        %v7331 = vsel %vm4393, %v7267, %v5971
        %v7332 = vsel %vm4393, %v7268, %v5973
        %v7333 = vsel %vm4393, %v7269, %v5975
        %v7334 = vsel %vm4393, %v7270, %v5977
        %v7335 = vsel %vm4393, %v7271, %v5979
        %v7336 = vsel %vm4393, %v7272, %v5981
        %v7337 = vsel %vm4393, %v7273, %v5983
        %v7338 = vsel %vm4393, %v7274, %v5985
        %v7339 = vsel %vm4393, %v7275, %v5987
        %v7340 = vsel %vm4393, %v7276, %v5989
        %v7341 = vsel %vm4393, %v7277, %v5991
        %v7342 = vsel %vm4393, %v7278, %v5993
        %v7343 = vsel %vm4393, %v7279, %v5995
        %v7344 = vsel %vm4393, %v7280, %v5997
        %v7345 = vsel %vm4393, %v7281, %v5999
        %v7346 = vsel %vm4393, %v7282, %v6001
        %v7347 = vsel %vm4393, %v7283, %v6003
        %v7348 = vsel %vm4458, %v7284, %v6069
        %v7349 = vsel %vm4458, %v7285, %v6071
        %v7350 = vsel %vm4458, %v7286, %v6073
        %v7351 = vsel %vm4458, %v7287, %v6075
        %v7352 = vsel %vm4458, %v7288, %v6077
        %v7353 = vsel %vm4458, %v7289, %v6079
        %v7354 = vsel %vm4458, %v7290, %v6081
        %v7355 = vsel %vm4458, %v7291, %v6083
        %v7356 = vsel %vm4458, %v7292, %v6085
        %v7357 = vsel %vm4458, %v7293, %v6087
        %v7358 = vsel %vm4458, %v7294, %v6089
        %v7359 = vsel %vm4458, %v7295, %v6091
        %v7360 = vsel %vm4458, %v7296, %v6093
        %v7361 = vsel %vm4458, %v7297, %v6095
        %v7362 = vsel %vm4458, %v7298, %v6097
        %v7363 = vsel %vm4458, %v7299, %v6099
        %v7364 = vsel %vm4458, %v7300, %v6101
        %v7365 = vsel %vm4458, %v7301, %v6103
        %v7366 = vsel %vm4458, %v7302, %v6105
        %v7367 = vsel %vm4458, %v7303, %v6107
        %v7368 = vsel %vm4458, %v7304, %v6109
        %v7369 = vsel %vm4458, %v7305, %v6111
        %v7370 = vsel %vm4458, %v7306, %v6113
        %v7371 = vsel %vm4458, %v7307, %v6115
        %v7372 = vsel %vm4458, %v7308, %v6117
        %v7373 = vsel %vm4458, %v7309, %v6119
        %v7374 = vsel %vm4458, %v7310, %v6121
        %v7375 = vsel %vm4458, %v7311, %v6123
        %v7376 = vsel %vm4458, %v7312, %v6125
        %v7377 = vsel %vm4458, %v7313, %v6127
        %v7378 = vsel %vm4458, %v7314, %v6129
        %v7379 = vsel %vm4458, %v7315, %v6131
        %v7380 = vsel %vm4458, %v7316, %v6133
        %v7381 = vsel %vm4458, %v7317, %v6135
        %v7382 = vsel %vm4458, %v7318, %v6137
        %v7383 = vsel %vm4458, %v7319, %v6139
        %v7384 = vsel %vm4458, %v7320, %v6141
        %v7385 = vsel %vm4458, %v7321, %v6143
        %v7386 = vsel %vm4458, %v7322, %v6145
        %v7387 = vsel %vm4458, %v7323, %v6147
        %v7388 = vsel %vm4458, %v7324, %v6149
        %v7389 = vsel %vm4458, %v7325, %v6151
        %v7390 = vsel %vm4458, %v7326, %v6153
        %v7391 = vsel %vm4458, %v7327, %v6155
        %v7392 = vsel %vm4458, %v7328, %v6157
        %v7393 = vsel %vm4458, %v7329, %v6159
        %v7394 = vsel %vm4458, %v7330, %v6161
        %v7395 = vsel %vm4458, %v7331, %v6163
        %v7396 = vsel %vm4458, %v7332, %v6165
        %v7397 = vsel %vm4458, %v7333, %v6167
        %v7398 = vsel %vm4458, %v7334, %v6169
        %v7399 = vsel %vm4458, %v7335, %v6171
        %v7400 = vsel %vm4458, %v7336, %v6173
        %v7401 = vsel %vm4458, %v7337, %v6175
        %v7402 = vsel %vm4458, %v7338, %v6177
        %v7403 = vsel %vm4458, %v7339, %v6179
        %v7404 = vsel %vm4458, %v7340, %v6181
        %v7405 = vsel %vm4458, %v7341, %v6183
        %v7406 = vsel %vm4458, %v7342, %v6185
        %v7407 = vsel %vm4458, %v7343, %v6187
        %v7408 = vsel %vm4458, %v7344, %v6189
        %v7409 = vsel %vm4458, %v7345, %v6191
        %v7410 = vsel %vm4458, %v7346, %v6193
        %v7411 = vsel %vm4458, %v7347, %v6195
        %v7412 = vsel %vm4523, %v7348, %v6261
        %v7413 = vsel %vm4523, %v7349, %v6263
        %v7414 = vsel %vm4523, %v7350, %v6265
        %v7415 = vsel %vm4523, %v7351, %v6267
        %v7416 = vsel %vm4523, %v7352, %v6269
        %v7417 = vsel %vm4523, %v7353, %v6271
        %v7418 = vsel %vm4523, %v7354, %v6273
        %v7419 = vsel %vm4523, %v7355, %v6275
        %v7420 = vsel %vm4523, %v7356, %v6277
        %v7421 = vsel %vm4523, %v7357, %v6279
        %v7422 = vsel %vm4523, %v7358, %v6281
        %v7423 = vsel %vm4523, %v7359, %v6283
        %v7424 = vsel %vm4523, %v7360, %v6285
        %v7425 = vsel %vm4523, %v7361, %v6287
        %v7426 = vsel %vm4523, %v7362, %v6289
        %v7427 = vsel %vm4523, %v7363, %v6291
        %v7428 = vsel %vm4523, %v7364, %v6293
        %v7429 = vsel %vm4523, %v7365, %v6295
        %v7430 = vsel %vm4523, %v7366, %v6297
        %v7431 = vsel %vm4523, %v7367, %v6299
        %v7432 = vsel %vm4523, %v7368, %v6301
        %v7433 = vsel %vm4523, %v7369, %v6303
        %v7434 = vsel %vm4523, %v7370, %v6305
        %v7435 = vsel %vm4523, %v7371, %v6307
        %v7436 = vsel %vm4523, %v7372, %v6309
        %v7437 = vsel %vm4523, %v7373, %v6311
        %v7438 = vsel %vm4523, %v7374, %v6313
        %v7439 = vsel %vm4523, %v7375, %v6315
        %v7440 = vsel %vm4523, %v7376, %v6317
        %v7441 = vsel %vm4523, %v7377, %v6319
        %v7442 = vsel %vm4523, %v7378, %v6321
        %v7443 = vsel %vm4523, %v7379, %v6323
        %v7444 = vsel %vm4523, %v7380, %v6325
        %v7445 = vsel %vm4523, %v7381, %v6327
        %v7446 = vsel %vm4523, %v7382, %v6329
        %v7447 = vsel %vm4523, %v7383, %v6331
        %v7448 = vsel %vm4523, %v7384, %v6333
        %v7449 = vsel %vm4523, %v7385, %v6335
        %v7450 = vsel %vm4523, %v7386, %v6337
        %v7451 = vsel %vm4523, %v7387, %v6339
        %v7452 = vsel %vm4523, %v7388, %v6341
        %v7453 = vsel %vm4523, %v7389, %v6343
        %v7454 = vsel %vm4523, %v7390, %v6345
        %v7455 = vsel %vm4523, %v7391, %v6347
        %v7456 = vsel %vm4523, %v7392, %v6349
        %v7457 = vsel %vm4523, %v7393, %v6351
        %v7458 = vsel %vm4523, %v7394, %v6353
        %v7459 = vsel %vm4523, %v7395, %v6355
        %v7460 = vsel %vm4523, %v7396, %v6357
        %v7461 = vsel %vm4523, %v7397, %v6359
        %v7462 = vsel %vm4523, %v7398, %v6361
        %v7463 = vsel %vm4523, %v7399, %v6363
        %v7464 = vsel %vm4523, %v7400, %v6365
        %v7465 = vsel %vm4523, %v7401, %v6367
        %v7466 = vsel %vm4523, %v7402, %v6369
        %v7467 = vsel %vm4523, %v7403, %v6371
        %v7468 = vsel %vm4523, %v7404, %v6373
        %v7469 = vsel %vm4523, %v7405, %v6375
        %v7470 = vsel %vm4523, %v7406, %v6377
        %v7471 = vsel %vm4523, %v7407, %v6379
        %v7472 = vsel %vm4523, %v7408, %v6381
        %v7473 = vsel %vm4523, %v7409, %v6383
        %v7474 = vsel %vm4523, %v7410, %v6385
        %v7475 = vsel %vm4523, %v7411, %v6387
        %v7476 = vsel %vm4588, %v7412, %v6453
        %v7477 = vsel %vm4588, %v7413, %v6455
        %v7478 = vsel %vm4588, %v7414, %v6457
        %v7479 = vsel %vm4588, %v7415, %v6459
        %v7480 = vsel %vm4588, %v7416, %v6461
        %v7481 = vsel %vm4588, %v7417, %v6463
        %v7482 = vsel %vm4588, %v7418, %v6465
        %v7483 = vsel %vm4588, %v7419, %v6467
        %v7484 = vsel %vm4588, %v7420, %v6469
        %v7485 = vsel %vm4588, %v7421, %v6471
        %v7486 = vsel %vm4588, %v7422, %v6473
        %v7487 = vsel %vm4588, %v7423, %v6475
        %v7488 = vsel %vm4588, %v7424, %v6477
        %v7489 = vsel %vm4588, %v7425, %v6479
        %v7490 = vsel %vm4588, %v7426, %v6481
        %v7491 = vsel %vm4588, %v7427, %v6483
        %v7492 = vsel %vm4588, %v7428, %v6485
        %v7493 = vsel %vm4588, %v7429, %v6487
        %v7494 = vsel %vm4588, %v7430, %v6489
        %v7495 = vsel %vm4588, %v7431, %v6491
        %v7496 = vsel %vm4588, %v7432, %v6493
        %v7497 = vsel %vm4588, %v7433, %v6495
        %v7498 = vsel %vm4588, %v7434, %v6497
        %v7499 = vsel %vm4588, %v7435, %v6499
        %v7500 = vsel %vm4588, %v7436, %v6501
        %v7501 = vsel %vm4588, %v7437, %v6503
        %v7502 = vsel %vm4588, %v7438, %v6505
        %v7503 = vsel %vm4588, %v7439, %v6507
        %v7504 = vsel %vm4588, %v7440, %v6509
        %v7505 = vsel %vm4588, %v7441, %v6511
        %v7506 = vsel %vm4588, %v7442, %v6513
        %v7507 = vsel %vm4588, %v7443, %v6515
        %v7508 = vsel %vm4588, %v7444, %v6517
        %v7509 = vsel %vm4588, %v7445, %v6519
        %v7510 = vsel %vm4588, %v7446, %v6521
        %v7511 = vsel %vm4588, %v7447, %v6523
        %v7512 = vsel %vm4588, %v7448, %v6525
        %v7513 = vsel %vm4588, %v7449, %v6527
        %v7514 = vsel %vm4588, %v7450, %v6529
        %v7515 = vsel %vm4588, %v7451, %v6531
        %v7516 = vsel %vm4588, %v7452, %v6533
        %v7517 = vsel %vm4588, %v7453, %v6535
        %v7518 = vsel %vm4588, %v7454, %v6537
        %v7519 = vsel %vm4588, %v7455, %v6539
        %v7520 = vsel %vm4588, %v7456, %v6541
        %v7521 = vsel %vm4588, %v7457, %v6543
        %v7522 = vsel %vm4588, %v7458, %v6545
        %v7523 = vsel %vm4588, %v7459, %v6547
        %v7524 = vsel %vm4588, %v7460, %v6549
        %v7525 = vsel %vm4588, %v7461, %v6551
        %v7526 = vsel %vm4588, %v7462, %v6553
        %v7527 = vsel %vm4588, %v7463, %v6555
        %v7528 = vsel %vm4588, %v7464, %v6557
        %v7529 = vsel %vm4588, %v7465, %v6559
        %v7530 = vsel %vm4588, %v7466, %v6561
        %v7531 = vsel %vm4588, %v7467, %v6563
        %v7532 = vsel %vm4588, %v7468, %v6565
        %v7533 = vsel %vm4588, %v7469, %v6567
        %v7534 = vsel %vm4588, %v7470, %v6569
        %v7535 = vsel %vm4588, %v7471, %v6571
        %v7536 = vsel %vm4588, %v7472, %v6573
        %v7537 = vsel %vm4588, %v7473, %v6575
        %v7538 = vsel %vm4588, %v7474, %v6577
        %v7539 = vsel %vm4588, %v7475, %v6579
        %v7540 = vsel %vm4653, %v7476, %v6645
        %v7541 = vsel %vm4653, %v7477, %v6647
        %v7542 = vsel %vm4653, %v7478, %v6649
        %v7543 = vsel %vm4653, %v7479, %v6651
        %v7544 = vsel %vm4653, %v7480, %v6653
        %v7545 = vsel %vm4653, %v7481, %v6655
        %v7546 = vsel %vm4653, %v7482, %v6657
        %v7547 = vsel %vm4653, %v7483, %v6659
        %v7548 = vsel %vm4653, %v7484, %v6661
        %v7549 = vsel %vm4653, %v7485, %v6663
        %v7550 = vsel %vm4653, %v7486, %v6665
        %v7551 = vsel %vm4653, %v7487, %v6667
        %v7552 = vsel %vm4653, %v7488, %v6669
        %v7553 = vsel %vm4653, %v7489, %v6671
        %v7554 = vsel %vm4653, %v7490, %v6673
        %v7555 = vsel %vm4653, %v7491, %v6675
        %v7556 = vsel %vm4653, %v7492, %v6677
        %v7557 = vsel %vm4653, %v7493, %v6679
        %v7558 = vsel %vm4653, %v7494, %v6681
        %v7559 = vsel %vm4653, %v7495, %v6683
        %v7560 = vsel %vm4653, %v7496, %v6685
        %v7561 = vsel %vm4653, %v7497, %v6687
        %v7562 = vsel %vm4653, %v7498, %v6689
        %v7563 = vsel %vm4653, %v7499, %v6691
        %v7564 = vsel %vm4653, %v7500, %v6693
        %v7565 = vsel %vm4653, %v7501, %v6695
        %v7566 = vsel %vm4653, %v7502, %v6697
        %v7567 = vsel %vm4653, %v7503, %v6699
        %v7568 = vsel %vm4653, %v7504, %v6701
        %v7569 = vsel %vm4653, %v7505, %v6703
        %v7570 = vsel %vm4653, %v7506, %v6705
        %v7571 = vsel %vm4653, %v7507, %v6707
        %v7572 = vsel %vm4653, %v7508, %v6709
        %v7573 = vsel %vm4653, %v7509, %v6711
        %v7574 = vsel %vm4653, %v7510, %v6713
        %v7575 = vsel %vm4653, %v7511, %v6715
        %v7576 = vsel %vm4653, %v7512, %v6717
        %v7577 = vsel %vm4653, %v7513, %v6719
        %v7578 = vsel %vm4653, %v7514, %v6721
        %v7579 = vsel %vm4653, %v7515, %v6723
        %v7580 = vsel %vm4653, %v7516, %v6725
        %v7581 = vsel %vm4653, %v7517, %v6727
        %v7582 = vsel %vm4653, %v7518, %v6729
        %v7583 = vsel %vm4653, %v7519, %v6731
        %v7584 = vsel %vm4653, %v7520, %v6733
        %v7585 = vsel %vm4653, %v7521, %v6735
        %v7586 = vsel %vm4653, %v7522, %v6737
        %v7587 = vsel %vm4653, %v7523, %v6739
        %v7588 = vsel %vm4653, %v7524, %v6741
        %v7589 = vsel %vm4653, %v7525, %v6743
        %v7590 = vsel %vm4653, %v7526, %v6745
        %v7591 = vsel %vm4653, %v7527, %v6747
        %v7592 = vsel %vm4653, %v7528, %v6749
        %v7593 = vsel %vm4653, %v7529, %v6751
        %v7594 = vsel %vm4653, %v7530, %v6753
        %v7595 = vsel %vm4653, %v7531, %v6755
        %v7596 = vsel %vm4653, %v7532, %v6757
        %v7597 = vsel %vm4653, %v7533, %v6759
        %v7598 = vsel %vm4653, %v7534, %v6761
        %v7599 = vsel %vm4653, %v7535, %v6763
        %v7600 = vsel %vm4653, %v7536, %v6765
        %v7601 = vsel %vm4653, %v7537, %v6767
        %v7602 = vsel %vm4653, %v7538, %v6769
        %v7603 = vsel %vm4653, %v7539, %v6771
        %v7604 = vsel %vm4718, %v7540, %v6837
        %v7605 = vsel %vm4718, %v7541, %v6839
        %v7606 = vsel %vm4718, %v7542, %v6841
        %v7607 = vsel %vm4718, %v7543, %v6843
        %v7608 = vsel %vm4718, %v7544, %v6845
        %v7609 = vsel %vm4718, %v7545, %v6847
        %v7610 = vsel %vm4718, %v7546, %v6849
        %v7611 = vsel %vm4718, %v7547, %v6851
        %v7612 = vsel %vm4718, %v7548, %v6853
        %v7613 = vsel %vm4718, %v7549, %v6855
        %v7614 = vsel %vm4718, %v7550, %v6857
        %v7615 = vsel %vm4718, %v7551, %v6859
        %v7616 = vsel %vm4718, %v7552, %v6861
        %v7617 = vsel %vm4718, %v7553, %v6863
        %v7618 = vsel %vm4718, %v7554, %v6865
        %v7619 = vsel %vm4718, %v7555, %v6867
        %v7620 = vsel %vm4718, %v7556, %v6869
        %v7621 = vsel %vm4718, %v7557, %v6871
        %v7622 = vsel %vm4718, %v7558, %v6873
        %v7623 = vsel %vm4718, %v7559, %v6875
        %v7624 = vsel %vm4718, %v7560, %v6877
        %v7625 = vsel %vm4718, %v7561, %v6879
        %v7626 = vsel %vm4718, %v7562, %v6881
        %v7627 = vsel %vm4718, %v7563, %v6883
        %v7628 = vsel %vm4718, %v7564, %v6885
        %v7629 = vsel %vm4718, %v7565, %v6887
        %v7630 = vsel %vm4718, %v7566, %v6889
        %v7631 = vsel %vm4718, %v7567, %v6891
        %v7632 = vsel %vm4718, %v7568, %v6893
        %v7633 = vsel %vm4718, %v7569, %v6895
        %v7634 = vsel %vm4718, %v7570, %v6897
        %v7635 = vsel %vm4718, %v7571, %v6899
        %v7636 = vsel %vm4718, %v7572, %v6901
        %v7637 = vsel %vm4718, %v7573, %v6903
        %v7638 = vsel %vm4718, %v7574, %v6905
        %v7639 = vsel %vm4718, %v7575, %v6907
        %v7640 = vsel %vm4718, %v7576, %v6909
        %v7641 = vsel %vm4718, %v7577, %v6911
        %v7642 = vsel %vm4718, %v7578, %v6913
        %v7643 = vsel %vm4718, %v7579, %v6915
        %v7644 = vsel %vm4718, %v7580, %v6917
        %v7645 = vsel %vm4718, %v7581, %v6919
        %v7646 = vsel %vm4718, %v7582, %v6921
        %v7647 = vsel %vm4718, %v7583, %v6923
        %v7648 = vsel %vm4718, %v7584, %v6925
        %v7649 = vsel %vm4718, %v7585, %v6927
        %v7650 = vsel %vm4718, %v7586, %v6929
        %v7651 = vsel %vm4718, %v7587, %v6931
        %v7652 = vsel %vm4718, %v7588, %v6933
        %v7653 = vsel %vm4718, %v7589, %v6935
        %v7654 = vsel %vm4718, %v7590, %v6937
        %v7655 = vsel %vm4718, %v7591, %v6939
        %v7656 = vsel %vm4718, %v7592, %v6941
        %v7657 = vsel %vm4718, %v7593, %v6943
        %v7658 = vsel %vm4718, %v7594, %v6945
        %v7659 = vsel %vm4718, %v7595, %v6947
        %v7660 = vsel %vm4718, %v7596, %v6949
        %v7661 = vsel %vm4718, %v7597, %v6951
        %v7662 = vsel %vm4718, %v7598, %v6953
        %v7663 = vsel %vm4718, %v7599, %v6955
        %v7664 = vsel %vm4718, %v7600, %v6957
        %v7665 = vsel %vm4718, %v7601, %v6959
        %v7666 = vsel %vm4718, %v7602, %v6961
        %v7667 = vsel %vm4718, %v7603, %v6963
        %v7668 = vsel %vm4783, %v7604, 0.0
        %v7669 = vsel %vm4783, %v7605, 0.0
        %v7670 = vsel %vm4783, %v7606, 0.0
        %v7671 = vsel %vm4783, %v7607, 0.0
        %v7672 = vsel %vm4783, %v7608, 0.0
        %v7673 = vsel %vm4783, %v7609, 0.0
        %v7674 = vsel %vm4783, %v7610, 0.0
        %v7675 = vsel %vm4783, %v7611, 0.0
        %v7676 = vsel %vm4783, %v7612, 0.0
        %v7677 = vsel %vm4783, %v7613, 0.0
        %v7678 = vsel %vm4783, %v7614, 0.0
        %v7679 = vsel %vm4783, %v7615, 0.0
        %v7680 = vsel %vm4783, %v7616, 0.0
        %v7681 = vsel %vm4783, %v7617, 0.0
        %v7682 = vsel %vm4783, %v7618, 0.0
        %v7683 = vsel %vm4783, %v7619, 0.0
        %v7684 = vsel %vm4783, %v7620, 0.0
        %v7685 = vsel %vm4783, %v7621, 0.0
        %v7686 = vsel %vm4783, %v7622, 0.0
        %v7687 = vsel %vm4783, %v7623, 0.0
        %v7688 = vsel %vm4783, %v7624, 0.0
        %v7689 = vsel %vm4783, %v7625, 0.0
        %v7690 = vsel %vm4783, %v7626, 0.0
        %v7691 = vsel %vm4783, %v7627, 0.0
        %v7692 = vsel %vm4783, %v7628, 0.0
        %v7693 = vsel %vm4783, %v7629, 0.0
        %v7694 = vsel %vm4783, %v7630, 0.0
        %v7695 = vsel %vm4783, %v7631, 0.0
        %v7696 = vsel %vm4783, %v7632, 0.0
        %v7697 = vsel %vm4783, %v7633, 0.0
        %v7698 = vsel %vm4783, %v7634, 0.0
        %v7699 = vsel %vm4783, %v7635, 0.0
        %v7700 = vsel %vm4783, %v7636, 0.0
        %v7701 = vsel %vm4783, %v7637, 0.0
        %v7702 = vsel %vm4783, %v7638, 0.0
        %v7703 = vsel %vm4783, %v7639, 0.0
        %v7704 = vsel %vm4783, %v7640, 0.0
        %v7705 = vsel %vm4783, %v7641, 0.0
        %v7706 = vsel %vm4783, %v7642, 0.0
        %v7707 = vsel %vm4783, %v7643, 0.0
        %v7708 = vsel %vm4783, %v7644, 0.0
        %v7709 = vsel %vm4783, %v7645, 0.0
        %v7710 = vsel %vm4783, %v7646, 0.0
        %v7711 = vsel %vm4783, %v7647, 0.0
        %v7712 = vsel %vm4783, %v7648, 0.0
        %v7713 = vsel %vm4783, %v7649, 0.0
        %v7714 = vsel %vm4783, %v7650, 0.0
        %v7715 = vsel %vm4783, %v7651, 0.0
        %v7716 = vsel %vm4783, %v7652, 0.0
        %v7717 = vsel %vm4783, %v7653, 0.0
        %v7718 = vsel %vm4783, %v7654, 0.0
        %v7719 = vsel %vm4783, %v7655, 0.0
        %v7720 = vsel %vm4783, %v7656, 0.0
        %v7721 = vsel %vm4783, %v7657, 0.0
        %v7722 = vsel %vm4783, %v7658, 0.0
        %v7723 = vsel %vm4783, %v7659, 0.0
        %v7724 = vsel %vm4783, %v7660, 0.0
        %v7725 = vsel %vm4783, %v7661, 0.0
        %v7726 = vsel %vm4783, %v7662, 0.0
        %v7727 = vsel %vm4783, %v7663, 0.0
        %v7728 = vsel %vm4783, %v7664, 0.0
        %v7729 = vsel %vm4783, %v7665, 0.0
        %v7730 = vsel %vm4783, %v7666, 0.0
        %v7731 = vsel %vm4783, %v7667, 0.0
        %7796 = vrot.lane.b32.xlu0 %v7668, 64
        %v7797 = vpop.permute.xlu0 %7796
        %7798 = vrot.lane.b32.xlu0 %v7669, 64
        %v7799 = vpop.permute.xlu0 %7798
        %7800 = vrot.lane.b32.xlu0 %v7670, 64
        %v7801 = vpop.permute.xlu0 %7800
        %7802 = vrot.lane.b32.xlu0 %v7671, 64
        %v7803 = vpop.permute.xlu0 %7802
        %7804 = vrot.lane.b32.xlu0 %v7672, 64
        %v7805 = vpop.permute.xlu0 %7804
        %7806 = vrot.lane.b32.xlu0 %v7673, 64
        %v7807 = vpop.permute.xlu0 %7806
        %7808 = vrot.lane.b32.xlu0 %v7674, 64
        %v7809 = vpop.permute.xlu0 %7808
        %7810 = vrot.lane.b32.xlu0 %v7675, 64
        %v7811 = vpop.permute.xlu0 %7810
        %7812 = vrot.lane.b32.xlu0 %v7676, 64
        %v7813 = vpop.permute.xlu0 %7812
        %7814 = vrot.lane.b32.xlu0 %v7677, 64
        %v7815 = vpop.permute.xlu0 %7814
        %7816 = vrot.lane.b32.xlu0 %v7678, 64
        %v7817 = vpop.permute.xlu0 %7816
        %7818 = vrot.lane.b32.xlu0 %v7679, 64
        %v7819 = vpop.permute.xlu0 %7818
        %7820 = vrot.lane.b32.xlu0 %v7680, 64
        %v7821 = vpop.permute.xlu0 %7820
        %7822 = vrot.lane.b32.xlu0 %v7681, 64
        %v7823 = vpop.permute.xlu0 %7822
        %7824 = vrot.lane.b32.xlu0 %v7682, 64
        %v7825 = vpop.permute.xlu0 %7824
        %7826 = vrot.lane.b32.xlu0 %v7683, 64
        %v7827 = vpop.permute.xlu0 %7826
        %7828 = vrot.lane.b32.xlu0 %v7684, 64
        %v7829 = vpop.permute.xlu0 %7828
        %7830 = vrot.lane.b32.xlu0 %v7685, 64
        %v7831 = vpop.permute.xlu0 %7830
        %7832 = vrot.lane.b32.xlu0 %v7686, 64
        %v7833 = vpop.permute.xlu0 %7832
        %7834 = vrot.lane.b32.xlu0 %v7687, 64
        %v7835 = vpop.permute.xlu0 %7834
        %7836 = vrot.lane.b32.xlu0 %v7688, 64
        %v7837 = vpop.permute.xlu0 %7836
        %7838 = vrot.lane.b32.xlu0 %v7689, 64
        %v7839 = vpop.permute.xlu0 %7838
        %7840 = vrot.lane.b32.xlu0 %v7690, 64
        %v7841 = vpop.permute.xlu0 %7840
        %7842 = vrot.lane.b32.xlu0 %v7691, 64
        %v7843 = vpop.permute.xlu0 %7842
        %7844 = vrot.lane.b32.xlu0 %v7692, 64
        %v7845 = vpop.permute.xlu0 %7844
        %7846 = vrot.lane.b32.xlu0 %v7693, 64
        %v7847 = vpop.permute.xlu0 %7846
        %7848 = vrot.lane.b32.xlu0 %v7694, 64
        %v7849 = vpop.permute.xlu0 %7848
        %7850 = vrot.lane.b32.xlu0 %v7695, 64
        %v7851 = vpop.permute.xlu0 %7850
        %7852 = vrot.lane.b32.xlu0 %v7696, 64
        %v7853 = vpop.permute.xlu0 %7852
        %7854 = vrot.lane.b32.xlu0 %v7697, 64
        %v7855 = vpop.permute.xlu0 %7854
        %7856 = vrot.lane.b32.xlu0 %v7698, 64
        %v7857 = vpop.permute.xlu0 %7856
        %7858 = vrot.lane.b32.xlu0 %v7699, 64
        %v7859 = vpop.permute.xlu0 %7858
        %7860 = vrot.lane.b32.xlu0 %v7700, 64
        %v7861 = vpop.permute.xlu0 %7860
        %7862 = vrot.lane.b32.xlu0 %v7701, 64
        %v7863 = vpop.permute.xlu0 %7862
        %7864 = vrot.lane.b32.xlu0 %v7702, 64
        %v7865 = vpop.permute.xlu0 %7864
        %7866 = vrot.lane.b32.xlu0 %v7703, 64
        %v7867 = vpop.permute.xlu0 %7866
        %7868 = vrot.lane.b32.xlu0 %v7704, 64
        %v7869 = vpop.permute.xlu0 %7868
        %7870 = vrot.lane.b32.xlu0 %v7705, 64
        %v7871 = vpop.permute.xlu0 %7870
        %7872 = vrot.lane.b32.xlu0 %v7706, 64
        %v7873 = vpop.permute.xlu0 %7872
        %7874 = vrot.lane.b32.xlu0 %v7707, 64
        %v7875 = vpop.permute.xlu0 %7874
        %7876 = vrot.lane.b32.xlu0 %v7708, 64
        %v7877 = vpop.permute.xlu0 %7876
        %7878 = vrot.lane.b32.xlu0 %v7709, 64
        %v7879 = vpop.permute.xlu0 %7878
        %7880 = vrot.lane.b32.xlu0 %v7710, 64
        %v7881 = vpop.permute.xlu0 %7880
        %7882 = vrot.lane.b32.xlu0 %v7711, 64
        %v7883 = vpop.permute.xlu0 %7882
        %7884 = vrot.lane.b32.xlu0 %v7712, 64
        %v7885 = vpop.permute.xlu0 %7884
        %7886 = vrot.lane.b32.xlu0 %v7713, 64
        %v7887 = vpop.permute.xlu0 %7886
        %7888 = vrot.lane.b32.xlu0 %v7714, 64
        %v7889 = vpop.permute.xlu0 %7888
        %7890 = vrot.lane.b32.xlu0 %v7715, 64
        %v7891 = vpop.permute.xlu0 %7890
        %7892 = vrot.lane.b32.xlu0 %v7716, 64
        %v7893 = vpop.permute.xlu0 %7892
        %7894 = vrot.lane.b32.xlu0 %v7717, 64
        %v7895 = vpop.permute.xlu0 %7894
        %7896 = vrot.lane.b32.xlu0 %v7718, 64
        %v7897 = vpop.permute.xlu0 %7896
        %7898 = vrot.lane.b32.xlu0 %v7719, 64
        %v7899 = vpop.permute.xlu0 %7898
        %7900 = vrot.lane.b32.xlu0 %v7720, 64
        %v7901 = vpop.permute.xlu0 %7900
        %7902 = vrot.lane.b32.xlu0 %v7721, 64
        %v7903 = vpop.permute.xlu0 %7902
        %7904 = vrot.lane.b32.xlu0 %v7722, 64
        %v7905 = vpop.permute.xlu0 %7904
        %7906 = vrot.lane.b32.xlu0 %v7723, 64
        %v7907 = vpop.permute.xlu0 %7906
        %7908 = vrot.lane.b32.xlu0 %v7724, 64
        %v7909 = vpop.permute.xlu0 %7908
        %7910 = vrot.lane.b32.xlu0 %v7725, 64
        %v7911 = vpop.permute.xlu0 %7910
        %7912 = vrot.lane.b32.xlu0 %v7726, 64
        %v7913 = vpop.permute.xlu0 %7912
        %7914 = vrot.lane.b32.xlu0 %v7727, 64
        %v7915 = vpop.permute.xlu0 %7914
        %7916 = vrot.lane.b32.xlu0 %v7728, 64
        %v7917 = vpop.permute.xlu0 %7916
        %7918 = vrot.lane.b32.xlu0 %v7729, 64
        %v7919 = vpop.permute.xlu0 %7918
        %7920 = vrot.lane.b32.xlu0 %v7730, 64
        %v7921 = vpop.permute.xlu0 %7920
        %7922 = vrot.lane.b32.xlu0 %v7731, 64
        %v7923 = vpop.permute.xlu0 %7922
        %vm7988 = vcmask 523264
        %v7989 = vsel %vm7988, %v5044, %v7797
        %v7990 = vsel %vm7988, %v5045, %v7799
        %v7991 = vsel %vm7988, %v5046, %v7801
        %v7992 = vsel %vm7988, %v5047, %v7803
        %v7993 = vsel %vm7988, %v5048, %v7805
        %v7994 = vsel %vm7988, %v5049, %v7807
        %v7995 = vsel %vm7988, %v5050, %v7809
        %v7996 = vsel %vm7988, %v5051, %v7811
        %v7997 = vsel %vm7988, %v5052, %v7813
        %v7998 = vsel %vm7988, %v5053, %v7815
        %v7999 = vsel %vm7988, %v5054, %v7817
        %v8000 = vsel %vm7988, %v5055, %v7819
        %v8001 = vsel %vm7988, %v5056, %v7821
        %v8002 = vsel %vm7988, %v5057, %v7823
        %v8003 = vsel %vm7988, %v5058, %v7825
        %v8004 = vsel %vm7988, %v5059, %v7827
        %v8005 = vsel %vm7988, %v5060, %v7829
        %v8006 = vsel %vm7988, %v5061, %v7831
        %v8007 = vsel %vm7988, %v5062, %v7833
        %v8008 = vsel %vm7988, %v5063, %v7835
        %v8009 = vsel %vm7988, %v5064, %v7837
        %v8010 = vsel %vm7988, %v5065, %v7839
        %v8011 = vsel %vm7988, %v5066, %v7841
        %v8012 = vsel %vm7988, %v5067, %v7843
        %v8013 = vsel %vm7988, %v5068, %v7845
        %v8014 = vsel %vm7988, %v5069, %v7847
        %v8015 = vsel %vm7988, %v5070, %v7849
        %v8016 = vsel %vm7988, %v5071, %v7851
        %v8017 = vsel %vm7988, %v5072, %v7853
        %v8018 = vsel %vm7988, %v5073, %v7855
        %v8019 = vsel %vm7988, %v5074, %v7857
        %v8020 = vsel %vm7988, %v5075, %v7859
        %v8021 = vsel %vm7988, %v5076, %v7861
        %v8022 = vsel %vm7988, %v5077, %v7863
        %v8023 = vsel %vm7988, %v5078, %v7865
        %v8024 = vsel %vm7988, %v5079, %v7867
        %v8025 = vsel %vm7988, %v5080, %v7869
        %v8026 = vsel %vm7988, %v5081, %v7871
        %v8027 = vsel %vm7988, %v5082, %v7873
        %v8028 = vsel %vm7988, %v5083, %v7875
        %v8029 = vsel %vm7988, %v5084, %v7877
        %v8030 = vsel %vm7988, %v5085, %v7879
        %v8031 = vsel %vm7988, %v5086, %v7881
        %v8032 = vsel %vm7988, %v5087, %v7883
        %v8033 = vsel %vm7988, %v5088, %v7885
        %v8034 = vsel %vm7988, %v5089, %v7887
        %v8035 = vsel %vm7988, %v5090, %v7889
        %v8036 = vsel %vm7988, %v5091, %v7891
        %v8037 = vsel %vm7988, %v5092, %v7893
        %v8038 = vsel %vm7988, %v5093, %v7895
        %v8039 = vsel %vm7988, %v5094, %v7897
        %v8040 = vsel %vm7988, %v5095, %v7899
        %v8041 = vsel %vm7988, %v5096, %v7901
        %v8042 = vsel %vm7988, %v5097, %v7903
        %v8043 = vsel %vm7988, %v5098, %v7905
        %v8044 = vsel %vm7988, %v5099, %v7907
        %v8045 = vsel %vm7988, %v5100, %v7909
        %v8046 = vsel %vm7988, %v5101, %v7911
        %v8047 = vsel %vm7988, %v5102, %v7913
        %v8048 = vsel %vm7988, %v5103, %v7915
        %v8049 = vsel %vm7988, %v5104, %v7917
        %v8050 = vsel %vm7988, %v5105, %v7919
        %v8051 = vsel %vm7988, %v5106, %v7921
        %v8052 = vsel %vm7988, %v5107, %v7923
        %v8053 = vld [vmem:[%s1] sm:$0xff]
        %v8054 = vld [vmem:[%s1 + $0x8] sm:$0xff]
        %v8055 = vld [vmem:[%s1 + $0x10] sm:$0xff]
        %v8056 = vld [vmem:[%s1 + $0x18] sm:$0xff]
        %v8057 = vld [vmem:[%s1 + $0x20] sm:$0xff]
        %v8058 = vld [vmem:[%s1 + $0x28] sm:$0xff]
        %v8059 = vld [vmem:[%s1 + $0x30] sm:$0xff]
        %v8060 = vld [vmem:[%s1 + $0x38] sm:$0xff]
        %v8061 = vld [vmem:[%s1 + $0x40] sm:$0xff]
        %v8062 = vld [vmem:[%s1 + $0x48] sm:$0xff]
        %v8063 = vld [vmem:[%s1 + $0x50] sm:$0xff]
        %v8064 = vld [vmem:[%s1 + $0x58] sm:$0xff]
        %v8065 = vld [vmem:[%s1 + $0x60] sm:$0xff]
        %v8066 = vld [vmem:[%s1 + $0x68] sm:$0xff]
        %v8067 = vld [vmem:[%s1 + $0x70] sm:$0xff]
        %v8068 = vld [vmem:[%s1 + $0x78] sm:$0xff]
        %v8069 = vld [vmem:[%s2] sm:$0x1]
        %v8071 = vlaneseq
        %v8072 = vshrl.u32 %v8071, 7
        %v8073 = vsub.s32 0, %v8072
        %v8074 = vrot.slane %v8069, %v8073
        %8076 = vmatprep.subr.mxu0 0.0
        %8077 = vmatpush1.msra.mxu0 %v8053
        %8078 = vmatprep.subr.mxu0 0.0
        %8079 = vmatpush1.msra.mxu0 %v8054
        %8080 = vmatprep.subr.mxu0 0.0
        %8081 = vmatpush1.msra.mxu0 %v8055
        %8082 = vmatprep.subr.mxu0 0.0
        %8083 = vmatpush1.msra.mxu0 %v8056
        %8084 = vmatprep.subr.mxu0 0.0
        %8085 = vmatpush1.msra.mxu0 %v8057
        %8086 = vmatprep.subr.mxu0 0.0
        %8087 = vmatpush1.msra.mxu0 %v8058
        %8088 = vmatprep.subr.mxu0 0.0
        %8089 = vmatpush1.msra.mxu0 %v8059
        %8090 = vmatprep.subr.mxu0 0.0
        %8091 = vmatpush1.msra.mxu0 %v8060
        %8092 = vmatprep.subr.mxu0 0.0
        %8093 = vmatpush1.msra.mxu0 %v8061
        %8094 = vmatprep.subr.mxu0 0.0
        %8095 = vmatpush1.msra.mxu0 %v8062
        %8096 = vmatprep.subr.mxu0 0.0
        %8097 = vmatpush1.msra.mxu0 %v8063
        %8098 = vmatprep.subr.mxu0 0.0
        %8099 = vmatpush1.msra.mxu0 %v8064
        %8100 = vmatprep.subr.mxu0 0.0
        %8101 = vmatpush1.msra.mxu0 %v8065
        %8102 = vmatprep.subr.mxu0 0.0
        %8103 = vmatpush1.msra.mxu0 %v8066
        %8104 = vmatprep.subr.mxu0 0.0
        %8105 = vmatpush1.msra.mxu0 %v8067
        %8106 = vmatprep.subr.mxu0 0.0
        %8107 = vmatpush1.msra.mxu0 %v8068
        %8108 = vmatprep.subr.mxu0 0.0
        %8109 = vmatpush1.msra.mxu0 0.0
        %8110 = vmatprep.subr.mxu0 0.0
        %8111 = vmatpush1.msra.mxu0 0.0
        %8112 = vmatprep.subr.mxu0 0.0
        %8113 = vmatpush1.msra.mxu0 0.0
        %8114 = vmatprep.subr.mxu0 0.0
        %8115 = vmatpush1.msra.mxu0 0.0
        %8116 = vmatprep.subr.mxu0 0.0
        %8117 = vmatpush1.msra.mxu0 0.0
        %8118 = vmatprep.subr.mxu0 0.0
        %8119 = vmatpush1.msra.mxu0 0.0
        %8120 = vmatprep.subr.mxu0 0.0
        %8121 = vmatpush1.msra.mxu0 0.0
        %8122 = vmatprep.subr.mxu0 0.0
        %8123 = vmatpush1.msra.mxu0 0.0
        %8124 = vmatprep.subr.mxu0 0.0
        %8125 = vmatpush1.msra.mxu0 0.0
        %8126 = vmatprep.subr.mxu0 0.0
        %8127 = vmatpush1.msra.mxu0 0.0
        %8128 = vmatprep.subr.mxu0 0.0
        %8129 = vmatpush1.msra.mxu0 0.0
        %8130 = vmatprep.subr.mxu0 0.0
        %8131 = vmatpush1.msra.mxu0 0.0
        %8132 = vmatprep.subr.mxu0 0.0
        %8133 = vmatpush1.msra.mxu0 0.0
        %8134 = vmatprep.subr.mxu0 0.0
        %8135 = vmatpush1.msra.mxu0 0.0
        %8136 = vmatprep.subr.mxu0 0.0
        %8137 = vmatpush1.msra.mxu0 0.0
        %8138 = vmatprep.subr.mxu0 0.0
        %8139 = vmatpush1.msra.mxu0 0.0
        %8140 = vmatprep.mubr.f32.mxu0 0.0
        %8141 = vmatmul.mubr.f32.gmra.mrb[0].mxu0 %v7989
        %v8142 = vpop.f32.mrb[0].mxu0
        %v8143 = vadd.f32 %v8074, %v8142
        %v8144 = vpop.f32.mrb[0].mxu0
        %8145 = vmatprep.mubr.f32.mxu0 0.0
        %8146 = vmatmul.mubr.f32.gmra.mrb[0].mxu0 %v7990
        %v8147 = vpop.f32.mrb[0].mxu0
        %v8148 = vadd.f32 %v8074, %v8147
        %v8149 = vpop.f32.mrb[0].mxu0
        %8150 = vmatprep.mubr.f32.mxu0 0.0
        %8151 = vmatmul.mubr.f32.gmra.mrb[0].mxu0 %v7991
        %v8152 = vpop.f32.mrb[0].mxu0
        %v8153 = vadd.f32 %v8074, %v8152
        %v8154 = vpop.f32.mrb[0].mxu0
        %8155 = vmatprep.mubr.f32.mxu0 0.0
        %8156 = vmatmul.mubr.f32.gmra.mrb[0].mxu0 %v7992
        %v8157 = vpop.f32.mrb[0].mxu0
        %v8158 = vadd.f32 %v8074, %v8157
        %v8159 = vpop.f32.mrb[0].mxu0
        %8160 = vmatprep.mubr.f32.mxu0 0.0
        %8161 = vmatmul.mubr.f32.gmra.mrb[0].mxu0 %v7993
        %v8162 = vpop.f32.mrb[0].mxu0
        %v8163 = vadd.f32 %v8074, %v8162
        %v8164 = vpop.f32.mrb[0].mxu0
        %8165 = vmatprep.mubr.f32.mxu0 0.0
        %8166 = vmatmul.mubr.f32.gmra.mrb[0].mxu0 %v7994
        %v8167 = vpop.f32.mrb[0].mxu0
        %v8168 = vadd.f32 %v8074, %v8167
        %v8169 = vpop.f32.mrb[0].mxu0
        %8170 = vmatprep.mubr.f32.mxu0 0.0
        %8171 = vmatmul.mubr.f32.gmra.mrb[0].mxu0 %v7995
        %v8172 = vpop.f32.mrb[0].mxu0
        %v8173 = vadd.f32 %v8074, %v8172
        %v8174 = vpop.f32.mrb[0].mxu0
        %8175 = vmatprep.mubr.f32.mxu0 0.0
        %8176 = vmatmul.mubr.f32.gmra.mrb[0].mxu0 %v7996
        %v8177 = vpop.f32.mrb[0].mxu0
        %v8178 = vadd.f32 %v8074, %v8177
        %v8179 = vpop.f32.mrb[0].mxu0
        %8180 = vmatprep.mubr.f32.mxu0 0.0
        %8181 = vmatmul.mubr.f32.gmra.mrb[0].mxu0 %v7997
        %v8182 = vpop.f32.mrb[0].mxu0
        %v8183 = vadd.f32 %v8074, %v8182
        %v8184 = vpop.f32.mrb[0].mxu0
        %8185 = vmatprep.mubr.f32.mxu0 0.0
        %8186 = vmatmul.mubr.f32.gmra.mrb[0].mxu0 %v7998
        %v8187 = vpop.f32.mrb[0].mxu0
        %v8188 = vadd.f32 %v8074, %v8187
        %v8189 = vpop.f32.mrb[0].mxu0
        %8190 = vmatprep.mubr.f32.mxu0 0.0
        %8191 = vmatmul.mubr.f32.gmra.mrb[0].mxu0 %v7999
        %v8192 = vpop.f32.mrb[0].mxu0
        %v8193 = vadd.f32 %v8074, %v8192
        %v8194 = vpop.f32.mrb[0].mxu0
        %8195 = vmatprep.mubr.f32.mxu0 0.0
        %8196 = vmatmul.mubr.f32.gmra.mrb[0].mxu0 %v8000
        %v8197 = vpop.f32.mrb[0].mxu0
        %v8198 = vadd.f32 %v8074, %v8197
        %v8199 = vpop.f32.mrb[0].mxu0
        %8200 = vmatprep.mubr.f32.mxu0 0.0
        %8201 = vmatmul.mubr.f32.gmra.mrb[0].mxu0 %v8001
        %v8202 = vpop.f32.mrb[0].mxu0
        %v8203 = vadd.f32 %v8074, %v8202
        %v8204 = vpop.f32.mrb[0].mxu0
        %8205 = vmatprep.mubr.f32.mxu0 0.0
        %8206 = vmatmul.mubr.f32.gmra.mrb[0].mxu0 %v8002
        %v8207 = vpop.f32.mrb[0].mxu0
        %v8208 = vadd.f32 %v8074, %v8207
        %v8209 = vpop.f32.mrb[0].mxu0
        %8210 = vmatprep.mubr.f32.mxu0 0.0
        %8211 = vmatmul.mubr.f32.gmra.mrb[0].mxu0 %v8003
        %v8212 = vpop.f32.mrb[0].mxu0
        %v8213 = vadd.f32 %v8074, %v8212
        %v8214 = vpop.f32.mrb[0].mxu0
        %8215 = vmatprep.mubr.f32.mxu0 0.0
        %8216 = vmatmul.mubr.f32.gmra.mrb[0].mxu0 %v8004
        %v8217 = vpop.f32.mrb[0].mxu0
        %v8218 = vadd.f32 %v8074, %v8217
        %v8219 = vpop.f32.mrb[0].mxu0
        %8220 = vmatprep.mubr.f32.mxu0 0.0
        %8221 = vmatmul.mubr.f32.gmra.mrb[0].mxu0 %v8005
        %v8222 = vpop.f32.mrb[0].mxu0
        %v8223 = vadd.f32 %v8074, %v8222
        %v8224 = vpop.f32.mrb[0].mxu0
        %8225 = vmatprep.mubr.f32.mxu0 0.0
        %8226 = vmatmul.mubr.f32.gmra.mrb[0].mxu0 %v8006
        %v8227 = vpop.f32.mrb[0].mxu0
        %v8228 = vadd.f32 %v8074, %v8227
        %v8229 = vpop.f32.mrb[0].mxu0
        %8230 = vmatprep.mubr.f32.mxu0 0.0
        %8231 = vmatmul.mubr.f32.gmra.mrb[0].mxu0 %v8007
        %v8232 = vpop.f32.mrb[0].mxu0
        %v8233 = vadd.f32 %v8074, %v8232
        %v8234 = vpop.f32.mrb[0].mxu0
        %8235 = vmatprep.mubr.f32.mxu0 0.0
        %8236 = vmatmul.mubr.f32.gmra.mrb[0].mxu0 %v8008
        %v8237 = vpop.f32.mrb[0].mxu0
        %v8238 = vadd.f32 %v8074, %v8237
        %v8239 = vpop.f32.mrb[0].mxu0
        %8240 = vmatprep.mubr.f32.mxu0 0.0
        %8241 = vmatmul.mubr.f32.gmra.mrb[0].mxu0 %v8009
        %v8242 = vpop.f32.mrb[0].mxu0
        %v8243 = vadd.f32 %v8074, %v8242
        %v8244 = vpop.f32.mrb[0].mxu0
        %8245 = vmatprep.mubr.f32.mxu0 0.0
        %8246 = vmatmul.mubr.f32.gmra.mrb[0].mxu0 %v8010
        %v8247 = vpop.f32.mrb[0].mxu0
        %v8248 = vadd.f32 %v8074, %v8247
        %v8249 = vpop.f32.mrb[0].mxu0
        %8250 = vmatprep.mubr.f32.mxu0 0.0
        %8251 = vmatmul.mubr.f32.gmra.mrb[0].mxu0 %v8011
        %v8252 = vpop.f32.mrb[0].mxu0
        %v8253 = vadd.f32 %v8074, %v8252
        %v8254 = vpop.f32.mrb[0].mxu0
        %8255 = vmatprep.mubr.f32.mxu0 0.0
        %8256 = vmatmul.mubr.f32.gmra.mrb[0].mxu0 %v8012
        %v8257 = vpop.f32.mrb[0].mxu0
        %v8258 = vadd.f32 %v8074, %v8257
        %v8259 = vpop.f32.mrb[0].mxu0
        %8260 = vmatprep.mubr.f32.mxu0 0.0
        %8261 = vmatmul.mubr.f32.gmra.mrb[0].mxu0 %v8013
        %v8262 = vpop.f32.mrb[0].mxu0
        %v8263 = vadd.f32 %v8074, %v8262
        %v8264 = vpop.f32.mrb[0].mxu0
        %8265 = vmatprep.mubr.f32.mxu0 0.0
        %8266 = vmatmul.mubr.f32.gmra.mrb[0].mxu0 %v8014
        %v8267 = vpop.f32.mrb[0].mxu0
        %v8268 = vadd.f32 %v8074, %v8267
        %v8269 = vpop.f32.mrb[0].mxu0
        %8270 = vmatprep.mubr.f32.mxu0 0.0
        %8271 = vmatmul.mubr.f32.gmra.mrb[0].mxu0 %v8015
        %v8272 = vpop.f32.mrb[0].mxu0
        %v8273 = vadd.f32 %v8074, %v8272
        %v8274 = vpop.f32.mrb[0].mxu0
        %8275 = vmatprep.mubr.f32.mxu0 0.0
        %8276 = vmatmul.mubr.f32.gmra.mrb[0].mxu0 %v8016
        %v8277 = vpop.f32.mrb[0].mxu0
        %v8278 = vadd.f32 %v8074, %v8277
        %v8279 = vpop.f32.mrb[0].mxu0
        %8280 = vmatprep.mubr.f32.mxu0 0.0
        %8281 = vmatmul.mubr.f32.gmra.mrb[0].mxu0 %v8017
        %v8282 = vpop.f32.mrb[0].mxu0
        %v8283 = vadd.f32 %v8074, %v8282
        %v8284 = vpop.f32.mrb[0].mxu0
        %8285 = vmatprep.mubr.f32.mxu0 0.0
        %8286 = vmatmul.mubr.f32.gmra.mrb[0].mxu0 %v8018
        %v8287 = vpop.f32.mrb[0].mxu0
        %v8288 = vadd.f32 %v8074, %v8287
        %v8289 = vpop.f32.mrb[0].mxu0
        %8290 = vmatprep.mubr.f32.mxu0 0.0
        %8291 = vmatmul.mubr.f32.gmra.mrb[0].mxu0 %v8019
        %v8292 = vpop.f32.mrb[0].mxu0
        %v8293 = vadd.f32 %v8074, %v8292
        %v8294 = vpop.f32.mrb[0].mxu0
        %8295 = vmatprep.mubr.f32.mxu0 0.0
        %8296 = vmatmul.mubr.f32.gmra.mrb[0].mxu0 %v8020
        %v8297 = vpop.f32.mrb[0].mxu0
        %v8298 = vadd.f32 %v8074, %v8297
        %v8299 = vpop.f32.mrb[0].mxu0
        %8300 = vmatprep.mubr.f32.mxu0 0.0
        %8301 = vmatmul.mubr.f32.gmra.mrb[0].mxu0 %v8021
        %v8302 = vpop.f32.mrb[0].mxu0
        %v8303 = vadd.f32 %v8074, %v8302
        %v8304 = vpop.f32.mrb[0].mxu0
        %8305 = vmatprep.mubr.f32.mxu0 0.0
        %8306 = vmatmul.mubr.f32.gmra.mrb[0].mxu0 %v8022
        %v8307 = vpop.f32.mrb[0].mxu0
        %v8308 = vadd.f32 %v8074, %v8307
        %v8309 = vpop.f32.mrb[0].mxu0
        %8310 = vmatprep.mubr.f32.mxu0 0.0
        %8311 = vmatmul.mubr.f32.gmra.mrb[0].mxu0 %v8023
        %v8312 = vpop.f32.mrb[0].mxu0
        %v8313 = vadd.f32 %v8074, %v8312
        %v8314 = vpop.f32.mrb[0].mxu0
        %8315 = vmatprep.mubr.f32.mxu0 0.0
        %8316 = vmatmul.mubr.f32.gmra.mrb[0].mxu0 %v8024
        %v8317 = vpop.f32.mrb[0].mxu0
        %v8318 = vadd.f32 %v8074, %v8317
        %v8319 = vpop.f32.mrb[0].mxu0
        %8320 = vmatprep.mubr.f32.mxu0 0.0
        %8321 = vmatmul.mubr.f32.gmra.mrb[0].mxu0 %v8025
        %v8322 = vpop.f32.mrb[0].mxu0
        %v8323 = vadd.f32 %v8074, %v8322
        %v8324 = vpop.f32.mrb[0].mxu0
        %8325 = vmatprep.mubr.f32.mxu0 0.0
        %8326 = vmatmul.mubr.f32.gmra.mrb[0].mxu0 %v8026
        %v8327 = vpop.f32.mrb[0].mxu0
        %v8328 = vadd.f32 %v8074, %v8327
        %v8329 = vpop.f32.mrb[0].mxu0
        %8330 = vmatprep.mubr.f32.mxu0 0.0
        %8331 = vmatmul.mubr.f32.gmra.mrb[0].mxu0 %v8027
        %v8332 = vpop.f32.mrb[0].mxu0
        %v8333 = vadd.f32 %v8074, %v8332
        %v8334 = vpop.f32.mrb[0].mxu0
        %8335 = vmatprep.mubr.f32.mxu0 0.0
        %8336 = vmatmul.mubr.f32.gmra.mrb[0].mxu0 %v8028
        %v8337 = vpop.f32.mrb[0].mxu0
        %v8338 = vadd.f32 %v8074, %v8337
        %v8339 = vpop.f32.mrb[0].mxu0
        %8340 = vmatprep.mubr.f32.mxu0 0.0
        %8341 = vmatmul.mubr.f32.gmra.mrb[0].mxu0 %v8029
        %v8342 = vpop.f32.mrb[0].mxu0
        %v8343 = vadd.f32 %v8074, %v8342
        %v8344 = vpop.f32.mrb[0].mxu0
        %8345 = vmatprep.mubr.f32.mxu0 0.0
        %8346 = vmatmul.mubr.f32.gmra.mrb[0].mxu0 %v8030
        %v8347 = vpop.f32.mrb[0].mxu0
        %v8348 = vadd.f32 %v8074, %v8347
        %v8349 = vpop.f32.mrb[0].mxu0
        %8350 = vmatprep.mubr.f32.mxu0 0.0
        %8351 = vmatmul.mubr.f32.gmra.mrb[0].mxu0 %v8031
        %v8352 = vpop.f32.mrb[0].mxu0
        %v8353 = vadd.f32 %v8074, %v8352
        %v8354 = vpop.f32.mrb[0].mxu0
        %8355 = vmatprep.mubr.f32.mxu0 0.0
        %8356 = vmatmul.mubr.f32.gmra.mrb[0].mxu0 %v8032
        %v8357 = vpop.f32.mrb[0].mxu0
        %v8358 = vadd.f32 %v8074, %v8357
        %v8359 = vpop.f32.mrb[0].mxu0
        %8360 = vmatprep.mubr.f32.mxu0 0.0
        %8361 = vmatmul.mubr.f32.gmra.mrb[0].mxu0 %v8033
        %v8362 = vpop.f32.mrb[0].mxu0
        %v8363 = vadd.f32 %v8074, %v8362
        %v8364 = vpop.f32.mrb[0].mxu0
        %8365 = vmatprep.mubr.f32.mxu0 0.0
        %8366 = vmatmul.mubr.f32.gmra.mrb[0].mxu0 %v8034
        %v8367 = vpop.f32.mrb[0].mxu0
        %v8368 = vadd.f32 %v8074, %v8367
        %v8369 = vpop.f32.mrb[0].mxu0
        %8370 = vmatprep.mubr.f32.mxu0 0.0
        %8371 = vmatmul.mubr.f32.gmra.mrb[0].mxu0 %v8035
        %v8372 = vpop.f32.mrb[0].mxu0
        %v8373 = vadd.f32 %v8074, %v8372
        %v8374 = vpop.f32.mrb[0].mxu0
        %8375 = vmatprep.mubr.f32.mxu0 0.0
        %8376 = vmatmul.mubr.f32.gmra.mrb[0].mxu0 %v8036
        %v8377 = vpop.f32.mrb[0].mxu0
        %v8378 = vadd.f32 %v8074, %v8377
        %v8379 = vpop.f32.mrb[0].mxu0
        %8380 = vmatprep.mubr.f32.mxu0 0.0
        %8381 = vmatmul.mubr.f32.gmra.mrb[0].mxu0 %v8037
        %v8382 = vpop.f32.mrb[0].mxu0
        %v8383 = vadd.f32 %v8074, %v8382
        %v8384 = vpop.f32.mrb[0].mxu0
        %8385 = vmatprep.mubr.f32.mxu0 0.0
        %8386 = vmatmul.mubr.f32.gmra.mrb[0].mxu0 %v8038
        %v8387 = vpop.f32.mrb[0].mxu0
        %v8388 = vadd.f32 %v8074, %v8387
        %v8389 = vpop.f32.mrb[0].mxu0
        %8390 = vmatprep.mubr.f32.mxu0 0.0
        %8391 = vmatmul.mubr.f32.gmra.mrb[0].mxu0 %v8039
        %v8392 = vpop.f32.mrb[0].mxu0
        %v8393 = vadd.f32 %v8074, %v8392
        %v8394 = vpop.f32.mrb[0].mxu0
        %8395 = vmatprep.mubr.f32.mxu0 0.0
        %8396 = vmatmul.mubr.f32.gmra.mrb[0].mxu0 %v8040
        %v8397 = vpop.f32.mrb[0].mxu0
        %v8398 = vadd.f32 %v8074, %v8397
        %v8399 = vpop.f32.mrb[0].mxu0
        %8400 = vmatprep.mubr.f32.mxu0 0.0
        %8401 = vmatmul.mubr.f32.gmra.mrb[0].mxu0 %v8041
        %v8402 = vpop.f32.mrb[0].mxu0
        %v8403 = vadd.f32 %v8074, %v8402
        %v8404 = vpop.f32.mrb[0].mxu0
        %8405 = vmatprep.mubr.f32.mxu0 0.0
        %8406 = vmatmul.mubr.f32.gmra.mrb[0].mxu0 %v8042
        %v8407 = vpop.f32.mrb[0].mxu0
        %v8408 = vadd.f32 %v8074, %v8407
        %v8409 = vpop.f32.mrb[0].mxu0
        %8410 = vmatprep.mubr.f32.mxu0 0.0
        %8411 = vmatmul.mubr.f32.gmra.mrb[0].mxu0 %v8043
        %v8412 = vpop.f32.mrb[0].mxu0
        %v8413 = vadd.f32 %v8074, %v8412
        %v8414 = vpop.f32.mrb[0].mxu0
        %8415 = vmatprep.mubr.f32.mxu0 0.0
        %8416 = vmatmul.mubr.f32.gmra.mrb[0].mxu0 %v8044
        %v8417 = vpop.f32.mrb[0].mxu0
        %v8418 = vadd.f32 %v8074, %v8417
        %v8419 = vpop.f32.mrb[0].mxu0
        %8420 = vmatprep.mubr.f32.mxu0 0.0
        %8421 = vmatmul.mubr.f32.gmra.mrb[0].mxu0 %v8045
        %v8422 = vpop.f32.mrb[0].mxu0
        %v8423 = vadd.f32 %v8074, %v8422
        %v8424 = vpop.f32.mrb[0].mxu0
        %8425 = vmatprep.mubr.f32.mxu0 0.0
        %8426 = vmatmul.mubr.f32.gmra.mrb[0].mxu0 %v8046
        %v8427 = vpop.f32.mrb[0].mxu0
        %v8428 = vadd.f32 %v8074, %v8427
        %v8429 = vpop.f32.mrb[0].mxu0
        %8430 = vmatprep.mubr.f32.mxu0 0.0
        %8431 = vmatmul.mubr.f32.gmra.mrb[0].mxu0 %v8047
        %v8432 = vpop.f32.mrb[0].mxu0
        %v8433 = vadd.f32 %v8074, %v8432
        %v8434 = vpop.f32.mrb[0].mxu0
        %8435 = vmatprep.mubr.f32.mxu0 0.0
        %8436 = vmatmul.mubr.f32.gmra.mrb[0].mxu0 %v8048
        %v8437 = vpop.f32.mrb[0].mxu0
        %v8438 = vadd.f32 %v8074, %v8437
        %v8439 = vpop.f32.mrb[0].mxu0
        %8440 = vmatprep.mubr.f32.mxu0 0.0
        %8441 = vmatmul.mubr.f32.gmra.mrb[0].mxu0 %v8049
        %v8442 = vpop.f32.mrb[0].mxu0
        %v8443 = vadd.f32 %v8074, %v8442
        %v8444 = vpop.f32.mrb[0].mxu0
        %8445 = vmatprep.mubr.f32.mxu0 0.0
        %8446 = vmatmul.mubr.f32.gmra.mrb[0].mxu0 %v8050
        %v8447 = vpop.f32.mrb[0].mxu0
        %v8448 = vadd.f32 %v8074, %v8447
        %v8449 = vpop.f32.mrb[0].mxu0
        %8450 = vmatprep.mubr.f32.mxu0 0.0
        %8451 = vmatmul.mubr.f32.gmra.mrb[0].mxu0 %v8051
        %v8452 = vpop.f32.mrb[0].mxu0
        %v8453 = vadd.f32 %v8074, %v8452
        %v8454 = vpop.f32.mrb[0].mxu0
        %8455 = vmatprep.mubr.f32.mxu0 0.0
        %8456 = vmatmul.mubr.f32.gmra.mrb[0].mxu0 %v8052
        %v8457 = vpop.f32.mrb[0].mxu0
        %v8458 = vadd.f32 %v8074, %v8457
        %v8459 = vpop.f32.mrb[0].mxu0
        %8460 = vdwg.mxu0
        %vm8461 = vcmp.gt.f32.partialorder %v8143, 0.0
        %vm8462 = vcmp.gt.f32.partialorder %v8148, 0.0
        %vm8463 = vcmp.gt.f32.partialorder %v8153, 0.0
        %vm8464 = vcmp.gt.f32.partialorder %v8158, 0.0
        %vm8465 = vcmp.gt.f32.partialorder %v8163, 0.0
        %vm8466 = vcmp.gt.f32.partialorder %v8168, 0.0
        %vm8467 = vcmp.gt.f32.partialorder %v8173, 0.0
        %vm8468 = vcmp.gt.f32.partialorder %v8178, 0.0
        %vm8469 = vcmp.gt.f32.partialorder %v8183, 0.0
        %vm8470 = vcmp.gt.f32.partialorder %v8188, 0.0
        %vm8471 = vcmp.gt.f32.partialorder %v8193, 0.0
        %vm8472 = vcmp.gt.f32.partialorder %v8198, 0.0
        %vm8473 = vcmp.gt.f32.partialorder %v8203, 0.0
        %vm8474 = vcmp.gt.f32.partialorder %v8208, 0.0
        %vm8475 = vcmp.gt.f32.partialorder %v8213, 0.0
        %vm8476 = vcmp.gt.f32.partialorder %v8218, 0.0
        %vm8477 = vcmp.gt.f32.partialorder %v8223, 0.0
        %vm8478 = vcmp.gt.f32.partialorder %v8228, 0.0
        %vm8479 = vcmp.gt.f32.partialorder %v8233, 0.0
        %vm8480 = vcmp.gt.f32.partialorder %v8238, 0.0
        %vm8481 = vcmp.gt.f32.partialorder %v8243, 0.0
        %vm8482 = vcmp.gt.f32.partialorder %v8248, 0.0
        %vm8483 = vcmp.gt.f32.partialorder %v8253, 0.0
        %vm8484 = vcmp.gt.f32.partialorder %v8258, 0.0
        %vm8485 = vcmp.gt.f32.partialorder %v8263, 0.0
        %vm8486 = vcmp.gt.f32.partialorder %v8268, 0.0
        %vm8487 = vcmp.gt.f32.partialorder %v8273, 0.0
        %vm8488 = vcmp.gt.f32.partialorder %v8278, 0.0
        %vm8489 = vcmp.gt.f32.partialorder %v8283, 0.0
        %vm8490 = vcmp.gt.f32.partialorder %v8288, 0.0
        %vm8491 = vcmp.gt.f32.partialorder %v8293, 0.0
        %vm8492 = vcmp.gt.f32.partialorder %v8298, 0.0
        %vm8493 = vcmp.gt.f32.partialorder %v8303, 0.0
        %vm8494 = vcmp.gt.f32.partialorder %v8308, 0.0
        %vm8495 = vcmp.gt.f32.partialorder %v8313, 0.0
        %vm8496 = vcmp.gt.f32.partialorder %v8318, 0.0
        %vm8497 = vcmp.gt.f32.partialorder %v8323, 0.0
        %vm8498 = vcmp.gt.f32.partialorder %v8328, 0.0
        %vm8499 = vcmp.gt.f32.partialorder %v8333, 0.0
        %vm8500 = vcmp.gt.f32.partialorder %v8338, 0.0
        %vm8501 = vcmp.gt.f32.partialorder %v8343, 0.0
        %vm8502 = vcmp.gt.f32.partialorder %v8348, 0.0
        %vm8503 = vcmp.gt.f32.partialorder %v8353, 0.0
        %vm8504 = vcmp.gt.f32.partialorder %v8358, 0.0
        %vm8505 = vcmp.gt.f32.partialorder %v8363, 0.0
        %vm8506 = vcmp.gt.f32.partialorder %v8368, 0.0
        %vm8507 = vcmp.gt.f32.partialorder %v8373, 0.0
        %vm8508 = vcmp.gt.f32.partialorder %v8378, 0.0
        %vm8509 = vcmp.gt.f32.partialorder %v8383, 0.0
        %vm8510 = vcmp.gt.f32.partialorder %v8388, 0.0
        %vm8511 = vcmp.gt.f32.partialorder %v8393, 0.0
        %vm8512 = vcmp.gt.f32.partialorder %v8398, 0.0
        %vm8513 = vcmp.gt.f32.partialorder %v8403, 0.0
        %vm8514 = vcmp.gt.f32.partialorder %v8408, 0.0
        %vm8515 = vcmp.gt.f32.partialorder %v8413, 0.0
        %vm8516 = vcmp.gt.f32.partialorder %v8418, 0.0
        %vm8517 = vcmp.gt.f32.partialorder %v8423, 0.0
        %vm8518 = vcmp.gt.f32.partialorder %v8428, 0.0
        %vm8519 = vcmp.gt.f32.partialorder %v8433, 0.0
        %vm8520 = vcmp.gt.f32.partialorder %v8438, 0.0
        %vm8521 = vcmp.gt.f32.partialorder %v8443, 0.0
        %vm8522 = vcmp.gt.f32.partialorder %v8448, 0.0
        %vm8523 = vcmp.gt.f32.partialorder %v8453, 0.0
        %vm8524 = vcmp.gt.f32.partialorder %v8458, 0.0
        %v8525 = vmul.f32 %v8143, 0.2
        %v8526 = vmul.f32 %v8148, 0.2
        %v8527 = vmul.f32 %v8153, 0.2
        %v8528 = vmul.f32 %v8158, 0.2
        %v8529 = vmul.f32 %v8163, 0.2
        %v8530 = vmul.f32 %v8168, 0.2
        %v8531 = vmul.f32 %v8173, 0.2
        %v8532 = vmul.f32 %v8178, 0.2
        %v8533 = vmul.f32 %v8183, 0.2
        %v8534 = vmul.f32 %v8188, 0.2
        %v8535 = vmul.f32 %v8193, 0.2
        %v8536 = vmul.f32 %v8198, 0.2
        %v8537 = vmul.f32 %v8203, 0.2
        %v8538 = vmul.f32 %v8208, 0.2
        %v8539 = vmul.f32 %v8213, 0.2
        %v8540 = vmul.f32 %v8218, 0.2
        %v8541 = vmul.f32 %v8223, 0.2
        %v8542 = vmul.f32 %v8228, 0.2
        %v8543 = vmul.f32 %v8233, 0.2
        %v8544 = vmul.f32 %v8238, 0.2
        %v8545 = vmul.f32 %v8243, 0.2
        %v8546 = vmul.f32 %v8248, 0.2
        %v8547 = vmul.f32 %v8253, 0.2
        %v8548 = vmul.f32 %v8258, 0.2
        %v8549 = vmul.f32 %v8263, 0.2
        %v8550 = vmul.f32 %v8268, 0.2
        %v8551 = vmul.f32 %v8273, 0.2
        %v8552 = vmul.f32 %v8278, 0.2
        %v8553 = vmul.f32 %v8283, 0.2
        %v8554 = vmul.f32 %v8288, 0.2
        %v8555 = vmul.f32 %v8293, 0.2
        %v8556 = vmul.f32 %v8298, 0.2
        %v8557 = vmul.f32 %v8303, 0.2
        %v8558 = vmul.f32 %v8308, 0.2
        %v8559 = vmul.f32 %v8313, 0.2
        %v8560 = vmul.f32 %v8318, 0.2
        %v8561 = vmul.f32 %v8323, 0.2
        %v8562 = vmul.f32 %v8328, 0.2
        %v8563 = vmul.f32 %v8333, 0.2
        %v8564 = vmul.f32 %v8338, 0.2
        %v8565 = vmul.f32 %v8343, 0.2
        %v8566 = vmul.f32 %v8348, 0.2
        %v8567 = vmul.f32 %v8353, 0.2
        %v8568 = vmul.f32 %v8358, 0.2
        %v8569 = vmul.f32 %v8363, 0.2
        %v8570 = vmul.f32 %v8368, 0.2
        %v8571 = vmul.f32 %v8373, 0.2
        %v8572 = vmul.f32 %v8378, 0.2
        %v8573 = vmul.f32 %v8383, 0.2
        %v8574 = vmul.f32 %v8388, 0.2
        %v8575 = vmul.f32 %v8393, 0.2
        %v8576 = vmul.f32 %v8398, 0.2
        %v8577 = vmul.f32 %v8403, 0.2
        %v8578 = vmul.f32 %v8408, 0.2
        %v8579 = vmul.f32 %v8413, 0.2
        %v8580 = vmul.f32 %v8418, 0.2
        %v8581 = vmul.f32 %v8423, 0.2
        %v8582 = vmul.f32 %v8428, 0.2
        %v8583 = vmul.f32 %v8433, 0.2
        %v8584 = vmul.f32 %v8438, 0.2
        %v8585 = vmul.f32 %v8443, 0.2
        %v8586 = vmul.f32 %v8448, 0.2
        %v8587 = vmul.f32 %v8453, 0.2
        %v8588 = vmul.f32 %v8458, 0.2
        %v8589 = vsel %vm8461, %v8143, %v8525
        %v8590 = vsel %vm8462, %v8148, %v8526
        %v8591 = vsel %vm8463, %v8153, %v8527
        %v8592 = vsel %vm8464, %v8158, %v8528
        %v8593 = vsel %vm8465, %v8163, %v8529
        %v8594 = vsel %vm8466, %v8168, %v8530
        %v8595 = vsel %vm8467, %v8173, %v8531
        %v8596 = vsel %vm8468, %v8178, %v8532
        %v8597 = vsel %vm8469, %v8183, %v8533
        %v8598 = vsel %vm8470, %v8188, %v8534
        %v8599 = vsel %vm8471, %v8193, %v8535
        %v8600 = vsel %vm8472, %v8198, %v8536
        %v8601 = vsel %vm8473, %v8203, %v8537
        %v8602 = vsel %vm8474, %v8208, %v8538
        %v8603 = vsel %vm8475, %v8213, %v8539
        %v8604 = vsel %vm8476, %v8218, %v8540
        %v8605 = vsel %vm8477, %v8223, %v8541
        %v8606 = vsel %vm8478, %v8228, %v8542
        %v8607 = vsel %vm8479, %v8233, %v8543
        %v8608 = vsel %vm8480, %v8238, %v8544
        %v8609 = vsel %vm8481, %v8243, %v8545
        %v8610 = vsel %vm8482, %v8248, %v8546
        %v8611 = vsel %vm8483, %v8253, %v8547
        %v8612 = vsel %vm8484, %v8258, %v8548
        %v8613 = vsel %vm8485, %v8263, %v8549
        %v8614 = vsel %vm8486, %v8268, %v8550
        %v8615 = vsel %vm8487, %v8273, %v8551
        %v8616 = vsel %vm8488, %v8278, %v8552
        %v8617 = vsel %vm8489, %v8283, %v8553
        %v8618 = vsel %vm8490, %v8288, %v8554
        %v8619 = vsel %vm8491, %v8293, %v8555
        %v8620 = vsel %vm8492, %v8298, %v8556
        %v8621 = vsel %vm8493, %v8303, %v8557
        %v8622 = vsel %vm8494, %v8308, %v8558
        %v8623 = vsel %vm8495, %v8313, %v8559
        %v8624 = vsel %vm8496, %v8318, %v8560
        %v8625 = vsel %vm8497, %v8323, %v8561
        %v8626 = vsel %vm8498, %v8328, %v8562
        %v8627 = vsel %vm8499, %v8333, %v8563
        %v8628 = vsel %vm8500, %v8338, %v8564
        %v8629 = vsel %vm8501, %v8343, %v8565
        %v8630 = vsel %vm8502, %v8348, %v8566
        %v8631 = vsel %vm8503, %v8353, %v8567
        %v8632 = vsel %vm8504, %v8358, %v8568
        %v8633 = vsel %vm8505, %v8363, %v8569
        %v8634 = vsel %vm8506, %v8368, %v8570
        %v8635 = vsel %vm8507, %v8373, %v8571
        %v8636 = vsel %vm8508, %v8378, %v8572
        %v8637 = vsel %vm8509, %v8383, %v8573
        %v8638 = vsel %vm8510, %v8388, %v8574
        %v8639 = vsel %vm8511, %v8393, %v8575
        %v8640 = vsel %vm8512, %v8398, %v8576
        %v8641 = vsel %vm8513, %v8403, %v8577
        %v8642 = vsel %vm8514, %v8408, %v8578
        %v8643 = vsel %vm8515, %v8413, %v8579
        %v8644 = vsel %vm8516, %v8418, %v8580
        %v8645 = vsel %vm8517, %v8423, %v8581
        %v8646 = vsel %vm8518, %v8428, %v8582
        %v8647 = vsel %vm8519, %v8433, %v8583
        %v8648 = vsel %vm8520, %v8438, %v8584
        %v8649 = vsel %vm8521, %v8443, %v8585
        %v8650 = vsel %vm8522, %v8448, %v8586
        %v8651 = vsel %vm8523, %v8453, %v8587
        %v8652 = vsel %vm8524, %v8458, %v8588
        %8653 = vst [vmem:[%s177] sm:$0xff] %v8589
        %8654 = vst [vmem:[%s177 + $0x8] sm:$0xff] %v8590
        %8655 = vst [vmem:[%s177 + $0x10] sm:$0xff] %v8591
        %8656 = vst [vmem:[%s177 + $0x18] sm:$0xff] %v8592
        %8657 = vst [vmem:[%s177 + $0x20] sm:$0xff] %v8593
        %8658 = vst [vmem:[%s177 + $0x28] sm:$0xff] %v8594
        %8659 = vst [vmem:[%s177 + $0x30] sm:$0xff] %v8595
        %8660 = vst [vmem:[%s177 + $0x38] sm:$0xff] %v8596
        %8661 = vst [vmem:[%s177 + $0x40] sm:$0xff] %v8597
        %8662 = vst [vmem:[%s177 + $0x48] sm:$0xff] %v8598
        %8663 = vst [vmem:[%s177 + $0x50] sm:$0xff] %v8599
        %8664 = vst [vmem:[%s177 + $0x58] sm:$0xff] %v8600
        %8665 = vst [vmem:[%s177 + $0x60] sm:$0xff] %v8601
        %8666 = vst [vmem:[%s177 + $0x68] sm:$0xff] %v8602
        %8667 = vst [vmem:[%s177 + $0x70] sm:$0xff] %v8603
        %8668 = vst [vmem:[%s177 + $0x78] sm:$0xff] %v8604
        %8669 = vst [vmem:[%s177 + $0x80] sm:$0xff] %v8605
        %8670 = vst [vmem:[%s177 + $0x88] sm:$0xff] %v8606
        %8671 = vst [vmem:[%s177 + $0x90] sm:$0xff] %v8607
        %8672 = vst [vmem:[%s177 + $0x98] sm:$0xff] %v8608
        %8673 = vst [vmem:[%s177 + $0xa0] sm:$0xff] %v8609
        %8674 = vst [vmem:[%s177 + $0xa8] sm:$0xff] %v8610
        %8675 = vst [vmem:[%s177 + $0xb0] sm:$0xff] %v8611
        %8676 = vst [vmem:[%s177 + $0xb8] sm:$0xff] %v8612
        %8677 = vst [vmem:[%s177 + $0xc0] sm:$0xff] %v8613
        %8678 = vst [vmem:[%s177 + $0xc8] sm:$0xff] %v8614
        %8679 = vst [vmem:[%s177 + $0xd0] sm:$0xff] %v8615
        %8680 = vst [vmem:[%s177 + $0xd8] sm:$0xff] %v8616
        %8681 = vst [vmem:[%s177 + $0xe0] sm:$0xff] %v8617
        %8682 = vst [vmem:[%s177 + $0xe8] sm:$0xff] %v8618
        %8683 = vst [vmem:[%s177 + $0xf0] sm:$0xff] %v8619
        %8684 = vst [vmem:[%s177 + $0xf8] sm:$0xff] %v8620
        %8685 = vst [vmem:[%s177 + $0x100] sm:$0xff] %v8621
        %8686 = vst [vmem:[%s177 + $0x108] sm:$0xff] %v8622
        %8687 = vst [vmem:[%s177 + $0x110] sm:$0xff] %v8623
        %8688 = vst [vmem:[%s177 + $0x118] sm:$0xff] %v8624
        %8689 = vst [vmem:[%s177 + $0x120] sm:$0xff] %v8625
        %8690 = vst [vmem:[%s177 + $0x128] sm:$0xff] %v8626
        %8691 = vst [vmem:[%s177 + $0x130] sm:$0xff] %v8627
        %8692 = vst [vmem:[%s177 + $0x138] sm:$0xff] %v8628
        %8693 = vst [vmem:[%s177 + $0x140] sm:$0xff] %v8629
        %8694 = vst [vmem:[%s177 + $0x148] sm:$0xff] %v8630
        %8695 = vst [vmem:[%s177 + $0x150] sm:$0xff] %v8631
        %8696 = vst [vmem:[%s177 + $0x158] sm:$0xff] %v8632
        %8697 = vst [vmem:[%s177 + $0x160] sm:$0xff] %v8633
        %8698 = vst [vmem:[%s177 + $0x168] sm:$0xff] %v8634
        %8699 = vst [vmem:[%s177 + $0x170] sm:$0xff] %v8635
        %8700 = vst [vmem:[%s177 + $0x178] sm:$0xff] %v8636
        %8701 = vst [vmem:[%s177 + $0x180] sm:$0xff] %v8637
        %8702 = vst [vmem:[%s177 + $0x188] sm:$0xff] %v8638
        %8703 = vst [vmem:[%s177 + $0x190] sm:$0xff] %v8639
        %8704 = vst [vmem:[%s177 + $0x198] sm:$0xff] %v8640
        %8705 = vst [vmem:[%s177 + $0x1a0] sm:$0xff] %v8641
        %8706 = vst [vmem:[%s177 + $0x1a8] sm:$0xff] %v8642
        %8707 = vst [vmem:[%s177 + $0x1b0] sm:$0xff] %v8643
        %8708 = vst [vmem:[%s177 + $0x1b8] sm:$0xff] %v8644
        %8709 = vst [vmem:[%s177 + $0x1c0] sm:$0xff] %v8645
        %8710 = vst [vmem:[%s177 + $0x1c8] sm:$0xff] %v8646
        %8711 = vst [vmem:[%s177 + $0x1d0] sm:$0xff] %v8647
        %8712 = vst [vmem:[%s177 + $0x1d8] sm:$0xff] %v8648
        %8713 = vst [vmem:[%s177 + $0x1e0] sm:$0xff] %v8649
        %8714 = vst [vmem:[%s177 + $0x1e8] sm:$0xff] %v8650
        %8715 = vst [vmem:[%s177 + $0x1f0] sm:$0xff] %v8651
        %8716 = vst [vmem:[%s177 + $0x1f8] sm:$0xff] %v8652
        %s8717 = sand.u32 %s107, 1
        %s8718 = scalar_lea.sflag [#allocation3], %s8717
        %s8719 = sand.u32 %s107, 1
        %s8720 = smul.addr %s8719, 512
        %s8721 = scalar_lea.vmem [#allocation2], %s8720
        // Predicated region
        $region33: #{tpu_custom_call.1} parent=31 // pred_check
          %p8722 = pneg %p117
        $region34: #{tpu_custom_call.1} parent=31 // pred_check_branch
          %8724 = sbr.rel (%p8722) target = $region36
        $region35: #{tpu_custom_call.1} parent=31 // pred_region
          %s8725 = smul.u32 64, %s22
          %s8727 = ssub.s32 8192, 8192
          %8728 = vsyncadd %s8718, %s8727
          %s8729 = smul.addr %s21, 64
          %s8730 = sadd.s32 %s8725, %s8729
          %s8731 = smul.addr %s8730, 128
          %s8732 = scalar_lea.hbm %s3, %s8731
          %s8733 = sshll.u32 %s8721, 4
          %s8734 = int_to_ptr.vmem [resolvable:$true] %s8733
          %8739 = dma.vmem_to_hbm [thread:$0]  %s8734, 8192, %s8732, %s8718, 128, 128, 8
        $region36: #{tpu_custom_call.1} parent=31 // pred_fallthru
          _
      $region32: #{tpu_custom_call.1} parent=5 // pred_fallthru
        _
      %p8740 = scmp.le.s32.totalorder 2, %s12
      // Predicated region
      $region37: #{tpu_custom_call.1} parent=5 // pred_check
        %p8741 = pneg %p8740
      $region38: #{tpu_custom_call.1} parent=5 // pred_check_branch
        %8743 = sbr.rel (%p8741) target = $region40
      $region39: #{tpu_custom_call.1} parent=5 // pred_region
        %s8744 = ssub.s32 %s12, 2
        // Predicated region
        $region41: #{tpu_custom_call.1} parent=39 // pred_check
          %p8745 = pneg %p123
        $region42: #{tpu_custom_call.1} parent=39 // pred_check_branch
          %8747 = sbr.rel (%p8745) target = $region44
        $region43: #{tpu_custom_call.1} parent=39 // pred_region
          %s8748 = sand.u32 %s108, 1
          %s8749 = scalar_lea.sflag [#allocation3], %s8748
          %s8750 = sand.u32 %s108, 1
          %s8751 = smul.addr %s8750, 512
          %s8752 = scalar_lea.vmem [#allocation2], %s8751
          %8753 = dma.done %s8749, 8192
        $region44: #{tpu_custom_call.1} parent=39 // pred_fallthru
          _
      $region40: #{tpu_custom_call.1} parent=5 // pred_fallthru
        _
    $region6: #{tpu_custom_call.1} parent=1 // loop_footer
      %s16 = sadd.s32 1, %s12
    $region7: #{tpu_custom_call.1} parent=1 // loop_footer_branch
      %11 = sbr.rel target = $region3
    $region8: #{tpu_custom_call.1} parent=1 // loop_exit
      _
    %8754 = vsyncpa [#allocation3], 1
    %s8755 = scalar_lea.sflag [#allocation3], 1
    %8756 = vsyncpa %s8755, 1

</llo_original>
